<compile_context>
chip_gen: v6e
topology: v6e:2x2x1
jax: 0.10.0
libtpu: 0.0.40
codegen_flags: <defaults>
</compile_context>

<pallas_src>
import jax
import jax.numpy as jnp
from jax.experimental import pallas as pl
from jax.experimental.pallas import tpu as pltpu

BN_EPS = 1e-5


def _basic_block_kernel(x_ref, w1_ref, g1_ref, b1_ref, w2_ref, g2_ref, b2_ref,
                        out_ref, xpad_ref, hpad_ref, slab_ref):
    N, H, W, Cin = x_ref.shape
    cp = xpad_ref.shape[-1]          # padded channel count (multiple of 128)
    NHW = N * H * W
    inv_n = 1.0 / float(NHW)

    # ---- padded input: spatial halo (pad=1) + channel pad, built in VMEM ----
    xpad_ref[...] = jnp.zeros_like(xpad_ref)
    xpad_ref[:, 1:H + 1, 1:W + 1, :Cin] = x_ref[...]

    def im2col(src_ref):
        # slab[:, t*cp:(t+1)*cp] = shifted 3x3 window for tap t (lane-dense).
        for t in range(9):
            kh, kw = divmod(t, 3)
            patch = src_ref[:, kh:kh + H, kw:kw + W, :]
            slab_ref[:, t * cp:(t + 1) * cp] = patch.reshape(NHW, cp)

    def batchnorm(acc, g_ref, b_ref):
        # One-pass batch stats (sum + sum-of-squares), biased var, eps=1e-5.
        # Padded channels have acc == 0 and gamma == beta == 0 -> stay 0.
        s = jnp.sum(acc, axis=0, keepdims=True)
        ss = jnp.sum(acc * acc, axis=0, keepdims=True)
        mean = s * inv_n
        var = jnp.maximum(ss * inv_n - mean * mean, 0.0)
        scale = jax.lax.rsqrt(var + BN_EPS) * g_ref[...]
        return (acc - mean) * scale + b_ref[...]

    # ---- conv1 + BN1 + ReLU -------------------------------------------------
    im2col(xpad_ref)
    acc1 = jnp.dot(slab_ref[...], w1_ref[...],
                   preferred_element_type=jnp.float32)        # (NHW, cp) f32
    h = jnp.maximum(batchnorm(acc1, g1_ref, b1_ref), 0.0)

    # ---- conv2 + BN2 + identity residual + ReLU -----------------------------
    hpad_ref[...] = jnp.zeros_like(hpad_ref)
    hpad_ref[:, 1:H + 1, 1:W + 1, :] = h.astype(hpad_ref.dtype).reshape(
        N, H, W, cp)
    im2col(hpad_ref)                                          # slab reused
    acc2 = jnp.dot(slab_ref[...], w2_ref[...],
                   preferred_element_type=jnp.float32)        # (NHW, cp) f32
    y = batchnorm(acc2, g2_ref, b2_ref)

    # Identity residual: re-use the already channel-padded x held in VMEM
    # (padded channels of both terms are exactly zero).
    res = xpad_ref[:, 1:H + 1, 1:W + 1, :].reshape(NHW, cp)
    y = jnp.maximum(y + res.astype(jnp.float32), 0.0)
    out_ref[...] = y.astype(out_ref.dtype)                    # lane-dense store


# ------------------------------ wrapper --------------------------------------
def _round_up(v, m):
    return -(-v // m) * m


def _pack_conv_weight(w, cin_p, cout_p, dtype):
    # HWIO (3,3,Cin,Cout) -> zero-padded (3,3,cin_p,cout_p) -> (9*cin_p, cout_p)
    kh, kw, cin, cout = w.shape
    wp = jnp.zeros((kh, kw, cin_p, cout_p), dtype)
    wp = wp.at[:, :, :cin, :cout].set(w.astype(dtype))
    return wp.reshape(kh * kw * cin_p, cout_p)


def _pack_bn_param(v, cout_p):
    # Pad gamma/beta with zeros so padded channels stay exactly zero.
    vp = jnp.zeros((cout_p,), jnp.float32)
    vp = vp.at[:v.shape[0]].set(v.astype(jnp.float32))
    return vp.reshape(1, cout_p)


def basic_block_forward(x, params):
    """BasicBlock.forward with stride=1, down_sample=None (identity residual)."""
    # TODO(synk): stride>1 / down_sample projection branch not implemented
    # (module defaults are stride=1, down_sample=None).
    N, H, W, Cin = x.shape
    Cout = params["w1"].shape[-1]
    assert params["w2"].shape[-1] == Cout and Cin == Cout, (
        "identity residual requires in_channels == out_channels")

    cp = max(128, _round_up(Cin, 128))        # lane-dense channel padding
    nhw = N * H * W

    w1p = _pack_conv_weight(params["w1"], cp, cp, x.dtype)
    w2p = _pack_conv_weight(params["w2"], cp, cp, x.dtype)
    g1p = _pack_bn_param(params["g1"], cp)
    b1p = _pack_bn_param(params["b1"], cp)
    g2p = _pack_bn_param(params["g2"], cp)
    b2p = _pack_bn_param(params["b2"], cp)

    vmem = pl.BlockSpec(memory_space=pltpu.MemorySpace.VMEM)
    out = pl.pallas_call(
        _basic_block_kernel,
        out_shape=jax.ShapeDtypeStruct((nhw, cp), x.dtype),
        in_specs=[vmem] * 7,
        out_specs=vmem,
        scratch_shapes=[
            pltpu.VMEM((N, H + 2, W + 2, cp), x.dtype),   # x, halo+chan padded
            pltpu.VMEM((N, H + 2, W + 2, cp), x.dtype),   # h, halo padded
            pltpu.VMEM((nhw, 9 * cp), x.dtype),           # shared im2col slab
        ],
        compiler_params=pltpu.CompilerParams(
            vmem_limit_bytes=32 * 1024 * 1024),
    )(x, w1p, g1p, b1p, w2p, g2p, b2p)

    # TODO(synk): for real ResNet stage shapes, add a row-tile grid with
    # cross-tile BN stat accumulation (scratch + pl.when finalize) and a
    # Cout-block "parallel" axis for v7x megacore; BN batch statistics couple
    # all spatial tiles, so a naive spatial grid would be numerically wrong.
    return out[:, :Cout].reshape(N, H, W, Cout)


def init_basic_block_params(key, in_channels, out_channels):
    """Deterministic parameter init (shapes from BasicBlock.__init__)."""
    k1, k2 = jax.random.split(key)
    # Conv weights in HWIO; PyTorch would be OIHW (Cout, Cin, 3, 3).
    w1 = 0.1 * jax.random.normal(k1, (3, 3, in_channels, out_channels),
                                 jnp.float32)
    w2 = 0.1 * jax.random.normal(k2, (3, 3, out_channels, out_channels),
                                 jnp.float32)
    # BatchNorm2d default init: weight (gamma) = 1, bias (beta) = 0.
    g1 = jnp.ones((out_channels,), jnp.float32)
    b1 = jnp.zeros((out_channels,), jnp.float32)
    g2 = jnp.ones((out_channels,), jnp.float32)
    b2 = jnp.zeros((out_channels,), jnp.float32)
    return dict(w1=w1, g1=g1, b1=b1, w2=w2, g2=g2, b2=b2)


# ---------------- pure-JAX reference (for correctness check) ----------------
def _ref_conv(x, w):
    return jax.lax.conv_general_dilated(
        x, w, window_strides=(1, 1), padding="SAME",
        dimension_numbers=("NHWC", "HWIO", "NHWC"))


def _ref_bn(x, gamma, beta):
    # TODO(synk): running_mean/running_var (momentum state) not tracked; the
    # forward output matches PyTorch training-mode BN which uses batch stats.
    mean = jnp.mean(x, axis=(0, 1, 2), keepdims=True)
    var = jnp.mean((x - mean) ** 2, axis=(0, 1, 2), keepdims=True)
    return (x - mean) * jax.lax.rsqrt(var + BN_EPS) * gamma + beta


def basic_block_reference(x, p):
    h = jax.nn.relu(_ref_bn(_ref_conv(x, p["w1"]), p["g1"], p["b1"]))
    h = _ref_bn(_ref_conv(h, p["w2"]), p["g2"], p["b2"])
    return jax.nn.relu(h + x)


if __name__ == "__main__":
    key = jax.random.PRNGKey(0)
    kx, kp = jax.random.split(key)

    N, C, H, W = 2, 4, 16, 16            # PyTorch-convention NCHW shape
    x_nchw = jax.random.normal(kx, (N, C, H, W), jnp.float32)
    x = jnp.transpose(x_nchw, (0, 2, 3, 1))    # -> NHWC for the kernel

    params = init_basic_block_params(kp, in_channels=C, out_channels=C)

    y = jax.block_until_ready(basic_block_forward(x, params))
    y_ref = jax.block_until_ready(basic_block_reference(x, params))

    assert y.shape == (N, H, W, C)
    max_err = float(jnp.max(jnp.abs(y - y_ref)))
    assert jnp.allclose(y, y_ref, atol=1e-4, rtol=1e-4), max_err

    print("KERNEL_OK")
</pallas_src>

<mosaic_0001>
module attributes {stable_mosaic.version = 11 : i64} {
  func.func @_basic_block_kernel(%arg0: memref<2x16x16x4xf32, #tpu.memory_space<vmem>>, %arg1: memref<1152x128xf32, #tpu.memory_space<vmem>>, %arg2: memref<1x128xf32, #tpu.memory_space<vmem>>, %arg3: memref<1x128xf32, #tpu.memory_space<vmem>>, %arg4: memref<1152x128xf32, #tpu.memory_space<vmem>>, %arg5: memref<1x128xf32, #tpu.memory_space<vmem>>, %arg6: memref<1x128xf32, #tpu.memory_space<vmem>>, %arg7: memref<512x128xf32, #tpu.memory_space<vmem>>, %arg8: memref<2x18x18x128xf32, #tpu.memory_space<vmem>>, %arg9: memref<2x18x18x128xf32, #tpu.memory_space<vmem>>, %arg10: memref<512x1152xf32, #tpu.memory_space<vmem>>) attributes {dimension_semantics = [], scalar_prefetch = 0 : i64, scratch_operands = 3 : i64, tpu.core_type = #tpu.core_type<tc>} {
    %cst = arith.constant 0.000000e+00 : f32
    %0 = vector.broadcast %cst : f32 to vector<2x18x18x128xf32>
    %c0 = arith.constant 0 : index
    %c0_0 = arith.constant 0 : index
    %c0_1 = arith.constant 0 : index
    %c0_2 = arith.constant 0 : index
    %1 = vector.load %arg8[%c0, %c0_0, %c0_1, %c0_2] : memref<2x18x18x128xf32, #tpu.memory_space<vmem>>, vector<2x18x18x128xf32>
    tpu.vector_store %arg8[%c0, %c0_0, %c0_1, %c0_2], %0 {strides = array<i32>} : memref<2x18x18x128xf32, #tpu.memory_space<vmem>>, vector<2x18x18x128xf32>,
    %c0_3 = arith.constant 0 : index
    %c0_4 = arith.constant 0 : index
    %c0_5 = arith.constant 0 : index
    %c0_6 = arith.constant 0 : index
    %2 = vector.load %arg0[%c0_3, %c0_4, %c0_5, %c0_6] : memref<2x16x16x4xf32, #tpu.memory_space<vmem>>, vector<2x16x16x4xf32>
    %c0_7 = arith.constant 0 : index
    %c1 = arith.constant 1 : index
    %c1_8 = arith.constant 1 : index
    %c0_9 = arith.constant 0 : index
    %3 = vector.load %arg8[%c0_7, %c1, %c1_8, %c0_9] : memref<2x18x18x128xf32, #tpu.memory_space<vmem>>, vector<2x16x16x4xf32>
    tpu.vector_store %arg8[%c0_7, %c1, %c1_8, %c0_9], %2 {strides = array<i32>} : memref<2x18x18x128xf32, #tpu.memory_space<vmem>>, vector<2x16x16x4xf32>,
    %c0_10 = arith.constant 0 : index
    %c0_11 = arith.constant 0 : index
    %c0_12 = arith.constant 0 : index
    %c0_13 = arith.constant 0 : index
    %4 = vector.load %arg8[%c0_10, %c0_11, %c0_12, %c0_13] : memref<2x18x18x128xf32, #tpu.memory_space<vmem>>, vector<2x16x16x128xf32>
    %5 = vector.shape_cast %4 : vector<2x16x16x128xf32> to vector<512x128xf32>
    %c0_14 = arith.constant 0 : index
    %c0_15 = arith.constant 0 : index
    %6 = vector.load %arg10[%c0_14, %c0_15] : memref<512x1152xf32, #tpu.memory_space<vmem>>, vector<512x128xf32>
    tpu.vector_store %arg10[%c0_14, %c0_15], %5 {strides = array<i32>} : memref<512x1152xf32, #tpu.memory_space<vmem>>, vector<512x128xf32>,
    %c0_16 = arith.constant 0 : index
    %c0_17 = arith.constant 0 : index
    %c1_18 = arith.constant 1 : index
    %c0_19 = arith.constant 0 : index
    %7 = vector.load %arg8[%c0_16, %c0_17, %c1_18, %c0_19] : memref<2x18x18x128xf32, #tpu.memory_space<vmem>>, vector<2x16x16x128xf32>
    %8 = vector.shape_cast %7 : vector<2x16x16x128xf32> to vector<512x128xf32>
    %c0_20 = arith.constant 0 : index
    %c128 = arith.constant 128 : index
    %9 = vector.load %arg10[%c0_20, %c128] : memref<512x1152xf32, #tpu.memory_space<vmem>>, vector<512x128xf32>
    tpu.vector_store %arg10[%c0_20, %c128], %8 {strides = array<i32>} : memref<512x1152xf32, #tpu.memory_space<vmem>>, vector<512x128xf32>,
    %c0_21 = arith.constant 0 : index
    %c0_22 = arith.constant 0 : index
    %c2 = arith.constant 2 : index
    %c0_23 = arith.constant 0 : index
    %10 = vector.load %arg8[%c0_21, %c0_22, %c2, %c0_23] : memref<2x18x18x128xf32, #tpu.memory_space<vmem>>, vector<2x16x16x128xf32>
    %11 = vector.shape_cast %10 : vector<2x16x16x128xf32> to vector<512x128xf32>
    %c0_24 = arith.constant 0 : index
    %c256 = arith.constant 256 : index
    %12 = vector.load %arg10[%c0_24, %c256] : memref<512x1152xf32, #tpu.memory_space<vmem>>, vector<512x128xf32>
    tpu.vector_store %arg10[%c0_24, %c256], %11 {strides = array<i32>} : memref<512x1152xf32, #tpu.memory_space<vmem>>, vector<512x128xf32>,
    %c0_25 = arith.constant 0 : index
    %c1_26 = arith.constant 1 : index
    %c0_27 = arith.constant 0 : index
    %c0_28 = arith.constant 0 : index
    %13 = vector.load %arg8[%c0_25, %c1_26, %c0_27, %c0_28] : memref<2x18x18x128xf32, #tpu.memory_space<vmem>>, vector<2x16x16x128xf32>
    %14 = vector.shape_cast %13 : vector<2x16x16x128xf32> to vector<512x128xf32>
    %c0_29 = arith.constant 0 : index
    %c384 = arith.constant 384 : index
    %15 = vector.load %arg10[%c0_29, %c384] : memref<512x1152xf32, #tpu.memory_space<vmem>>, vector<512x128xf32>
    tpu.vector_store %arg10[%c0_29, %c384], %14 {strides = array<i32>} : memref<512x1152xf32, #tpu.memory_space<vmem>>, vector<512x128xf32>,
    %c0_30 = arith.constant 0 : index
    %c1_31 = arith.constant 1 : index
    %c1_32 = arith.constant 1 : index
    %c0_33 = arith.constant 0 : index
    %16 = vector.load %arg8[%c0_30, %c1_31, %c1_32, %c0_33] : memref<2x18x18x128xf32, #tpu.memory_space<vmem>>, vector<2x16x16x128xf32>
    %17 = vector.shape_cast %16 : vector<2x16x16x128xf32> to vector<512x128xf32>
    %c0_34 = arith.constant 0 : index
    %c512 = arith.constant 512 : index
    %18 = vector.load %arg10[%c0_34, %c512] : memref<512x1152xf32, #tpu.memory_space<vmem>>, vector<512x128xf32>
    tpu.vector_store %arg10[%c0_34, %c512], %17 {strides = array<i32>} : memref<512x1152xf32, #tpu.memory_space<vmem>>, vector<512x128xf32>,
    %c0_35 = arith.constant 0 : index
    %c1_36 = arith.constant 1 : index
    %c2_37 = arith.constant 2 : index
    %c0_38 = arith.constant 0 : index
    %19 = vector.load %arg8[%c0_35, %c1_36, %c2_37, %c0_38] : memref<2x18x18x128xf32, #tpu.memory_space<vmem>>, vector<2x16x16x128xf32>
    %20 = vector.shape_cast %19 : vector<2x16x16x128xf32> to vector<512x128xf32>
    %c0_39 = arith.constant 0 : index
    %c640 = arith.constant 640 : index
    %21 = vector.load %arg10[%c0_39, %c640] : memref<512x1152xf32, #tpu.memory_space<vmem>>, vector<512x128xf32>
    tpu.vector_store %arg10[%c0_39, %c640], %20 {strides = array<i32>} : memref<512x1152xf32, #tpu.memory_space<vmem>>, vector<512x128xf32>,
    %c0_40 = arith.constant 0 : index
    %c2_41 = arith.constant 2 : index
    %c0_42 = arith.constant 0 : index
    %c0_43 = arith.constant 0 : index
    %22 = vector.load %arg8[%c0_40, %c2_41, %c0_42, %c0_43] : memref<2x18x18x128xf32, #tpu.memory_space<vmem>>, vector<2x16x16x128xf32>
    %23 = vector.shape_cast %22 : vector<2x16x16x128xf32> to vector<512x128xf32>
    %c0_44 = arith.constant 0 : index
    %c768 = arith.constant 768 : index
    %24 = vector.load %arg10[%c0_44, %c768] : memref<512x1152xf32, #tpu.memory_space<vmem>>, vector<512x128xf32>
    tpu.vector_store %arg10[%c0_44, %c768], %23 {strides = array<i32>} : memref<512x1152xf32, #tpu.memory_space<vmem>>, vector<512x128xf32>,
    %c0_45 = arith.constant 0 : index
    %c2_46 = arith.constant 2 : index
    %c1_47 = arith.constant 1 : index
    %c0_48 = arith.constant 0 : index
    %25 = vector.load %arg8[%c0_45, %c2_46, %c1_47, %c0_48] : memref<2x18x18x128xf32, #tpu.memory_space<vmem>>, vector<2x16x16x128xf32>
    %26 = vector.shape_cast %25 : vector<2x16x16x128xf32> to vector<512x128xf32>
    %c0_49 = arith.constant 0 : index
    %c896 = arith.constant 896 : index
    %27 = vector.load %arg10[%c0_49, %c896] : memref<512x1152xf32, #tpu.memory_space<vmem>>, vector<512x128xf32>
    tpu.vector_store %arg10[%c0_49, %c896], %26 {strides = array<i32>} : memref<512x1152xf32, #tpu.memory_space<vmem>>, vector<512x128xf32>,
    %c0_50 = arith.constant 0 : index
    %c2_51 = arith.constant 2 : index
    %c2_52 = arith.constant 2 : index
    %c0_53 = arith.constant 0 : index
    %28 = vector.load %arg8[%c0_50, %c2_51, %c2_52, %c0_53] : memref<2x18x18x128xf32, #tpu.memory_space<vmem>>, vector<2x16x16x128xf32>
    %29 = vector.shape_cast %28 : vector<2x16x16x128xf32> to vector<512x128xf32>
    %c0_54 = arith.constant 0 : index
    %c1024 = arith.constant 1024 : index
    %30 = vector.load %arg10[%c0_54, %c1024] : memref<512x1152xf32, #tpu.memory_space<vmem>>, vector<512x128xf32>
    tpu.vector_store %arg10[%c0_54, %c1024], %29 {strides = array<i32>} : memref<512x1152xf32, #tpu.memory_space<vmem>>, vector<512x128xf32>,
    %c0_55 = arith.constant 0 : index
    %c0_56 = arith.constant 0 : index
    %31 = vector.load %arg10[%c0_55, %c0_56] : memref<512x1152xf32, #tpu.memory_space<vmem>>, vector<512x1152xf32>
    %c0_57 = arith.constant 0 : index
    %c0_58 = arith.constant 0 : index
    %32 = vector.load %arg1[%c0_57, %c0_58] : memref<1152x128xf32, #tpu.memory_space<vmem>>, vector<1152x128xf32>
    %cst_59 = arith.constant dense<0.000000e+00> : vector<512x128xf32>
    %33 = tpu.matmul %31, %32, %cst_59 {dimension_numbers = #tpu.dot_dimension_numbers<[1], [0], [0], [1], [0, 0, 1, 1], [], []>} : vector<512x1152xf32>, vector<1152x128xf32>, vector<512x128xf32> -> vector<512x128xf32>
    %cst_60 = arith.constant dense<0.000000e+00> : vector<128xf32>
    %34 = vector.multi_reduction <add>, %33, %cst_60 [0] : vector<512x128xf32> to vector<128xf32>
    %35 = vector.shape_cast %34 : vector<128xf32> to vector<1x128xf32>
    %36 = arith.mulf %33, %33 : vector<512x128xf32>
    %cst_61 = arith.constant dense<0.000000e+00> : vector<128xf32>
    %37 = vector.multi_reduction <add>, %36, %cst_61 [0] : vector<512x128xf32> to vector<128xf32>
    %38 = vector.shape_cast %37 : vector<128xf32> to vector<1x128xf32>
    %cst_62 = arith.constant 0.001953125 : f32
    %39 = vector.broadcast %cst_62 : f32 to vector<1x128xf32>
    %40 = arith.mulf %35, %39 : vector<1x128xf32>
    %cst_63 = arith.constant 0.001953125 : f32
    %41 = vector.broadcast %cst_63 : f32 to vector<1x128xf32>
    %42 = arith.mulf %38, %41 : vector<1x128xf32>
    %43 = arith.mulf %40, %40 : vector<1x128xf32>
    %44 = arith.subf %42, %43 : vector<1x128xf32>
    %cst_64 = arith.constant 0.000000e+00 : f32
    %45 = vector.broadcast %cst_64 : f32 to vector<1x128xf32>
    %46 = arith.maximumf %44, %45 : vector<1x128xf32>
    %cst_65 = arith.constant 9.99999974E-6 : f32
    %47 = vector.broadcast %cst_65 : f32 to vector<1x128xf32>
    %48 = arith.addf %46, %47 : vector<1x128xf32>
    %49 = math.rsqrt %48 : vector<1x128xf32>
    %c0_66 = arith.constant 0 : index
    %c0_67 = arith.constant 0 : index
    %50 = vector.load %arg2[%c0_66, %c0_67] : memref<1x128xf32, #tpu.memory_space<vmem>>, vector<1x128xf32>
    %51 = arith.mulf %49, %50 : vector<1x128xf32>
    %52 = vector.broadcast %40 : vector<1x128xf32> to vector<512x128xf32>
    %53 = arith.subf %33, %52 : vector<512x128xf32>
    %54 = vector.broadcast %51 : vector<1x128xf32> to vector<512x128xf32>
    %55 = arith.mulf %53, %54 : vector<512x128xf32>
    %c0_68 = arith.constant 0 : index
    %c0_69 = arith.constant 0 : index
    %56 = vector.load %arg3[%c0_68, %c0_69] : memref<1x128xf32, #tpu.memory_space<vmem>>, vector<1x128xf32>
    %57 = vector.broadcast %56 : vector<1x128xf32> to vector<512x128xf32>
    %58 = arith.addf %55, %57 : vector<512x128xf32>
    %cst_70 = arith.constant 0.000000e+00 : f32
    %59 = vector.broadcast %cst_70 : f32 to vector<512x128xf32>
    %60 = arith.maximumf %58, %59 : vector<512x128xf32>
    %cst_71 = arith.constant 0.000000e+00 : f32
    %61 = vector.broadcast %cst_71 : f32 to vector<2x18x18x128xf32>
    %c0_72 = arith.constant 0 : index
    %c0_73 = arith.constant 0 : index
    %c0_74 = arith.constant 0 : index
    %c0_75 = arith.constant 0 : index
    %62 = vector.load %arg9[%c0_72, %c0_73, %c0_74, %c0_75] : memref<2x18x18x128xf32, #tpu.memory_space<vmem>>, vector<2x18x18x128xf32>
    tpu.vector_store %arg9[%c0_72, %c0_73, %c0_74, %c0_75], %61 {strides = array<i32>} : memref<2x18x18x128xf32, #tpu.memory_space<vmem>>, vector<2x18x18x128xf32>,
    %63 = vector.shape_cast %60 : vector<512x128xf32> to vector<2x16x16x128xf32>
    %c0_76 = arith.constant 0 : index
    %c1_77 = arith.constant 1 : index
    %c1_78 = arith.constant 1 : index
    %c0_79 = arith.constant 0 : index
    %64 = vector.load %arg9[%c0_76, %c1_77, %c1_78, %c0_79] : memref<2x18x18x128xf32, #tpu.memory_space<vmem>>, vector<2x16x16x128xf32>
    tpu.vector_store %arg9[%c0_76, %c1_77, %c1_78, %c0_79], %63 {strides = array<i32>} : memref<2x18x18x128xf32, #tpu.memory_space<vmem>>, vector<2x16x16x128xf32>,
    %c0_80 = arith.constant 0 : index
    %c0_81 = arith.constant 0 : index
    %c0_82 = arith.constant 0 : index
    %c0_83 = arith.constant 0 : index
    %65 = vector.load %arg9[%c0_80, %c0_81, %c0_82, %c0_83] : memref<2x18x18x128xf32, #tpu.memory_space<vmem>>, vector<2x16x16x128xf32>
    %66 = vector.shape_cast %65 : vector<2x16x16x128xf32> to vector<512x128xf32>
    %c0_84 = arith.constant 0 : index
    %c0_85 = arith.constant 0 : index
    %67 = vector.load %arg10[%c0_84, %c0_85] : memref<512x1152xf32, #tpu.memory_space<vmem>>, vector<512x128xf32>
    tpu.vector_store %arg10[%c0_84, %c0_85], %66 {strides = array<i32>} : memref<512x1152xf32, #tpu.memory_space<vmem>>, vector<512x128xf32>,
    %c0_86 = arith.constant 0 : index
    %c0_87 = arith.constant 0 : index
    %c1_88 = arith.constant 1 : index
    %c0_89 = arith.constant 0 : index
    %68 = vector.load %arg9[%c0_86, %c0_87, %c1_88, %c0_89] : memref<2x18x18x128xf32, #tpu.memory_space<vmem>>, vector<2x16x16x128xf32>
    %69 = vector.shape_cast %68 : vector<2x16x16x128xf32> to vector<512x128xf32>
    %c0_90 = arith.constant 0 : index
    %c128_91 = arith.constant 128 : index
    %70 = vector.load %arg10[%c0_90, %c128_91] : memref<512x1152xf32, #tpu.memory_space<vmem>>, vector<512x128xf32>
    tpu.vector_store %arg10[%c0_90, %c128_91], %69 {strides = array<i32>} : memref<512x1152xf32, #tpu.memory_space<vmem>>, vector<512x128xf32>,
    %c0_92 = arith.constant 0 : index
    %c0_93 = arith.constant 0 : index
    %c2_94 = arith.constant 2 : index
    %c0_95 = arith.constant 0 : index
    %71 = vector.load %arg9[%c0_92, %c0_93, %c2_94, %c0_95] : memref<2x18x18x128xf32, #tpu.memory_space<vmem>>, vector<2x16x16x128xf32>
    %72 = vector.shape_cast %71 : vector<2x16x16x128xf32> to vector<512x128xf32>
    %c0_96 = arith.constant 0 : index
    %c256_97 = arith.constant 256 : index
    %73 = vector.load %arg10[%c0_96, %c256_97] : memref<512x1152xf32, #tpu.memory_space<vmem>>, vector<512x128xf32>
    tpu.vector_store %arg10[%c0_96, %c256_97], %72 {strides = array<i32>} : memref<512x1152xf32, #tpu.memory_space<vmem>>, vector<512x128xf32>,
    %c0_98 = arith.constant 0 : index
    %c1_99 = arith.constant 1 : index
    %c0_100 = arith.constant 0 : index
    %c0_101 = arith.constant 0 : index
    %74 = vector.load %arg9[%c0_98, %c1_99, %c0_100, %c0_101] : memref<2x18x18x128xf32, #tpu.memory_space<vmem>>, vector<2x16x16x128xf32>
    %75 = vector.shape_cast %74 : vector<2x16x16x128xf32> to vector<512x128xf32>
    %c0_102 = arith.constant 0 : index
    %c384_103 = arith.constant 384 : index
    %76 = vector.load %arg10[%c0_102, %c384_103] : memref<512x1152xf32, #tpu.memory_space<vmem>>, vector<512x128xf32>
    tpu.vector_store %arg10[%c0_102, %c384_103], %75 {strides = array<i32>} : memref<512x1152xf32, #tpu.memory_space<vmem>>, vector<512x128xf32>,
    %c0_104 = arith.constant 0 : index
    %c1_105 = arith.constant 1 : index
    %c1_106 = arith.constant 1 : index
    %c0_107 = arith.constant 0 : index
    %77 = vector.load %arg9[%c0_104, %c1_105, %c1_106, %c0_107] : memref<2x18x18x128xf32, #tpu.memory_space<vmem>>, vector<2x16x16x128xf32>
    %78 = vector.shape_cast %77 : vector<2x16x16x128xf32> to vector<512x128xf32>
    %c0_108 = arith.constant 0 : index
    %c512_109 = arith.constant 512 : index
    %79 = vector.load %arg10[%c0_108, %c512_109] : memref<512x1152xf32, #tpu.memory_space<vmem>>, vector<512x128xf32>
    tpu.vector_store %arg10[%c0_108, %c512_109], %78 {strides = array<i32>} : memref<512x1152xf32, #tpu.memory_space<vmem>>, vector<512x128xf32>,
    %c0_110 = arith.constant 0 : index
    %c1_111 = arith.constant 1 : index
    %c2_112 = arith.constant 2 : index
    %c0_113 = arith.constant 0 : index
    %80 = vector.load %arg9[%c0_110, %c1_111, %c2_112, %c0_113] : memref<2x18x18x128xf32, #tpu.memory_space<vmem>>, vector<2x16x16x128xf32>
    %81 = vector.shape_cast %80 : vector<2x16x16x128xf32> to vector<512x128xf32>
    %c0_114 = arith.constant 0 : index
    %c640_115 = arith.constant 640 : index
    %82 = vector.load %arg10[%c0_114, %c640_115] : memref<512x1152xf32, #tpu.memory_space<vmem>>, vector<512x128xf32>
    tpu.vector_store %arg10[%c0_114, %c640_115], %81 {strides = array<i32>} : memref<512x1152xf32, #tpu.memory_space<vmem>>, vector<512x128xf32>,
    %c0_116 = arith.constant 0 : index
    %c2_117 = arith.constant 2 : index
    %c0_118 = arith.constant 0 : index
    %c0_119 = arith.constant 0 : index
    %83 = vector.load %arg9[%c0_116, %c2_117, %c0_118, %c0_119] : memref<2x18x18x128xf32, #tpu.memory_space<vmem>>, vector<2x16x16x128xf32>
    %84 = vector.shape_cast %83 : vector<2x16x16x128xf32> to vector<512x128xf32>
    %c0_120 = arith.constant 0 : index
    %c768_121 = arith.constant 768 : index
    %85 = vector.load %arg10[%c0_120, %c768_121] : memref<512x1152xf32, #tpu.memory_space<vmem>>, vector<512x128xf32>
    tpu.vector_store %arg10[%c0_120, %c768_121], %84 {strides = array<i32>} : memref<512x1152xf32, #tpu.memory_space<vmem>>, vector<512x128xf32>,
    %c0_122 = arith.constant 0 : index
    %c2_123 = arith.constant 2 : index
    %c1_124 = arith.constant 1 : index
    %c0_125 = arith.constant 0 : index
    %86 = vector.load %arg9[%c0_122, %c2_123, %c1_124, %c0_125] : memref<2x18x18x128xf32, #tpu.memory_space<vmem>>, vector<2x16x16x128xf32>
    %87 = vector.shape_cast %86 : vector<2x16x16x128xf32> to vector<512x128xf32>
    %c0_126 = arith.constant 0 : index
    %c896_127 = arith.constant 896 : index
    %88 = vector.load %arg10[%c0_126, %c896_127] : memref<512x1152xf32, #tpu.memory_space<vmem>>, vector<512x128xf32>
    tpu.vector_store %arg10[%c0_126, %c896_127], %87 {strides = array<i32>} : memref<512x1152xf32, #tpu.memory_space<vmem>>, vector<512x128xf32>,
    %c0_128 = arith.constant 0 : index
    %c2_129 = arith.constant 2 : index
    %c2_130 = arith.constant 2 : index
    %c0_131 = arith.constant 0 : index
    %89 = vector.load %arg9[%c0_128, %c2_129, %c2_130, %c0_131] : memref<2x18x18x128xf32, #tpu.memory_space<vmem>>, vector<2x16x16x128xf32>
    %90 = vector.shape_cast %89 : vector<2x16x16x128xf32> to vector<512x128xf32>
    %c0_132 = arith.constant 0 : index
    %c1024_133 = arith.constant 1024 : index
    %91 = vector.load %arg10[%c0_132, %c1024_133] : memref<512x1152xf32, #tpu.memory_space<vmem>>, vector<512x128xf32>
    tpu.vector_store %arg10[%c0_132, %c1024_133], %90 {strides = array<i32>} : memref<512x1152xf32, #tpu.memory_space<vmem>>, vector<512x128xf32>,
    %c0_134 = arith.constant 0 : index
    %c0_135 = arith.constant 0 : index
    %92 = vector.load %arg10[%c0_134, %c0_135] : memref<512x1152xf32, #tpu.memory_space<vmem>>, vector<512x1152xf32>
    %c0_136 = arith.constant 0 : index
    %c0_137 = arith.constant 0 : index
    %93 = vector.load %arg4[%c0_136, %c0_137] : memref<1152x128xf32, #tpu.memory_space<vmem>>, vector<1152x128xf32>
    %cst_138 = arith.constant dense<0.000000e+00> : vector<512x128xf32>
    %94 = tpu.matmul %92, %93, %cst_138 {dimension_numbers = #tpu.dot_dimension_numbers<[1], [0], [0], [1], [0, 0, 1, 1], [], []>} : vector<512x1152xf32>, vector<1152x128xf32>, vector<512x128xf32> -> vector<512x128xf32>
    %cst_139 = arith.constant dense<0.000000e+00> : vector<128xf32>
    %95 = vector.multi_reduction <add>, %94, %cst_139 [0] : vector<512x128xf32> to vector<128xf32>
    %96 = vector.shape_cast %95 : vector<128xf32> to vector<1x128xf32>
    %97 = arith.mulf %94, %94 : vector<512x128xf32>
    %cst_140 = arith.constant dense<0.000000e+00> : vector<128xf32>
    %98 = vector.multi_reduction <add>, %97, %cst_140 [0] : vector<512x128xf32> to vector<128xf32>
    %99 = vector.shape_cast %98 : vector<128xf32> to vector<1x128xf32>
    %cst_141 = arith.constant 0.001953125 : f32
    %100 = vector.broadcast %cst_141 : f32 to vector<1x128xf32>
    %101 = arith.mulf %96, %100 : vector<1x128xf32>
    %cst_142 = arith.constant 0.001953125 : f32
    %102 = vector.broadcast %cst_142 : f32 to vector<1x128xf32>
    %103 = arith.mulf %99, %102 : vector<1x128xf32>
    %104 = arith.mulf %101, %101 : vector<1x128xf32>
    %105 = arith.subf %103, %104 : vector<1x128xf32>
    %cst_143 = arith.constant 0.000000e+00 : f32
    %106 = vector.broadcast %cst_143 : f32 to vector<1x128xf32>
    %107 = arith.maximumf %105, %106 : vector<1x128xf32>
    %cst_144 = arith.constant 9.99999974E-6 : f32
    %108 = vector.broadcast %cst_144 : f32 to vector<1x128xf32>
    %109 = arith.addf %107, %108 : vector<1x128xf32>
    %110 = math.rsqrt %109 : vector<1x128xf32>
    %c0_145 = arith.constant 0 : index
    %c0_146 = arith.constant 0 : index
    %111 = vector.load %arg5[%c0_145, %c0_146] : memref<1x128xf32, #tpu.memory_space<vmem>>, vector<1x128xf32>
    %112 = arith.mulf %110, %111 : vector<1x128xf32>
    %113 = vector.broadcast %101 : vector<1x128xf32> to vector<512x128xf32>
    %114 = arith.subf %94, %113 : vector<512x128xf32>
    %115 = vector.broadcast %112 : vector<1x128xf32> to vector<512x128xf32>
    %116 = arith.mulf %114, %115 : vector<512x128xf32>
    %c0_147 = arith.constant 0 : index
    %c0_148 = arith.constant 0 : index
    %117 = vector.load %arg6[%c0_147, %c0_148] : memref<1x128xf32, #tpu.memory_space<vmem>>, vector<1x128xf32>
    %118 = vector.broadcast %117 : vector<1x128xf32> to vector<512x128xf32>
    %119 = arith.addf %116, %118 : vector<512x128xf32>
    %c0_149 = arith.constant 0 : index
    %c1_150 = arith.constant 1 : index
    %c1_151 = arith.constant 1 : index
    %c0_152 = arith.constant 0 : index
    %120 = vector.load %arg8[%c0_149, %c1_150, %c1_151, %c0_152] : memref<2x18x18x128xf32, #tpu.memory_space<vmem>>, vector<2x16x16x128xf32>
    %121 = vector.shape_cast %120 : vector<2x16x16x128xf32> to vector<512x128xf32>
    %122 = arith.addf %119, %121 : vector<512x128xf32>
    %cst_153 = arith.constant 0.000000e+00 : f32
    %123 = vector.broadcast %cst_153 : f32 to vector<512x128xf32>
    %124 = arith.maximumf %122, %123 : vector<512x128xf32>
    %c0_154 = arith.constant 0 : index
    %c0_155 = arith.constant 0 : index
    %125 = vector.load %arg7[%c0_154, %c0_155] : memref<512x128xf32, #tpu.memory_space<vmem>>, vector<512x128xf32>
    tpu.vector_store %arg7[%c0_154, %c0_155], %124 {strides = array<i32>} : memref<512x128xf32, #tpu.memory_space<vmem>>, vector<512x128xf32>,
    return
  }
}

</mosaic_0001>

<llo_original>
// kernel: tpu_custom_call.1
$region0: #{tpu_custom_call.1}
  #allocation0 [shape = 'u32[]', space=smem, size = 0x4, offset = 0x4, fixed_abs, tag = 'smem constant byte address 0x4 - core index']
  #allocation1 [shape = 'u32[144,128]{1,0:T(1,128)}', space=vmem, size = 0x12000, scoped, tag = 'internal scratch']
  #allocation2 [shape = 'f32[2,18,18,128]{3,2,1,0:T(8,128)}', space=vmem, size = 0x6c000, scoped, tag = 'scratch operand']
  #allocation3 [shape = 'f32[2,18,18,128]{3,2,1,0:T(8,128)}', space=vmem, size = 0x6c000, scoped, tag = 'scratch operand']
  #allocation4 [shape = 'f32[512,1152]{1,0:T(8,128)}', space=vmem, size = 0x240000, scoped, tag = 'scratch operand']
  %s0 = inlined_call_operand.vmem [shape: f32[2,16,16,4], index: 0, kind: input, shape index: {}]
  %s1 = inlined_call_operand.hbm [shape: f32[1152,128], index: 1, kind: input, shape index: {}]
  %s2 = inlined_call_operand.vmem [shape: f32[1,128], index: 2, kind: input, shape index: {}]
  %s3 = inlined_call_operand.vmem [shape: f32[1,128], index: 3, kind: input, shape index: {}]
  %s4 = inlined_call_operand.hbm [shape: f32[1152,128], index: 4, kind: input, shape index: {}]
  %s5 = inlined_call_operand.vmem [shape: f32[1,128], index: 5, kind: input, shape index: {}]
  %s6 = inlined_call_operand.vmem [shape: f32[1,128], index: 6, kind: input, shape index: {}]
  %s7 = inlined_call_operand.hbm [shape: f32[512,128], index: 7, kind: output, shape index: {}]
  %s8 = sld [smem:[#allocation0]]
  $region46: #{tpu_custom_call.1} parent=0
    _
  %s10 = ssub.s32 1, %s8
  %s11 = scalar_select 0, %s10, %s8
  $region1: #{tpu_custom_call.1} parent=0
    #allocation5 [shape = 'u8[589824]{0}', space=vmem, size = 0x90000, scoped, tag = 'input window, operand 1, single buffered']
    #allocation6 [shape = 's32[1]{0}', space=sflag, size = 0x4, scoped, tag = 'scoped memory for tpu_custom_call.1']
    #allocation7 [shape = 's32[1]{0}', space=sflag, size = 0x4, scoped, tag = 'scoped memory for tpu_custom_call.1']
    #allocation8 [shape = 'u8[589824]{0}', space=vmem, size = 0x90000, scoped, tag = 'input window, operand 4, single buffered']
    #allocation9 [shape = 's32[1]{0}', space=sflag, size = 0x4, scoped, tag = 'scoped memory for tpu_custom_call.1']
    #allocation10 [shape = 'u8[262144]{0}', space=vmem, size = 0x40000, scoped, tag = 'output window, operand 0, single buffered']
    %12 = vsyncpa [#allocation6], 0
    %13 = vsyncpa [#allocation9], 0
    %14 = vsyncpa [#allocation7], 0
    // Predicated region
    $region2: #{tpu_custom_call.1} parent=1 // pred_check
      _
    $region3: #{tpu_custom_call.1} parent=1 // pred_check_branch
      %16 = sbr.rel (0) target = $region5
    $region4: #{tpu_custom_call.1} parent=1 // pred_region
      _
    $region5: #{tpu_custom_call.1} parent=1 // pred_fallthru
      _
    // Predicated region
    $region6: #{tpu_custom_call.1} parent=1 // pred_check
      _
    $region7: #{tpu_custom_call.1} parent=1 // pred_check_branch
      %18 = sbr.rel (0) target = $region9
    $region8: #{tpu_custom_call.1} parent=1 // pred_region
      %s20 = ssub.s32 18432, 18432
      %21 = vsyncadd [#allocation6], %s20
      %s22 = sshll.u32 [#allocation5], 4
      %s23 = int_to_ptr.vmem [resolvable:$true] %s22
      %28 = dma.hbm_to_vmem [thread:$0]  %s1, 18432, %s23, [#allocation6], 128, 128, 8
    $region9: #{tpu_custom_call.1} parent=1 // pred_fallthru
      _
    // Predicated region
    $region10: #{tpu_custom_call.1} parent=1 // pred_check
      _
    $region11: #{tpu_custom_call.1} parent=1 // pred_check_branch
      %30 = sbr.rel (0) target = $region13
    $region12: #{tpu_custom_call.1} parent=1 // pred_region
      _
    $region13: #{tpu_custom_call.1} parent=1 // pred_fallthru
      _
    // Predicated region
    $region14: #{tpu_custom_call.1} parent=1 // pred_check
      _
    $region15: #{tpu_custom_call.1} parent=1 // pred_check_branch
      %32 = sbr.rel (0) target = $region17
    $region16: #{tpu_custom_call.1} parent=1 // pred_region
      _
    $region17: #{tpu_custom_call.1} parent=1 // pred_fallthru
      _
    // Predicated region
    $region18: #{tpu_custom_call.1} parent=1 // pred_check
      _
    $region19: #{tpu_custom_call.1} parent=1 // pred_check_branch
      %34 = sbr.rel (0) target = $region21
    $region20: #{tpu_custom_call.1} parent=1 // pred_region
      %s36 = ssub.s32 18432, 18432
      %37 = vsyncadd [#allocation9], %s36
      %s38 = sshll.u32 [#allocation8], 4
      %s39 = int_to_ptr.vmem [resolvable:$true] %s38
      %44 = dma.hbm_to_vmem [thread:$0]  %s4, 18432, %s39, [#allocation9], 128, 128, 8
    $region21: #{tpu_custom_call.1} parent=1 // pred_fallthru
      _
    // Predicated region
    $region22: #{tpu_custom_call.1} parent=1 // pred_check
      _
    $region23: #{tpu_custom_call.1} parent=1 // pred_check_branch
      %46 = sbr.rel (0) target = $region25
    $region24: #{tpu_custom_call.1} parent=1 // pred_region
      _
    $region25: #{tpu_custom_call.1} parent=1 // pred_fallthru
      _
    // Predicated region
    $region26: #{tpu_custom_call.1} parent=1 // pred_check
      _
    $region27: #{tpu_custom_call.1} parent=1 // pred_check_branch
      %48 = sbr.rel (0) target = $region29
    $region28: #{tpu_custom_call.1} parent=1 // pred_region
      _
    $region29: #{tpu_custom_call.1} parent=1 // pred_fallthru
      _
    // Predicated region
    $region30: #{tpu_custom_call.1} parent=1 // pred_check
      _
    $region31: #{tpu_custom_call.1} parent=1 // pred_check_branch
      %50 = sbr.rel (0) target = $region33
    $region32: #{tpu_custom_call.1} parent=1 // pred_region
      %51 = dma.done [#allocation6], 18432
    $region33: #{tpu_custom_call.1} parent=1 // pred_fallthru
      _
    // Predicated region
    $region34: #{tpu_custom_call.1} parent=1 // pred_check
      _
    $region35: #{tpu_custom_call.1} parent=1 // pred_check_branch
      %53 = sbr.rel (0) target = $region37
    $region36: #{tpu_custom_call.1} parent=1 // pred_region
      %54 = dma.done [#allocation9], 18432
    $region37: #{tpu_custom_call.1} parent=1 // pred_fallthru
      _
    %55 = vst [vmem:[#allocation2] sm:$0xff] 0.0
    %56 = vst [vmem:[#allocation2 + $0x8] sm:$0xff] 0.0
    %57 = vst [vmem:[#allocation2 + $0x10] sm:$0x3] 0.0
    %58 = vst [vmem:[#allocation2 + $0x18] sm:$0xff] 0.0
    %59 = vst [vmem:[#allocation2 + $0x20] sm:$0xff] 0.0
    %60 = vst [vmem:[#allocation2 + $0x28] sm:$0x3] 0.0
    %61 = vst [vmem:[#allocation2 + $0x30] sm:$0xff] 0.0
    %62 = vst [vmem:[#allocation2 + $0x38] sm:$0xff] 0.0
    %63 = vst [vmem:[#allocation2 + $0x40] sm:$0x3] 0.0
    %64 = vst [vmem:[#allocation2 + $0x48] sm:$0xff] 0.0
    %65 = vst [vmem:[#allocation2 + $0x50] sm:$0xff] 0.0
    %66 = vst [vmem:[#allocation2 + $0x58] sm:$0x3] 0.0
    %67 = vst [vmem:[#allocation2 + $0x60] sm:$0xff] 0.0
    %68 = vst [vmem:[#allocation2 + $0x68] sm:$0xff] 0.0
    %69 = vst [vmem:[#allocation2 + $0x70] sm:$0x3] 0.0
    %70 = vst [vmem:[#allocation2 + $0x78] sm:$0xff] 0.0
    %71 = vst [vmem:[#allocation2 + $0x80] sm:$0xff] 0.0
    %72 = vst [vmem:[#allocation2 + $0x88] sm:$0x3] 0.0
    %73 = vst [vmem:[#allocation2 + $0x90] sm:$0xff] 0.0
    %74 = vst [vmem:[#allocation2 + $0x98] sm:$0xff] 0.0
    %75 = vst [vmem:[#allocation2 + $0xa0] sm:$0x3] 0.0
    %76 = vst [vmem:[#allocation2 + $0xa8] sm:$0xff] 0.0
    %77 = vst [vmem:[#allocation2 + $0xb0] sm:$0xff] 0.0
    %78 = vst [vmem:[#allocation2 + $0xb8] sm:$0x3] 0.0
    %79 = vst [vmem:[#allocation2 + $0xc0] sm:$0xff] 0.0
    %80 = vst [vmem:[#allocation2 + $0xc8] sm:$0xff] 0.0
    %81 = vst [vmem:[#allocation2 + $0xd0] sm:$0x3] 0.0
    %82 = vst [vmem:[#allocation2 + $0xd8] sm:$0xff] 0.0
    %83 = vst [vmem:[#allocation2 + $0xe0] sm:$0xff] 0.0
    %84 = vst [vmem:[#allocation2 + $0xe8] sm:$0x3] 0.0
    %85 = vst [vmem:[#allocation2 + $0xf0] sm:$0xff] 0.0
    %86 = vst [vmem:[#allocation2 + $0xf8] sm:$0xff] 0.0
    %87 = vst [vmem:[#allocation2 + $0x100] sm:$0x3] 0.0
    %88 = vst [vmem:[#allocation2 + $0x108] sm:$0xff] 0.0
    %89 = vst [vmem:[#allocation2 + $0x110] sm:$0xff] 0.0
    %90 = vst [vmem:[#allocation2 + $0x118] sm:$0x3] 0.0
    %91 = vst [vmem:[#allocation2 + $0x120] sm:$0xff] 0.0
    %92 = vst [vmem:[#allocation2 + $0x128] sm:$0xff] 0.0
    %93 = vst [vmem:[#allocation2 + $0x130] sm:$0x3] 0.0
    %94 = vst [vmem:[#allocation2 + $0x138] sm:$0xff] 0.0
    %95 = vst [vmem:[#allocation2 + $0x140] sm:$0xff] 0.0
    %96 = vst [vmem:[#allocation2 + $0x148] sm:$0x3] 0.0
    %97 = vst [vmem:[#allocation2 + $0x150] sm:$0xff] 0.0
    %98 = vst [vmem:[#allocation2 + $0x158] sm:$0xff] 0.0
    %99 = vst [vmem:[#allocation2 + $0x160] sm:$0x3] 0.0
    %100 = vst [vmem:[#allocation2 + $0x168] sm:$0xff] 0.0
    %101 = vst [vmem:[#allocation2 + $0x170] sm:$0xff] 0.0
    %102 = vst [vmem:[#allocation2 + $0x178] sm:$0x3] 0.0
    %103 = vst [vmem:[#allocation2 + $0x180] sm:$0xff] 0.0
    %104 = vst [vmem:[#allocation2 + $0x188] sm:$0xff] 0.0
    %105 = vst [vmem:[#allocation2 + $0x190] sm:$0x3] 0.0
    %106 = vst [vmem:[#allocation2 + $0x198] sm:$0xff] 0.0
    %107 = vst [vmem:[#allocation2 + $0x1a0] sm:$0xff] 0.0
    %108 = vst [vmem:[#allocation2 + $0x1a8] sm:$0x3] 0.0
    %109 = vst [vmem:[#allocation2 + $0x1b0] sm:$0xff] 0.0
    %110 = vst [vmem:[#allocation2 + $0x1b8] sm:$0xff] 0.0
    %111 = vst [vmem:[#allocation2 + $0x1c0] sm:$0x3] 0.0
    %112 = vst [vmem:[#allocation2 + $0x1c8] sm:$0xff] 0.0
    %113 = vst [vmem:[#allocation2 + $0x1d0] sm:$0xff] 0.0
    %114 = vst [vmem:[#allocation2 + $0x1d8] sm:$0x3] 0.0
    %115 = vst [vmem:[#allocation2 + $0x1e0] sm:$0xff] 0.0
    %116 = vst [vmem:[#allocation2 + $0x1e8] sm:$0xff] 0.0
    %117 = vst [vmem:[#allocation2 + $0x1f0] sm:$0x3] 0.0
    %118 = vst [vmem:[#allocation2 + $0x1f8] sm:$0xff] 0.0
    %119 = vst [vmem:[#allocation2 + $0x200] sm:$0xff] 0.0
    %120 = vst [vmem:[#allocation2 + $0x208] sm:$0x3] 0.0
    %121 = vst [vmem:[#allocation2 + $0x210] sm:$0xff] 0.0
    %122 = vst [vmem:[#allocation2 + $0x218] sm:$0xff] 0.0
    %123 = vst [vmem:[#allocation2 + $0x220] sm:$0x3] 0.0
    %124 = vst [vmem:[#allocation2 + $0x228] sm:$0xff] 0.0
    %125 = vst [vmem:[#allocation2 + $0x230] sm:$0xff] 0.0
    %126 = vst [vmem:[#allocation2 + $0x238] sm:$0x3] 0.0
    %127 = vst [vmem:[#allocation2 + $0x240] sm:$0xff] 0.0
    %128 = vst [vmem:[#allocation2 + $0x248] sm:$0xff] 0.0
    %129 = vst [vmem:[#allocation2 + $0x250] sm:$0x3] 0.0
    %130 = vst [vmem:[#allocation2 + $0x258] sm:$0xff] 0.0
    %131 = vst [vmem:[#allocation2 + $0x260] sm:$0xff] 0.0
    %132 = vst [vmem:[#allocation2 + $0x268] sm:$0x3] 0.0
    %133 = vst [vmem:[#allocation2 + $0x270] sm:$0xff] 0.0
    %134 = vst [vmem:[#allocation2 + $0x278] sm:$0xff] 0.0
    %135 = vst [vmem:[#allocation2 + $0x280] sm:$0x3] 0.0
    %136 = vst [vmem:[#allocation2 + $0x288] sm:$0xff] 0.0
    %137 = vst [vmem:[#allocation2 + $0x290] sm:$0xff] 0.0
    %138 = vst [vmem:[#allocation2 + $0x298] sm:$0x3] 0.0
    %139 = vst [vmem:[#allocation2 + $0x2a0] sm:$0xff] 0.0
    %140 = vst [vmem:[#allocation2 + $0x2a8] sm:$0xff] 0.0
    %141 = vst [vmem:[#allocation2 + $0x2b0] sm:$0x3] 0.0
    %142 = vst [vmem:[#allocation2 + $0x2b8] sm:$0xff] 0.0
    %143 = vst [vmem:[#allocation2 + $0x2c0] sm:$0xff] 0.0
    %144 = vst [vmem:[#allocation2 + $0x2c8] sm:$0x3] 0.0
    %145 = vst [vmem:[#allocation2 + $0x2d0] sm:$0xff] 0.0
    %146 = vst [vmem:[#allocation2 + $0x2d8] sm:$0xff] 0.0
    %147 = vst [vmem:[#allocation2 + $0x2e0] sm:$0x3] 0.0
    %148 = vst [vmem:[#allocation2 + $0x2e8] sm:$0xff] 0.0
    %149 = vst [vmem:[#allocation2 + $0x2f0] sm:$0xff] 0.0
    %150 = vst [vmem:[#allocation2 + $0x2f8] sm:$0x3] 0.0
    %151 = vst [vmem:[#allocation2 + $0x300] sm:$0xff] 0.0
    %152 = vst [vmem:[#allocation2 + $0x308] sm:$0xff] 0.0
    %153 = vst [vmem:[#allocation2 + $0x310] sm:$0x3] 0.0
    %154 = vst [vmem:[#allocation2 + $0x318] sm:$0xff] 0.0
    %155 = vst [vmem:[#allocation2 + $0x320] sm:$0xff] 0.0
    %156 = vst [vmem:[#allocation2 + $0x328] sm:$0x3] 0.0
    %157 = vst [vmem:[#allocation2 + $0x330] sm:$0xff] 0.0
    %158 = vst [vmem:[#allocation2 + $0x338] sm:$0xff] 0.0
    %159 = vst [vmem:[#allocation2 + $0x340] sm:$0x3] 0.0
    %160 = vst [vmem:[#allocation2 + $0x348] sm:$0xff] 0.0
    %161 = vst [vmem:[#allocation2 + $0x350] sm:$0xff] 0.0
    %162 = vst [vmem:[#allocation2 + $0x358] sm:$0x3] 0.0
    %v163 = vld [vmem:[%s0] sm:$0xff]
    %v164 = vld [vmem:[%s0 + $0x8] sm:$0xff]
    %v165 = vld [vmem:[%s0 + $0x10] sm:$0xff]
    %v166 = vld [vmem:[%s0 + $0x18] sm:$0xff]
    %v167 = vld [vmem:[%s0 + $0x20] sm:$0xff]
    %v168 = vld [vmem:[%s0 + $0x28] sm:$0xff]
    %v169 = vld [vmem:[%s0 + $0x30] sm:$0xff]
    %v170 = vld [vmem:[%s0 + $0x38] sm:$0xff]
    %v171 = vld [vmem:[%s0 + $0x40] sm:$0xff]
    %v172 = vld [vmem:[%s0 + $0x48] sm:$0xff]
    %v173 = vld [vmem:[%s0 + $0x50] sm:$0xff]
    %v174 = vld [vmem:[%s0 + $0x58] sm:$0xff]
    %v175 = vld [vmem:[%s0 + $0x60] sm:$0xff]
    %v176 = vld [vmem:[%s0 + $0x68] sm:$0xff]
    %v177 = vld [vmem:[%s0 + $0x70] sm:$0xff]
    %v178 = vld [vmem:[%s0 + $0x78] sm:$0xff]
    %v179 = vld [vmem:[%s0 + $0x80] sm:$0xff]
    %v180 = vld [vmem:[%s0 + $0x88] sm:$0xff]
    %v181 = vld [vmem:[%s0 + $0x90] sm:$0xff]
    %v182 = vld [vmem:[%s0 + $0x98] sm:$0xff]
    %v183 = vld [vmem:[%s0 + $0xa0] sm:$0xff]
    %v184 = vld [vmem:[%s0 + $0xa8] sm:$0xff]
    %v185 = vld [vmem:[%s0 + $0xb0] sm:$0xff]
    %v186 = vld [vmem:[%s0 + $0xb8] sm:$0xff]
    %v187 = vld [vmem:[%s0 + $0xc0] sm:$0xff]
    %v188 = vld [vmem:[%s0 + $0xc8] sm:$0xff]
    %v189 = vld [vmem:[%s0 + $0xd0] sm:$0xff]
    %v190 = vld [vmem:[%s0 + $0xd8] sm:$0xff]
    %v191 = vld [vmem:[%s0 + $0xe0] sm:$0xff]
    %v192 = vld [vmem:[%s0 + $0xe8] sm:$0xff]
    %v193 = vld [vmem:[%s0 + $0xf0] sm:$0xff]
    %v194 = vld [vmem:[%s0 + $0xf8] sm:$0xff]
    %v195 = vld [vmem:[%s0 + $0x100] sm:$0xff]
    %v196 = vld [vmem:[%s0 + $0x108] sm:$0xff]
    %v197 = vld [vmem:[%s0 + $0x110] sm:$0xff]
    %v198 = vld [vmem:[%s0 + $0x118] sm:$0xff]
    %v199 = vld [vmem:[%s0 + $0x120] sm:$0xff]
    %v200 = vld [vmem:[%s0 + $0x128] sm:$0xff]
    %v201 = vld [vmem:[%s0 + $0x130] sm:$0xff]
    %v202 = vld [vmem:[%s0 + $0x138] sm:$0xff]
    %v203 = vld [vmem:[%s0 + $0x140] sm:$0xff]
    %v204 = vld [vmem:[%s0 + $0x148] sm:$0xff]
    %v205 = vld [vmem:[%s0 + $0x150] sm:$0xff]
    %v206 = vld [vmem:[%s0 + $0x158] sm:$0xff]
    %v207 = vld [vmem:[%s0 + $0x160] sm:$0xff]
    %v208 = vld [vmem:[%s0 + $0x168] sm:$0xff]
    %v209 = vld [vmem:[%s0 + $0x170] sm:$0xff]
    %v210 = vld [vmem:[%s0 + $0x178] sm:$0xff]
    %v211 = vld [vmem:[%s0 + $0x180] sm:$0xff]
    %v212 = vld [vmem:[%s0 + $0x188] sm:$0xff]
    %v213 = vld [vmem:[%s0 + $0x190] sm:$0xff]
    %v214 = vld [vmem:[%s0 + $0x198] sm:$0xff]
    %v215 = vld [vmem:[%s0 + $0x1a0] sm:$0xff]
    %v216 = vld [vmem:[%s0 + $0x1a8] sm:$0xff]
    %v217 = vld [vmem:[%s0 + $0x1b0] sm:$0xff]
    %v218 = vld [vmem:[%s0 + $0x1b8] sm:$0xff]
    %v219 = vld [vmem:[%s0 + $0x1c0] sm:$0xff]
    %v220 = vld [vmem:[%s0 + $0x1c8] sm:$0xff]
    %v221 = vld [vmem:[%s0 + $0x1d0] sm:$0xff]
    %v222 = vld [vmem:[%s0 + $0x1d8] sm:$0xff]
    %v223 = vld [vmem:[%s0 + $0x1e0] sm:$0xff]
    %v224 = vld [vmem:[%s0 + $0x1e8] sm:$0xff]
    %v225 = vld [vmem:[%s0 + $0x1f0] sm:$0xff]
    %v226 = vld [vmem:[%s0 + $0x1f8] sm:$0xff]
    %s227 = scalar_lea.vmem [#allocation2], 24
    %vm228 = vcmask 31744
    %229 = vst.msk [vmem:[%s227 + $0x1] sm:$0xff] %vm228, %v163
    %230 = vst.msk [vmem:[%s227 + $0x9] sm:$0xff] %vm228, %v164
    %231 = vst.msk [vmem:[%s227 + $0x19] sm:$0xff] %vm228, %v165
    %232 = vst.msk [vmem:[%s227 + $0x21] sm:$0xff] %vm228, %v166
    %233 = vst.msk [vmem:[%s227 + $0x31] sm:$0xff] %vm228, %v167
    %234 = vst.msk [vmem:[%s227 + $0x39] sm:$0xff] %vm228, %v168
    %235 = vst.msk [vmem:[%s227 + $0x49] sm:$0xff] %vm228, %v169
    %236 = vst.msk [vmem:[%s227 + $0x51] sm:$0xff] %vm228, %v170
    %237 = vst.msk [vmem:[%s227 + $0x61] sm:$0xff] %vm228, %v171
    %238 = vst.msk [vmem:[%s227 + $0x69] sm:$0xff] %vm228, %v172
    %239 = vst.msk [vmem:[%s227 + $0x79] sm:$0xff] %vm228, %v173
    %240 = vst.msk [vmem:[%s227 + $0x81] sm:$0xff] %vm228, %v174
    %241 = vst.msk [vmem:[%s227 + $0x91] sm:$0xff] %vm228, %v175
    %242 = vst.msk [vmem:[%s227 + $0x99] sm:$0xff] %vm228, %v176
    %243 = vst.msk [vmem:[%s227 + $0xa9] sm:$0xff] %vm228, %v177
    %244 = vst.msk [vmem:[%s227 + $0xb1] sm:$0xff] %vm228, %v178
    %245 = vst.msk [vmem:[%s227 + $0xc1] sm:$0xff] %vm228, %v179
    %246 = vst.msk [vmem:[%s227 + $0xc9] sm:$0xff] %vm228, %v180
    %247 = vst.msk [vmem:[%s227 + $0xd9] sm:$0xff] %vm228, %v181
    %248 = vst.msk [vmem:[%s227 + $0xe1] sm:$0xff] %vm228, %v182
    %249 = vst.msk [vmem:[%s227 + $0xf1] sm:$0xff] %vm228, %v183
    %250 = vst.msk [vmem:[%s227 + $0xf9] sm:$0xff] %vm228, %v184
    %251 = vst.msk [vmem:[%s227 + $0x109] sm:$0xff] %vm228, %v185
    %252 = vst.msk [vmem:[%s227 + $0x111] sm:$0xff] %vm228, %v186
    %253 = vst.msk [vmem:[%s227 + $0x121] sm:$0xff] %vm228, %v187
    %254 = vst.msk [vmem:[%s227 + $0x129] sm:$0xff] %vm228, %v188
    %255 = vst.msk [vmem:[%s227 + $0x139] sm:$0xff] %vm228, %v189
    %256 = vst.msk [vmem:[%s227 + $0x141] sm:$0xff] %vm228, %v190
    %257 = vst.msk [vmem:[%s227 + $0x151] sm:$0xff] %vm228, %v191
    %258 = vst.msk [vmem:[%s227 + $0x159] sm:$0xff] %vm228, %v192
    %259 = vst.msk [vmem:[%s227 + $0x169] sm:$0xff] %vm228, %v193
    %260 = vst.msk [vmem:[%s227 + $0x171] sm:$0xff] %vm228, %v194
    %261 = vst.msk [vmem:[%s227 + $0x1b1] sm:$0xff] %vm228, %v195
    %262 = vst.msk [vmem:[%s227 + $0x1b9] sm:$0xff] %vm228, %v196
    %263 = vst.msk [vmem:[%s227 + $0x1c9] sm:$0xff] %vm228, %v197
    %264 = vst.msk [vmem:[%s227 + $0x1d1] sm:$0xff] %vm228, %v198
    %265 = vst.msk [vmem:[%s227 + $0x1e1] sm:$0xff] %vm228, %v199
    %266 = vst.msk [vmem:[%s227 + $0x1e9] sm:$0xff] %vm228, %v200
    %267 = vst.msk [vmem:[%s227 + $0x1f9] sm:$0xff] %vm228, %v201
    %268 = vst.msk [vmem:[%s227 + $0x201] sm:$0xff] %vm228, %v202
    %269 = vst.msk [vmem:[%s227 + $0x211] sm:$0xff] %vm228, %v203
    %270 = vst.msk [vmem:[%s227 + $0x219] sm:$0xff] %vm228, %v204
    %271 = vst.msk [vmem:[%s227 + $0x229] sm:$0xff] %vm228, %v205
    %272 = vst.msk [vmem:[%s227 + $0x231] sm:$0xff] %vm228, %v206
    %273 = vst.msk [vmem:[%s227 + $0x241] sm:$0xff] %vm228, %v207
    %274 = vst.msk [vmem:[%s227 + $0x249] sm:$0xff] %vm228, %v208
    %275 = vst.msk [vmem:[%s227 + $0x259] sm:$0xff] %vm228, %v209
    %276 = vst.msk [vmem:[%s227 + $0x261] sm:$0xff] %vm228, %v210
    %277 = vst.msk [vmem:[%s227 + $0x271] sm:$0xff] %vm228, %v211
    %278 = vst.msk [vmem:[%s227 + $0x279] sm:$0xff] %vm228, %v212
    %279 = vst.msk [vmem:[%s227 + $0x289] sm:$0xff] %vm228, %v213
    %280 = vst.msk [vmem:[%s227 + $0x291] sm:$0xff] %vm228, %v214
    %281 = vst.msk [vmem:[%s227 + $0x2a1] sm:$0xff] %vm228, %v215
    %282 = vst.msk [vmem:[%s227 + $0x2a9] sm:$0xff] %vm228, %v216
    %283 = vst.msk [vmem:[%s227 + $0x2b9] sm:$0xff] %vm228, %v217
    %284 = vst.msk [vmem:[%s227 + $0x2c1] sm:$0xff] %vm228, %v218
    %285 = vst.msk [vmem:[%s227 + $0x2d1] sm:$0xff] %vm228, %v219
    %286 = vst.msk [vmem:[%s227 + $0x2d9] sm:$0xff] %vm228, %v220
    %287 = vst.msk [vmem:[%s227 + $0x2e9] sm:$0xff] %vm228, %v221
    %288 = vst.msk [vmem:[%s227 + $0x2f1] sm:$0xff] %vm228, %v222
    %289 = vst.msk [vmem:[%s227 + $0x301] sm:$0xff] %vm228, %v223
    %290 = vst.msk [vmem:[%s227 + $0x309] sm:$0xff] %vm228, %v224
    %291 = vst.msk [vmem:[%s227 + $0x319] sm:$0xff] %vm228, %v225
    %292 = vst.msk [vmem:[%s227 + $0x321] sm:$0xff] %vm228, %v226
    %v293 = vld [vmem:[#allocation2] sm:$0xff]
    %v294 = vld [vmem:[#allocation2 + $0x8] sm:$0xff]
    %v295 = vld [vmem:[#allocation2 + $0x18] sm:$0xff]
    %v296 = vld [vmem:[#allocation2 + $0x20] sm:$0xff]
    %v297 = vld [vmem:[#allocation2 + $0x30] sm:$0xff]
    %v298 = vld [vmem:[#allocation2 + $0x38] sm:$0xff]
    %v299 = vld [vmem:[#allocation2 + $0x48] sm:$0xff]
    %v300 = vld [vmem:[#allocation2 + $0x50] sm:$0xff]
    %v301 = vld [vmem:[#allocation2 + $0x60] sm:$0xff]
    %v302 = vld [vmem:[#allocation2 + $0x68] sm:$0xff]
    %v303 = vld [vmem:[#allocation2 + $0x78] sm:$0xff]
    %v304 = vld [vmem:[#allocation2 + $0x80] sm:$0xff]
    %v305 = vld [vmem:[#allocation2 + $0x90] sm:$0xff]
    %v306 = vld [vmem:[#allocation2 + $0x98] sm:$0xff]
    %v307 = vld [vmem:[#allocation2 + $0xa8] sm:$0xff]
    %v308 = vld [vmem:[#allocation2 + $0xb0] sm:$0xff]
    %v309 = vld [vmem:[#allocation2 + $0xc0] sm:$0xff]
    %v310 = vld [vmem:[#allocation2 + $0xc8] sm:$0xff]
    %v311 = vld [vmem:[#allocation2 + $0xd8] sm:$0xff]
    %v312 = vld [vmem:[#allocation2 + $0xe0] sm:$0xff]
    %v313 = vld [vmem:[#allocation2 + $0xf0] sm:$0xff]
    %v314 = vld [vmem:[#allocation2 + $0xf8] sm:$0xff]
    %v315 = vld [vmem:[#allocation2 + $0x108] sm:$0xff]
    %v316 = vld [vmem:[#allocation2 + $0x110] sm:$0xff]
    %v317 = vld [vmem:[#allocation2 + $0x120] sm:$0xff]
    %v318 = vld [vmem:[#allocation2 + $0x128] sm:$0xff]
    %v319 = vld [vmem:[#allocation2 + $0x138] sm:$0xff]
    %v320 = vld [vmem:[#allocation2 + $0x140] sm:$0xff]
    %v321 = vld [vmem:[#allocation2 + $0x150] sm:$0xff]
    %v322 = vld [vmem:[#allocation2 + $0x158] sm:$0xff]
    %v323 = vld [vmem:[#allocation2 + $0x168] sm:$0xff]
    %v324 = vld [vmem:[#allocation2 + $0x170] sm:$0xff]
    %v325 = vld [vmem:[#allocation2 + $0x1b0] sm:$0xff]
    %v326 = vld [vmem:[#allocation2 + $0x1b8] sm:$0xff]
    %v327 = vld [vmem:[#allocation2 + $0x1c8] sm:$0xff]
    %v328 = vld [vmem:[#allocation2 + $0x1d0] sm:$0xff]
    %v329 = vld [vmem:[#allocation2 + $0x1e0] sm:$0xff]
    %v330 = vld [vmem:[#allocation2 + $0x1e8] sm:$0xff]
    %v331 = vld [vmem:[#allocation2 + $0x1f8] sm:$0xff]
    %v332 = vld [vmem:[#allocation2 + $0x200] sm:$0xff]
    %v333 = vld [vmem:[#allocation2 + $0x210] sm:$0xff]
    %v334 = vld [vmem:[#allocation2 + $0x218] sm:$0xff]
    %v335 = vld [vmem:[#allocation2 + $0x228] sm:$0xff]
    %v336 = vld [vmem:[#allocation2 + $0x230] sm:$0xff]
    %v337 = vld [vmem:[#allocation2 + $0x240] sm:$0xff]
    %v338 = vld [vmem:[#allocation2 + $0x248] sm:$0xff]
    %v339 = vld [vmem:[#allocation2 + $0x258] sm:$0xff]
    %v340 = vld [vmem:[#allocation2 + $0x260] sm:$0xff]
    %v341 = vld [vmem:[#allocation2 + $0x270] sm:$0xff]
    %v342 = vld [vmem:[#allocation2 + $0x278] sm:$0xff]
    %v343 = vld [vmem:[#allocation2 + $0x288] sm:$0xff]
    %v344 = vld [vmem:[#allocation2 + $0x290] sm:$0xff]
    %v345 = vld [vmem:[#allocation2 + $0x2a0] sm:$0xff]
    %v346 = vld [vmem:[#allocation2 + $0x2a8] sm:$0xff]
    %v347 = vld [vmem:[#allocation2 + $0x2b8] sm:$0xff]
    %v348 = vld [vmem:[#allocation2 + $0x2c0] sm:$0xff]
    %v349 = vld [vmem:[#allocation2 + $0x2d0] sm:$0xff]
    %v350 = vld [vmem:[#allocation2 + $0x2d8] sm:$0xff]
    %v351 = vld [vmem:[#allocation2 + $0x2e8] sm:$0xff]
    %v352 = vld [vmem:[#allocation2 + $0x2f0] sm:$0xff]
    %v353 = vld [vmem:[#allocation2 + $0x300] sm:$0xff]
    %v354 = vld [vmem:[#allocation2 + $0x308] sm:$0xff]
    %v355 = vld [vmem:[#allocation2 + $0x318] sm:$0xff]
    %v356 = vld [vmem:[#allocation2 + $0x320] sm:$0xff]
    %357 = vst [vmem:[#allocation4] sm:$0xff] %v293
    %358 = vst [vmem:[#allocation4 + $0x48] sm:$0xff] %v294
    %359 = vst [vmem:[#allocation4 + $0x90] sm:$0xff] %v295
    %360 = vst [vmem:[#allocation4 + $0xd8] sm:$0xff] %v296
    %361 = vst [vmem:[#allocation4 + $0x120] sm:$0xff] %v297
    %362 = vst [vmem:[#allocation4 + $0x168] sm:$0xff] %v298
    %363 = vst [vmem:[#allocation4 + $0x1b0] sm:$0xff] %v299
    %364 = vst [vmem:[#allocation4 + $0x1f8] sm:$0xff] %v300
    %365 = vst [vmem:[#allocation4 + $0x240] sm:$0xff] %v301
    %366 = vst [vmem:[#allocation4 + $0x288] sm:$0xff] %v302
    %367 = vst [vmem:[#allocation4 + $0x2d0] sm:$0xff] %v303
    %368 = vst [vmem:[#allocation4 + $0x318] sm:$0xff] %v304
    %369 = vst [vmem:[#allocation4 + $0x360] sm:$0xff] %v305
    %370 = vst [vmem:[#allocation4 + $0x3a8] sm:$0xff] %v306
    %371 = vst [vmem:[#allocation4 + $0x3f0] sm:$0xff] %v307
    %372 = vst [vmem:[#allocation4 + $0x438] sm:$0xff] %v308
    %373 = vst [vmem:[#allocation4 + $0x480] sm:$0xff] %v309
    %374 = vst [vmem:[#allocation4 + $0x4c8] sm:$0xff] %v310
    %375 = vst [vmem:[#allocation4 + $0x510] sm:$0xff] %v311
    %376 = vst [vmem:[#allocation4 + $0x558] sm:$0xff] %v312
    %377 = vst [vmem:[#allocation4 + $0x5a0] sm:$0xff] %v313
    %378 = vst [vmem:[#allocation4 + $0x5e8] sm:$0xff] %v314
    %379 = vst [vmem:[#allocation4 + $0x630] sm:$0xff] %v315
    %380 = vst [vmem:[#allocation4 + $0x678] sm:$0xff] %v316
    %381 = vst [vmem:[#allocation4 + $0x6c0] sm:$0xff] %v317
    %382 = vst [vmem:[#allocation4 + $0x708] sm:$0xff] %v318
    %383 = vst [vmem:[#allocation4 + $0x750] sm:$0xff] %v319
    %384 = vst [vmem:[#allocation4 + $0x798] sm:$0xff] %v320
    %385 = vst [vmem:[#allocation4 + $0x7e0] sm:$0xff] %v321
    %386 = vst [vmem:[#allocation4 + $0x828] sm:$0xff] %v322
    %387 = vst [vmem:[#allocation4 + $0x870] sm:$0xff] %v323
    %388 = vst [vmem:[#allocation4 + $0x8b8] sm:$0xff] %v324
    %389 = vst [vmem:[#allocation4 + $0x900] sm:$0xff] %v325
    %390 = vst [vmem:[#allocation4 + $0x948] sm:$0xff] %v326
    %391 = vst [vmem:[#allocation4 + $0x990] sm:$0xff] %v327
    %392 = vst [vmem:[#allocation4 + $0x9d8] sm:$0xff] %v328
    %393 = vst [vmem:[#allocation4 + $0xa20] sm:$0xff] %v329
    %394 = vst [vmem:[#allocation4 + $0xa68] sm:$0xff] %v330
    %395 = vst [vmem:[#allocation4 + $0xab0] sm:$0xff] %v331
    %396 = vst [vmem:[#allocation4 + $0xaf8] sm:$0xff] %v332
    %397 = vst [vmem:[#allocation4 + $0xb40] sm:$0xff] %v333
    %398 = vst [vmem:[#allocation4 + $0xb88] sm:$0xff] %v334
    %399 = vst [vmem:[#allocation4 + $0xbd0] sm:$0xff] %v335
    %400 = vst [vmem:[#allocation4 + $0xc18] sm:$0xff] %v336
    %401 = vst [vmem:[#allocation4 + $0xc60] sm:$0xff] %v337
    %402 = vst [vmem:[#allocation4 + $0xca8] sm:$0xff] %v338
    %403 = vst [vmem:[#allocation4 + $0xcf0] sm:$0xff] %v339
    %404 = vst [vmem:[#allocation4 + $0xd38] sm:$0xff] %v340
    %405 = vst [vmem:[#allocation4 + $0xd80] sm:$0xff] %v341
    %406 = vst [vmem:[#allocation4 + $0xdc8] sm:$0xff] %v342
    %407 = vst [vmem:[#allocation4 + $0xe10] sm:$0xff] %v343
    %408 = vst [vmem:[#allocation4 + $0xe58] sm:$0xff] %v344
    %409 = vst [vmem:[#allocation4 + $0xea0] sm:$0xff] %v345
    %410 = vst [vmem:[#allocation4 + $0xee8] sm:$0xff] %v346
    %411 = vst [vmem:[#allocation4 + $0xf30] sm:$0xff] %v347
    %412 = vst [vmem:[#allocation4 + $0xf78] sm:$0xff] %v348
    %413 = vst [vmem:[#allocation4 + $0xfc0] sm:$0xff] %v349
    %414 = vst [vmem:[#allocation4 + $0x1008] sm:$0xff] %v350
    %415 = vst [vmem:[#allocation4 + $0x1050] sm:$0xff] %v351
    %416 = vst [vmem:[#allocation4 + $0x1098] sm:$0xff] %v352
    %417 = vst [vmem:[#allocation4 + $0x10e0] sm:$0xff] %v353
    %418 = vst [vmem:[#allocation4 + $0x1128] sm:$0xff] %v354
    %419 = vst [vmem:[#allocation4 + $0x1170] sm:$0xff] %v355
    %420 = vst [vmem:[#allocation4 + $0x11b8] sm:$0xff] %v356
    %v421 = vld [vmem:[#allocation2 + $0x1] sm:$0xff]
    %v422 = vld [vmem:[#allocation2 + $0x9] sm:$0xff]
    %v423 = vld [vmem:[#allocation2 + $0x19] sm:$0xff]
    %v424 = vld [vmem:[#allocation2 + $0x21] sm:$0xff]
    %v425 = vld [vmem:[#allocation2 + $0x31] sm:$0xff]
    %v426 = vld [vmem:[#allocation2 + $0x39] sm:$0xff]
    %v427 = vld [vmem:[#allocation2 + $0x49] sm:$0xff]
    %v428 = vld [vmem:[#allocation2 + $0x51] sm:$0xff]
    %v429 = vld [vmem:[#allocation2 + $0x61] sm:$0xff]
    %v430 = vld [vmem:[#allocation2 + $0x69] sm:$0xff]
    %v431 = vld [vmem:[#allocation2 + $0x79] sm:$0xff]
    %v432 = vld [vmem:[#allocation2 + $0x81] sm:$0xff]
    %v433 = vld [vmem:[#allocation2 + $0x91] sm:$0xff]
    %v434 = vld [vmem:[#allocation2 + $0x99] sm:$0xff]
    %v435 = vld [vmem:[#allocation2 + $0xa9] sm:$0xff]
    %v436 = vld [vmem:[#allocation2 + $0xb1] sm:$0xff]
    %v437 = vld [vmem:[#allocation2 + $0xc1] sm:$0xff]
    %v438 = vld [vmem:[#allocation2 + $0xc9] sm:$0xff]
    %v439 = vld [vmem:[#allocation2 + $0xd9] sm:$0xff]
    %v440 = vld [vmem:[#allocation2 + $0xe1] sm:$0xff]
    %v441 = vld [vmem:[#allocation2 + $0xf1] sm:$0xff]
    %v442 = vld [vmem:[#allocation2 + $0xf9] sm:$0xff]
    %v443 = vld [vmem:[#allocation2 + $0x109] sm:$0xff]
    %v444 = vld [vmem:[#allocation2 + $0x111] sm:$0xff]
    %v445 = vld [vmem:[#allocation2 + $0x121] sm:$0xff]
    %v446 = vld [vmem:[#allocation2 + $0x129] sm:$0xff]
    %v447 = vld [vmem:[#allocation2 + $0x139] sm:$0xff]
    %v448 = vld [vmem:[#allocation2 + $0x141] sm:$0xff]
    %v449 = vld [vmem:[#allocation2 + $0x151] sm:$0xff]
    %v450 = vld [vmem:[#allocation2 + $0x159] sm:$0xff]
    %v451 = vld [vmem:[#allocation2 + $0x169] sm:$0xff]
    %v452 = vld [vmem:[#allocation2 + $0x171] sm:$0xff]
    %v453 = vld [vmem:[#allocation2 + $0x1b1] sm:$0xff]
    %v454 = vld [vmem:[#allocation2 + $0x1b9] sm:$0xff]
    %v455 = vld [vmem:[#allocation2 + $0x1c9] sm:$0xff]
    %v456 = vld [vmem:[#allocation2 + $0x1d1] sm:$0xff]
    %v457 = vld [vmem:[#allocation2 + $0x1e1] sm:$0xff]
    %v458 = vld [vmem:[#allocation2 + $0x1e9] sm:$0xff]
    %v459 = vld [vmem:[#allocation2 + $0x1f9] sm:$0xff]
    %v460 = vld [vmem:[#allocation2 + $0x201] sm:$0xff]
    %v461 = vld [vmem:[#allocation2 + $0x211] sm:$0xff]
    %v462 = vld [vmem:[#allocation2 + $0x219] sm:$0xff]
    %v463 = vld [vmem:[#allocation2 + $0x229] sm:$0xff]
    %v464 = vld [vmem:[#allocation2 + $0x231] sm:$0xff]
    %v465 = vld [vmem:[#allocation2 + $0x241] sm:$0xff]
    %v466 = vld [vmem:[#allocation2 + $0x249] sm:$0xff]
    %v467 = vld [vmem:[#allocation2 + $0x259] sm:$0xff]
    %v468 = vld [vmem:[#allocation2 + $0x261] sm:$0xff]
    %v469 = vld [vmem:[#allocation2 + $0x271] sm:$0xff]
    %v470 = vld [vmem:[#allocation2 + $0x279] sm:$0xff]
    %v471 = vld [vmem:[#allocation2 + $0x289] sm:$0xff]
    %v472 = vld [vmem:[#allocation2 + $0x291] sm:$0xff]
    %v473 = vld [vmem:[#allocation2 + $0x2a1] sm:$0xff]
    %v474 = vld [vmem:[#allocation2 + $0x2a9] sm:$0xff]
    %v475 = vld [vmem:[#allocation2 + $0x2b9] sm:$0xff]
    %v476 = vld [vmem:[#allocation2 + $0x2c1] sm:$0xff]
    %v477 = vld [vmem:[#allocation2 + $0x2d1] sm:$0xff]
    %v478 = vld [vmem:[#allocation2 + $0x2d9] sm:$0xff]
    %v479 = vld [vmem:[#allocation2 + $0x2e9] sm:$0xff]
    %v480 = vld [vmem:[#allocation2 + $0x2f1] sm:$0xff]
    %v481 = vld [vmem:[#allocation2 + $0x301] sm:$0xff]
    %v482 = vld [vmem:[#allocation2 + $0x309] sm:$0xff]
    %v483 = vld [vmem:[#allocation2 + $0x319] sm:$0xff]
    %v484 = vld [vmem:[#allocation2 + $0x321] sm:$0xff]
    %485 = vst [vmem:[#allocation4 + $0x8] sm:$0xff] %v421
    %486 = vst [vmem:[#allocation4 + $0x50] sm:$0xff] %v422
    %487 = vst [vmem:[#allocation4 + $0x98] sm:$0xff] %v423
    %488 = vst [vmem:[#allocation4 + $0xe0] sm:$0xff] %v424
    %489 = vst [vmem:[#allocation4 + $0x128] sm:$0xff] %v425
    %490 = vst [vmem:[#allocation4 + $0x170] sm:$0xff] %v426
    %491 = vst [vmem:[#allocation4 + $0x1b8] sm:$0xff] %v427
    %492 = vst [vmem:[#allocation4 + $0x200] sm:$0xff] %v428
    %493 = vst [vmem:[#allocation4 + $0x248] sm:$0xff] %v429
    %494 = vst [vmem:[#allocation4 + $0x290] sm:$0xff] %v430
    %495 = vst [vmem:[#allocation4 + $0x2d8] sm:$0xff] %v431
    %496 = vst [vmem:[#allocation4 + $0x320] sm:$0xff] %v432
    %497 = vst [vmem:[#allocation4 + $0x368] sm:$0xff] %v433
    %498 = vst [vmem:[#allocation4 + $0x3b0] sm:$0xff] %v434
    %499 = vst [vmem:[#allocation4 + $0x3f8] sm:$0xff] %v435
    %500 = vst [vmem:[#allocation4 + $0x440] sm:$0xff] %v436
    %501 = vst [vmem:[#allocation4 + $0x488] sm:$0xff] %v437
    %502 = vst [vmem:[#allocation4 + $0x4d0] sm:$0xff] %v438
    %503 = vst [vmem:[#allocation4 + $0x518] sm:$0xff] %v439
    %504 = vst [vmem:[#allocation4 + $0x560] sm:$0xff] %v440
    %505 = vst [vmem:[#allocation4 + $0x5a8] sm:$0xff] %v441
    %506 = vst [vmem:[#allocation4 + $0x5f0] sm:$0xff] %v442
    %507 = vst [vmem:[#allocation4 + $0x638] sm:$0xff] %v443
    %508 = vst [vmem:[#allocation4 + $0x680] sm:$0xff] %v444
    %509 = vst [vmem:[#allocation4 + $0x6c8] sm:$0xff] %v445
    %510 = vst [vmem:[#allocation4 + $0x710] sm:$0xff] %v446
    %511 = vst [vmem:[#allocation4 + $0x758] sm:$0xff] %v447
    %512 = vst [vmem:[#allocation4 + $0x7a0] sm:$0xff] %v448
    %513 = vst [vmem:[#allocation4 + $0x7e8] sm:$0xff] %v449
    %514 = vst [vmem:[#allocation4 + $0x830] sm:$0xff] %v450
    %515 = vst [vmem:[#allocation4 + $0x878] sm:$0xff] %v451
    %516 = vst [vmem:[#allocation4 + $0x8c0] sm:$0xff] %v452
    %517 = vst [vmem:[#allocation4 + $0x908] sm:$0xff] %v453
    %518 = vst [vmem:[#allocation4 + $0x950] sm:$0xff] %v454
    %519 = vst [vmem:[#allocation4 + $0x998] sm:$0xff] %v455
    %520 = vst [vmem:[#allocation4 + $0x9e0] sm:$0xff] %v456
    %521 = vst [vmem:[#allocation4 + $0xa28] sm:$0xff] %v457
    %522 = vst [vmem:[#allocation4 + $0xa70] sm:$0xff] %v458
    %523 = vst [vmem:[#allocation4 + $0xab8] sm:$0xff] %v459
    %524 = vst [vmem:[#allocation4 + $0xb00] sm:$0xff] %v460
    %525 = vst [vmem:[#allocation4 + $0xb48] sm:$0xff] %v461
    %526 = vst [vmem:[#allocation4 + $0xb90] sm:$0xff] %v462
    %527 = vst [vmem:[#allocation4 + $0xbd8] sm:$0xff] %v463
    %528 = vst [vmem:[#allocation4 + $0xc20] sm:$0xff] %v464
    %529 = vst [vmem:[#allocation4 + $0xc68] sm:$0xff] %v465
    %530 = vst [vmem:[#allocation4 + $0xcb0] sm:$0xff] %v466
    %531 = vst [vmem:[#allocation4 + $0xcf8] sm:$0xff] %v467
    %532 = vst [vmem:[#allocation4 + $0xd40] sm:$0xff] %v468
    %533 = vst [vmem:[#allocation4 + $0xd88] sm:$0xff] %v469
    %534 = vst [vmem:[#allocation4 + $0xdd0] sm:$0xff] %v470
    %535 = vst [vmem:[#allocation4 + $0xe18] sm:$0xff] %v471
    %536 = vst [vmem:[#allocation4 + $0xe60] sm:$0xff] %v472
    %537 = vst [vmem:[#allocation4 + $0xea8] sm:$0xff] %v473
    %538 = vst [vmem:[#allocation4 + $0xef0] sm:$0xff] %v474
    %539 = vst [vmem:[#allocation4 + $0xf38] sm:$0xff] %v475
    %540 = vst [vmem:[#allocation4 + $0xf80] sm:$0xff] %v476
    %541 = vst [vmem:[#allocation4 + $0xfc8] sm:$0xff] %v477
    %542 = vst [vmem:[#allocation4 + $0x1010] sm:$0xff] %v478
    %543 = vst [vmem:[#allocation4 + $0x1058] sm:$0xff] %v479
    %544 = vst [vmem:[#allocation4 + $0x10a0] sm:$0xff] %v480
    %545 = vst [vmem:[#allocation4 + $0x10e8] sm:$0xff] %v481
    %546 = vst [vmem:[#allocation4 + $0x1130] sm:$0xff] %v482
    %547 = vst [vmem:[#allocation4 + $0x1178] sm:$0xff] %v483
    %548 = vst [vmem:[#allocation4 + $0x11c0] sm:$0xff] %v484
    %v549 = vld [vmem:[#allocation2 + $0x2] sm:$0xff]
    %v550 = vld [vmem:[#allocation2 + $0xa] sm:$0xff]
    %v551 = vld [vmem:[#allocation2 + $0x1a] sm:$0xff]
    %v552 = vld [vmem:[#allocation2 + $0x22] sm:$0xff]
    %v553 = vld [vmem:[#allocation2 + $0x32] sm:$0xff]
    %v554 = vld [vmem:[#allocation2 + $0x3a] sm:$0xff]
    %v555 = vld [vmem:[#allocation2 + $0x4a] sm:$0xff]
    %v556 = vld [vmem:[#allocation2 + $0x52] sm:$0xff]
    %v557 = vld [vmem:[#allocation2 + $0x62] sm:$0xff]
    %v558 = vld [vmem:[#allocation2 + $0x6a] sm:$0xff]
    %v559 = vld [vmem:[#allocation2 + $0x7a] sm:$0xff]
    %v560 = vld [vmem:[#allocation2 + $0x82] sm:$0xff]
    %v561 = vld [vmem:[#allocation2 + $0x92] sm:$0xff]
    %v562 = vld [vmem:[#allocation2 + $0x9a] sm:$0xff]
    %v563 = vld [vmem:[#allocation2 + $0xaa] sm:$0xff]
    %v564 = vld [vmem:[#allocation2 + $0xb2] sm:$0xff]
    %v565 = vld [vmem:[#allocation2 + $0xc2] sm:$0xff]
    %v566 = vld [vmem:[#allocation2 + $0xca] sm:$0xff]
    %v567 = vld [vmem:[#allocation2 + $0xda] sm:$0xff]
    %v568 = vld [vmem:[#allocation2 + $0xe2] sm:$0xff]
    %v569 = vld [vmem:[#allocation2 + $0xf2] sm:$0xff]
    %v570 = vld [vmem:[#allocation2 + $0xfa] sm:$0xff]
    %v571 = vld [vmem:[#allocation2 + $0x10a] sm:$0xff]
    %v572 = vld [vmem:[#allocation2 + $0x112] sm:$0xff]
    %v573 = vld [vmem:[#allocation2 + $0x122] sm:$0xff]
    %v574 = vld [vmem:[#allocation2 + $0x12a] sm:$0xff]
    %v575 = vld [vmem:[#allocation2 + $0x13a] sm:$0xff]
    %v576 = vld [vmem:[#allocation2 + $0x142] sm:$0xff]
    %v577 = vld [vmem:[#allocation2 + $0x152] sm:$0xff]
    %v578 = vld [vmem:[#allocation2 + $0x15a] sm:$0xff]
    %v579 = vld [vmem:[#allocation2 + $0x16a] sm:$0xff]
    %v580 = vld [vmem:[#allocation2 + $0x172] sm:$0xff]
    %v581 = vld [vmem:[#allocation2 + $0x1b2] sm:$0xff]
    %v582 = vld [vmem:[#allocation2 + $0x1ba] sm:$0xff]
    %v583 = vld [vmem:[#allocation2 + $0x1ca] sm:$0xff]
    %v584 = vld [vmem:[#allocation2 + $0x1d2] sm:$0xff]
    %v585 = vld [vmem:[#allocation2 + $0x1e2] sm:$0xff]
    %v586 = vld [vmem:[#allocation2 + $0x1ea] sm:$0xff]
    %v587 = vld [vmem:[#allocation2 + $0x1fa] sm:$0xff]
    %v588 = vld [vmem:[#allocation2 + $0x202] sm:$0xff]
    %v589 = vld [vmem:[#allocation2 + $0x212] sm:$0xff]
    %v590 = vld [vmem:[#allocation2 + $0x21a] sm:$0xff]
    %v591 = vld [vmem:[#allocation2 + $0x22a] sm:$0xff]
    %v592 = vld [vmem:[#allocation2 + $0x232] sm:$0xff]
    %v593 = vld [vmem:[#allocation2 + $0x242] sm:$0xff]
    %v594 = vld [vmem:[#allocation2 + $0x24a] sm:$0xff]
    %v595 = vld [vmem:[#allocation2 + $0x25a] sm:$0xff]
    %v596 = vld [vmem:[#allocation2 + $0x262] sm:$0xff]
    %v597 = vld [vmem:[#allocation2 + $0x272] sm:$0xff]
    %v598 = vld [vmem:[#allocation2 + $0x27a] sm:$0xff]
    %v599 = vld [vmem:[#allocation2 + $0x28a] sm:$0xff]
    %v600 = vld [vmem:[#allocation2 + $0x292] sm:$0xff]
    %v601 = vld [vmem:[#allocation2 + $0x2a2] sm:$0xff]
    %v602 = vld [vmem:[#allocation2 + $0x2aa] sm:$0xff]
    %v603 = vld [vmem:[#allocation2 + $0x2ba] sm:$0xff]
    %v604 = vld [vmem:[#allocation2 + $0x2c2] sm:$0xff]
    %v605 = vld [vmem:[#allocation2 + $0x2d2] sm:$0xff]
    %v606 = vld [vmem:[#allocation2 + $0x2da] sm:$0xff]
    %v607 = vld [vmem:[#allocation2 + $0x2ea] sm:$0xff]
    %v608 = vld [vmem:[#allocation2 + $0x2f2] sm:$0xff]
    %v609 = vld [vmem:[#allocation2 + $0x302] sm:$0xff]
    %v610 = vld [vmem:[#allocation2 + $0x30a] sm:$0xff]
    %v611 = vld [vmem:[#allocation2 + $0x31a] sm:$0xff]
    %v612 = vld [vmem:[#allocation2 + $0x322] sm:$0xff]
    %613 = vst [vmem:[#allocation4 + $0x10] sm:$0xff] %v549
    %614 = vst [vmem:[#allocation4 + $0x58] sm:$0xff] %v550
    %615 = vst [vmem:[#allocation4 + $0xa0] sm:$0xff] %v551
    %616 = vst [vmem:[#allocation4 + $0xe8] sm:$0xff] %v552
    %617 = vst [vmem:[#allocation4 + $0x130] sm:$0xff] %v553
    %618 = vst [vmem:[#allocation4 + $0x178] sm:$0xff] %v554
    %619 = vst [vmem:[#allocation4 + $0x1c0] sm:$0xff] %v555
    %620 = vst [vmem:[#allocation4 + $0x208] sm:$0xff] %v556
    %621 = vst [vmem:[#allocation4 + $0x250] sm:$0xff] %v557
    %622 = vst [vmem:[#allocation4 + $0x298] sm:$0xff] %v558
    %623 = vst [vmem:[#allocation4 + $0x2e0] sm:$0xff] %v559
    %624 = vst [vmem:[#allocation4 + $0x328] sm:$0xff] %v560
    %625 = vst [vmem:[#allocation4 + $0x370] sm:$0xff] %v561
    %626 = vst [vmem:[#allocation4 + $0x3b8] sm:$0xff] %v562
    %627 = vst [vmem:[#allocation4 + $0x400] sm:$0xff] %v563
    %628 = vst [vmem:[#allocation4 + $0x448] sm:$0xff] %v564
    %629 = vst [vmem:[#allocation4 + $0x490] sm:$0xff] %v565
    %630 = vst [vmem:[#allocation4 + $0x4d8] sm:$0xff] %v566
    %631 = vst [vmem:[#allocation4 + $0x520] sm:$0xff] %v567
    %632 = vst [vmem:[#allocation4 + $0x568] sm:$0xff] %v568
    %633 = vst [vmem:[#allocation4 + $0x5b0] sm:$0xff] %v569
    %634 = vst [vmem:[#allocation4 + $0x5f8] sm:$0xff] %v570
    %635 = vst [vmem:[#allocation4 + $0x640] sm:$0xff] %v571
    %636 = vst [vmem:[#allocation4 + $0x688] sm:$0xff] %v572
    %637 = vst [vmem:[#allocation4 + $0x6d0] sm:$0xff] %v573
    %638 = vst [vmem:[#allocation4 + $0x718] sm:$0xff] %v574
    %639 = vst [vmem:[#allocation4 + $0x760] sm:$0xff] %v575
    %640 = vst [vmem:[#allocation4 + $0x7a8] sm:$0xff] %v576
    %641 = vst [vmem:[#allocation4 + $0x7f0] sm:$0xff] %v577
    %642 = vst [vmem:[#allocation4 + $0x838] sm:$0xff] %v578
    %643 = vst [vmem:[#allocation4 + $0x880] sm:$0xff] %v579
    %644 = vst [vmem:[#allocation4 + $0x8c8] sm:$0xff] %v580
    %645 = vst [vmem:[#allocation4 + $0x910] sm:$0xff] %v581
    %646 = vst [vmem:[#allocation4 + $0x958] sm:$0xff] %v582
    %647 = vst [vmem:[#allocation4 + $0x9a0] sm:$0xff] %v583
    %648 = vst [vmem:[#allocation4 + $0x9e8] sm:$0xff] %v584
    %649 = vst [vmem:[#allocation4 + $0xa30] sm:$0xff] %v585
    %650 = vst [vmem:[#allocation4 + $0xa78] sm:$0xff] %v586
    %651 = vst [vmem:[#allocation4 + $0xac0] sm:$0xff] %v587
    %652 = vst [vmem:[#allocation4 + $0xb08] sm:$0xff] %v588
    %653 = vst [vmem:[#allocation4 + $0xb50] sm:$0xff] %v589
    %654 = vst [vmem:[#allocation4 + $0xb98] sm:$0xff] %v590
    %655 = vst [vmem:[#allocation4 + $0xbe0] sm:$0xff] %v591
    %656 = vst [vmem:[#allocation4 + $0xc28] sm:$0xff] %v592
    %657 = vst [vmem:[#allocation4 + $0xc70] sm:$0xff] %v593
    %658 = vst [vmem:[#allocation4 + $0xcb8] sm:$0xff] %v594
    %659 = vst [vmem:[#allocation4 + $0xd00] sm:$0xff] %v595
    %660 = vst [vmem:[#allocation4 + $0xd48] sm:$0xff] %v596
    %661 = vst [vmem:[#allocation4 + $0xd90] sm:$0xff] %v597
    %662 = vst [vmem:[#allocation4 + $0xdd8] sm:$0xff] %v598
    %663 = vst [vmem:[#allocation4 + $0xe20] sm:$0xff] %v599
    %664 = vst [vmem:[#allocation4 + $0xe68] sm:$0xff] %v600
    %665 = vst [vmem:[#allocation4 + $0xeb0] sm:$0xff] %v601
    %666 = vst [vmem:[#allocation4 + $0xef8] sm:$0xff] %v602
    %667 = vst [vmem:[#allocation4 + $0xf40] sm:$0xff] %v603
    %668 = vst [vmem:[#allocation4 + $0xf88] sm:$0xff] %v604
    %669 = vst [vmem:[#allocation4 + $0xfd0] sm:$0xff] %v605
    %670 = vst [vmem:[#allocation4 + $0x1018] sm:$0xff] %v606
    %671 = vst [vmem:[#allocation4 + $0x1060] sm:$0xff] %v607
    %672 = vst [vmem:[#allocation4 + $0x10a8] sm:$0xff] %v608
    %673 = vst [vmem:[#allocation4 + $0x10f0] sm:$0xff] %v609
    %674 = vst [vmem:[#allocation4 + $0x1138] sm:$0xff] %v610
    %675 = vst [vmem:[#allocation4 + $0x1180] sm:$0xff] %v611
    %676 = vst [vmem:[#allocation4 + $0x11c8] sm:$0xff] %v612
    %v677 = vld [vmem:[%s227] sm:$0xff]
    %v678 = vld [vmem:[%s227 + $0x8] sm:$0xff]
    %v679 = vld [vmem:[%s227 + $0x18] sm:$0xff]
    %v680 = vld [vmem:[%s227 + $0x20] sm:$0xff]
    %v681 = vld [vmem:[%s227 + $0x30] sm:$0xff]
    %v682 = vld [vmem:[%s227 + $0x38] sm:$0xff]
    %v683 = vld [vmem:[%s227 + $0x48] sm:$0xff]
    %v684 = vld [vmem:[%s227 + $0x50] sm:$0xff]
    %v685 = vld [vmem:[%s227 + $0x60] sm:$0xff]
    %v686 = vld [vmem:[%s227 + $0x68] sm:$0xff]
    %v687 = vld [vmem:[%s227 + $0x78] sm:$0xff]
    %v688 = vld [vmem:[%s227 + $0x80] sm:$0xff]
    %v689 = vld [vmem:[%s227 + $0x90] sm:$0xff]
    %v690 = vld [vmem:[%s227 + $0x98] sm:$0xff]
    %v691 = vld [vmem:[%s227 + $0xa8] sm:$0xff]
    %v692 = vld [vmem:[%s227 + $0xb0] sm:$0xff]
    %v693 = vld [vmem:[%s227 + $0xc0] sm:$0xff]
    %v694 = vld [vmem:[%s227 + $0xc8] sm:$0xff]
    %v695 = vld [vmem:[%s227 + $0xd8] sm:$0xff]
    %v696 = vld [vmem:[%s227 + $0xe0] sm:$0xff]
    %v697 = vld [vmem:[%s227 + $0xf0] sm:$0xff]
    %v698 = vld [vmem:[%s227 + $0xf8] sm:$0xff]
    %v699 = vld [vmem:[%s227 + $0x108] sm:$0xff]
    %v700 = vld [vmem:[%s227 + $0x110] sm:$0xff]
    %v701 = vld [vmem:[%s227 + $0x120] sm:$0xff]
    %v702 = vld [vmem:[%s227 + $0x128] sm:$0xff]
    %v703 = vld [vmem:[%s227 + $0x138] sm:$0xff]
    %v704 = vld [vmem:[%s227 + $0x140] sm:$0xff]
    %v705 = vld [vmem:[%s227 + $0x150] sm:$0xff]
    %v706 = vld [vmem:[%s227 + $0x158] sm:$0xff]
    %v707 = vld [vmem:[%s227 + $0x168] sm:$0xff]
    %v708 = vld [vmem:[%s227 + $0x170] sm:$0xff]
    %v709 = vld [vmem:[%s227 + $0x1b0] sm:$0xff]
    %v710 = vld [vmem:[%s227 + $0x1b8] sm:$0xff]
    %v711 = vld [vmem:[%s227 + $0x1c8] sm:$0xff]
    %v712 = vld [vmem:[%s227 + $0x1d0] sm:$0xff]
    %v713 = vld [vmem:[%s227 + $0x1e0] sm:$0xff]
    %v714 = vld [vmem:[%s227 + $0x1e8] sm:$0xff]
    %v715 = vld [vmem:[%s227 + $0x1f8] sm:$0xff]
    %v716 = vld [vmem:[%s227 + $0x200] sm:$0xff]
    %v717 = vld [vmem:[%s227 + $0x210] sm:$0xff]
    %v718 = vld [vmem:[%s227 + $0x218] sm:$0xff]
    %v719 = vld [vmem:[%s227 + $0x228] sm:$0xff]
    %v720 = vld [vmem:[%s227 + $0x230] sm:$0xff]
    %v721 = vld [vmem:[%s227 + $0x240] sm:$0xff]
    %v722 = vld [vmem:[%s227 + $0x248] sm:$0xff]
    %v723 = vld [vmem:[%s227 + $0x258] sm:$0xff]
    %v724 = vld [vmem:[%s227 + $0x260] sm:$0xff]
    %v725 = vld [vmem:[%s227 + $0x270] sm:$0xff]
    %v726 = vld [vmem:[%s227 + $0x278] sm:$0xff]
    %v727 = vld [vmem:[%s227 + $0x288] sm:$0xff]
    %v728 = vld [vmem:[%s227 + $0x290] sm:$0xff]
    %v729 = vld [vmem:[%s227 + $0x2a0] sm:$0xff]
    %v730 = vld [vmem:[%s227 + $0x2a8] sm:$0xff]
    %v731 = vld [vmem:[%s227 + $0x2b8] sm:$0xff]
    %v732 = vld [vmem:[%s227 + $0x2c0] sm:$0xff]
    %v733 = vld [vmem:[%s227 + $0x2d0] sm:$0xff]
    %v734 = vld [vmem:[%s227 + $0x2d8] sm:$0xff]
    %v735 = vld [vmem:[%s227 + $0x2e8] sm:$0xff]
    %v736 = vld [vmem:[%s227 + $0x2f0] sm:$0xff]
    %v737 = vld [vmem:[%s227 + $0x300] sm:$0xff]
    %v738 = vld [vmem:[%s227 + $0x308] sm:$0xff]
    %v739 = vld [vmem:[%s227 + $0x318] sm:$0xff]
    %v740 = vld [vmem:[%s227 + $0x320] sm:$0xff]
    %741 = vst [vmem:[#allocation4 + $0x18] sm:$0xff] %v677
    %742 = vst [vmem:[#allocation4 + $0x60] sm:$0xff] %v678
    %743 = vst [vmem:[#allocation4 + $0xa8] sm:$0xff] %v679
    %744 = vst [vmem:[#allocation4 + $0xf0] sm:$0xff] %v680
    %745 = vst [vmem:[#allocation4 + $0x138] sm:$0xff] %v681
    %746 = vst [vmem:[#allocation4 + $0x180] sm:$0xff] %v682
    %747 = vst [vmem:[#allocation4 + $0x1c8] sm:$0xff] %v683
    %748 = vst [vmem:[#allocation4 + $0x210] sm:$0xff] %v684
    %749 = vst [vmem:[#allocation4 + $0x258] sm:$0xff] %v685
    %750 = vst [vmem:[#allocation4 + $0x2a0] sm:$0xff] %v686
    %751 = vst [vmem:[#allocation4 + $0x2e8] sm:$0xff] %v687
    %752 = vst [vmem:[#allocation4 + $0x330] sm:$0xff] %v688
    %753 = vst [vmem:[#allocation4 + $0x378] sm:$0xff] %v689
    %754 = vst [vmem:[#allocation4 + $0x3c0] sm:$0xff] %v690
    %755 = vst [vmem:[#allocation4 + $0x408] sm:$0xff] %v691
    %756 = vst [vmem:[#allocation4 + $0x450] sm:$0xff] %v692
    %757 = vst [vmem:[#allocation4 + $0x498] sm:$0xff] %v693
    %758 = vst [vmem:[#allocation4 + $0x4e0] sm:$0xff] %v694
    %759 = vst [vmem:[#allocation4 + $0x528] sm:$0xff] %v695
    %760 = vst [vmem:[#allocation4 + $0x570] sm:$0xff] %v696
    %761 = vst [vmem:[#allocation4 + $0x5b8] sm:$0xff] %v697
    %762 = vst [vmem:[#allocation4 + $0x600] sm:$0xff] %v698
    %763 = vst [vmem:[#allocation4 + $0x648] sm:$0xff] %v699
    %764 = vst [vmem:[#allocation4 + $0x690] sm:$0xff] %v700
    %765 = vst [vmem:[#allocation4 + $0x6d8] sm:$0xff] %v701
    %766 = vst [vmem:[#allocation4 + $0x720] sm:$0xff] %v702
    %767 = vst [vmem:[#allocation4 + $0x768] sm:$0xff] %v703
    %768 = vst [vmem:[#allocation4 + $0x7b0] sm:$0xff] %v704
    %769 = vst [vmem:[#allocation4 + $0x7f8] sm:$0xff] %v705
    %770 = vst [vmem:[#allocation4 + $0x840] sm:$0xff] %v706
    %771 = vst [vmem:[#allocation4 + $0x888] sm:$0xff] %v707
    %772 = vst [vmem:[#allocation4 + $0x8d0] sm:$0xff] %v708
    %773 = vst [vmem:[#allocation4 + $0x918] sm:$0xff] %v709
    %774 = vst [vmem:[#allocation4 + $0x960] sm:$0xff] %v710
    %775 = vst [vmem:[#allocation4 + $0x9a8] sm:$0xff] %v711
    %776 = vst [vmem:[#allocation4 + $0x9f0] sm:$0xff] %v712
    %777 = vst [vmem:[#allocation4 + $0xa38] sm:$0xff] %v713
    %778 = vst [vmem:[#allocation4 + $0xa80] sm:$0xff] %v714
    %779 = vst [vmem:[#allocation4 + $0xac8] sm:$0xff] %v715
    %780 = vst [vmem:[#allocation4 + $0xb10] sm:$0xff] %v716
    %781 = vst [vmem:[#allocation4 + $0xb58] sm:$0xff] %v717
    %782 = vst [vmem:[#allocation4 + $0xba0] sm:$0xff] %v718
    %783 = vst [vmem:[#allocation4 + $0xbe8] sm:$0xff] %v719
    %784 = vst [vmem:[#allocation4 + $0xc30] sm:$0xff] %v720
    %785 = vst [vmem:[#allocation4 + $0xc78] sm:$0xff] %v721
    %786 = vst [vmem:[#allocation4 + $0xcc0] sm:$0xff] %v722
    %787 = vst [vmem:[#allocation4 + $0xd08] sm:$0xff] %v723
    %788 = vst [vmem:[#allocation4 + $0xd50] sm:$0xff] %v724
    %789 = vst [vmem:[#allocation4 + $0xd98] sm:$0xff] %v725
    %790 = vst [vmem:[#allocation4 + $0xde0] sm:$0xff] %v726
    %791 = vst [vmem:[#allocation4 + $0xe28] sm:$0xff] %v727
    %792 = vst [vmem:[#allocation4 + $0xe70] sm:$0xff] %v728
    %793 = vst [vmem:[#allocation4 + $0xeb8] sm:$0xff] %v729
    %794 = vst [vmem:[#allocation4 + $0xf00] sm:$0xff] %v730
    %795 = vst [vmem:[#allocation4 + $0xf48] sm:$0xff] %v731
    %796 = vst [vmem:[#allocation4 + $0xf90] sm:$0xff] %v732
    %797 = vst [vmem:[#allocation4 + $0xfd8] sm:$0xff] %v733
    %798 = vst [vmem:[#allocation4 + $0x1020] sm:$0xff] %v734
    %799 = vst [vmem:[#allocation4 + $0x1068] sm:$0xff] %v735
    %800 = vst [vmem:[#allocation4 + $0x10b0] sm:$0xff] %v736
    %801 = vst [vmem:[#allocation4 + $0x10f8] sm:$0xff] %v737
    %802 = vst [vmem:[#allocation4 + $0x1140] sm:$0xff] %v738
    %803 = vst [vmem:[#allocation4 + $0x1188] sm:$0xff] %v739
    %804 = vst [vmem:[#allocation4 + $0x11d0] sm:$0xff] %v740
    %v805 = vld [vmem:[%s227 + $0x1] sm:$0xff]
    %v806 = vld [vmem:[%s227 + $0x9] sm:$0xff]
    %v807 = vld [vmem:[%s227 + $0x19] sm:$0xff]
    %v808 = vld [vmem:[%s227 + $0x21] sm:$0xff]
    %v809 = vld [vmem:[%s227 + $0x31] sm:$0xff]
    %v810 = vld [vmem:[%s227 + $0x39] sm:$0xff]
    %v811 = vld [vmem:[%s227 + $0x49] sm:$0xff]
    %v812 = vld [vmem:[%s227 + $0x51] sm:$0xff]
    %v813 = vld [vmem:[%s227 + $0x61] sm:$0xff]
    %v814 = vld [vmem:[%s227 + $0x69] sm:$0xff]
    %v815 = vld [vmem:[%s227 + $0x79] sm:$0xff]
    %v816 = vld [vmem:[%s227 + $0x81] sm:$0xff]
    %v817 = vld [vmem:[%s227 + $0x91] sm:$0xff]
    %v818 = vld [vmem:[%s227 + $0x99] sm:$0xff]
    %v819 = vld [vmem:[%s227 + $0xa9] sm:$0xff]
    %v820 = vld [vmem:[%s227 + $0xb1] sm:$0xff]
    %v821 = vld [vmem:[%s227 + $0xc1] sm:$0xff]
    %v822 = vld [vmem:[%s227 + $0xc9] sm:$0xff]
    %v823 = vld [vmem:[%s227 + $0xd9] sm:$0xff]
    %v824 = vld [vmem:[%s227 + $0xe1] sm:$0xff]
    %v825 = vld [vmem:[%s227 + $0xf1] sm:$0xff]
    %v826 = vld [vmem:[%s227 + $0xf9] sm:$0xff]
    %v827 = vld [vmem:[%s227 + $0x109] sm:$0xff]
    %v828 = vld [vmem:[%s227 + $0x111] sm:$0xff]
    %v829 = vld [vmem:[%s227 + $0x121] sm:$0xff]
    %v830 = vld [vmem:[%s227 + $0x129] sm:$0xff]
    %v831 = vld [vmem:[%s227 + $0x139] sm:$0xff]
    %v832 = vld [vmem:[%s227 + $0x141] sm:$0xff]
    %v833 = vld [vmem:[%s227 + $0x151] sm:$0xff]
    %v834 = vld [vmem:[%s227 + $0x159] sm:$0xff]
    %v835 = vld [vmem:[%s227 + $0x169] sm:$0xff]
    %v836 = vld [vmem:[%s227 + $0x171] sm:$0xff]
    %v837 = vld [vmem:[%s227 + $0x1b1] sm:$0xff]
    %v838 = vld [vmem:[%s227 + $0x1b9] sm:$0xff]
    %v839 = vld [vmem:[%s227 + $0x1c9] sm:$0xff]
    %v840 = vld [vmem:[%s227 + $0x1d1] sm:$0xff]
    %v841 = vld [vmem:[%s227 + $0x1e1] sm:$0xff]
    %v842 = vld [vmem:[%s227 + $0x1e9] sm:$0xff]
    %v843 = vld [vmem:[%s227 + $0x1f9] sm:$0xff]
    %v844 = vld [vmem:[%s227 + $0x201] sm:$0xff]
    %v845 = vld [vmem:[%s227 + $0x211] sm:$0xff]
    %v846 = vld [vmem:[%s227 + $0x219] sm:$0xff]
    %v847 = vld [vmem:[%s227 + $0x229] sm:$0xff]
    %v848 = vld [vmem:[%s227 + $0x231] sm:$0xff]
    %v849 = vld [vmem:[%s227 + $0x241] sm:$0xff]
    %v850 = vld [vmem:[%s227 + $0x249] sm:$0xff]
    %v851 = vld [vmem:[%s227 + $0x259] sm:$0xff]
    %v852 = vld [vmem:[%s227 + $0x261] sm:$0xff]
    %v853 = vld [vmem:[%s227 + $0x271] sm:$0xff]
    %v854 = vld [vmem:[%s227 + $0x279] sm:$0xff]
    %v855 = vld [vmem:[%s227 + $0x289] sm:$0xff]
    %v856 = vld [vmem:[%s227 + $0x291] sm:$0xff]
    %v857 = vld [vmem:[%s227 + $0x2a1] sm:$0xff]
    %v858 = vld [vmem:[%s227 + $0x2a9] sm:$0xff]
    %v859 = vld [vmem:[%s227 + $0x2b9] sm:$0xff]
    %v860 = vld [vmem:[%s227 + $0x2c1] sm:$0xff]
    %v861 = vld [vmem:[%s227 + $0x2d1] sm:$0xff]
    %v862 = vld [vmem:[%s227 + $0x2d9] sm:$0xff]
    %v863 = vld [vmem:[%s227 + $0x2e9] sm:$0xff]
    %v864 = vld [vmem:[%s227 + $0x2f1] sm:$0xff]
    %v865 = vld [vmem:[%s227 + $0x301] sm:$0xff]
    %v866 = vld [vmem:[%s227 + $0x309] sm:$0xff]
    %v867 = vld [vmem:[%s227 + $0x319] sm:$0xff]
    %v868 = vld [vmem:[%s227 + $0x321] sm:$0xff]
    %869 = vst [vmem:[#allocation4 + $0x20] sm:$0xff] %v805
    %870 = vst [vmem:[#allocation4 + $0x68] sm:$0xff] %v806
    %871 = vst [vmem:[#allocation4 + $0xb0] sm:$0xff] %v807
    %872 = vst [vmem:[#allocation4 + $0xf8] sm:$0xff] %v808
    %873 = vst [vmem:[#allocation4 + $0x140] sm:$0xff] %v809
    %874 = vst [vmem:[#allocation4 + $0x188] sm:$0xff] %v810
    %875 = vst [vmem:[#allocation4 + $0x1d0] sm:$0xff] %v811
    %876 = vst [vmem:[#allocation4 + $0x218] sm:$0xff] %v812
    %877 = vst [vmem:[#allocation4 + $0x260] sm:$0xff] %v813
    %878 = vst [vmem:[#allocation4 + $0x2a8] sm:$0xff] %v814
    %879 = vst [vmem:[#allocation4 + $0x2f0] sm:$0xff] %v815
    %880 = vst [vmem:[#allocation4 + $0x338] sm:$0xff] %v816
    %881 = vst [vmem:[#allocation4 + $0x380] sm:$0xff] %v817
    %882 = vst [vmem:[#allocation4 + $0x3c8] sm:$0xff] %v818
    %883 = vst [vmem:[#allocation4 + $0x410] sm:$0xff] %v819
    %884 = vst [vmem:[#allocation4 + $0x458] sm:$0xff] %v820
    %885 = vst [vmem:[#allocation4 + $0x4a0] sm:$0xff] %v821
    %886 = vst [vmem:[#allocation4 + $0x4e8] sm:$0xff] %v822
    %887 = vst [vmem:[#allocation4 + $0x530] sm:$0xff] %v823
    %888 = vst [vmem:[#allocation4 + $0x578] sm:$0xff] %v824
    %889 = vst [vmem:[#allocation4 + $0x5c0] sm:$0xff] %v825
    %890 = vst [vmem:[#allocation4 + $0x608] sm:$0xff] %v826
    %891 = vst [vmem:[#allocation4 + $0x650] sm:$0xff] %v827
    %892 = vst [vmem:[#allocation4 + $0x698] sm:$0xff] %v828
    %893 = vst [vmem:[#allocation4 + $0x6e0] sm:$0xff] %v829
    %894 = vst [vmem:[#allocation4 + $0x728] sm:$0xff] %v830
    %895 = vst [vmem:[#allocation4 + $0x770] sm:$0xff] %v831
    %896 = vst [vmem:[#allocation4 + $0x7b8] sm:$0xff] %v832
    %897 = vst [vmem:[#allocation4 + $0x800] sm:$0xff] %v833
    %898 = vst [vmem:[#allocation4 + $0x848] sm:$0xff] %v834
    %899 = vst [vmem:[#allocation4 + $0x890] sm:$0xff] %v835
    %900 = vst [vmem:[#allocation4 + $0x8d8] sm:$0xff] %v836
    %901 = vst [vmem:[#allocation4 + $0x920] sm:$0xff] %v837
    %902 = vst [vmem:[#allocation4 + $0x968] sm:$0xff] %v838
    %903 = vst [vmem:[#allocation4 + $0x9b0] sm:$0xff] %v839
    %904 = vst [vmem:[#allocation4 + $0x9f8] sm:$0xff] %v840
    %905 = vst [vmem:[#allocation4 + $0xa40] sm:$0xff] %v841
    %906 = vst [vmem:[#allocation4 + $0xa88] sm:$0xff] %v842
    %907 = vst [vmem:[#allocation4 + $0xad0] sm:$0xff] %v843
    %908 = vst [vmem:[#allocation4 + $0xb18] sm:$0xff] %v844
    %909 = vst [vmem:[#allocation4 + $0xb60] sm:$0xff] %v845
    %910 = vst [vmem:[#allocation4 + $0xba8] sm:$0xff] %v846
    %911 = vst [vmem:[#allocation4 + $0xbf0] sm:$0xff] %v847
    %912 = vst [vmem:[#allocation4 + $0xc38] sm:$0xff] %v848
    %913 = vst [vmem:[#allocation4 + $0xc80] sm:$0xff] %v849
    %914 = vst [vmem:[#allocation4 + $0xcc8] sm:$0xff] %v850
    %915 = vst [vmem:[#allocation4 + $0xd10] sm:$0xff] %v851
    %916 = vst [vmem:[#allocation4 + $0xd58] sm:$0xff] %v852
    %917 = vst [vmem:[#allocation4 + $0xda0] sm:$0xff] %v853
    %918 = vst [vmem:[#allocation4 + $0xde8] sm:$0xff] %v854
    %919 = vst [vmem:[#allocation4 + $0xe30] sm:$0xff] %v855
    %920 = vst [vmem:[#allocation4 + $0xe78] sm:$0xff] %v856
    %921 = vst [vmem:[#allocation4 + $0xec0] sm:$0xff] %v857
    %922 = vst [vmem:[#allocation4 + $0xf08] sm:$0xff] %v858
    %923 = vst [vmem:[#allocation4 + $0xf50] sm:$0xff] %v859
    %924 = vst [vmem:[#allocation4 + $0xf98] sm:$0xff] %v860
    %925 = vst [vmem:[#allocation4 + $0xfe0] sm:$0xff] %v861
    %926 = vst [vmem:[#allocation4 + $0x1028] sm:$0xff] %v862
    %927 = vst [vmem:[#allocation4 + $0x1070] sm:$0xff] %v863
    %928 = vst [vmem:[#allocation4 + $0x10b8] sm:$0xff] %v864
    %929 = vst [vmem:[#allocation4 + $0x1100] sm:$0xff] %v865
    %930 = vst [vmem:[#allocation4 + $0x1148] sm:$0xff] %v866
    %931 = vst [vmem:[#allocation4 + $0x1190] sm:$0xff] %v867
    %932 = vst [vmem:[#allocation4 + $0x11d8] sm:$0xff] %v868
    %v933 = vld [vmem:[%s227 + $0x2] sm:$0xff]
    %v934 = vld [vmem:[%s227 + $0xa] sm:$0xff]
    %v935 = vld [vmem:[%s227 + $0x1a] sm:$0xff]
    %v936 = vld [vmem:[%s227 + $0x22] sm:$0xff]
    %v937 = vld [vmem:[%s227 + $0x32] sm:$0xff]
    %v938 = vld [vmem:[%s227 + $0x3a] sm:$0xff]
    %v939 = vld [vmem:[%s227 + $0x4a] sm:$0xff]
    %v940 = vld [vmem:[%s227 + $0x52] sm:$0xff]
    %v941 = vld [vmem:[%s227 + $0x62] sm:$0xff]
    %v942 = vld [vmem:[%s227 + $0x6a] sm:$0xff]
    %v943 = vld [vmem:[%s227 + $0x7a] sm:$0xff]
    %v944 = vld [vmem:[%s227 + $0x82] sm:$0xff]
    %v945 = vld [vmem:[%s227 + $0x92] sm:$0xff]
    %v946 = vld [vmem:[%s227 + $0x9a] sm:$0xff]
    %v947 = vld [vmem:[%s227 + $0xaa] sm:$0xff]
    %v948 = vld [vmem:[%s227 + $0xb2] sm:$0xff]
    %v949 = vld [vmem:[%s227 + $0xc2] sm:$0xff]
    %v950 = vld [vmem:[%s227 + $0xca] sm:$0xff]
    %v951 = vld [vmem:[%s227 + $0xda] sm:$0xff]
    %v952 = vld [vmem:[%s227 + $0xe2] sm:$0xff]
    %v953 = vld [vmem:[%s227 + $0xf2] sm:$0xff]
    %v954 = vld [vmem:[%s227 + $0xfa] sm:$0xff]
    %v955 = vld [vmem:[%s227 + $0x10a] sm:$0xff]
    %v956 = vld [vmem:[%s227 + $0x112] sm:$0xff]
    %v957 = vld [vmem:[%s227 + $0x122] sm:$0xff]
    %v958 = vld [vmem:[%s227 + $0x12a] sm:$0xff]
    %v959 = vld [vmem:[%s227 + $0x13a] sm:$0xff]
    %v960 = vld [vmem:[%s227 + $0x142] sm:$0xff]
    %v961 = vld [vmem:[%s227 + $0x152] sm:$0xff]
    %v962 = vld [vmem:[%s227 + $0x15a] sm:$0xff]
    %v963 = vld [vmem:[%s227 + $0x16a] sm:$0xff]
    %v964 = vld [vmem:[%s227 + $0x172] sm:$0xff]
    %v965 = vld [vmem:[%s227 + $0x1b2] sm:$0xff]
    %v966 = vld [vmem:[%s227 + $0x1ba] sm:$0xff]
    %v967 = vld [vmem:[%s227 + $0x1ca] sm:$0xff]
    %v968 = vld [vmem:[%s227 + $0x1d2] sm:$0xff]
    %v969 = vld [vmem:[%s227 + $0x1e2] sm:$0xff]
    %v970 = vld [vmem:[%s227 + $0x1ea] sm:$0xff]
    %v971 = vld [vmem:[%s227 + $0x1fa] sm:$0xff]
    %v972 = vld [vmem:[%s227 + $0x202] sm:$0xff]
    %v973 = vld [vmem:[%s227 + $0x212] sm:$0xff]
    %v974 = vld [vmem:[%s227 + $0x21a] sm:$0xff]
    %v975 = vld [vmem:[%s227 + $0x22a] sm:$0xff]
    %v976 = vld [vmem:[%s227 + $0x232] sm:$0xff]
    %v977 = vld [vmem:[%s227 + $0x242] sm:$0xff]
    %v978 = vld [vmem:[%s227 + $0x24a] sm:$0xff]
    %v979 = vld [vmem:[%s227 + $0x25a] sm:$0xff]
    %v980 = vld [vmem:[%s227 + $0x262] sm:$0xff]
    %v981 = vld [vmem:[%s227 + $0x272] sm:$0xff]
    %v982 = vld [vmem:[%s227 + $0x27a] sm:$0xff]
    %v983 = vld [vmem:[%s227 + $0x28a] sm:$0xff]
    %v984 = vld [vmem:[%s227 + $0x292] sm:$0xff]
    %v985 = vld [vmem:[%s227 + $0x2a2] sm:$0xff]
    %v986 = vld [vmem:[%s227 + $0x2aa] sm:$0xff]
    %v987 = vld [vmem:[%s227 + $0x2ba] sm:$0xff]
    %v988 = vld [vmem:[%s227 + $0x2c2] sm:$0xff]
    %v989 = vld [vmem:[%s227 + $0x2d2] sm:$0xff]
    %v990 = vld [vmem:[%s227 + $0x2da] sm:$0xff]
    %v991 = vld [vmem:[%s227 + $0x2ea] sm:$0xff]
    %v992 = vld [vmem:[%s227 + $0x2f2] sm:$0xff]
    %v993 = vld [vmem:[%s227 + $0x302] sm:$0xff]
    %v994 = vld [vmem:[%s227 + $0x30a] sm:$0xff]
    %v995 = vld [vmem:[%s227 + $0x31a] sm:$0xff]
    %v996 = vld [vmem:[%s227 + $0x322] sm:$0xff]
    %997 = vst [vmem:[#allocation4 + $0x28] sm:$0xff] %v933
    %998 = vst [vmem:[#allocation4 + $0x70] sm:$0xff] %v934
    %999 = vst [vmem:[#allocation4 + $0xb8] sm:$0xff] %v935
    %1000 = vst [vmem:[#allocation4 + $0x100] sm:$0xff] %v936
    %1001 = vst [vmem:[#allocation4 + $0x148] sm:$0xff] %v937
    %1002 = vst [vmem:[#allocation4 + $0x190] sm:$0xff] %v938
    %1003 = vst [vmem:[#allocation4 + $0x1d8] sm:$0xff] %v939
    %1004 = vst [vmem:[#allocation4 + $0x220] sm:$0xff] %v940
    %1005 = vst [vmem:[#allocation4 + $0x268] sm:$0xff] %v941
    %1006 = vst [vmem:[#allocation4 + $0x2b0] sm:$0xff] %v942
    %1007 = vst [vmem:[#allocation4 + $0x2f8] sm:$0xff] %v943
    %1008 = vst [vmem:[#allocation4 + $0x340] sm:$0xff] %v944
    %1009 = vst [vmem:[#allocation4 + $0x388] sm:$0xff] %v945
    %1010 = vst [vmem:[#allocation4 + $0x3d0] sm:$0xff] %v946
    %1011 = vst [vmem:[#allocation4 + $0x418] sm:$0xff] %v947
    %1012 = vst [vmem:[#allocation4 + $0x460] sm:$0xff] %v948
    %1013 = vst [vmem:[#allocation4 + $0x4a8] sm:$0xff] %v949
    %1014 = vst [vmem:[#allocation4 + $0x4f0] sm:$0xff] %v950
    %1015 = vst [vmem:[#allocation4 + $0x538] sm:$0xff] %v951
    %1016 = vst [vmem:[#allocation4 + $0x580] sm:$0xff] %v952
    %1017 = vst [vmem:[#allocation4 + $0x5c8] sm:$0xff] %v953
    %1018 = vst [vmem:[#allocation4 + $0x610] sm:$0xff] %v954
    %1019 = vst [vmem:[#allocation4 + $0x658] sm:$0xff] %v955
    %1020 = vst [vmem:[#allocation4 + $0x6a0] sm:$0xff] %v956
    %1021 = vst [vmem:[#allocation4 + $0x6e8] sm:$0xff] %v957
    %1022 = vst [vmem:[#allocation4 + $0x730] sm:$0xff] %v958
    %1023 = vst [vmem:[#allocation4 + $0x778] sm:$0xff] %v959
    %1024 = vst [vmem:[#allocation4 + $0x7c0] sm:$0xff] %v960
    %1025 = vst [vmem:[#allocation4 + $0x808] sm:$0xff] %v961
    %1026 = vst [vmem:[#allocation4 + $0x850] sm:$0xff] %v962
    %1027 = vst [vmem:[#allocation4 + $0x898] sm:$0xff] %v963
    %1028 = vst [vmem:[#allocation4 + $0x8e0] sm:$0xff] %v964
    %1029 = vst [vmem:[#allocation4 + $0x928] sm:$0xff] %v965
    %1030 = vst [vmem:[#allocation4 + $0x970] sm:$0xff] %v966
    %1031 = vst [vmem:[#allocation4 + $0x9b8] sm:$0xff] %v967
    %1032 = vst [vmem:[#allocation4 + $0xa00] sm:$0xff] %v968
    %1033 = vst [vmem:[#allocation4 + $0xa48] sm:$0xff] %v969
    %1034 = vst [vmem:[#allocation4 + $0xa90] sm:$0xff] %v970
    %1035 = vst [vmem:[#allocation4 + $0xad8] sm:$0xff] %v971
    %1036 = vst [vmem:[#allocation4 + $0xb20] sm:$0xff] %v972
    %1037 = vst [vmem:[#allocation4 + $0xb68] sm:$0xff] %v973
    %1038 = vst [vmem:[#allocation4 + $0xbb0] sm:$0xff] %v974
    %1039 = vst [vmem:[#allocation4 + $0xbf8] sm:$0xff] %v975
    %1040 = vst [vmem:[#allocation4 + $0xc40] sm:$0xff] %v976
    %1041 = vst [vmem:[#allocation4 + $0xc88] sm:$0xff] %v977
    %1042 = vst [vmem:[#allocation4 + $0xcd0] sm:$0xff] %v978
    %1043 = vst [vmem:[#allocation4 + $0xd18] sm:$0xff] %v979
    %1044 = vst [vmem:[#allocation4 + $0xd60] sm:$0xff] %v980
    %1045 = vst [vmem:[#allocation4 + $0xda8] sm:$0xff] %v981
    %1046 = vst [vmem:[#allocation4 + $0xdf0] sm:$0xff] %v982
    %1047 = vst [vmem:[#allocation4 + $0xe38] sm:$0xff] %v983
    %1048 = vst [vmem:[#allocation4 + $0xe80] sm:$0xff] %v984
    %1049 = vst [vmem:[#allocation4 + $0xec8] sm:$0xff] %v985
    %1050 = vst [vmem:[#allocation4 + $0xf10] sm:$0xff] %v986
    %1051 = vst [vmem:[#allocation4 + $0xf58] sm:$0xff] %v987
    %1052 = vst [vmem:[#allocation4 + $0xfa0] sm:$0xff] %v988
    %1053 = vst [vmem:[#allocation4 + $0xfe8] sm:$0xff] %v989
    %1054 = vst [vmem:[#allocation4 + $0x1030] sm:$0xff] %v990
    %1055 = vst [vmem:[#allocation4 + $0x1078] sm:$0xff] %v991
    %1056 = vst [vmem:[#allocation4 + $0x10c0] sm:$0xff] %v992
    %1057 = vst [vmem:[#allocation4 + $0x1108] sm:$0xff] %v993
    %1058 = vst [vmem:[#allocation4 + $0x1150] sm:$0xff] %v994
    %1059 = vst [vmem:[#allocation4 + $0x1198] sm:$0xff] %v995
    %1060 = vst [vmem:[#allocation4 + $0x11e0] sm:$0xff] %v996
    %s1061 = scalar_lea.vmem [#allocation2], 48
    %v1062 = vld [vmem:[%s1061] sm:$0xff]
    %v1063 = vld [vmem:[%s1061 + $0x8] sm:$0xff]
    %v1064 = vld [vmem:[%s1061 + $0x18] sm:$0xff]
    %v1065 = vld [vmem:[%s1061 + $0x20] sm:$0xff]
    %v1066 = vld [vmem:[%s1061 + $0x30] sm:$0xff]
    %v1067 = vld [vmem:[%s1061 + $0x38] sm:$0xff]
    %v1068 = vld [vmem:[%s1061 + $0x48] sm:$0xff]
    %v1069 = vld [vmem:[%s1061 + $0x50] sm:$0xff]
    %v1070 = vld [vmem:[%s1061 + $0x60] sm:$0xff]
    %v1071 = vld [vmem:[%s1061 + $0x68] sm:$0xff]
    %v1072 = vld [vmem:[%s1061 + $0x78] sm:$0xff]
    %v1073 = vld [vmem:[%s1061 + $0x80] sm:$0xff]
    %v1074 = vld [vmem:[%s1061 + $0x90] sm:$0xff]
    %v1075 = vld [vmem:[%s1061 + $0x98] sm:$0xff]
    %v1076 = vld [vmem:[%s1061 + $0xa8] sm:$0xff]
    %v1077 = vld [vmem:[%s1061 + $0xb0] sm:$0xff]
    %v1078 = vld [vmem:[%s1061 + $0xc0] sm:$0xff]
    %v1079 = vld [vmem:[%s1061 + $0xc8] sm:$0xff]
    %v1080 = vld [vmem:[%s1061 + $0xd8] sm:$0xff]
    %v1081 = vld [vmem:[%s1061 + $0xe0] sm:$0xff]
    %v1082 = vld [vmem:[%s1061 + $0xf0] sm:$0xff]
    %v1083 = vld [vmem:[%s1061 + $0xf8] sm:$0xff]
    %v1084 = vld [vmem:[%s1061 + $0x108] sm:$0xff]
    %v1085 = vld [vmem:[%s1061 + $0x110] sm:$0xff]
    %v1086 = vld [vmem:[%s1061 + $0x120] sm:$0xff]
    %v1087 = vld [vmem:[%s1061 + $0x128] sm:$0xff]
    %v1088 = vld [vmem:[%s1061 + $0x138] sm:$0xff]
    %v1089 = vld [vmem:[%s1061 + $0x140] sm:$0xff]
    %v1090 = vld [vmem:[%s1061 + $0x150] sm:$0xff]
    %v1091 = vld [vmem:[%s1061 + $0x158] sm:$0xff]
    %v1092 = vld [vmem:[%s1061 + $0x168] sm:$0xff]
    %v1093 = vld [vmem:[%s1061 + $0x170] sm:$0xff]
    %v1094 = vld [vmem:[%s1061 + $0x1b0] sm:$0xff]
    %v1095 = vld [vmem:[%s1061 + $0x1b8] sm:$0xff]
    %v1096 = vld [vmem:[%s1061 + $0x1c8] sm:$0xff]
    %v1097 = vld [vmem:[%s1061 + $0x1d0] sm:$0xff]
    %v1098 = vld [vmem:[%s1061 + $0x1e0] sm:$0xff]
    %v1099 = vld [vmem:[%s1061 + $0x1e8] sm:$0xff]
    %v1100 = vld [vmem:[%s1061 + $0x1f8] sm:$0xff]
    %v1101 = vld [vmem:[%s1061 + $0x200] sm:$0xff]
    %v1102 = vld [vmem:[%s1061 + $0x210] sm:$0xff]
    %v1103 = vld [vmem:[%s1061 + $0x218] sm:$0xff]
    %v1104 = vld [vmem:[%s1061 + $0x228] sm:$0xff]
    %v1105 = vld [vmem:[%s1061 + $0x230] sm:$0xff]
    %v1106 = vld [vmem:[%s1061 + $0x240] sm:$0xff]
    %v1107 = vld [vmem:[%s1061 + $0x248] sm:$0xff]
    %v1108 = vld [vmem:[%s1061 + $0x258] sm:$0xff]
    %v1109 = vld [vmem:[%s1061 + $0x260] sm:$0xff]
    %v1110 = vld [vmem:[%s1061 + $0x270] sm:$0xff]
    %v1111 = vld [vmem:[%s1061 + $0x278] sm:$0xff]
    %v1112 = vld [vmem:[%s1061 + $0x288] sm:$0xff]
    %v1113 = vld [vmem:[%s1061 + $0x290] sm:$0xff]
    %v1114 = vld [vmem:[%s1061 + $0x2a0] sm:$0xff]
    %v1115 = vld [vmem:[%s1061 + $0x2a8] sm:$0xff]
    %v1116 = vld [vmem:[%s1061 + $0x2b8] sm:$0xff]
    %v1117 = vld [vmem:[%s1061 + $0x2c0] sm:$0xff]
    %v1118 = vld [vmem:[%s1061 + $0x2d0] sm:$0xff]
    %v1119 = vld [vmem:[%s1061 + $0x2d8] sm:$0xff]
    %v1120 = vld [vmem:[%s1061 + $0x2e8] sm:$0xff]
    %v1121 = vld [vmem:[%s1061 + $0x2f0] sm:$0xff]
    %v1122 = vld [vmem:[%s1061 + $0x300] sm:$0xff]
    %v1123 = vld [vmem:[%s1061 + $0x308] sm:$0xff]
    %v1124 = vld [vmem:[%s1061 + $0x318] sm:$0xff]
    %v1125 = vld [vmem:[%s1061 + $0x320] sm:$0xff]
    %1126 = vst [vmem:[#allocation4 + $0x30] sm:$0xff] %v1062
    %1127 = vst [vmem:[#allocation4 + $0x78] sm:$0xff] %v1063
    %1128 = vst [vmem:[#allocation4 + $0xc0] sm:$0xff] %v1064
    %1129 = vst [vmem:[#allocation4 + $0x108] sm:$0xff] %v1065
    %1130 = vst [vmem:[#allocation4 + $0x150] sm:$0xff] %v1066
    %1131 = vst [vmem:[#allocation4 + $0x198] sm:$0xff] %v1067
    %1132 = vst [vmem:[#allocation4 + $0x1e0] sm:$0xff] %v1068
    %1133 = vst [vmem:[#allocation4 + $0x228] sm:$0xff] %v1069
    %1134 = vst [vmem:[#allocation4 + $0x270] sm:$0xff] %v1070
    %1135 = vst [vmem:[#allocation4 + $0x2b8] sm:$0xff] %v1071
    %1136 = vst [vmem:[#allocation4 + $0x300] sm:$0xff] %v1072
    %1137 = vst [vmem:[#allocation4 + $0x348] sm:$0xff] %v1073
    %1138 = vst [vmem:[#allocation4 + $0x390] sm:$0xff] %v1074
    %1139 = vst [vmem:[#allocation4 + $0x3d8] sm:$0xff] %v1075
    %1140 = vst [vmem:[#allocation4 + $0x420] sm:$0xff] %v1076
    %1141 = vst [vmem:[#allocation4 + $0x468] sm:$0xff] %v1077
    %1142 = vst [vmem:[#allocation4 + $0x4b0] sm:$0xff] %v1078
    %1143 = vst [vmem:[#allocation4 + $0x4f8] sm:$0xff] %v1079
    %1144 = vst [vmem:[#allocation4 + $0x540] sm:$0xff] %v1080
    %1145 = vst [vmem:[#allocation4 + $0x588] sm:$0xff] %v1081
    %1146 = vst [vmem:[#allocation4 + $0x5d0] sm:$0xff] %v1082
    %1147 = vst [vmem:[#allocation4 + $0x618] sm:$0xff] %v1083
    %1148 = vst [vmem:[#allocation4 + $0x660] sm:$0xff] %v1084
    %1149 = vst [vmem:[#allocation4 + $0x6a8] sm:$0xff] %v1085
    %1150 = vst [vmem:[#allocation4 + $0x6f0] sm:$0xff] %v1086
    %1151 = vst [vmem:[#allocation4 + $0x738] sm:$0xff] %v1087
    %1152 = vst [vmem:[#allocation4 + $0x780] sm:$0xff] %v1088
    %1153 = vst [vmem:[#allocation4 + $0x7c8] sm:$0xff] %v1089
    %1154 = vst [vmem:[#allocation4 + $0x810] sm:$0xff] %v1090
    %1155 = vst [vmem:[#allocation4 + $0x858] sm:$0xff] %v1091
    %1156 = vst [vmem:[#allocation4 + $0x8a0] sm:$0xff] %v1092
    %1157 = vst [vmem:[#allocation4 + $0x8e8] sm:$0xff] %v1093
    %1158 = vst [vmem:[#allocation4 + $0x930] sm:$0xff] %v1094
    %1159 = vst [vmem:[#allocation4 + $0x978] sm:$0xff] %v1095
    %1160 = vst [vmem:[#allocation4 + $0x9c0] sm:$0xff] %v1096
    %1161 = vst [vmem:[#allocation4 + $0xa08] sm:$0xff] %v1097
    %1162 = vst [vmem:[#allocation4 + $0xa50] sm:$0xff] %v1098
    %1163 = vst [vmem:[#allocation4 + $0xa98] sm:$0xff] %v1099
    %1164 = vst [vmem:[#allocation4 + $0xae0] sm:$0xff] %v1100
    %1165 = vst [vmem:[#allocation4 + $0xb28] sm:$0xff] %v1101
    %1166 = vst [vmem:[#allocation4 + $0xb70] sm:$0xff] %v1102
    %1167 = vst [vmem:[#allocation4 + $0xbb8] sm:$0xff] %v1103
    %1168 = vst [vmem:[#allocation4 + $0xc00] sm:$0xff] %v1104
    %1169 = vst [vmem:[#allocation4 + $0xc48] sm:$0xff] %v1105
    %1170 = vst [vmem:[#allocation4 + $0xc90] sm:$0xff] %v1106
    %1171 = vst [vmem:[#allocation4 + $0xcd8] sm:$0xff] %v1107
    %1172 = vst [vmem:[#allocation4 + $0xd20] sm:$0xff] %v1108
    %1173 = vst [vmem:[#allocation4 + $0xd68] sm:$0xff] %v1109
    %1174 = vst [vmem:[#allocation4 + $0xdb0] sm:$0xff] %v1110
    %1175 = vst [vmem:[#allocation4 + $0xdf8] sm:$0xff] %v1111
    %1176 = vst [vmem:[#allocation4 + $0xe40] sm:$0xff] %v1112
    %1177 = vst [vmem:[#allocation4 + $0xe88] sm:$0xff] %v1113
    %1178 = vst [vmem:[#allocation4 + $0xed0] sm:$0xff] %v1114
    %1179 = vst [vmem:[#allocation4 + $0xf18] sm:$0xff] %v1115
    %1180 = vst [vmem:[#allocation4 + $0xf60] sm:$0xff] %v1116
    %1181 = vst [vmem:[#allocation4 + $0xfa8] sm:$0xff] %v1117
    %1182 = vst [vmem:[#allocation4 + $0xff0] sm:$0xff] %v1118
    %1183 = vst [vmem:[#allocation4 + $0x1038] sm:$0xff] %v1119
    %1184 = vst [vmem:[#allocation4 + $0x1080] sm:$0xff] %v1120
    %1185 = vst [vmem:[#allocation4 + $0x10c8] sm:$0xff] %v1121
    %1186 = vst [vmem:[#allocation4 + $0x1110] sm:$0xff] %v1122
    %1187 = vst [vmem:[#allocation4 + $0x1158] sm:$0xff] %v1123
    %1188 = vst [vmem:[#allocation4 + $0x11a0] sm:$0xff] %v1124
    %1189 = vst [vmem:[#allocation4 + $0x11e8] sm:$0xff] %v1125
    %v1190 = vld [vmem:[%s1061 + $0x1] sm:$0xff]
    %v1191 = vld [vmem:[%s1061 + $0x9] sm:$0xff]
    %v1192 = vld [vmem:[%s1061 + $0x19] sm:$0xff]
    %v1193 = vld [vmem:[%s1061 + $0x21] sm:$0xff]
    %v1194 = vld [vmem:[%s1061 + $0x31] sm:$0xff]
    %v1195 = vld [vmem:[%s1061 + $0x39] sm:$0xff]
    %v1196 = vld [vmem:[%s1061 + $0x49] sm:$0xff]
    %v1197 = vld [vmem:[%s1061 + $0x51] sm:$0xff]
    %v1198 = vld [vmem:[%s1061 + $0x61] sm:$0xff]
    %v1199 = vld [vmem:[%s1061 + $0x69] sm:$0xff]
    %v1200 = vld [vmem:[%s1061 + $0x79] sm:$0xff]
    %v1201 = vld [vmem:[%s1061 + $0x81] sm:$0xff]
    %v1202 = vld [vmem:[%s1061 + $0x91] sm:$0xff]
    %v1203 = vld [vmem:[%s1061 + $0x99] sm:$0xff]
    %v1204 = vld [vmem:[%s1061 + $0xa9] sm:$0xff]
    %v1205 = vld [vmem:[%s1061 + $0xb1] sm:$0xff]
    %v1206 = vld [vmem:[%s1061 + $0xc1] sm:$0xff]
    %v1207 = vld [vmem:[%s1061 + $0xc9] sm:$0xff]
    %v1208 = vld [vmem:[%s1061 + $0xd9] sm:$0xff]
    %v1209 = vld [vmem:[%s1061 + $0xe1] sm:$0xff]
    %v1210 = vld [vmem:[%s1061 + $0xf1] sm:$0xff]
    %v1211 = vld [vmem:[%s1061 + $0xf9] sm:$0xff]
    %v1212 = vld [vmem:[%s1061 + $0x109] sm:$0xff]
    %v1213 = vld [vmem:[%s1061 + $0x111] sm:$0xff]
    %v1214 = vld [vmem:[%s1061 + $0x121] sm:$0xff]
    %v1215 = vld [vmem:[%s1061 + $0x129] sm:$0xff]
    %v1216 = vld [vmem:[%s1061 + $0x139] sm:$0xff]
    %v1217 = vld [vmem:[%s1061 + $0x141] sm:$0xff]
    %v1218 = vld [vmem:[%s1061 + $0x151] sm:$0xff]
    %v1219 = vld [vmem:[%s1061 + $0x159] sm:$0xff]
    %v1220 = vld [vmem:[%s1061 + $0x169] sm:$0xff]
    %v1221 = vld [vmem:[%s1061 + $0x171] sm:$0xff]
    %v1222 = vld [vmem:[%s1061 + $0x1b1] sm:$0xff]
    %v1223 = vld [vmem:[%s1061 + $0x1b9] sm:$0xff]
    %v1224 = vld [vmem:[%s1061 + $0x1c9] sm:$0xff]
    %v1225 = vld [vmem:[%s1061 + $0x1d1] sm:$0xff]
    %v1226 = vld [vmem:[%s1061 + $0x1e1] sm:$0xff]
    %v1227 = vld [vmem:[%s1061 + $0x1e9] sm:$0xff]
    %v1228 = vld [vmem:[%s1061 + $0x1f9] sm:$0xff]
    %v1229 = vld [vmem:[%s1061 + $0x201] sm:$0xff]
    %v1230 = vld [vmem:[%s1061 + $0x211] sm:$0xff]
    %v1231 = vld [vmem:[%s1061 + $0x219] sm:$0xff]
    %v1232 = vld [vmem:[%s1061 + $0x229] sm:$0xff]
    %v1233 = vld [vmem:[%s1061 + $0x231] sm:$0xff]
    %v1234 = vld [vmem:[%s1061 + $0x241] sm:$0xff]
    %v1235 = vld [vmem:[%s1061 + $0x249] sm:$0xff]
    %v1236 = vld [vmem:[%s1061 + $0x259] sm:$0xff]
    %v1237 = vld [vmem:[%s1061 + $0x261] sm:$0xff]
    %v1238 = vld [vmem:[%s1061 + $0x271] sm:$0xff]
    %v1239 = vld [vmem:[%s1061 + $0x279] sm:$0xff]
    %v1240 = vld [vmem:[%s1061 + $0x289] sm:$0xff]
    %v1241 = vld [vmem:[%s1061 + $0x291] sm:$0xff]
    %v1242 = vld [vmem:[%s1061 + $0x2a1] sm:$0xff]
    %v1243 = vld [vmem:[%s1061 + $0x2a9] sm:$0xff]
    %v1244 = vld [vmem:[%s1061 + $0x2b9] sm:$0xff]
    %v1245 = vld [vmem:[%s1061 + $0x2c1] sm:$0xff]
    %v1246 = vld [vmem:[%s1061 + $0x2d1] sm:$0xff]
    %v1247 = vld [vmem:[%s1061 + $0x2d9] sm:$0xff]
    %v1248 = vld [vmem:[%s1061 + $0x2e9] sm:$0xff]
    %v1249 = vld [vmem:[%s1061 + $0x2f1] sm:$0xff]
    %v1250 = vld [vmem:[%s1061 + $0x301] sm:$0xff]
    %v1251 = vld [vmem:[%s1061 + $0x309] sm:$0xff]
    %v1252 = vld [vmem:[%s1061 + $0x319] sm:$0xff]
    %v1253 = vld [vmem:[%s1061 + $0x321] sm:$0xff]
    %1254 = vst [vmem:[#allocation4 + $0x38] sm:$0xff] %v1190
    %1255 = vst [vmem:[#allocation4 + $0x80] sm:$0xff] %v1191
    %1256 = vst [vmem:[#allocation4 + $0xc8] sm:$0xff] %v1192
    %1257 = vst [vmem:[#allocation4 + $0x110] sm:$0xff] %v1193
    %1258 = vst [vmem:[#allocation4 + $0x158] sm:$0xff] %v1194
    %1259 = vst [vmem:[#allocation4 + $0x1a0] sm:$0xff] %v1195
    %1260 = vst [vmem:[#allocation4 + $0x1e8] sm:$0xff] %v1196
    %1261 = vst [vmem:[#allocation4 + $0x230] sm:$0xff] %v1197
    %1262 = vst [vmem:[#allocation4 + $0x278] sm:$0xff] %v1198
    %1263 = vst [vmem:[#allocation4 + $0x2c0] sm:$0xff] %v1199
    %1264 = vst [vmem:[#allocation4 + $0x308] sm:$0xff] %v1200
    %1265 = vst [vmem:[#allocation4 + $0x350] sm:$0xff] %v1201
    %1266 = vst [vmem:[#allocation4 + $0x398] sm:$0xff] %v1202
    %1267 = vst [vmem:[#allocation4 + $0x3e0] sm:$0xff] %v1203
    %1268 = vst [vmem:[#allocation4 + $0x428] sm:$0xff] %v1204
    %1269 = vst [vmem:[#allocation4 + $0x470] sm:$0xff] %v1205
    %1270 = vst [vmem:[#allocation4 + $0x4b8] sm:$0xff] %v1206
    %1271 = vst [vmem:[#allocation4 + $0x500] sm:$0xff] %v1207
    %1272 = vst [vmem:[#allocation4 + $0x548] sm:$0xff] %v1208
    %1273 = vst [vmem:[#allocation4 + $0x590] sm:$0xff] %v1209
    %1274 = vst [vmem:[#allocation4 + $0x5d8] sm:$0xff] %v1210
    %1275 = vst [vmem:[#allocation4 + $0x620] sm:$0xff] %v1211
    %1276 = vst [vmem:[#allocation4 + $0x668] sm:$0xff] %v1212
    %1277 = vst [vmem:[#allocation4 + $0x6b0] sm:$0xff] %v1213
    %1278 = vst [vmem:[#allocation4 + $0x6f8] sm:$0xff] %v1214
    %1279 = vst [vmem:[#allocation4 + $0x740] sm:$0xff] %v1215
    %1280 = vst [vmem:[#allocation4 + $0x788] sm:$0xff] %v1216
    %1281 = vst [vmem:[#allocation4 + $0x7d0] sm:$0xff] %v1217
    %1282 = vst [vmem:[#allocation4 + $0x818] sm:$0xff] %v1218
    %1283 = vst [vmem:[#allocation4 + $0x860] sm:$0xff] %v1219
    %1284 = vst [vmem:[#allocation4 + $0x8a8] sm:$0xff] %v1220
    %1285 = vst [vmem:[#allocation4 + $0x8f0] sm:$0xff] %v1221
    %1286 = vst [vmem:[#allocation4 + $0x938] sm:$0xff] %v1222
    %1287 = vst [vmem:[#allocation4 + $0x980] sm:$0xff] %v1223
    %1288 = vst [vmem:[#allocation4 + $0x9c8] sm:$0xff] %v1224
    %1289 = vst [vmem:[#allocation4 + $0xa10] sm:$0xff] %v1225
    %1290 = vst [vmem:[#allocation4 + $0xa58] sm:$0xff] %v1226
    %1291 = vst [vmem:[#allocation4 + $0xaa0] sm:$0xff] %v1227
    %1292 = vst [vmem:[#allocation4 + $0xae8] sm:$0xff] %v1228
    %1293 = vst [vmem:[#allocation4 + $0xb30] sm:$0xff] %v1229
    %1294 = vst [vmem:[#allocation4 + $0xb78] sm:$0xff] %v1230
    %1295 = vst [vmem:[#allocation4 + $0xbc0] sm:$0xff] %v1231
    %1296 = vst [vmem:[#allocation4 + $0xc08] sm:$0xff] %v1232
    %1297 = vst [vmem:[#allocation4 + $0xc50] sm:$0xff] %v1233
    %1298 = vst [vmem:[#allocation4 + $0xc98] sm:$0xff] %v1234
    %1299 = vst [vmem:[#allocation4 + $0xce0] sm:$0xff] %v1235
    %1300 = vst [vmem:[#allocation4 + $0xd28] sm:$0xff] %v1236
    %1301 = vst [vmem:[#allocation4 + $0xd70] sm:$0xff] %v1237
    %1302 = vst [vmem:[#allocation4 + $0xdb8] sm:$0xff] %v1238
    %1303 = vst [vmem:[#allocation4 + $0xe00] sm:$0xff] %v1239
    %1304 = vst [vmem:[#allocation4 + $0xe48] sm:$0xff] %v1240
    %1305 = vst [vmem:[#allocation4 + $0xe90] sm:$0xff] %v1241
    %1306 = vst [vmem:[#allocation4 + $0xed8] sm:$0xff] %v1242
    %1307 = vst [vmem:[#allocation4 + $0xf20] sm:$0xff] %v1243
    %1308 = vst [vmem:[#allocation4 + $0xf68] sm:$0xff] %v1244
    %1309 = vst [vmem:[#allocation4 + $0xfb0] sm:$0xff] %v1245
    %1310 = vst [vmem:[#allocation4 + $0xff8] sm:$0xff] %v1246
    %1311 = vst [vmem:[#allocation4 + $0x1040] sm:$0xff] %v1247
    %1312 = vst [vmem:[#allocation4 + $0x1088] sm:$0xff] %v1248
    %1313 = vst [vmem:[#allocation4 + $0x10d0] sm:$0xff] %v1249
    %1314 = vst [vmem:[#allocation4 + $0x1118] sm:$0xff] %v1250
    %1315 = vst [vmem:[#allocation4 + $0x1160] sm:$0xff] %v1251
    %1316 = vst [vmem:[#allocation4 + $0x11a8] sm:$0xff] %v1252
    %1317 = vst [vmem:[#allocation4 + $0x11f0] sm:$0xff] %v1253
    %v1318 = vld [vmem:[%s1061 + $0x2] sm:$0xff]
    %v1319 = vld [vmem:[%s1061 + $0xa] sm:$0xff]
    %v1320 = vld [vmem:[%s1061 + $0x1a] sm:$0xff]
    %v1321 = vld [vmem:[%s1061 + $0x22] sm:$0xff]
    %v1322 = vld [vmem:[%s1061 + $0x32] sm:$0xff]
    %v1323 = vld [vmem:[%s1061 + $0x3a] sm:$0xff]
    %v1324 = vld [vmem:[%s1061 + $0x4a] sm:$0xff]
    %v1325 = vld [vmem:[%s1061 + $0x52] sm:$0xff]
    %v1326 = vld [vmem:[%s1061 + $0x62] sm:$0xff]
    %v1327 = vld [vmem:[%s1061 + $0x6a] sm:$0xff]
    %v1328 = vld [vmem:[%s1061 + $0x7a] sm:$0xff]
    %v1329 = vld [vmem:[%s1061 + $0x82] sm:$0xff]
    %v1330 = vld [vmem:[%s1061 + $0x92] sm:$0xff]
    %v1331 = vld [vmem:[%s1061 + $0x9a] sm:$0xff]
    %v1332 = vld [vmem:[%s1061 + $0xaa] sm:$0xff]
    %v1333 = vld [vmem:[%s1061 + $0xb2] sm:$0xff]
    %v1334 = vld [vmem:[%s1061 + $0xc2] sm:$0xff]
    %v1335 = vld [vmem:[%s1061 + $0xca] sm:$0xff]
    %v1336 = vld [vmem:[%s1061 + $0xda] sm:$0xff]
    %v1337 = vld [vmem:[%s1061 + $0xe2] sm:$0xff]
    %v1338 = vld [vmem:[%s1061 + $0xf2] sm:$0xff]
    %v1339 = vld [vmem:[%s1061 + $0xfa] sm:$0xff]
    %v1340 = vld [vmem:[%s1061 + $0x10a] sm:$0xff]
    %v1341 = vld [vmem:[%s1061 + $0x112] sm:$0xff]
    %v1342 = vld [vmem:[%s1061 + $0x122] sm:$0xff]
    %v1343 = vld [vmem:[%s1061 + $0x12a] sm:$0xff]
    %v1344 = vld [vmem:[%s1061 + $0x13a] sm:$0xff]
    %v1345 = vld [vmem:[%s1061 + $0x142] sm:$0xff]
    %v1346 = vld [vmem:[%s1061 + $0x152] sm:$0xff]
    %v1347 = vld [vmem:[%s1061 + $0x15a] sm:$0xff]
    %v1348 = vld [vmem:[%s1061 + $0x16a] sm:$0xff]
    %v1349 = vld [vmem:[%s1061 + $0x172] sm:$0xff]
    %v1350 = vld [vmem:[%s1061 + $0x1b2] sm:$0xff]
    %v1351 = vld [vmem:[%s1061 + $0x1ba] sm:$0xff]
    %v1352 = vld [vmem:[%s1061 + $0x1ca] sm:$0xff]
    %v1353 = vld [vmem:[%s1061 + $0x1d2] sm:$0xff]
    %v1354 = vld [vmem:[%s1061 + $0x1e2] sm:$0xff]
    %v1355 = vld [vmem:[%s1061 + $0x1ea] sm:$0xff]
    %v1356 = vld [vmem:[%s1061 + $0x1fa] sm:$0xff]
    %v1357 = vld [vmem:[%s1061 + $0x202] sm:$0xff]
    %v1358 = vld [vmem:[%s1061 + $0x212] sm:$0xff]
    %v1359 = vld [vmem:[%s1061 + $0x21a] sm:$0xff]
    %v1360 = vld [vmem:[%s1061 + $0x22a] sm:$0xff]
    %v1361 = vld [vmem:[%s1061 + $0x232] sm:$0xff]
    %v1362 = vld [vmem:[%s1061 + $0x242] sm:$0xff]
    %v1363 = vld [vmem:[%s1061 + $0x24a] sm:$0xff]
    %v1364 = vld [vmem:[%s1061 + $0x25a] sm:$0xff]
    %v1365 = vld [vmem:[%s1061 + $0x262] sm:$0xff]
    %v1366 = vld [vmem:[%s1061 + $0x272] sm:$0xff]
    %v1367 = vld [vmem:[%s1061 + $0x27a] sm:$0xff]
    %v1368 = vld [vmem:[%s1061 + $0x28a] sm:$0xff]
    %v1369 = vld [vmem:[%s1061 + $0x292] sm:$0xff]
    %v1370 = vld [vmem:[%s1061 + $0x2a2] sm:$0xff]
    %v1371 = vld [vmem:[%s1061 + $0x2aa] sm:$0xff]
    %v1372 = vld [vmem:[%s1061 + $0x2ba] sm:$0xff]
    %v1373 = vld [vmem:[%s1061 + $0x2c2] sm:$0xff]
    %v1374 = vld [vmem:[%s1061 + $0x2d2] sm:$0xff]
    %v1375 = vld [vmem:[%s1061 + $0x2da] sm:$0xff]
    %v1376 = vld [vmem:[%s1061 + $0x2ea] sm:$0xff]
    %v1377 = vld [vmem:[%s1061 + $0x2f2] sm:$0xff]
    %v1378 = vld [vmem:[%s1061 + $0x302] sm:$0xff]
    %v1379 = vld [vmem:[%s1061 + $0x30a] sm:$0xff]
    %v1380 = vld [vmem:[%s1061 + $0x31a] sm:$0xff]
    %v1381 = vld [vmem:[%s1061 + $0x322] sm:$0xff]
    %1382 = vst [vmem:[#allocation4 + $0x40] sm:$0xff] %v1318
    %1383 = vst [vmem:[#allocation4 + $0x88] sm:$0xff] %v1319
    %1384 = vst [vmem:[#allocation4 + $0xd0] sm:$0xff] %v1320
    %1385 = vst [vmem:[#allocation4 + $0x118] sm:$0xff] %v1321
    %1386 = vst [vmem:[#allocation4 + $0x160] sm:$0xff] %v1322
    %1387 = vst [vmem:[#allocation4 + $0x1a8] sm:$0xff] %v1323
    %1388 = vst [vmem:[#allocation4 + $0x1f0] sm:$0xff] %v1324
    %1389 = vst [vmem:[#allocation4 + $0x238] sm:$0xff] %v1325
    %1390 = vst [vmem:[#allocation4 + $0x280] sm:$0xff] %v1326
    %1391 = vst [vmem:[#allocation4 + $0x2c8] sm:$0xff] %v1327
    %1392 = vst [vmem:[#allocation4 + $0x310] sm:$0xff] %v1328
    %1393 = vst [vmem:[#allocation4 + $0x358] sm:$0xff] %v1329
    %1394 = vst [vmem:[#allocation4 + $0x3a0] sm:$0xff] %v1330
    %1395 = vst [vmem:[#allocation4 + $0x3e8] sm:$0xff] %v1331
    %1396 = vst [vmem:[#allocation4 + $0x430] sm:$0xff] %v1332
    %1397 = vst [vmem:[#allocation4 + $0x478] sm:$0xff] %v1333
    %1398 = vst [vmem:[#allocation4 + $0x4c0] sm:$0xff] %v1334
    %1399 = vst [vmem:[#allocation4 + $0x508] sm:$0xff] %v1335
    %1400 = vst [vmem:[#allocation4 + $0x550] sm:$0xff] %v1336
    %1401 = vst [vmem:[#allocation4 + $0x598] sm:$0xff] %v1337
    %1402 = vst [vmem:[#allocation4 + $0x5e0] sm:$0xff] %v1338
    %1403 = vst [vmem:[#allocation4 + $0x628] sm:$0xff] %v1339
    %1404 = vst [vmem:[#allocation4 + $0x670] sm:$0xff] %v1340
    %1405 = vst [vmem:[#allocation4 + $0x6b8] sm:$0xff] %v1341
    %1406 = vst [vmem:[#allocation4 + $0x700] sm:$0xff] %v1342
    %1407 = vst [vmem:[#allocation4 + $0x748] sm:$0xff] %v1343
    %1408 = vst [vmem:[#allocation4 + $0x790] sm:$0xff] %v1344
    %1409 = vst [vmem:[#allocation4 + $0x7d8] sm:$0xff] %v1345
    %1410 = vst [vmem:[#allocation4 + $0x820] sm:$0xff] %v1346
    %1411 = vst [vmem:[#allocation4 + $0x868] sm:$0xff] %v1347
    %1412 = vst [vmem:[#allocation4 + $0x8b0] sm:$0xff] %v1348
    %1413 = vst [vmem:[#allocation4 + $0x8f8] sm:$0xff] %v1349
    %1414 = vst [vmem:[#allocation4 + $0x940] sm:$0xff] %v1350
    %1415 = vst [vmem:[#allocation4 + $0x988] sm:$0xff] %v1351
    %1416 = vst [vmem:[#allocation4 + $0x9d0] sm:$0xff] %v1352
    %1417 = vst [vmem:[#allocation4 + $0xa18] sm:$0xff] %v1353
    %1418 = vst [vmem:[#allocation4 + $0xa60] sm:$0xff] %v1354
    %1419 = vst [vmem:[#allocation4 + $0xaa8] sm:$0xff] %v1355
    %1420 = vst [vmem:[#allocation4 + $0xaf0] sm:$0xff] %v1356
    %1421 = vst [vmem:[#allocation4 + $0xb38] sm:$0xff] %v1357
    %1422 = vst [vmem:[#allocation4 + $0xb80] sm:$0xff] %v1358
    %1423 = vst [vmem:[#allocation4 + $0xbc8] sm:$0xff] %v1359
    %1424 = vst [vmem:[#allocation4 + $0xc10] sm:$0xff] %v1360
    %1425 = vst [vmem:[#allocation4 + $0xc58] sm:$0xff] %v1361
    %1426 = vst [vmem:[#allocation4 + $0xca0] sm:$0xff] %v1362
    %1427 = vst [vmem:[#allocation4 + $0xce8] sm:$0xff] %v1363
    %1428 = vst [vmem:[#allocation4 + $0xd30] sm:$0xff] %v1364
    %1429 = vst [vmem:[#allocation4 + $0xd78] sm:$0xff] %v1365
    %1430 = vst [vmem:[#allocation4 + $0xdc0] sm:$0xff] %v1366
    %1431 = vst [vmem:[#allocation4 + $0xe08] sm:$0xff] %v1367
    %1432 = vst [vmem:[#allocation4 + $0xe50] sm:$0xff] %v1368
    %1433 = vst [vmem:[#allocation4 + $0xe98] sm:$0xff] %v1369
    %1434 = vst [vmem:[#allocation4 + $0xee0] sm:$0xff] %v1370
    %1435 = vst [vmem:[#allocation4 + $0xf28] sm:$0xff] %v1371
    %1436 = vst [vmem:[#allocation4 + $0xf70] sm:$0xff] %v1372
    %1437 = vst [vmem:[#allocation4 + $0xfb8] sm:$0xff] %v1373
    %1438 = vst [vmem:[#allocation4 + $0x1000] sm:$0xff] %v1374
    %1439 = vst [vmem:[#allocation4 + $0x1048] sm:$0xff] %v1375
    %1440 = vst [vmem:[#allocation4 + $0x1090] sm:$0xff] %v1376
    %1441 = vst [vmem:[#allocation4 + $0x10d8] sm:$0xff] %v1377
    %1442 = vst [vmem:[#allocation4 + $0x1120] sm:$0xff] %v1378
    %1443 = vst [vmem:[#allocation4 + $0x1168] sm:$0xff] %v1379
    %1444 = vst [vmem:[#allocation4 + $0x11b0] sm:$0xff] %v1380
    %1445 = vst [vmem:[#allocation4 + $0x11f8] sm:$0xff] %v1381
    %v1446 = vld [vmem:[#allocation4] sm:$0xff]
    %v1447 = vld [vmem:[#allocation4 + $0x8] sm:$0xff]
    %v1448 = vld [vmem:[#allocation4 + $0x10] sm:$0xff]
    %v1449 = vld [vmem:[#allocation4 + $0x18] sm:$0xff]
    %v1450 = vld [vmem:[#allocation4 + $0x20] sm:$0xff]
    %v1451 = vld [vmem:[#allocation4 + $0x28] sm:$0xff]
    %v1452 = vld [vmem:[#allocation4 + $0x30] sm:$0xff]
    %v1453 = vld [vmem:[#allocation4 + $0x38] sm:$0xff]
    %v1454 = vld [vmem:[#allocation4 + $0x40] sm:$0xff]
    %v1455 = vld [vmem:[#allocation4 + $0x48] sm:$0xff]
    %v1456 = vld [vmem:[#allocation4 + $0x50] sm:$0xff]
    %v1457 = vld [vmem:[#allocation4 + $0x58] sm:$0xff]
    %v1458 = vld [vmem:[#allocation4 + $0x60] sm:$0xff]
    %v1459 = vld [vmem:[#allocation4 + $0x68] sm:$0xff]
    %v1460 = vld [vmem:[#allocation4 + $0x70] sm:$0xff]
    %v1461 = vld [vmem:[#allocation4 + $0x78] sm:$0xff]
    %v1462 = vld [vmem:[#allocation4 + $0x80] sm:$0xff]
    %v1463 = vld [vmem:[#allocation4 + $0x88] sm:$0xff]
    %v1464 = vld [vmem:[#allocation4 + $0x90] sm:$0xff]
    %v1465 = vld [vmem:[#allocation4 + $0x98] sm:$0xff]
    %v1466 = vld [vmem:[#allocation4 + $0xa0] sm:$0xff]
    %v1467 = vld [vmem:[#allocation4 + $0xa8] sm:$0xff]
    %v1468 = vld [vmem:[#allocation4 + $0xb0] sm:$0xff]
    %v1469 = vld [vmem:[#allocation4 + $0xb8] sm:$0xff]
    %v1470 = vld [vmem:[#allocation4 + $0xc0] sm:$0xff]
    %v1471 = vld [vmem:[#allocation4 + $0xc8] sm:$0xff]
    %v1472 = vld [vmem:[#allocation4 + $0xd0] sm:$0xff]
    %v1473 = vld [vmem:[#allocation4 + $0xd8] sm:$0xff]
    %v1474 = vld [vmem:[#allocation4 + $0xe0] sm:$0xff]
    %v1475 = vld [vmem:[#allocation4 + $0xe8] sm:$0xff]
    %v1476 = vld [vmem:[#allocation4 + $0xf0] sm:$0xff]
    %v1477 = vld [vmem:[#allocation4 + $0xf8] sm:$0xff]
    %v1478 = vld [vmem:[#allocation4 + $0x100] sm:$0xff]
    %v1479 = vld [vmem:[#allocation4 + $0x108] sm:$0xff]
    %v1480 = vld [vmem:[#allocation4 + $0x110] sm:$0xff]
    %v1481 = vld [vmem:[#allocation4 + $0x118] sm:$0xff]
    %v1482 = vld [vmem:[#allocation4 + $0x120] sm:$0xff]
    %v1483 = vld [vmem:[#allocation4 + $0x128] sm:$0xff]
    %v1484 = vld [vmem:[#allocation4 + $0x130] sm:$0xff]
    %v1485 = vld [vmem:[#allocation4 + $0x138] sm:$0xff]
    %v1486 = vld [vmem:[#allocation4 + $0x140] sm:$0xff]
    %v1487 = vld [vmem:[#allocation4 + $0x148] sm:$0xff]
    %v1488 = vld [vmem:[#allocation4 + $0x150] sm:$0xff]
    %v1489 = vld [vmem:[#allocation4 + $0x158] sm:$0xff]
    %v1490 = vld [vmem:[#allocation4 + $0x160] sm:$0xff]
    %v1491 = vld [vmem:[#allocation4 + $0x168] sm:$0xff]
    %v1492 = vld [vmem:[#allocation4 + $0x170] sm:$0xff]
    %v1493 = vld [vmem:[#allocation4 + $0x178] sm:$0xff]
    %v1494 = vld [vmem:[#allocation4 + $0x180] sm:$0xff]
    %v1495 = vld [vmem:[#allocation4 + $0x188] sm:$0xff]
    %v1496 = vld [vmem:[#allocation4 + $0x190] sm:$0xff]
    %v1497 = vld [vmem:[#allocation4 + $0x198] sm:$0xff]
    %v1498 = vld [vmem:[#allocation4 + $0x1a0] sm:$0xff]
    %v1499 = vld [vmem:[#allocation4 + $0x1a8] sm:$0xff]
    %v1500 = vld [vmem:[#allocation4 + $0x1b0] sm:$0xff]
    %v1501 = vld [vmem:[#allocation4 + $0x1b8] sm:$0xff]
    %v1502 = vld [vmem:[#allocation4 + $0x1c0] sm:$0xff]
    %v1503 = vld [vmem:[#allocation4 + $0x1c8] sm:$0xff]
    %v1504 = vld [vmem:[#allocation4 + $0x1d0] sm:$0xff]
    %v1505 = vld [vmem:[#allocation4 + $0x1d8] sm:$0xff]
    %v1506 = vld [vmem:[#allocation4 + $0x1e0] sm:$0xff]
    %v1507 = vld [vmem:[#allocation4 + $0x1e8] sm:$0xff]
    %v1508 = vld [vmem:[#allocation4 + $0x1f0] sm:$0xff]
    %v1509 = vld [vmem:[#allocation4 + $0x1f8] sm:$0xff]
    %v1510 = vld [vmem:[#allocation4 + $0x200] sm:$0xff]
    %v1511 = vld [vmem:[#allocation4 + $0x208] sm:$0xff]
    %v1512 = vld [vmem:[#allocation4 + $0x210] sm:$0xff]
    %v1513 = vld [vmem:[#allocation4 + $0x218] sm:$0xff]
    %v1514 = vld [vmem:[#allocation4 + $0x220] sm:$0xff]
    %v1515 = vld [vmem:[#allocation4 + $0x228] sm:$0xff]
    %v1516 = vld [vmem:[#allocation4 + $0x230] sm:$0xff]
    %v1517 = vld [vmem:[#allocation4 + $0x238] sm:$0xff]
    %v1518 = vld [vmem:[#allocation4 + $0x240] sm:$0xff]
    %v1519 = vld [vmem:[#allocation4 + $0x248] sm:$0xff]
    %v1520 = vld [vmem:[#allocation4 + $0x250] sm:$0xff]
    %v1521 = vld [vmem:[#allocation4 + $0x258] sm:$0xff]
    %v1522 = vld [vmem:[#allocation4 + $0x260] sm:$0xff]
    %v1523 = vld [vmem:[#allocation4 + $0x268] sm:$0xff]
    %v1524 = vld [vmem:[#allocation4 + $0x270] sm:$0xff]
    %v1525 = vld [vmem:[#allocation4 + $0x278] sm:$0xff]
    %v1526 = vld [vmem:[#allocation4 + $0x280] sm:$0xff]
    %v1527 = vld [vmem:[#allocation4 + $0x288] sm:$0xff]
    %v1528 = vld [vmem:[#allocation4 + $0x290] sm:$0xff]
    %v1529 = vld [vmem:[#allocation4 + $0x298] sm:$0xff]
    %v1530 = vld [vmem:[#allocation4 + $0x2a0] sm:$0xff]
    %v1531 = vld [vmem:[#allocation4 + $0x2a8] sm:$0xff]
    %v1532 = vld [vmem:[#allocation4 + $0x2b0] sm:$0xff]
    %v1533 = vld [vmem:[#allocation4 + $0x2b8] sm:$0xff]
    %v1534 = vld [vmem:[#allocation4 + $0x2c0] sm:$0xff]
    %v1535 = vld [vmem:[#allocation4 + $0x2c8] sm:$0xff]
    %v1536 = vld [vmem:[#allocation4 + $0x2d0] sm:$0xff]
    %v1537 = vld [vmem:[#allocation4 + $0x2d8] sm:$0xff]
    %v1538 = vld [vmem:[#allocation4 + $0x2e0] sm:$0xff]
    %v1539 = vld [vmem:[#allocation4 + $0x2e8] sm:$0xff]
    %v1540 = vld [vmem:[#allocation4 + $0x2f0] sm:$0xff]
    %v1541 = vld [vmem:[#allocation4 + $0x2f8] sm:$0xff]
    %v1542 = vld [vmem:[#allocation4 + $0x300] sm:$0xff]
    %v1543 = vld [vmem:[#allocation4 + $0x308] sm:$0xff]
    %v1544 = vld [vmem:[#allocation4 + $0x310] sm:$0xff]
    %v1545 = vld [vmem:[#allocation4 + $0x318] sm:$0xff]
    %v1546 = vld [vmem:[#allocation4 + $0x320] sm:$0xff]
    %v1547 = vld [vmem:[#allocation4 + $0x328] sm:$0xff]
    %v1548 = vld [vmem:[#allocation4 + $0x330] sm:$0xff]
    %v1549 = vld [vmem:[#allocation4 + $0x338] sm:$0xff]
    %v1550 = vld [vmem:[#allocation4 + $0x340] sm:$0xff]
    %v1551 = vld [vmem:[#allocation4 + $0x348] sm:$0xff]
    %v1552 = vld [vmem:[#allocation4 + $0x350] sm:$0xff]
    %v1553 = vld [vmem:[#allocation4 + $0x358] sm:$0xff]
    %v1554 = vld [vmem:[#allocation4 + $0x360] sm:$0xff]
    %v1555 = vld [vmem:[#allocation4 + $0x368] sm:$0xff]
    %v1556 = vld [vmem:[#allocation4 + $0x370] sm:$0xff]
    %v1557 = vld [vmem:[#allocation4 + $0x378] sm:$0xff]
    %v1558 = vld [vmem:[#allocation4 + $0x380] sm:$0xff]
    %v1559 = vld [vmem:[#allocation4 + $0x388] sm:$0xff]
    %v1560 = vld [vmem:[#allocation4 + $0x390] sm:$0xff]
    %v1561 = vld [vmem:[#allocation4 + $0x398] sm:$0xff]
    %v1562 = vld [vmem:[#allocation4 + $0x3a0] sm:$0xff]
    %v1563 = vld [vmem:[#allocation4 + $0x3a8] sm:$0xff]
    %v1564 = vld [vmem:[#allocation4 + $0x3b0] sm:$0xff]
    %v1565 = vld [vmem:[#allocation4 + $0x3b8] sm:$0xff]
    %v1566 = vld [vmem:[#allocation4 + $0x3c0] sm:$0xff]
    %v1567 = vld [vmem:[#allocation4 + $0x3c8] sm:$0xff]
    %v1568 = vld [vmem:[#allocation4 + $0x3d0] sm:$0xff]
    %v1569 = vld [vmem:[#allocation4 + $0x3d8] sm:$0xff]
    %v1570 = vld [vmem:[#allocation4 + $0x3e0] sm:$0xff]
    %v1571 = vld [vmem:[#allocation4 + $0x3e8] sm:$0xff]
    %v1572 = vld [vmem:[#allocation4 + $0x3f0] sm:$0xff]
    %v1573 = vld [vmem:[#allocation4 + $0x3f8] sm:$0xff]
    %v1574 = vld [vmem:[#allocation4 + $0x400] sm:$0xff]
    %v1575 = vld [vmem:[#allocation4 + $0x408] sm:$0xff]
    %v1576 = vld [vmem:[#allocation4 + $0x410] sm:$0xff]
    %v1577 = vld [vmem:[#allocation4 + $0x418] sm:$0xff]
    %v1578 = vld [vmem:[#allocation4 + $0x420] sm:$0xff]
    %v1579 = vld [vmem:[#allocation4 + $0x428] sm:$0xff]
    %v1580 = vld [vmem:[#allocation4 + $0x430] sm:$0xff]
    %v1581 = vld [vmem:[#allocation4 + $0x438] sm:$0xff]
    %v1582 = vld [vmem:[#allocation4 + $0x440] sm:$0xff]
    %v1583 = vld [vmem:[#allocation4 + $0x448] sm:$0xff]
    %v1584 = vld [vmem:[#allocation4 + $0x450] sm:$0xff]
    %v1585 = vld [vmem:[#allocation4 + $0x458] sm:$0xff]
    %v1586 = vld [vmem:[#allocation4 + $0x460] sm:$0xff]
    %v1587 = vld [vmem:[#allocation4 + $0x468] sm:$0xff]
    %v1588 = vld [vmem:[#allocation4 + $0x470] sm:$0xff]
    %v1589 = vld [vmem:[#allocation4 + $0x478] sm:$0xff]
    %v1590 = vld [vmem:[#allocation4 + $0x480] sm:$0xff]
    %v1591 = vld [vmem:[#allocation4 + $0x488] sm:$0xff]
    %v1592 = vld [vmem:[#allocation4 + $0x490] sm:$0xff]
    %v1593 = vld [vmem:[#allocation4 + $0x498] sm:$0xff]
    %v1594 = vld [vmem:[#allocation4 + $0x4a0] sm:$0xff]
    %v1595 = vld [vmem:[#allocation4 + $0x4a8] sm:$0xff]
    %v1596 = vld [vmem:[#allocation4 + $0x4b0] sm:$0xff]
    %v1597 = vld [vmem:[#allocation4 + $0x4b8] sm:$0xff]
    %v1598 = vld [vmem:[#allocation4 + $0x4c0] sm:$0xff]
    %v1599 = vld [vmem:[#allocation4 + $0x4c8] sm:$0xff]
    %v1600 = vld [vmem:[#allocation4 + $0x4d0] sm:$0xff]
    %v1601 = vld [vmem:[#allocation4 + $0x4d8] sm:$0xff]
    %v1602 = vld [vmem:[#allocation4 + $0x4e0] sm:$0xff]
    %v1603 = vld [vmem:[#allocation4 + $0x4e8] sm:$0xff]
    %v1604 = vld [vmem:[#allocation4 + $0x4f0] sm:$0xff]
    %v1605 = vld [vmem:[#allocation4 + $0x4f8] sm:$0xff]
    %v1606 = vld [vmem:[#allocation4 + $0x500] sm:$0xff]
    %v1607 = vld [vmem:[#allocation4 + $0x508] sm:$0xff]
    %v1608 = vld [vmem:[#allocation4 + $0x510] sm:$0xff]
    %v1609 = vld [vmem:[#allocation4 + $0x518] sm:$0xff]
    %v1610 = vld [vmem:[#allocation4 + $0x520] sm:$0xff]
    %v1611 = vld [vmem:[#allocation4 + $0x528] sm:$0xff]
    %v1612 = vld [vmem:[#allocation4 + $0x530] sm:$0xff]
    %v1613 = vld [vmem:[#allocation4 + $0x538] sm:$0xff]
    %v1614 = vld [vmem:[#allocation4 + $0x540] sm:$0xff]
    %v1615 = vld [vmem:[#allocation4 + $0x548] sm:$0xff]
    %v1616 = vld [vmem:[#allocation4 + $0x550] sm:$0xff]
    %v1617 = vld [vmem:[#allocation4 + $0x558] sm:$0xff]
    %v1618 = vld [vmem:[#allocation4 + $0x560] sm:$0xff]
    %v1619 = vld [vmem:[#allocation4 + $0x568] sm:$0xff]
    %v1620 = vld [vmem:[#allocation4 + $0x570] sm:$0xff]
    %v1621 = vld [vmem:[#allocation4 + $0x578] sm:$0xff]
    %v1622 = vld [vmem:[#allocation4 + $0x580] sm:$0xff]
    %v1623 = vld [vmem:[#allocation4 + $0x588] sm:$0xff]
    %v1624 = vld [vmem:[#allocation4 + $0x590] sm:$0xff]
    %v1625 = vld [vmem:[#allocation4 + $0x598] sm:$0xff]
    %v1626 = vld [vmem:[#allocation4 + $0x5a0] sm:$0xff]
    %v1627 = vld [vmem:[#allocation4 + $0x5a8] sm:$0xff]
    %v1628 = vld [vmem:[#allocation4 + $0x5b0] sm:$0xff]
    %v1629 = vld [vmem:[#allocation4 + $0x5b8] sm:$0xff]
    %v1630 = vld [vmem:[#allocation4 + $0x5c0] sm:$0xff]
    %v1631 = vld [vmem:[#allocation4 + $0x5c8] sm:$0xff]
    %v1632 = vld [vmem:[#allocation4 + $0x5d0] sm:$0xff]
    %v1633 = vld [vmem:[#allocation4 + $0x5d8] sm:$0xff]
    %v1634 = vld [vmem:[#allocation4 + $0x5e0] sm:$0xff]
    %v1635 = vld [vmem:[#allocation4 + $0x5e8] sm:$0xff]
    %v1636 = vld [vmem:[#allocation4 + $0x5f0] sm:$0xff]
    %v1637 = vld [vmem:[#allocation4 + $0x5f8] sm:$0xff]
    %v1638 = vld [vmem:[#allocation4 + $0x600] sm:$0xff]
    %v1639 = vld [vmem:[#allocation4 + $0x608] sm:$0xff]
    %v1640 = vld [vmem:[#allocation4 + $0x610] sm:$0xff]
    %v1641 = vld [vmem:[#allocation4 + $0x618] sm:$0xff]
    %v1642 = vld [vmem:[#allocation4 + $0x620] sm:$0xff]
    %v1643 = vld [vmem:[#allocation4 + $0x628] sm:$0xff]
    %v1644 = vld [vmem:[#allocation4 + $0x630] sm:$0xff]
    %v1645 = vld [vmem:[#allocation4 + $0x638] sm:$0xff]
    %v1646 = vld [vmem:[#allocation4 + $0x640] sm:$0xff]
    %v1647 = vld [vmem:[#allocation4 + $0x648] sm:$0xff]
    %v1648 = vld [vmem:[#allocation4 + $0x650] sm:$0xff]
    %v1649 = vld [vmem:[#allocation4 + $0x658] sm:$0xff]
    %v1650 = vld [vmem:[#allocation4 + $0x660] sm:$0xff]
    %v1651 = vld [vmem:[#allocation4 + $0x668] sm:$0xff]
    %v1652 = vld [vmem:[#allocation4 + $0x670] sm:$0xff]
    %v1653 = vld [vmem:[#allocation4 + $0x678] sm:$0xff]
    %v1654 = vld [vmem:[#allocation4 + $0x680] sm:$0xff]
    %v1655 = vld [vmem:[#allocation4 + $0x688] sm:$0xff]
    %v1656 = vld [vmem:[#allocation4 + $0x690] sm:$0xff]
    %v1657 = vld [vmem:[#allocation4 + $0x698] sm:$0xff]
    %v1658 = vld [vmem:[#allocation4 + $0x6a0] sm:$0xff]
    %v1659 = vld [vmem:[#allocation4 + $0x6a8] sm:$0xff]
    %v1660 = vld [vmem:[#allocation4 + $0x6b0] sm:$0xff]
    %v1661 = vld [vmem:[#allocation4 + $0x6b8] sm:$0xff]
    %v1662 = vld [vmem:[#allocation4 + $0x6c0] sm:$0xff]
    %v1663 = vld [vmem:[#allocation4 + $0x6c8] sm:$0xff]
    %v1664 = vld [vmem:[#allocation4 + $0x6d0] sm:$0xff]
    %v1665 = vld [vmem:[#allocation4 + $0x6d8] sm:$0xff]
    %v1666 = vld [vmem:[#allocation4 + $0x6e0] sm:$0xff]
    %v1667 = vld [vmem:[#allocation4 + $0x6e8] sm:$0xff]
    %v1668 = vld [vmem:[#allocation4 + $0x6f0] sm:$0xff]
    %v1669 = vld [vmem:[#allocation4 + $0x6f8] sm:$0xff]
    %v1670 = vld [vmem:[#allocation4 + $0x700] sm:$0xff]
    %v1671 = vld [vmem:[#allocation4 + $0x708] sm:$0xff]
    %v1672 = vld [vmem:[#allocation4 + $0x710] sm:$0xff]
    %v1673 = vld [vmem:[#allocation4 + $0x718] sm:$0xff]
    %v1674 = vld [vmem:[#allocation4 + $0x720] sm:$0xff]
    %v1675 = vld [vmem:[#allocation4 + $0x728] sm:$0xff]
    %v1676 = vld [vmem:[#allocation4 + $0x730] sm:$0xff]
    %v1677 = vld [vmem:[#allocation4 + $0x738] sm:$0xff]
    %v1678 = vld [vmem:[#allocation4 + $0x740] sm:$0xff]
    %v1679 = vld [vmem:[#allocation4 + $0x748] sm:$0xff]
    %v1680 = vld [vmem:[#allocation4 + $0x750] sm:$0xff]
    %v1681 = vld [vmem:[#allocation4 + $0x758] sm:$0xff]
    %v1682 = vld [vmem:[#allocation4 + $0x760] sm:$0xff]
    %v1683 = vld [vmem:[#allocation4 + $0x768] sm:$0xff]
    %v1684 = vld [vmem:[#allocation4 + $0x770] sm:$0xff]
    %v1685 = vld [vmem:[#allocation4 + $0x778] sm:$0xff]
    %v1686 = vld [vmem:[#allocation4 + $0x780] sm:$0xff]
    %v1687 = vld [vmem:[#allocation4 + $0x788] sm:$0xff]
    %v1688 = vld [vmem:[#allocation4 + $0x790] sm:$0xff]
    %v1689 = vld [vmem:[#allocation4 + $0x798] sm:$0xff]
    %v1690 = vld [vmem:[#allocation4 + $0x7a0] sm:$0xff]
    %v1691 = vld [vmem:[#allocation4 + $0x7a8] sm:$0xff]
    %v1692 = vld [vmem:[#allocation4 + $0x7b0] sm:$0xff]
    %v1693 = vld [vmem:[#allocation4 + $0x7b8] sm:$0xff]
    %v1694 = vld [vmem:[#allocation4 + $0x7c0] sm:$0xff]
    %v1695 = vld [vmem:[#allocation4 + $0x7c8] sm:$0xff]
    %v1696 = vld [vmem:[#allocation4 + $0x7d0] sm:$0xff]
    %v1697 = vld [vmem:[#allocation4 + $0x7d8] sm:$0xff]
    %v1698 = vld [vmem:[#allocation4 + $0x7e0] sm:$0xff]
    %v1699 = vld [vmem:[#allocation4 + $0x7e8] sm:$0xff]
    %v1700 = vld [vmem:[#allocation4 + $0x7f0] sm:$0xff]
    %v1701 = vld [vmem:[#allocation4 + $0x7f8] sm:$0xff]
    %v1702 = vld [vmem:[#allocation4 + $0x800] sm:$0xff]
    %v1703 = vld [vmem:[#allocation4 + $0x808] sm:$0xff]
    %v1704 = vld [vmem:[#allocation4 + $0x810] sm:$0xff]
    %v1705 = vld [vmem:[#allocation4 + $0x818] sm:$0xff]
    %v1706 = vld [vmem:[#allocation4 + $0x820] sm:$0xff]
    %v1707 = vld [vmem:[#allocation4 + $0x828] sm:$0xff]
    %v1708 = vld [vmem:[#allocation4 + $0x830] sm:$0xff]
    %v1709 = vld [vmem:[#allocation4 + $0x838] sm:$0xff]
    %v1710 = vld [vmem:[#allocation4 + $0x840] sm:$0xff]
    %v1711 = vld [vmem:[#allocation4 + $0x848] sm:$0xff]
    %v1712 = vld [vmem:[#allocation4 + $0x850] sm:$0xff]
    %v1713 = vld [vmem:[#allocation4 + $0x858] sm:$0xff]
    %v1714 = vld [vmem:[#allocation4 + $0x860] sm:$0xff]
    %v1715 = vld [vmem:[#allocation4 + $0x868] sm:$0xff]
    %v1716 = vld [vmem:[#allocation4 + $0x870] sm:$0xff]
    %v1717 = vld [vmem:[#allocation4 + $0x878] sm:$0xff]
    %v1718 = vld [vmem:[#allocation4 + $0x880] sm:$0xff]
    %v1719 = vld [vmem:[#allocation4 + $0x888] sm:$0xff]
    %v1720 = vld [vmem:[#allocation4 + $0x890] sm:$0xff]
    %v1721 = vld [vmem:[#allocation4 + $0x898] sm:$0xff]
    %v1722 = vld [vmem:[#allocation4 + $0x8a0] sm:$0xff]
    %v1723 = vld [vmem:[#allocation4 + $0x8a8] sm:$0xff]
    %v1724 = vld [vmem:[#allocation4 + $0x8b0] sm:$0xff]
    %v1725 = vld [vmem:[#allocation4 + $0x8b8] sm:$0xff]
    %v1726 = vld [vmem:[#allocation4 + $0x8c0] sm:$0xff]
    %v1727 = vld [vmem:[#allocation4 + $0x8c8] sm:$0xff]
    %v1728 = vld [vmem:[#allocation4 + $0x8d0] sm:$0xff]
    %v1729 = vld [vmem:[#allocation4 + $0x8d8] sm:$0xff]
    %v1730 = vld [vmem:[#allocation4 + $0x8e0] sm:$0xff]
    %v1731 = vld [vmem:[#allocation4 + $0x8e8] sm:$0xff]
    %v1732 = vld [vmem:[#allocation4 + $0x8f0] sm:$0xff]
    %v1733 = vld [vmem:[#allocation4 + $0x8f8] sm:$0xff]
    %v1734 = vld [vmem:[#allocation4 + $0x900] sm:$0xff]
    %v1735 = vld [vmem:[#allocation4 + $0x908] sm:$0xff]
    %v1736 = vld [vmem:[#allocation4 + $0x910] sm:$0xff]
    %v1737 = vld [vmem:[#allocation4 + $0x918] sm:$0xff]
    %v1738 = vld [vmem:[#allocation4 + $0x920] sm:$0xff]
    %v1739 = vld [vmem:[#allocation4 + $0x928] sm:$0xff]
    %v1740 = vld [vmem:[#allocation4 + $0x930] sm:$0xff]
    %v1741 = vld [vmem:[#allocation4 + $0x938] sm:$0xff]
    %v1742 = vld [vmem:[#allocation4 + $0x940] sm:$0xff]
    %v1743 = vld [vmem:[#allocation4 + $0x948] sm:$0xff]
    %v1744 = vld [vmem:[#allocation4 + $0x950] sm:$0xff]
    %v1745 = vld [vmem:[#allocation4 + $0x958] sm:$0xff]
    %v1746 = vld [vmem:[#allocation4 + $0x960] sm:$0xff]
    %v1747 = vld [vmem:[#allocation4 + $0x968] sm:$0xff]
    %v1748 = vld [vmem:[#allocation4 + $0x970] sm:$0xff]
    %v1749 = vld [vmem:[#allocation4 + $0x978] sm:$0xff]
    %v1750 = vld [vmem:[#allocation4 + $0x980] sm:$0xff]
    %v1751 = vld [vmem:[#allocation4 + $0x988] sm:$0xff]
    %v1752 = vld [vmem:[#allocation4 + $0x990] sm:$0xff]
    %v1753 = vld [vmem:[#allocation4 + $0x998] sm:$0xff]
    %v1754 = vld [vmem:[#allocation4 + $0x9a0] sm:$0xff]
    %v1755 = vld [vmem:[#allocation4 + $0x9a8] sm:$0xff]
    %v1756 = vld [vmem:[#allocation4 + $0x9b0] sm:$0xff]
    %v1757 = vld [vmem:[#allocation4 + $0x9b8] sm:$0xff]
    %v1758 = vld [vmem:[#allocation4 + $0x9c0] sm:$0xff]
    %v1759 = vld [vmem:[#allocation4 + $0x9c8] sm:$0xff]
    %v1760 = vld [vmem:[#allocation4 + $0x9d0] sm:$0xff]
    %v1761 = vld [vmem:[#allocation4 + $0x9d8] sm:$0xff]
    %v1762 = vld [vmem:[#allocation4 + $0x9e0] sm:$0xff]
    %v1763 = vld [vmem:[#allocation4 + $0x9e8] sm:$0xff]
    %v1764 = vld [vmem:[#allocation4 + $0x9f0] sm:$0xff]
    %v1765 = vld [vmem:[#allocation4 + $0x9f8] sm:$0xff]
    %v1766 = vld [vmem:[#allocation4 + $0xa00] sm:$0xff]
    %v1767 = vld [vmem:[#allocation4 + $0xa08] sm:$0xff]
    %v1768 = vld [vmem:[#allocation4 + $0xa10] sm:$0xff]
    %v1769 = vld [vmem:[#allocation4 + $0xa18] sm:$0xff]
    %v1770 = vld [vmem:[#allocation4 + $0xa20] sm:$0xff]
    %v1771 = vld [vmem:[#allocation4 + $0xa28] sm:$0xff]
    %v1772 = vld [vmem:[#allocation4 + $0xa30] sm:$0xff]
    %v1773 = vld [vmem:[#allocation4 + $0xa38] sm:$0xff]
    %v1774 = vld [vmem:[#allocation4 + $0xa40] sm:$0xff]
    %v1775 = vld [vmem:[#allocation4 + $0xa48] sm:$0xff]
    %v1776 = vld [vmem:[#allocation4 + $0xa50] sm:$0xff]
    %v1777 = vld [vmem:[#allocation4 + $0xa58] sm:$0xff]
    %v1778 = vld [vmem:[#allocation4 + $0xa60] sm:$0xff]
    %v1779 = vld [vmem:[#allocation4 + $0xa68] sm:$0xff]
    %v1780 = vld [vmem:[#allocation4 + $0xa70] sm:$0xff]
    %v1781 = vld [vmem:[#allocation4 + $0xa78] sm:$0xff]
    %v1782 = vld [vmem:[#allocation4 + $0xa80] sm:$0xff]
    %v1783 = vld [vmem:[#allocation4 + $0xa88] sm:$0xff]
    %v1784 = vld [vmem:[#allocation4 + $0xa90] sm:$0xff]
    %v1785 = vld [vmem:[#allocation4 + $0xa98] sm:$0xff]
    %v1786 = vld [vmem:[#allocation4 + $0xaa0] sm:$0xff]
    %v1787 = vld [vmem:[#allocation4 + $0xaa8] sm:$0xff]
    %v1788 = vld [vmem:[#allocation4 + $0xab0] sm:$0xff]
    %v1789 = vld [vmem:[#allocation4 + $0xab8] sm:$0xff]
    %v1790 = vld [vmem:[#allocation4 + $0xac0] sm:$0xff]
    %v1791 = vld [vmem:[#allocation4 + $0xac8] sm:$0xff]
    %v1792 = vld [vmem:[#allocation4 + $0xad0] sm:$0xff]
    %v1793 = vld [vmem:[#allocation4 + $0xad8] sm:$0xff]
    %v1794 = vld [vmem:[#allocation4 + $0xae0] sm:$0xff]
    %v1795 = vld [vmem:[#allocation4 + $0xae8] sm:$0xff]
    %v1796 = vld [vmem:[#allocation4 + $0xaf0] sm:$0xff]
    %v1797 = vld [vmem:[#allocation4 + $0xaf8] sm:$0xff]
    %v1798 = vld [vmem:[#allocation4 + $0xb00] sm:$0xff]
    %v1799 = vld [vmem:[#allocation4 + $0xb08] sm:$0xff]
    %v1800 = vld [vmem:[#allocation4 + $0xb10] sm:$0xff]
    %v1801 = vld [vmem:[#allocation4 + $0xb18] sm:$0xff]
    %v1802 = vld [vmem:[#allocation4 + $0xb20] sm:$0xff]
    %v1803 = vld [vmem:[#allocation4 + $0xb28] sm:$0xff]
    %v1804 = vld [vmem:[#allocation4 + $0xb30] sm:$0xff]
    %v1805 = vld [vmem:[#allocation4 + $0xb38] sm:$0xff]
    %v1806 = vld [vmem:[#allocation4 + $0xb40] sm:$0xff]
    %v1807 = vld [vmem:[#allocation4 + $0xb48] sm:$0xff]
    %v1808 = vld [vmem:[#allocation4 + $0xb50] sm:$0xff]
    %v1809 = vld [vmem:[#allocation4 + $0xb58] sm:$0xff]
    %v1810 = vld [vmem:[#allocation4 + $0xb60] sm:$0xff]
    %v1811 = vld [vmem:[#allocation4 + $0xb68] sm:$0xff]
    %v1812 = vld [vmem:[#allocation4 + $0xb70] sm:$0xff]
    %v1813 = vld [vmem:[#allocation4 + $0xb78] sm:$0xff]
    %v1814 = vld [vmem:[#allocation4 + $0xb80] sm:$0xff]
    %v1815 = vld [vmem:[#allocation4 + $0xb88] sm:$0xff]
    %v1816 = vld [vmem:[#allocation4 + $0xb90] sm:$0xff]
    %v1817 = vld [vmem:[#allocation4 + $0xb98] sm:$0xff]
    %v1818 = vld [vmem:[#allocation4 + $0xba0] sm:$0xff]
    %v1819 = vld [vmem:[#allocation4 + $0xba8] sm:$0xff]
    %v1820 = vld [vmem:[#allocation4 + $0xbb0] sm:$0xff]
    %v1821 = vld [vmem:[#allocation4 + $0xbb8] sm:$0xff]
    %v1822 = vld [vmem:[#allocation4 + $0xbc0] sm:$0xff]
    %v1823 = vld [vmem:[#allocation4 + $0xbc8] sm:$0xff]
    %v1824 = vld [vmem:[#allocation4 + $0xbd0] sm:$0xff]
    %v1825 = vld [vmem:[#allocation4 + $0xbd8] sm:$0xff]
    %v1826 = vld [vmem:[#allocation4 + $0xbe0] sm:$0xff]
    %v1827 = vld [vmem:[#allocation4 + $0xbe8] sm:$0xff]
    %v1828 = vld [vmem:[#allocation4 + $0xbf0] sm:$0xff]
    %v1829 = vld [vmem:[#allocation4 + $0xbf8] sm:$0xff]
    %v1830 = vld [vmem:[#allocation4 + $0xc00] sm:$0xff]
    %v1831 = vld [vmem:[#allocation4 + $0xc08] sm:$0xff]
    %v1832 = vld [vmem:[#allocation4 + $0xc10] sm:$0xff]
    %v1833 = vld [vmem:[#allocation4 + $0xc18] sm:$0xff]
    %v1834 = vld [vmem:[#allocation4 + $0xc20] sm:$0xff]
    %v1835 = vld [vmem:[#allocation4 + $0xc28] sm:$0xff]
    %v1836 = vld [vmem:[#allocation4 + $0xc30] sm:$0xff]
    %v1837 = vld [vmem:[#allocation4 + $0xc38] sm:$0xff]
    %v1838 = vld [vmem:[#allocation4 + $0xc40] sm:$0xff]
    %v1839 = vld [vmem:[#allocation4 + $0xc48] sm:$0xff]
    %v1840 = vld [vmem:[#allocation4 + $0xc50] sm:$0xff]
    %v1841 = vld [vmem:[#allocation4 + $0xc58] sm:$0xff]
    %v1842 = vld [vmem:[#allocation4 + $0xc60] sm:$0xff]
    %v1843 = vld [vmem:[#allocation4 + $0xc68] sm:$0xff]
    %v1844 = vld [vmem:[#allocation4 + $0xc70] sm:$0xff]
    %v1845 = vld [vmem:[#allocation4 + $0xc78] sm:$0xff]
    %v1846 = vld [vmem:[#allocation4 + $0xc80] sm:$0xff]
    %v1847 = vld [vmem:[#allocation4 + $0xc88] sm:$0xff]
    %v1848 = vld [vmem:[#allocation4 + $0xc90] sm:$0xff]
    %v1849 = vld [vmem:[#allocation4 + $0xc98] sm:$0xff]
    %v1850 = vld [vmem:[#allocation4 + $0xca0] sm:$0xff]
    %v1851 = vld [vmem:[#allocation4 + $0xca8] sm:$0xff]
    %v1852 = vld [vmem:[#allocation4 + $0xcb0] sm:$0xff]
    %v1853 = vld [vmem:[#allocation4 + $0xcb8] sm:$0xff]
    %v1854 = vld [vmem:[#allocation4 + $0xcc0] sm:$0xff]
    %v1855 = vld [vmem:[#allocation4 + $0xcc8] sm:$0xff]
    %v1856 = vld [vmem:[#allocation4 + $0xcd0] sm:$0xff]
    %v1857 = vld [vmem:[#allocation4 + $0xcd8] sm:$0xff]
    %v1858 = vld [vmem:[#allocation4 + $0xce0] sm:$0xff]
    %v1859 = vld [vmem:[#allocation4 + $0xce8] sm:$0xff]
    %v1860 = vld [vmem:[#allocation4 + $0xcf0] sm:$0xff]
    %v1861 = vld [vmem:[#allocation4 + $0xcf8] sm:$0xff]
    %v1862 = vld [vmem:[#allocation4 + $0xd00] sm:$0xff]
    %v1863 = vld [vmem:[#allocation4 + $0xd08] sm:$0xff]
    %v1864 = vld [vmem:[#allocation4 + $0xd10] sm:$0xff]
    %v1865 = vld [vmem:[#allocation4 + $0xd18] sm:$0xff]
    %v1866 = vld [vmem:[#allocation4 + $0xd20] sm:$0xff]
    %v1867 = vld [vmem:[#allocation4 + $0xd28] sm:$0xff]
    %v1868 = vld [vmem:[#allocation4 + $0xd30] sm:$0xff]
    %v1869 = vld [vmem:[#allocation4 + $0xd38] sm:$0xff]
    %v1870 = vld [vmem:[#allocation4 + $0xd40] sm:$0xff]
    %v1871 = vld [vmem:[#allocation4 + $0xd48] sm:$0xff]
    %v1872 = vld [vmem:[#allocation4 + $0xd50] sm:$0xff]
    %v1873 = vld [vmem:[#allocation4 + $0xd58] sm:$0xff]
    %v1874 = vld [vmem:[#allocation4 + $0xd60] sm:$0xff]
    %v1875 = vld [vmem:[#allocation4 + $0xd68] sm:$0xff]
    %v1876 = vld [vmem:[#allocation4 + $0xd70] sm:$0xff]
    %v1877 = vld [vmem:[#allocation4 + $0xd78] sm:$0xff]
    %v1878 = vld [vmem:[#allocation4 + $0xd80] sm:$0xff]
    %v1879 = vld [vmem:[#allocation4 + $0xd88] sm:$0xff]
    %v1880 = vld [vmem:[#allocation4 + $0xd90] sm:$0xff]
    %v1881 = vld [vmem:[#allocation4 + $0xd98] sm:$0xff]
    %v1882 = vld [vmem:[#allocation4 + $0xda0] sm:$0xff]
    %v1883 = vld [vmem:[#allocation4 + $0xda8] sm:$0xff]
    %v1884 = vld [vmem:[#allocation4 + $0xdb0] sm:$0xff]
    %v1885 = vld [vmem:[#allocation4 + $0xdb8] sm:$0xff]
    %v1886 = vld [vmem:[#allocation4 + $0xdc0] sm:$0xff]
    %v1887 = vld [vmem:[#allocation4 + $0xdc8] sm:$0xff]
    %v1888 = vld [vmem:[#allocation4 + $0xdd0] sm:$0xff]
    %v1889 = vld [vmem:[#allocation4 + $0xdd8] sm:$0xff]
    %v1890 = vld [vmem:[#allocation4 + $0xde0] sm:$0xff]
    %v1891 = vld [vmem:[#allocation4 + $0xde8] sm:$0xff]
    %v1892 = vld [vmem:[#allocation4 + $0xdf0] sm:$0xff]
    %v1893 = vld [vmem:[#allocation4 + $0xdf8] sm:$0xff]
    %v1894 = vld [vmem:[#allocation4 + $0xe00] sm:$0xff]
    %v1895 = vld [vmem:[#allocation4 + $0xe08] sm:$0xff]
    %v1896 = vld [vmem:[#allocation4 + $0xe10] sm:$0xff]
    %v1897 = vld [vmem:[#allocation4 + $0xe18] sm:$0xff]
    %v1898 = vld [vmem:[#allocation4 + $0xe20] sm:$0xff]
    %v1899 = vld [vmem:[#allocation4 + $0xe28] sm:$0xff]
    %v1900 = vld [vmem:[#allocation4 + $0xe30] sm:$0xff]
    %v1901 = vld [vmem:[#allocation4 + $0xe38] sm:$0xff]
    %v1902 = vld [vmem:[#allocation4 + $0xe40] sm:$0xff]
    %v1903 = vld [vmem:[#allocation4 + $0xe48] sm:$0xff]
    %v1904 = vld [vmem:[#allocation4 + $0xe50] sm:$0xff]
    %v1905 = vld [vmem:[#allocation4 + $0xe58] sm:$0xff]
    %v1906 = vld [vmem:[#allocation4 + $0xe60] sm:$0xff]
    %v1907 = vld [vmem:[#allocation4 + $0xe68] sm:$0xff]
    %v1908 = vld [vmem:[#allocation4 + $0xe70] sm:$0xff]
    %v1909 = vld [vmem:[#allocation4 + $0xe78] sm:$0xff]
    %v1910 = vld [vmem:[#allocation4 + $0xe80] sm:$0xff]
    %v1911 = vld [vmem:[#allocation4 + $0xe88] sm:$0xff]
    %v1912 = vld [vmem:[#allocation4 + $0xe90] sm:$0xff]
    %v1913 = vld [vmem:[#allocation4 + $0xe98] sm:$0xff]
    %v1914 = vld [vmem:[#allocation4 + $0xea0] sm:$0xff]
    %v1915 = vld [vmem:[#allocation4 + $0xea8] sm:$0xff]
    %v1916 = vld [vmem:[#allocation4 + $0xeb0] sm:$0xff]
    %v1917 = vld [vmem:[#allocation4 + $0xeb8] sm:$0xff]
    %v1918 = vld [vmem:[#allocation4 + $0xec0] sm:$0xff]
    %v1919 = vld [vmem:[#allocation4 + $0xec8] sm:$0xff]
    %v1920 = vld [vmem:[#allocation4 + $0xed0] sm:$0xff]
    %v1921 = vld [vmem:[#allocation4 + $0xed8] sm:$0xff]
    %v1922 = vld [vmem:[#allocation4 + $0xee0] sm:$0xff]
    %v1923 = vld [vmem:[#allocation4 + $0xee8] sm:$0xff]
    %v1924 = vld [vmem:[#allocation4 + $0xef0] sm:$0xff]
    %v1925 = vld [vmem:[#allocation4 + $0xef8] sm:$0xff]
    %v1926 = vld [vmem:[#allocation4 + $0xf00] sm:$0xff]
    %v1927 = vld [vmem:[#allocation4 + $0xf08] sm:$0xff]
    %v1928 = vld [vmem:[#allocation4 + $0xf10] sm:$0xff]
    %v1929 = vld [vmem:[#allocation4 + $0xf18] sm:$0xff]
    %v1930 = vld [vmem:[#allocation4 + $0xf20] sm:$0xff]
    %v1931 = vld [vmem:[#allocation4 + $0xf28] sm:$0xff]
    %v1932 = vld [vmem:[#allocation4 + $0xf30] sm:$0xff]
    %v1933 = vld [vmem:[#allocation4 + $0xf38] sm:$0xff]
    %v1934 = vld [vmem:[#allocation4 + $0xf40] sm:$0xff]
    %v1935 = vld [vmem:[#allocation4 + $0xf48] sm:$0xff]
    %v1936 = vld [vmem:[#allocation4 + $0xf50] sm:$0xff]
    %v1937 = vld [vmem:[#allocation4 + $0xf58] sm:$0xff]
    %v1938 = vld [vmem:[#allocation4 + $0xf60] sm:$0xff]
    %v1939 = vld [vmem:[#allocation4 + $0xf68] sm:$0xff]
    %v1940 = vld [vmem:[#allocation4 + $0xf70] sm:$0xff]
    %v1941 = vld [vmem:[#allocation4 + $0xf78] sm:$0xff]
    %v1942 = vld [vmem:[#allocation4 + $0xf80] sm:$0xff]
    %v1943 = vld [vmem:[#allocation4 + $0xf88] sm:$0xff]
    %v1944 = vld [vmem:[#allocation4 + $0xf90] sm:$0xff]
    %v1945 = vld [vmem:[#allocation4 + $0xf98] sm:$0xff]
    %v1946 = vld [vmem:[#allocation4 + $0xfa0] sm:$0xff]
    %v1947 = vld [vmem:[#allocation4 + $0xfa8] sm:$0xff]
    %v1948 = vld [vmem:[#allocation4 + $0xfb0] sm:$0xff]
    %v1949 = vld [vmem:[#allocation4 + $0xfb8] sm:$0xff]
    %v1950 = vld [vmem:[#allocation4 + $0xfc0] sm:$0xff]
    %v1951 = vld [vmem:[#allocation4 + $0xfc8] sm:$0xff]
    %v1952 = vld [vmem:[#allocation4 + $0xfd0] sm:$0xff]
    %v1953 = vld [vmem:[#allocation4 + $0xfd8] sm:$0xff]
    %v1954 = vld [vmem:[#allocation4 + $0xfe0] sm:$0xff]
    %v1955 = vld [vmem:[#allocation4 + $0xfe8] sm:$0xff]
    %v1956 = vld [vmem:[#allocation4 + $0xff0] sm:$0xff]
    %v1957 = vld [vmem:[#allocation4 + $0xff8] sm:$0xff]
    %v1958 = vld [vmem:[#allocation4 + $0x1000] sm:$0xff]
    %v1959 = vld [vmem:[#allocation4 + $0x1008] sm:$0xff]
    %v1960 = vld [vmem:[#allocation4 + $0x1010] sm:$0xff]
    %v1961 = vld [vmem:[#allocation4 + $0x1018] sm:$0xff]
    %v1962 = vld [vmem:[#allocation4 + $0x1020] sm:$0xff]
    %v1963 = vld [vmem:[#allocation4 + $0x1028] sm:$0xff]
    %v1964 = vld [vmem:[#allocation4 + $0x1030] sm:$0xff]
    %v1965 = vld [vmem:[#allocation4 + $0x1038] sm:$0xff]
    %v1966 = vld [vmem:[#allocation4 + $0x1040] sm:$0xff]
    %v1967 = vld [vmem:[#allocation4 + $0x1048] sm:$0xff]
    %v1968 = vld [vmem:[#allocation4 + $0x1050] sm:$0xff]
    %v1969 = vld [vmem:[#allocation4 + $0x1058] sm:$0xff]
    %v1970 = vld [vmem:[#allocation4 + $0x1060] sm:$0xff]
    %v1971 = vld [vmem:[#allocation4 + $0x1068] sm:$0xff]
    %v1972 = vld [vmem:[#allocation4 + $0x1070] sm:$0xff]
    %v1973 = vld [vmem:[#allocation4 + $0x1078] sm:$0xff]
    %v1974 = vld [vmem:[#allocation4 + $0x1080] sm:$0xff]
    %v1975 = vld [vmem:[#allocation4 + $0x1088] sm:$0xff]
    %v1976 = vld [vmem:[#allocation4 + $0x1090] sm:$0xff]
    %v1977 = vld [vmem:[#allocation4 + $0x1098] sm:$0xff]
    %v1978 = vld [vmem:[#allocation4 + $0x10a0] sm:$0xff]
    %v1979 = vld [vmem:[#allocation4 + $0x10a8] sm:$0xff]
    %v1980 = vld [vmem:[#allocation4 + $0x10b0] sm:$0xff]
    %v1981 = vld [vmem:[#allocation4 + $0x10b8] sm:$0xff]
    %v1982 = vld [vmem:[#allocation4 + $0x10c0] sm:$0xff]
    %v1983 = vld [vmem:[#allocation4 + $0x10c8] sm:$0xff]
    %v1984 = vld [vmem:[#allocation4 + $0x10d0] sm:$0xff]
    %v1985 = vld [vmem:[#allocation4 + $0x10d8] sm:$0xff]
    %v1986 = vld [vmem:[#allocation4 + $0x10e0] sm:$0xff]
    %v1987 = vld [vmem:[#allocation4 + $0x10e8] sm:$0xff]
    %v1988 = vld [vmem:[#allocation4 + $0x10f0] sm:$0xff]
    %v1989 = vld [vmem:[#allocation4 + $0x10f8] sm:$0xff]
    %v1990 = vld [vmem:[#allocation4 + $0x1100] sm:$0xff]
    %v1991 = vld [vmem:[#allocation4 + $0x1108] sm:$0xff]
    %v1992 = vld [vmem:[#allocation4 + $0x1110] sm:$0xff]
    %v1993 = vld [vmem:[#allocation4 + $0x1118] sm:$0xff]
    %v1994 = vld [vmem:[#allocation4 + $0x1120] sm:$0xff]
    %v1995 = vld [vmem:[#allocation4 + $0x1128] sm:$0xff]
    %v1996 = vld [vmem:[#allocation4 + $0x1130] sm:$0xff]
    %v1997 = vld [vmem:[#allocation4 + $0x1138] sm:$0xff]
    %v1998 = vld [vmem:[#allocation4 + $0x1140] sm:$0xff]
    %v1999 = vld [vmem:[#allocation4 + $0x1148] sm:$0xff]
    %v2000 = vld [vmem:[#allocation4 + $0x1150] sm:$0xff]
    %v2001 = vld [vmem:[#allocation4 + $0x1158] sm:$0xff]
    %v2002 = vld [vmem:[#allocation4 + $0x1160] sm:$0xff]
    %v2003 = vld [vmem:[#allocation4 + $0x1168] sm:$0xff]
    %v2004 = vld [vmem:[#allocation4 + $0x1170] sm:$0xff]
    %v2005 = vld [vmem:[#allocation4 + $0x1178] sm:$0xff]
    %v2006 = vld [vmem:[#allocation4 + $0x1180] sm:$0xff]
    %v2007 = vld [vmem:[#allocation4 + $0x1188] sm:$0xff]
    %v2008 = vld [vmem:[#allocation4 + $0x1190] sm:$0xff]
    %v2009 = vld [vmem:[#allocation4 + $0x1198] sm:$0xff]
    %v2010 = vld [vmem:[#allocation4 + $0x11a0] sm:$0xff]
    %v2011 = vld [vmem:[#allocation4 + $0x11a8] sm:$0xff]
    %v2012 = vld [vmem:[#allocation4 + $0x11b0] sm:$0xff]
    %v2013 = vld [vmem:[#allocation4 + $0x11b8] sm:$0xff]
    %v2014 = vld [vmem:[#allocation4 + $0x11c0] sm:$0xff]
    %v2015 = vld [vmem:[#allocation4 + $0x11c8] sm:$0xff]
    %v2016 = vld [vmem:[#allocation4 + $0x11d0] sm:$0xff]
    %v2017 = vld [vmem:[#allocation4 + $0x11d8] sm:$0xff]
    %v2018 = vld [vmem:[#allocation4 + $0x11e0] sm:$0xff]
    %v2019 = vld [vmem:[#allocation4 + $0x11e8] sm:$0xff]
    %v2020 = vld [vmem:[#allocation4 + $0x11f0] sm:$0xff]
    %v2021 = vld [vmem:[#allocation4 + $0x11f8] sm:$0xff]
    %v2022 = vld [vmem:[#allocation5] sm:$0xff]
    %v2023 = vld [vmem:[#allocation5 + $0x8] sm:$0xff]
    %v2024 = vld [vmem:[#allocation5 + $0x10] sm:$0xff]
    %v2025 = vld [vmem:[#allocation5 + $0x18] sm:$0xff]
    %v2026 = vld [vmem:[#allocation5 + $0x20] sm:$0xff]
    %v2027 = vld [vmem:[#allocation5 + $0x28] sm:$0xff]
    %v2028 = vld [vmem:[#allocation5 + $0x30] sm:$0xff]
    %v2029 = vld [vmem:[#allocation5 + $0x38] sm:$0xff]
    %v2030 = vld [vmem:[#allocation5 + $0x40] sm:$0xff]
    %v2031 = vld [vmem:[#allocation5 + $0x48] sm:$0xff]
    %v2032 = vld [vmem:[#allocation5 + $0x50] sm:$0xff]
    %v2033 = vld [vmem:[#allocation5 + $0x58] sm:$0xff]
    %v2034 = vld [vmem:[#allocation5 + $0x60] sm:$0xff]
    %v2035 = vld [vmem:[#allocation5 + $0x68] sm:$0xff]
    %v2036 = vld [vmem:[#allocation5 + $0x70] sm:$0xff]
    %v2037 = vld [vmem:[#allocation5 + $0x78] sm:$0xff]
    %v2038 = vld [vmem:[#allocation5 + $0x80] sm:$0xff]
    %v2039 = vld [vmem:[#allocation5 + $0x88] sm:$0xff]
    %v2040 = vld [vmem:[#allocation5 + $0x90] sm:$0xff]
    %v2041 = vld [vmem:[#allocation5 + $0x98] sm:$0xff]
    %v2042 = vld [vmem:[#allocation5 + $0xa0] sm:$0xff]
    %v2043 = vld [vmem:[#allocation5 + $0xa8] sm:$0xff]
    %v2044 = vld [vmem:[#allocation5 + $0xb0] sm:$0xff]
    %v2045 = vld [vmem:[#allocation5 + $0xb8] sm:$0xff]
    %v2046 = vld [vmem:[#allocation5 + $0xc0] sm:$0xff]
    %v2047 = vld [vmem:[#allocation5 + $0xc8] sm:$0xff]
    %v2048 = vld [vmem:[#allocation5 + $0xd0] sm:$0xff]
    %v2049 = vld [vmem:[#allocation5 + $0xd8] sm:$0xff]
    %v2050 = vld [vmem:[#allocation5 + $0xe0] sm:$0xff]
    %v2051 = vld [vmem:[#allocation5 + $0xe8] sm:$0xff]
    %v2052 = vld [vmem:[#allocation5 + $0xf0] sm:$0xff]
    %v2053 = vld [vmem:[#allocation5 + $0xf8] sm:$0xff]
    %v2054 = vld [vmem:[#allocation5 + $0x100] sm:$0xff]
    %v2055 = vld [vmem:[#allocation5 + $0x108] sm:$0xff]
    %v2056 = vld [vmem:[#allocation5 + $0x110] sm:$0xff]
    %v2057 = vld [vmem:[#allocation5 + $0x118] sm:$0xff]
    %v2058 = vld [vmem:[#allocation5 + $0x120] sm:$0xff]
    %v2059 = vld [vmem:[#allocation5 + $0x128] sm:$0xff]
    %v2060 = vld [vmem:[#allocation5 + $0x130] sm:$0xff]
    %v2061 = vld [vmem:[#allocation5 + $0x138] sm:$0xff]
    %v2062 = vld [vmem:[#allocation5 + $0x140] sm:$0xff]
    %v2063 = vld [vmem:[#allocation5 + $0x148] sm:$0xff]
    %v2064 = vld [vmem:[#allocation5 + $0x150] sm:$0xff]
    %v2065 = vld [vmem:[#allocation5 + $0x158] sm:$0xff]
    %v2066 = vld [vmem:[#allocation5 + $0x160] sm:$0xff]
    %v2067 = vld [vmem:[#allocation5 + $0x168] sm:$0xff]
    %v2068 = vld [vmem:[#allocation5 + $0x170] sm:$0xff]
    %v2069 = vld [vmem:[#allocation5 + $0x178] sm:$0xff]
    %v2070 = vld [vmem:[#allocation5 + $0x180] sm:$0xff]
    %v2071 = vld [vmem:[#allocation5 + $0x188] sm:$0xff]
    %v2072 = vld [vmem:[#allocation5 + $0x190] sm:$0xff]
    %v2073 = vld [vmem:[#allocation5 + $0x198] sm:$0xff]
    %v2074 = vld [vmem:[#allocation5 + $0x1a0] sm:$0xff]
    %v2075 = vld [vmem:[#allocation5 + $0x1a8] sm:$0xff]
    %v2076 = vld [vmem:[#allocation5 + $0x1b0] sm:$0xff]
    %v2077 = vld [vmem:[#allocation5 + $0x1b8] sm:$0xff]
    %v2078 = vld [vmem:[#allocation5 + $0x1c0] sm:$0xff]
    %v2079 = vld [vmem:[#allocation5 + $0x1c8] sm:$0xff]
    %v2080 = vld [vmem:[#allocation5 + $0x1d0] sm:$0xff]
    %v2081 = vld [vmem:[#allocation5 + $0x1d8] sm:$0xff]
    %v2082 = vld [vmem:[#allocation5 + $0x1e0] sm:$0xff]
    %v2083 = vld [vmem:[#allocation5 + $0x1e8] sm:$0xff]
    %v2084 = vld [vmem:[#allocation5 + $0x1f0] sm:$0xff]
    %v2085 = vld [vmem:[#allocation5 + $0x1f8] sm:$0xff]
    %v2086 = vld [vmem:[#allocation5 + $0x200] sm:$0xff]
    %v2087 = vld [vmem:[#allocation5 + $0x208] sm:$0xff]
    %v2088 = vld [vmem:[#allocation5 + $0x210] sm:$0xff]
    %v2089 = vld [vmem:[#allocation5 + $0x218] sm:$0xff]
    %v2090 = vld [vmem:[#allocation5 + $0x220] sm:$0xff]
    %v2091 = vld [vmem:[#allocation5 + $0x228] sm:$0xff]
    %v2092 = vld [vmem:[#allocation5 + $0x230] sm:$0xff]
    %v2093 = vld [vmem:[#allocation5 + $0x238] sm:$0xff]
    %v2094 = vld [vmem:[#allocation5 + $0x240] sm:$0xff]
    %v2095 = vld [vmem:[#allocation5 + $0x248] sm:$0xff]
    %v2096 = vld [vmem:[#allocation5 + $0x250] sm:$0xff]
    %v2097 = vld [vmem:[#allocation5 + $0x258] sm:$0xff]
    %v2098 = vld [vmem:[#allocation5 + $0x260] sm:$0xff]
    %v2099 = vld [vmem:[#allocation5 + $0x268] sm:$0xff]
    %v2100 = vld [vmem:[#allocation5 + $0x270] sm:$0xff]
    %v2101 = vld [vmem:[#allocation5 + $0x278] sm:$0xff]
    %v2102 = vld [vmem:[#allocation5 + $0x280] sm:$0xff]
    %v2103 = vld [vmem:[#allocation5 + $0x288] sm:$0xff]
    %v2104 = vld [vmem:[#allocation5 + $0x290] sm:$0xff]
    %v2105 = vld [vmem:[#allocation5 + $0x298] sm:$0xff]
    %v2106 = vld [vmem:[#allocation5 + $0x2a0] sm:$0xff]
    %v2107 = vld [vmem:[#allocation5 + $0x2a8] sm:$0xff]
    %v2108 = vld [vmem:[#allocation5 + $0x2b0] sm:$0xff]
    %v2109 = vld [vmem:[#allocation5 + $0x2b8] sm:$0xff]
    %v2110 = vld [vmem:[#allocation5 + $0x2c0] sm:$0xff]
    %v2111 = vld [vmem:[#allocation5 + $0x2c8] sm:$0xff]
    %v2112 = vld [vmem:[#allocation5 + $0x2d0] sm:$0xff]
    %v2113 = vld [vmem:[#allocation5 + $0x2d8] sm:$0xff]
    %v2114 = vld [vmem:[#allocation5 + $0x2e0] sm:$0xff]
    %v2115 = vld [vmem:[#allocation5 + $0x2e8] sm:$0xff]
    %v2116 = vld [vmem:[#allocation5 + $0x2f0] sm:$0xff]
    %v2117 = vld [vmem:[#allocation5 + $0x2f8] sm:$0xff]
    %v2118 = vld [vmem:[#allocation5 + $0x300] sm:$0xff]
    %v2119 = vld [vmem:[#allocation5 + $0x308] sm:$0xff]
    %v2120 = vld [vmem:[#allocation5 + $0x310] sm:$0xff]
    %v2121 = vld [vmem:[#allocation5 + $0x318] sm:$0xff]
    %v2122 = vld [vmem:[#allocation5 + $0x320] sm:$0xff]
    %v2123 = vld [vmem:[#allocation5 + $0x328] sm:$0xff]
    %v2124 = vld [vmem:[#allocation5 + $0x330] sm:$0xff]
    %v2125 = vld [vmem:[#allocation5 + $0x338] sm:$0xff]
    %v2126 = vld [vmem:[#allocation5 + $0x340] sm:$0xff]
    %v2127 = vld [vmem:[#allocation5 + $0x348] sm:$0xff]
    %v2128 = vld [vmem:[#allocation5 + $0x350] sm:$0xff]
    %v2129 = vld [vmem:[#allocation5 + $0x358] sm:$0xff]
    %v2130 = vld [vmem:[#allocation5 + $0x360] sm:$0xff]
    %v2131 = vld [vmem:[#allocation5 + $0x368] sm:$0xff]
    %v2132 = vld [vmem:[#allocation5 + $0x370] sm:$0xff]
    %v2133 = vld [vmem:[#allocation5 + $0x378] sm:$0xff]
    %v2134 = vld [vmem:[#allocation5 + $0x380] sm:$0xff]
    %v2135 = vld [vmem:[#allocation5 + $0x388] sm:$0xff]
    %v2136 = vld [vmem:[#allocation5 + $0x390] sm:$0xff]
    %v2137 = vld [vmem:[#allocation5 + $0x398] sm:$0xff]
    %v2138 = vld [vmem:[#allocation5 + $0x3a0] sm:$0xff]
    %v2139 = vld [vmem:[#allocation5 + $0x3a8] sm:$0xff]
    %v2140 = vld [vmem:[#allocation5 + $0x3b0] sm:$0xff]
    %v2141 = vld [vmem:[#allocation5 + $0x3b8] sm:$0xff]
    %v2142 = vld [vmem:[#allocation5 + $0x3c0] sm:$0xff]
    %v2143 = vld [vmem:[#allocation5 + $0x3c8] sm:$0xff]
    %v2144 = vld [vmem:[#allocation5 + $0x3d0] sm:$0xff]
    %v2145 = vld [vmem:[#allocation5 + $0x3d8] sm:$0xff]
    %v2146 = vld [vmem:[#allocation5 + $0x3e0] sm:$0xff]
    %v2147 = vld [vmem:[#allocation5 + $0x3e8] sm:$0xff]
    %v2148 = vld [vmem:[#allocation5 + $0x3f0] sm:$0xff]
    %v2149 = vld [vmem:[#allocation5 + $0x3f8] sm:$0xff]
    %v2150 = vld [vmem:[#allocation5 + $0x400] sm:$0xff]
    %v2151 = vld [vmem:[#allocation5 + $0x408] sm:$0xff]
    %v2152 = vld [vmem:[#allocation5 + $0x410] sm:$0xff]
    %v2153 = vld [vmem:[#allocation5 + $0x418] sm:$0xff]
    %v2154 = vld [vmem:[#allocation5 + $0x420] sm:$0xff]
    %v2155 = vld [vmem:[#allocation5 + $0x428] sm:$0xff]
    %v2156 = vld [vmem:[#allocation5 + $0x430] sm:$0xff]
    %v2157 = vld [vmem:[#allocation5 + $0x438] sm:$0xff]
    %v2158 = vld [vmem:[#allocation5 + $0x440] sm:$0xff]
    %v2159 = vld [vmem:[#allocation5 + $0x448] sm:$0xff]
    %v2160 = vld [vmem:[#allocation5 + $0x450] sm:$0xff]
    %v2161 = vld [vmem:[#allocation5 + $0x458] sm:$0xff]
    %v2162 = vld [vmem:[#allocation5 + $0x460] sm:$0xff]
    %v2163 = vld [vmem:[#allocation5 + $0x468] sm:$0xff]
    %v2164 = vld [vmem:[#allocation5 + $0x470] sm:$0xff]
    %v2165 = vld [vmem:[#allocation5 + $0x478] sm:$0xff]
    %2166 = vmatprep.subr.mxu0 0.0
    %2167 = vmatpush1.msra.mxu0 %v2037
    %2168 = vmatprep.subr.mxu0 0.0
    %2169 = vmatpush1.msra.mxu0 %v2036
    %2170 = vmatprep.subr.mxu0 0.0
    %2171 = vmatpush1.msra.mxu0 %v2035
    %2172 = vmatprep.subr.mxu0 0.0
    %2173 = vmatpush1.msra.mxu0 %v2034
    %2174 = vmatprep.subr.mxu0 0.0
    %2175 = vmatpush1.msra.mxu0 %v2033
    %2176 = vmatprep.subr.mxu0 0.0
    %2177 = vmatpush1.msra.mxu0 %v2032
    %2178 = vmatprep.subr.mxu0 0.0
    %2179 = vmatpush1.msra.mxu0 %v2031
    %2180 = vmatprep.subr.mxu0 0.0
    %2181 = vmatpush1.msra.mxu0 %v2030
    %2182 = vmatprep.subr.mxu0 0.0
    %2183 = vmatpush1.msra.mxu0 %v2029
    %2184 = vmatprep.subr.mxu0 0.0
    %2185 = vmatpush1.msra.mxu0 %v2028
    %2186 = vmatprep.subr.mxu0 0.0
    %2187 = vmatpush1.msra.mxu0 %v2027
    %2188 = vmatprep.subr.mxu0 0.0
    %2189 = vmatpush1.msra.mxu0 %v2026
    %2190 = vmatprep.subr.mxu0 0.0
    %2191 = vmatpush1.msra.mxu0 %v2025
    %2192 = vmatprep.subr.mxu0 0.0
    %2193 = vmatpush1.msra.mxu0 %v2024
    %2194 = vmatprep.subr.mxu0 0.0
    %2195 = vmatpush1.msra.mxu0 %v2023
    %2196 = vmatprep.subr.mxu0 0.0
    %2197 = vmatpush1.msra.mxu0 %v2022
    %2198 = vmatprep.subr.mxu0 0.0
    %2199 = vmatpush2.msra.mxu0 %v2053
    %2200 = vmatprep.subr.mxu0 0.0
    %2201 = vmatpush2.msra.mxu0 %v2052
    %2202 = vmatprep.subr.mxu0 0.0
    %2203 = vmatpush2.msra.mxu0 %v2051
    %2204 = vmatprep.subr.mxu0 0.0
    %2205 = vmatpush2.msra.mxu0 %v2050
    %2206 = vmatprep.subr.mxu0 0.0
    %2207 = vmatpush2.msra.mxu0 %v2049
    %2208 = vmatprep.subr.mxu0 0.0
    %2209 = vmatpush2.msra.mxu0 %v2048
    %2210 = vmatprep.subr.mxu0 0.0
    %2211 = vmatpush2.msra.mxu0 %v2047
    %2212 = vmatprep.subr.mxu0 0.0
    %2213 = vmatpush2.msra.mxu0 %v2046
    %2214 = vmatprep.subr.mxu0 0.0
    %2215 = vmatpush2.msra.mxu0 %v2045
    %2216 = vmatprep.subr.mxu0 0.0
    %2217 = vmatpush2.msra.mxu0 %v2044
    %2218 = vmatprep.subr.mxu0 0.0
    %2219 = vmatpush2.msra.mxu0 %v2043
    %2220 = vmatprep.subr.mxu0 0.0
    %2221 = vmatpush2.msra.mxu0 %v2042
    %2222 = vmatprep.subr.mxu0 0.0
    %2223 = vmatpush2.msra.mxu0 %v2041
    %2224 = vmatprep.subr.mxu0 0.0
    %2225 = vmatpush2.msra.mxu0 %v2040
    %2226 = vmatprep.subr.mxu0 0.0
    %2227 = vmatpush2.msra.mxu0 %v2039
    %2228 = vmatprep.subr.mxu0 0.0
    %2229 = vmatpush2.msra.mxu0 %v2038
    %2230 = vmatprep.mubr.f32.mxu0 %v1447
    %2231 = vmatmul.mubr.f32.gmra.mxu0 %v1446
    %v2232 = vpop.f32.mrf.mxu0
    %v2233 = vadd.f32 0.0, %v2232
    %v2234 = vpop.f32.mrf.mxu0
    %2235 = vmatprep.mubr.f32.mxu0 %v1456
    %2236 = vmatmul.mubr.f32.gmra.mxu0 %v1455
    %v2237 = vpop.f32.mrf.mxu0
    %v2238 = vadd.f32 0.0, %v2237
    %v2239 = vpop.f32.mrf.mxu0
    %2240 = vmatprep.mubr.f32.mxu0 %v1465
    %2241 = vmatmul.mubr.f32.gmra.mxu0 %v1464
    %v2242 = vpop.f32.mrf.mxu0
    %v2243 = vadd.f32 0.0, %v2242
    %v2244 = vpop.f32.mrf.mxu0
    %2245 = vmatprep.mubr.f32.mxu0 %v1474
    %2246 = vmatmul.mubr.f32.gmra.mxu0 %v1473
    %v2247 = vpop.f32.mrf.mxu0
    %v2248 = vadd.f32 0.0, %v2247
    %v2249 = vpop.f32.mrf.mxu0
    %2250 = vmatprep.mubr.f32.mxu0 %v1483
    %2251 = vmatmul.mubr.f32.gmra.mxu0 %v1482
    %v2252 = vpop.f32.mrf.mxu0
    %v2253 = vadd.f32 0.0, %v2252
    %v2254 = vpop.f32.mrf.mxu0
    %2255 = vmatprep.mubr.f32.mxu0 %v1492
    %2256 = vmatmul.mubr.f32.gmra.mxu0 %v1491
    %v2257 = vpop.f32.mrf.mxu0
    %v2258 = vadd.f32 0.0, %v2257
    %v2259 = vpop.f32.mrf.mxu0
    %2260 = vmatprep.mubr.f32.mxu0 %v1501
    %2261 = vmatmul.mubr.f32.gmra.mxu0 %v1500
    %v2262 = vpop.f32.mrf.mxu0
    %v2263 = vadd.f32 0.0, %v2262
    %v2264 = vpop.f32.mrf.mxu0
    %2265 = vmatprep.mubr.f32.mxu0 %v1510
    %2266 = vmatmul.mubr.f32.gmra.mxu0 %v1509
    %v2267 = vpop.f32.mrf.mxu0
    %v2268 = vadd.f32 0.0, %v2267
    %v2269 = vpop.f32.mrf.mxu0
    %2270 = vmatprep.mubr.f32.mxu0 %v1519
    %2271 = vmatmul.mubr.f32.gmra.mxu0 %v1518
    %v2272 = vpop.f32.mrf.mxu0
    %v2273 = vadd.f32 0.0, %v2272
    %v2274 = vpop.f32.mrf.mxu0
    %2275 = vmatprep.mubr.f32.mxu0 %v1528
    %2276 = vmatmul.mubr.f32.gmra.mxu0 %v1527
    %v2277 = vpop.f32.mrf.mxu0
    %v2278 = vadd.f32 0.0, %v2277
    %v2279 = vpop.f32.mrf.mxu0
    %2280 = vmatprep.mubr.f32.mxu0 %v1537
    %2281 = vmatmul.mubr.f32.gmra.mxu0 %v1536
    %v2282 = vpop.f32.mrf.mxu0
    %v2283 = vadd.f32 0.0, %v2282
    %v2284 = vpop.f32.mrf.mxu0
    %2285 = vmatprep.mubr.f32.mxu0 %v1546
    %2286 = vmatmul.mubr.f32.gmra.mxu0 %v1545
    %v2287 = vpop.f32.mrf.mxu0
    %v2288 = vadd.f32 0.0, %v2287
    %v2289 = vpop.f32.mrf.mxu0
    %2290 = vmatprep.mubr.f32.mxu0 %v1555
    %2291 = vmatmul.mubr.f32.gmra.mxu0 %v1554
    %v2292 = vpop.f32.mrf.mxu0
    %v2293 = vadd.f32 0.0, %v2292
    %v2294 = vpop.f32.mrf.mxu0
    %2295 = vmatprep.mubr.f32.mxu0 %v1564
    %2296 = vmatmul.mubr.f32.gmra.mxu0 %v1563
    %v2297 = vpop.f32.mrf.mxu0
    %v2298 = vadd.f32 0.0, %v2297
    %v2299 = vpop.f32.mrf.mxu0
    %2300 = vmatprep.mubr.f32.mxu0 %v1573
    %2301 = vmatmul.mubr.f32.gmra.mxu0 %v1572
    %v2302 = vpop.f32.mrf.mxu0
    %v2303 = vadd.f32 0.0, %v2302
    %v2304 = vpop.f32.mrf.mxu0
    %2305 = vmatprep.mubr.f32.mxu0 %v1582
    %2306 = vmatmul.mubr.f32.gmra.mxu0 %v1581
    %v2307 = vpop.f32.mrf.mxu0
    %v2308 = vadd.f32 0.0, %v2307
    %v2309 = vpop.f32.mrf.mxu0
    %2310 = vmatprep.mubr.f32.mxu0 %v1591
    %2311 = vmatmul.mubr.f32.gmra.mxu0 %v1590
    %v2312 = vpop.f32.mrf.mxu0
    %v2313 = vadd.f32 0.0, %v2312
    %v2314 = vpop.f32.mrf.mxu0
    %2315 = vmatprep.mubr.f32.mxu0 %v1600
    %2316 = vmatmul.mubr.f32.gmra.mxu0 %v1599
    %v2317 = vpop.f32.mrf.mxu0
    %v2318 = vadd.f32 0.0, %v2317
    %v2319 = vpop.f32.mrf.mxu0
    %2320 = vmatprep.mubr.f32.mxu0 %v1609
    %2321 = vmatmul.mubr.f32.gmra.mxu0 %v1608
    %v2322 = vpop.f32.mrf.mxu0
    %v2323 = vadd.f32 0.0, %v2322
    %v2324 = vpop.f32.mrf.mxu0
    %2325 = vmatprep.mubr.f32.mxu0 %v1618
    %2326 = vmatmul.mubr.f32.gmra.mxu0 %v1617
    %v2327 = vpop.f32.mrf.mxu0
    %v2328 = vadd.f32 0.0, %v2327
    %v2329 = vpop.f32.mrf.mxu0
    %2330 = vmatprep.mubr.f32.mxu0 %v1627
    %2331 = vmatmul.mubr.f32.gmra.mxu0 %v1626
    %v2332 = vpop.f32.mrf.mxu0
    %v2333 = vadd.f32 0.0, %v2332
    %v2334 = vpop.f32.mrf.mxu0
    %2335 = vmatprep.mubr.f32.mxu0 %v1636
    %2336 = vmatmul.mubr.f32.gmra.mxu0 %v1635
    %v2337 = vpop.f32.mrf.mxu0
    %v2338 = vadd.f32 0.0, %v2337
    %v2339 = vpop.f32.mrf.mxu0
    %2340 = vmatprep.mubr.f32.mxu0 %v1645
    %2341 = vmatmul.mubr.f32.gmra.mxu0 %v1644
    %v2342 = vpop.f32.mrf.mxu0
    %v2343 = vadd.f32 0.0, %v2342
    %v2344 = vpop.f32.mrf.mxu0
    %2345 = vmatprep.mubr.f32.mxu0 %v1654
    %2346 = vmatmul.mubr.f32.gmra.mxu0 %v1653
    %v2347 = vpop.f32.mrf.mxu0
    %v2348 = vadd.f32 0.0, %v2347
    %v2349 = vpop.f32.mrf.mxu0
    %2350 = vmatprep.mubr.f32.mxu0 %v1663
    %2351 = vmatmul.mubr.f32.gmra.mxu0 %v1662
    %v2352 = vpop.f32.mrf.mxu0
    %v2353 = vadd.f32 0.0, %v2352
    %v2354 = vpop.f32.mrf.mxu0
    %2355 = vmatprep.mubr.f32.mxu0 %v1672
    %2356 = vmatmul.mubr.f32.gmra.mxu0 %v1671
    %v2357 = vpop.f32.mrf.mxu0
    %v2358 = vadd.f32 0.0, %v2357
    %v2359 = vpop.f32.mrf.mxu0
    %2360 = vmatprep.mubr.f32.mxu0 %v1681
    %2361 = vmatmul.mubr.f32.gmra.mxu0 %v1680
    %v2362 = vpop.f32.mrf.mxu0
    %v2363 = vadd.f32 0.0, %v2362
    %v2364 = vpop.f32.mrf.mxu0
    %2365 = vmatprep.mubr.f32.mxu0 %v1690
    %2366 = vmatmul.mubr.f32.gmra.mxu0 %v1689
    %v2367 = vpop.f32.mrf.mxu0
    %v2368 = vadd.f32 0.0, %v2367
    %v2369 = vpop.f32.mrf.mxu0
    %2370 = vmatprep.mubr.f32.mxu0 %v1699
    %2371 = vmatmul.mubr.f32.gmra.mxu0 %v1698
    %v2372 = vpop.f32.mrf.mxu0
    %v2373 = vadd.f32 0.0, %v2372
    %v2374 = vpop.f32.mrf.mxu0
    %2375 = vmatprep.mubr.f32.mxu0 %v1708
    %2376 = vmatmul.mubr.f32.gmra.mxu0 %v1707
    %v2377 = vpop.f32.mrf.mxu0
    %v2378 = vadd.f32 0.0, %v2377
    %v2379 = vpop.f32.mrf.mxu0
    %2380 = vmatprep.mubr.f32.mxu0 %v1717
    %2381 = vmatmul.mubr.f32.gmra.mxu0 %v1716
    %v2382 = vpop.f32.mrf.mxu0
    %v2383 = vadd.f32 0.0, %v2382
    %v2384 = vpop.f32.mrf.mxu0
    %2385 = vmatprep.mubr.f32.mxu0 %v1726
    %2386 = vmatmul.mubr.f32.gmra.mxu0 %v1725
    %v2387 = vpop.f32.mrf.mxu0
    %v2388 = vadd.f32 0.0, %v2387
    %v2389 = vpop.f32.mrf.mxu0
    %2390 = vmatprep.mubr.f32.mxu0 %v1735
    %2391 = vmatmul.mubr.f32.gmra.mxu0 %v1734
    %v2392 = vpop.f32.mrf.mxu0
    %v2393 = vadd.f32 0.0, %v2392
    %v2394 = vpop.f32.mrf.mxu0
    %2395 = vmatprep.mubr.f32.mxu0 %v1744
    %2396 = vmatmul.mubr.f32.gmra.mxu0 %v1743
    %v2397 = vpop.f32.mrf.mxu0
    %v2398 = vadd.f32 0.0, %v2397
    %v2399 = vpop.f32.mrf.mxu0
    %2400 = vmatprep.mubr.f32.mxu0 %v1753
    %2401 = vmatmul.mubr.f32.gmra.mxu0 %v1752
    %v2402 = vpop.f32.mrf.mxu0
    %v2403 = vadd.f32 0.0, %v2402
    %v2404 = vpop.f32.mrf.mxu0
    %2405 = vmatprep.mubr.f32.mxu0 %v1762
    %2406 = vmatmul.mubr.f32.gmra.mxu0 %v1761
    %v2407 = vpop.f32.mrf.mxu0
    %v2408 = vadd.f32 0.0, %v2407
    %v2409 = vpop.f32.mrf.mxu0
    %2410 = vmatprep.mubr.f32.mxu0 %v1771
    %2411 = vmatmul.mubr.f32.gmra.mxu0 %v1770
    %v2412 = vpop.f32.mrf.mxu0
    %v2413 = vadd.f32 0.0, %v2412
    %v2414 = vpop.f32.mrf.mxu0
    %2415 = vmatprep.mubr.f32.mxu0 %v1780
    %2416 = vmatmul.mubr.f32.gmra.mxu0 %v1779
    %v2417 = vpop.f32.mrf.mxu0
    %v2418 = vadd.f32 0.0, %v2417
    %v2419 = vpop.f32.mrf.mxu0
    %2420 = vmatprep.mubr.f32.mxu0 %v1789
    %2421 = vmatmul.mubr.f32.gmra.mxu0 %v1788
    %v2422 = vpop.f32.mrf.mxu0
    %v2423 = vadd.f32 0.0, %v2422
    %v2424 = vpop.f32.mrf.mxu0
    %2425 = vmatprep.mubr.f32.mxu0 %v1798
    %2426 = vmatmul.mubr.f32.gmra.mxu0 %v1797
    %v2427 = vpop.f32.mrf.mxu0
    %v2428 = vadd.f32 0.0, %v2427
    %v2429 = vpop.f32.mrf.mxu0
    %2430 = vmatprep.mubr.f32.mxu0 %v1807
    %2431 = vmatmul.mubr.f32.gmra.mxu0 %v1806
    %v2432 = vpop.f32.mrf.mxu0
    %v2433 = vadd.f32 0.0, %v2432
    %v2434 = vpop.f32.mrf.mxu0
    %2435 = vmatprep.mubr.f32.mxu0 %v1816
    %2436 = vmatmul.mubr.f32.gmra.mxu0 %v1815
    %v2437 = vpop.f32.mrf.mxu0
    %v2438 = vadd.f32 0.0, %v2437
    %v2439 = vpop.f32.mrf.mxu0
    %2440 = vmatprep.mubr.f32.mxu0 %v1825
    %2441 = vmatmul.mubr.f32.gmra.mxu0 %v1824
    %v2442 = vpop.f32.mrf.mxu0
    %v2443 = vadd.f32 0.0, %v2442
    %v2444 = vpop.f32.mrf.mxu0
    %2445 = vmatprep.mubr.f32.mxu0 %v1834
    %2446 = vmatmul.mubr.f32.gmra.mxu0 %v1833
    %v2447 = vpop.f32.mrf.mxu0
    %v2448 = vadd.f32 0.0, %v2447
    %v2449 = vpop.f32.mrf.mxu0
    %2450 = vmatprep.mubr.f32.mxu0 %v1843
    %2451 = vmatmul.mubr.f32.gmra.mxu0 %v1842
    %v2452 = vpop.f32.mrf.mxu0
    %v2453 = vadd.f32 0.0, %v2452
    %v2454 = vpop.f32.mrf.mxu0
    %2455 = vmatprep.mubr.f32.mxu0 %v1852
    %2456 = vmatmul.mubr.f32.gmra.mxu0 %v1851
    %v2457 = vpop.f32.mrf.mxu0
    %v2458 = vadd.f32 0.0, %v2457
    %v2459 = vpop.f32.mrf.mxu0
    %2460 = vmatprep.mubr.f32.mxu0 %v1861
    %2461 = vmatmul.mubr.f32.gmra.mxu0 %v1860
    %v2462 = vpop.f32.mrf.mxu0
    %v2463 = vadd.f32 0.0, %v2462
    %v2464 = vpop.f32.mrf.mxu0
    %2465 = vmatprep.mubr.f32.mxu0 %v1870
    %2466 = vmatmul.mubr.f32.gmra.mxu0 %v1869
    %v2467 = vpop.f32.mrf.mxu0
    %v2468 = vadd.f32 0.0, %v2467
    %v2469 = vpop.f32.mrf.mxu0
    %2470 = vmatprep.mubr.f32.mxu0 %v1879
    %2471 = vmatmul.mubr.f32.gmra.mxu0 %v1878
    %v2472 = vpop.f32.mrf.mxu0
    %v2473 = vadd.f32 0.0, %v2472
    %v2474 = vpop.f32.mrf.mxu0
    %2475 = vmatprep.mubr.f32.mxu0 %v1888
    %2476 = vmatmul.mubr.f32.gmra.mxu0 %v1887
    %v2477 = vpop.f32.mrf.mxu0
    %v2478 = vadd.f32 0.0, %v2477
    %v2479 = vpop.f32.mrf.mxu0
    %2480 = vmatprep.mubr.f32.mxu0 %v1897
    %2481 = vmatmul.mubr.f32.gmra.mxu0 %v1896
    %v2482 = vpop.f32.mrf.mxu0
    %v2483 = vadd.f32 0.0, %v2482
    %v2484 = vpop.f32.mrf.mxu0
    %2485 = vmatprep.mubr.f32.mxu0 %v1906
    %2486 = vmatmul.mubr.f32.gmra.mxu0 %v1905
    %v2487 = vpop.f32.mrf.mxu0
    %v2488 = vadd.f32 0.0, %v2487
    %v2489 = vpop.f32.mrf.mxu0
    %2490 = vmatprep.mubr.f32.mxu0 %v1915
    %2491 = vmatmul.mubr.f32.gmra.mxu0 %v1914
    %v2492 = vpop.f32.mrf.mxu0
    %v2493 = vadd.f32 0.0, %v2492
    %v2494 = vpop.f32.mrf.mxu0
    %2495 = vmatprep.mubr.f32.mxu0 %v1924
    %2496 = vmatmul.mubr.f32.gmra.mxu0 %v1923
    %v2497 = vpop.f32.mrf.mxu0
    %v2498 = vadd.f32 0.0, %v2497
    %v2499 = vpop.f32.mrf.mxu0
    %2500 = vmatprep.mubr.f32.mxu0 %v1933
    %2501 = vmatmul.mubr.f32.gmra.mxu0 %v1932
    %v2502 = vpop.f32.mrf.mxu0
    %v2503 = vadd.f32 0.0, %v2502
    %v2504 = vpop.f32.mrf.mxu0
    %2505 = vmatprep.mubr.f32.mxu0 %v1942
    %2506 = vmatmul.mubr.f32.gmra.mxu0 %v1941
    %v2507 = vpop.f32.mrf.mxu0
    %v2508 = vadd.f32 0.0, %v2507
    %v2509 = vpop.f32.mrf.mxu0
    %2510 = vmatprep.mubr.f32.mxu0 %v1951
    %2511 = vmatmul.mubr.f32.gmra.mxu0 %v1950
    %v2512 = vpop.f32.mrf.mxu0
    %v2513 = vadd.f32 0.0, %v2512
    %v2514 = vpop.f32.mrf.mxu0
    %2515 = vmatprep.mubr.f32.mxu0 %v1960
    %2516 = vmatmul.mubr.f32.gmra.mxu0 %v1959
    %v2517 = vpop.f32.mrf.mxu0
    %v2518 = vadd.f32 0.0, %v2517
    %v2519 = vpop.f32.mrf.mxu0
    %2520 = vmatprep.mubr.f32.mxu0 %v1969
    %2521 = vmatmul.mubr.f32.gmra.mxu0 %v1968
    %v2522 = vpop.f32.mrf.mxu0
    %v2523 = vadd.f32 0.0, %v2522
    %v2524 = vpop.f32.mrf.mxu0
    %2525 = vmatprep.mubr.f32.mxu0 %v1978
    %2526 = vmatmul.mubr.f32.gmra.mxu0 %v1977
    %v2527 = vpop.f32.mrf.mxu0
    %v2528 = vadd.f32 0.0, %v2527
    %v2529 = vpop.f32.mrf.mxu0
    %2530 = vmatprep.mubr.f32.mxu0 %v1987
    %2531 = vmatmul.mubr.f32.gmra.mxu0 %v1986
    %v2532 = vpop.f32.mrf.mxu0
    %v2533 = vadd.f32 0.0, %v2532
    %v2534 = vpop.f32.mrf.mxu0
    %2535 = vmatprep.mubr.f32.mxu0 %v1996
    %2536 = vmatmul.mubr.f32.gmra.mxu0 %v1995
    %v2537 = vpop.f32.mrf.mxu0
    %v2538 = vadd.f32 0.0, %v2537
    %v2539 = vpop.f32.mrf.mxu0
    %2540 = vmatprep.mubr.f32.mxu0 %v2005
    %2541 = vmatmul.mubr.f32.gmra.mxu0 %v2004
    %v2542 = vpop.f32.mrf.mxu0
    %v2543 = vadd.f32 0.0, %v2542
    %v2544 = vpop.f32.mrf.mxu0
    %2545 = vmatprep.mubr.f32.mxu0 %v2014
    %2546 = vmatmul.mubr.f32.gmra.mxu0 %v2013
    %v2547 = vpop.f32.mrf.mxu0
    %v2548 = vadd.f32 0.0, %v2547
    %v2549 = vpop.f32.mrf.mxu0
    %2550 = vdwg.mxu0
    %2551 = vmatprep.subr.mxu0 0.0
    %2552 = vmatpush1.msra.mxu0 %v2069
    %2553 = vmatprep.subr.mxu0 0.0
    %2554 = vmatpush1.msra.mxu0 %v2068
    %2555 = vmatprep.subr.mxu0 0.0
    %2556 = vmatpush1.msra.mxu0 %v2067
    %2557 = vmatprep.subr.mxu0 0.0
    %2558 = vmatpush1.msra.mxu0 %v2066
    %2559 = vmatprep.subr.mxu0 0.0
    %2560 = vmatpush1.msra.mxu0 %v2065
    %2561 = vmatprep.subr.mxu0 0.0
    %2562 = vmatpush1.msra.mxu0 %v2064
    %2563 = vmatprep.subr.mxu0 0.0
    %2564 = vmatpush1.msra.mxu0 %v2063
    %2565 = vmatprep.subr.mxu0 0.0
    %2566 = vmatpush1.msra.mxu0 %v2062
    %2567 = vmatprep.subr.mxu0 0.0
    %2568 = vmatpush1.msra.mxu0 %v2061
    %2569 = vmatprep.subr.mxu0 0.0
    %2570 = vmatpush1.msra.mxu0 %v2060
    %2571 = vmatprep.subr.mxu0 0.0
    %2572 = vmatpush1.msra.mxu0 %v2059
    %2573 = vmatprep.subr.mxu0 0.0
    %2574 = vmatpush1.msra.mxu0 %v2058
    %2575 = vmatprep.subr.mxu0 0.0
    %2576 = vmatpush1.msra.mxu0 %v2057
    %2577 = vmatprep.subr.mxu0 0.0
    %2578 = vmatpush1.msra.mxu0 %v2056
    %2579 = vmatprep.subr.mxu0 0.0
    %2580 = vmatpush1.msra.mxu0 %v2055
    %2581 = vmatprep.subr.mxu0 0.0
    %2582 = vmatpush1.msra.mxu0 %v2054
    %2583 = vmatprep.subr.mxu0 0.0
    %2584 = vmatpush2.msra.mxu0 %v2085
    %2585 = vmatprep.subr.mxu0 0.0
    %2586 = vmatpush2.msra.mxu0 %v2084
    %2587 = vmatprep.subr.mxu0 0.0
    %2588 = vmatpush2.msra.mxu0 %v2083
    %2589 = vmatprep.subr.mxu0 0.0
    %2590 = vmatpush2.msra.mxu0 %v2082
    %2591 = vmatprep.subr.mxu0 0.0
    %2592 = vmatpush2.msra.mxu0 %v2081
    %2593 = vmatprep.subr.mxu0 0.0
    %2594 = vmatpush2.msra.mxu0 %v2080
    %2595 = vmatprep.subr.mxu0 0.0
    %2596 = vmatpush2.msra.mxu0 %v2079
    %2597 = vmatprep.subr.mxu0 0.0
    %2598 = vmatpush2.msra.mxu0 %v2078
    %2599 = vmatprep.subr.mxu0 0.0
    %2600 = vmatpush2.msra.mxu0 %v2077
    %2601 = vmatprep.subr.mxu0 0.0
    %2602 = vmatpush2.msra.mxu0 %v2076
    %2603 = vmatprep.subr.mxu0 0.0
    %2604 = vmatpush2.msra.mxu0 %v2075
    %2605 = vmatprep.subr.mxu0 0.0
    %2606 = vmatpush2.msra.mxu0 %v2074
    %2607 = vmatprep.subr.mxu0 0.0
    %2608 = vmatpush2.msra.mxu0 %v2073
    %2609 = vmatprep.subr.mxu0 0.0
    %2610 = vmatpush2.msra.mxu0 %v2072
    %2611 = vmatprep.subr.mxu0 0.0
    %2612 = vmatpush2.msra.mxu0 %v2071
    %2613 = vmatprep.subr.mxu0 0.0
    %2614 = vmatpush2.msra.mxu0 %v2070
    %2615 = vmatprep.mubr.f32.mxu0 %v1449
    %2616 = vmatmul.mubr.f32.gmra.mxu0 %v1448
    %v2617 = vpop.f32.mrf.mxu0
    %v2618 = vadd.f32 %v2233, %v2617
    %v2619 = vpop.f32.mrf.mxu0
    %2620 = vmatprep.mubr.f32.mxu0 %v1458
    %2621 = vmatmul.mubr.f32.gmra.mxu0 %v1457
    %v2622 = vpop.f32.mrf.mxu0
    %v2623 = vadd.f32 %v2238, %v2622
    %v2624 = vpop.f32.mrf.mxu0
    %2625 = vmatprep.mubr.f32.mxu0 %v1467
    %2626 = vmatmul.mubr.f32.gmra.mxu0 %v1466
    %v2627 = vpop.f32.mrf.mxu0
    %v2628 = vadd.f32 %v2243, %v2627
    %v2629 = vpop.f32.mrf.mxu0
    %2630 = vmatprep.mubr.f32.mxu0 %v1476
    %2631 = vmatmul.mubr.f32.gmra.mxu0 %v1475
    %v2632 = vpop.f32.mrf.mxu0
    %v2633 = vadd.f32 %v2248, %v2632
    %v2634 = vpop.f32.mrf.mxu0
    %2635 = vmatprep.mubr.f32.mxu0 %v1485
    %2636 = vmatmul.mubr.f32.gmra.mxu0 %v1484
    %v2637 = vpop.f32.mrf.mxu0
    %v2638 = vadd.f32 %v2253, %v2637
    %v2639 = vpop.f32.mrf.mxu0
    %2640 = vmatprep.mubr.f32.mxu0 %v1494
    %2641 = vmatmul.mubr.f32.gmra.mxu0 %v1493
    %v2642 = vpop.f32.mrf.mxu0
    %v2643 = vadd.f32 %v2258, %v2642
    %v2644 = vpop.f32.mrf.mxu0
    %2645 = vmatprep.mubr.f32.mxu0 %v1503
    %2646 = vmatmul.mubr.f32.gmra.mxu0 %v1502
    %v2647 = vpop.f32.mrf.mxu0
    %v2648 = vadd.f32 %v2263, %v2647
    %v2649 = vpop.f32.mrf.mxu0
    %2650 = vmatprep.mubr.f32.mxu0 %v1512
    %2651 = vmatmul.mubr.f32.gmra.mxu0 %v1511
    %v2652 = vpop.f32.mrf.mxu0
    %v2653 = vadd.f32 %v2268, %v2652
    %v2654 = vpop.f32.mrf.mxu0
    %2655 = vmatprep.mubr.f32.mxu0 %v1521
    %2656 = vmatmul.mubr.f32.gmra.mxu0 %v1520
    %v2657 = vpop.f32.mrf.mxu0
    %v2658 = vadd.f32 %v2273, %v2657
    %v2659 = vpop.f32.mrf.mxu0
    %2660 = vmatprep.mubr.f32.mxu0 %v1530
    %2661 = vmatmul.mubr.f32.gmra.mxu0 %v1529
    %v2662 = vpop.f32.mrf.mxu0
    %v2663 = vadd.f32 %v2278, %v2662
    %v2664 = vpop.f32.mrf.mxu0
    %2665 = vmatprep.mubr.f32.mxu0 %v1539
    %2666 = vmatmul.mubr.f32.gmra.mxu0 %v1538
    %v2667 = vpop.f32.mrf.mxu0
    %v2668 = vadd.f32 %v2283, %v2667
    %v2669 = vpop.f32.mrf.mxu0
    %2670 = vmatprep.mubr.f32.mxu0 %v1548
    %2671 = vmatmul.mubr.f32.gmra.mxu0 %v1547
    %v2672 = vpop.f32.mrf.mxu0
    %v2673 = vadd.f32 %v2288, %v2672
    %v2674 = vpop.f32.mrf.mxu0
    %2675 = vmatprep.mubr.f32.mxu0 %v1557
    %2676 = vmatmul.mubr.f32.gmra.mxu0 %v1556
    %v2677 = vpop.f32.mrf.mxu0
    %v2678 = vadd.f32 %v2293, %v2677
    %v2679 = vpop.f32.mrf.mxu0
    %2680 = vmatprep.mubr.f32.mxu0 %v1566
    %2681 = vmatmul.mubr.f32.gmra.mxu0 %v1565
    %v2682 = vpop.f32.mrf.mxu0
    %v2683 = vadd.f32 %v2298, %v2682
    %v2684 = vpop.f32.mrf.mxu0
    %2685 = vmatprep.mubr.f32.mxu0 %v1575
    %2686 = vmatmul.mubr.f32.gmra.mxu0 %v1574
    %v2687 = vpop.f32.mrf.mxu0
    %v2688 = vadd.f32 %v2303, %v2687
    %v2689 = vpop.f32.mrf.mxu0
    %2690 = vmatprep.mubr.f32.mxu0 %v1584
    %2691 = vmatmul.mubr.f32.gmra.mxu0 %v1583
    %v2692 = vpop.f32.mrf.mxu0
    %v2693 = vadd.f32 %v2308, %v2692
    %v2694 = vpop.f32.mrf.mxu0
    %2695 = vmatprep.mubr.f32.mxu0 %v1593
    %2696 = vmatmul.mubr.f32.gmra.mxu0 %v1592
    %v2697 = vpop.f32.mrf.mxu0
    %v2698 = vadd.f32 %v2313, %v2697
    %v2699 = vpop.f32.mrf.mxu0
    %2700 = vmatprep.mubr.f32.mxu0 %v1602
    %2701 = vmatmul.mubr.f32.gmra.mxu0 %v1601
    %v2702 = vpop.f32.mrf.mxu0
    %v2703 = vadd.f32 %v2318, %v2702
    %v2704 = vpop.f32.mrf.mxu0
    %2705 = vmatprep.mubr.f32.mxu0 %v1611
    %2706 = vmatmul.mubr.f32.gmra.mxu0 %v1610
    %v2707 = vpop.f32.mrf.mxu0
    %v2708 = vadd.f32 %v2323, %v2707
    %v2709 = vpop.f32.mrf.mxu0
    %2710 = vmatprep.mubr.f32.mxu0 %v1620
    %2711 = vmatmul.mubr.f32.gmra.mxu0 %v1619
    %v2712 = vpop.f32.mrf.mxu0
    %v2713 = vadd.f32 %v2328, %v2712
    %v2714 = vpop.f32.mrf.mxu0
    %2715 = vmatprep.mubr.f32.mxu0 %v1629
    %2716 = vmatmul.mubr.f32.gmra.mxu0 %v1628
    %v2717 = vpop.f32.mrf.mxu0
    %v2718 = vadd.f32 %v2333, %v2717
    %v2719 = vpop.f32.mrf.mxu0
    %2720 = vmatprep.mubr.f32.mxu0 %v1638
    %2721 = vmatmul.mubr.f32.gmra.mxu0 %v1637
    %v2722 = vpop.f32.mrf.mxu0
    %v2723 = vadd.f32 %v2338, %v2722
    %v2724 = vpop.f32.mrf.mxu0
    %2725 = vmatprep.mubr.f32.mxu0 %v1647
    %2726 = vmatmul.mubr.f32.gmra.mxu0 %v1646
    %v2727 = vpop.f32.mrf.mxu0
    %v2728 = vadd.f32 %v2343, %v2727
    %v2729 = vpop.f32.mrf.mxu0
    %2730 = vmatprep.mubr.f32.mxu0 %v1656
    %2731 = vmatmul.mubr.f32.gmra.mxu0 %v1655
    %v2732 = vpop.f32.mrf.mxu0
    %v2733 = vadd.f32 %v2348, %v2732
    %v2734 = vpop.f32.mrf.mxu0
    %2735 = vmatprep.mubr.f32.mxu0 %v1665
    %2736 = vmatmul.mubr.f32.gmra.mxu0 %v1664
    %v2737 = vpop.f32.mrf.mxu0
    %v2738 = vadd.f32 %v2353, %v2737
    %v2739 = vpop.f32.mrf.mxu0
    %2740 = vmatprep.mubr.f32.mxu0 %v1674
    %2741 = vmatmul.mubr.f32.gmra.mxu0 %v1673
    %v2742 = vpop.f32.mrf.mxu0
    %v2743 = vadd.f32 %v2358, %v2742
    %v2744 = vpop.f32.mrf.mxu0
    %2745 = vmatprep.mubr.f32.mxu0 %v1683
    %2746 = vmatmul.mubr.f32.gmra.mxu0 %v1682
    %v2747 = vpop.f32.mrf.mxu0
    %v2748 = vadd.f32 %v2363, %v2747
    %v2749 = vpop.f32.mrf.mxu0
    %2750 = vmatprep.mubr.f32.mxu0 %v1692
    %2751 = vmatmul.mubr.f32.gmra.mxu0 %v1691
    %v2752 = vpop.f32.mrf.mxu0
    %v2753 = vadd.f32 %v2368, %v2752
    %v2754 = vpop.f32.mrf.mxu0
    %2755 = vmatprep.mubr.f32.mxu0 %v1701
    %2756 = vmatmul.mubr.f32.gmra.mxu0 %v1700
    %v2757 = vpop.f32.mrf.mxu0
    %v2758 = vadd.f32 %v2373, %v2757
    %v2759 = vpop.f32.mrf.mxu0
    %2760 = vmatprep.mubr.f32.mxu0 %v1710
    %2761 = vmatmul.mubr.f32.gmra.mxu0 %v1709
    %v2762 = vpop.f32.mrf.mxu0
    %v2763 = vadd.f32 %v2378, %v2762
    %v2764 = vpop.f32.mrf.mxu0
    %2765 = vmatprep.mubr.f32.mxu0 %v1719
    %2766 = vmatmul.mubr.f32.gmra.mxu0 %v1718
    %v2767 = vpop.f32.mrf.mxu0
    %v2768 = vadd.f32 %v2383, %v2767
    %v2769 = vpop.f32.mrf.mxu0
    %2770 = vmatprep.mubr.f32.mxu0 %v1728
    %2771 = vmatmul.mubr.f32.gmra.mxu0 %v1727
    %v2772 = vpop.f32.mrf.mxu0
    %v2773 = vadd.f32 %v2388, %v2772
    %v2774 = vpop.f32.mrf.mxu0
    %2775 = vmatprep.mubr.f32.mxu0 %v1737
    %2776 = vmatmul.mubr.f32.gmra.mxu0 %v1736
    %v2777 = vpop.f32.mrf.mxu0
    %v2778 = vadd.f32 %v2393, %v2777
    %v2779 = vpop.f32.mrf.mxu0
    %2780 = vmatprep.mubr.f32.mxu0 %v1746
    %2781 = vmatmul.mubr.f32.gmra.mxu0 %v1745
    %v2782 = vpop.f32.mrf.mxu0
    %v2783 = vadd.f32 %v2398, %v2782
    %v2784 = vpop.f32.mrf.mxu0
    %2785 = vmatprep.mubr.f32.mxu0 %v1755
    %2786 = vmatmul.mubr.f32.gmra.mxu0 %v1754
    %v2787 = vpop.f32.mrf.mxu0
    %v2788 = vadd.f32 %v2403, %v2787
    %v2789 = vpop.f32.mrf.mxu0
    %2790 = vmatprep.mubr.f32.mxu0 %v1764
    %2791 = vmatmul.mubr.f32.gmra.mxu0 %v1763
    %v2792 = vpop.f32.mrf.mxu0
    %v2793 = vadd.f32 %v2408, %v2792
    %v2794 = vpop.f32.mrf.mxu0
    %2795 = vmatprep.mubr.f32.mxu0 %v1773
    %2796 = vmatmul.mubr.f32.gmra.mxu0 %v1772
    %v2797 = vpop.f32.mrf.mxu0
    %v2798 = vadd.f32 %v2413, %v2797
    %v2799 = vpop.f32.mrf.mxu0
    %2800 = vmatprep.mubr.f32.mxu0 %v1782
    %2801 = vmatmul.mubr.f32.gmra.mxu0 %v1781
    %v2802 = vpop.f32.mrf.mxu0
    %v2803 = vadd.f32 %v2418, %v2802
    %v2804 = vpop.f32.mrf.mxu0
    %2805 = vmatprep.mubr.f32.mxu0 %v1791
    %2806 = vmatmul.mubr.f32.gmra.mxu0 %v1790
    %v2807 = vpop.f32.mrf.mxu0
    %v2808 = vadd.f32 %v2423, %v2807
    %v2809 = vpop.f32.mrf.mxu0
    %2810 = vmatprep.mubr.f32.mxu0 %v1800
    %2811 = vmatmul.mubr.f32.gmra.mxu0 %v1799
    %v2812 = vpop.f32.mrf.mxu0
    %v2813 = vadd.f32 %v2428, %v2812
    %v2814 = vpop.f32.mrf.mxu0
    %2815 = vmatprep.mubr.f32.mxu0 %v1809
    %2816 = vmatmul.mubr.f32.gmra.mxu0 %v1808
    %v2817 = vpop.f32.mrf.mxu0
    %v2818 = vadd.f32 %v2433, %v2817
    %v2819 = vpop.f32.mrf.mxu0
    %2820 = vmatprep.mubr.f32.mxu0 %v1818
    %2821 = vmatmul.mubr.f32.gmra.mxu0 %v1817
    %v2822 = vpop.f32.mrf.mxu0
    %v2823 = vadd.f32 %v2438, %v2822
    %v2824 = vpop.f32.mrf.mxu0
    %2825 = vmatprep.mubr.f32.mxu0 %v1827
    %2826 = vmatmul.mubr.f32.gmra.mxu0 %v1826
    %v2827 = vpop.f32.mrf.mxu0
    %v2828 = vadd.f32 %v2443, %v2827
    %v2829 = vpop.f32.mrf.mxu0
    %2830 = vmatprep.mubr.f32.mxu0 %v1836
    %2831 = vmatmul.mubr.f32.gmra.mxu0 %v1835
    %v2832 = vpop.f32.mrf.mxu0
    %v2833 = vadd.f32 %v2448, %v2832
    %v2834 = vpop.f32.mrf.mxu0
    %2835 = vmatprep.mubr.f32.mxu0 %v1845
    %2836 = vmatmul.mubr.f32.gmra.mxu0 %v1844
    %v2837 = vpop.f32.mrf.mxu0
    %v2838 = vadd.f32 %v2453, %v2837
    %v2839 = vpop.f32.mrf.mxu0
    %2840 = vmatprep.mubr.f32.mxu0 %v1854
    %2841 = vmatmul.mubr.f32.gmra.mxu0 %v1853
    %v2842 = vpop.f32.mrf.mxu0
    %v2843 = vadd.f32 %v2458, %v2842
    %v2844 = vpop.f32.mrf.mxu0
    %2845 = vmatprep.mubr.f32.mxu0 %v1863
    %2846 = vmatmul.mubr.f32.gmra.mxu0 %v1862
    %v2847 = vpop.f32.mrf.mxu0
    %v2848 = vadd.f32 %v2463, %v2847
    %v2849 = vpop.f32.mrf.mxu0
    %2850 = vmatprep.mubr.f32.mxu0 %v1872
    %2851 = vmatmul.mubr.f32.gmra.mxu0 %v1871
    %v2852 = vpop.f32.mrf.mxu0
    %v2853 = vadd.f32 %v2468, %v2852
    %v2854 = vpop.f32.mrf.mxu0
    %2855 = vmatprep.mubr.f32.mxu0 %v1881
    %2856 = vmatmul.mubr.f32.gmra.mxu0 %v1880
    %v2857 = vpop.f32.mrf.mxu0
    %v2858 = vadd.f32 %v2473, %v2857
    %v2859 = vpop.f32.mrf.mxu0
    %2860 = vmatprep.mubr.f32.mxu0 %v1890
    %2861 = vmatmul.mubr.f32.gmra.mxu0 %v1889
    %v2862 = vpop.f32.mrf.mxu0
    %v2863 = vadd.f32 %v2478, %v2862
    %v2864 = vpop.f32.mrf.mxu0
    %2865 = vmatprep.mubr.f32.mxu0 %v1899
    %2866 = vmatmul.mubr.f32.gmra.mxu0 %v1898
    %v2867 = vpop.f32.mrf.mxu0
    %v2868 = vadd.f32 %v2483, %v2867
    %v2869 = vpop.f32.mrf.mxu0
    %2870 = vmatprep.mubr.f32.mxu0 %v1908
    %2871 = vmatmul.mubr.f32.gmra.mxu0 %v1907
    %v2872 = vpop.f32.mrf.mxu0
    %v2873 = vadd.f32 %v2488, %v2872
    %v2874 = vpop.f32.mrf.mxu0
    %2875 = vmatprep.mubr.f32.mxu0 %v1917
    %2876 = vmatmul.mubr.f32.gmra.mxu0 %v1916
    %v2877 = vpop.f32.mrf.mxu0
    %v2878 = vadd.f32 %v2493, %v2877
    %v2879 = vpop.f32.mrf.mxu0
    %2880 = vmatprep.mubr.f32.mxu0 %v1926
    %2881 = vmatmul.mubr.f32.gmra.mxu0 %v1925
    %v2882 = vpop.f32.mrf.mxu0
    %v2883 = vadd.f32 %v2498, %v2882
    %v2884 = vpop.f32.mrf.mxu0
    %2885 = vmatprep.mubr.f32.mxu0 %v1935
    %2886 = vmatmul.mubr.f32.gmra.mxu0 %v1934
    %v2887 = vpop.f32.mrf.mxu0
    %v2888 = vadd.f32 %v2503, %v2887
    %v2889 = vpop.f32.mrf.mxu0
    %2890 = vmatprep.mubr.f32.mxu0 %v1944
    %2891 = vmatmul.mubr.f32.gmra.mxu0 %v1943
    %v2892 = vpop.f32.mrf.mxu0
    %v2893 = vadd.f32 %v2508, %v2892
    %v2894 = vpop.f32.mrf.mxu0
    %2895 = vmatprep.mubr.f32.mxu0 %v1953
    %2896 = vmatmul.mubr.f32.gmra.mxu0 %v1952
    %v2897 = vpop.f32.mrf.mxu0
    %v2898 = vadd.f32 %v2513, %v2897
    %v2899 = vpop.f32.mrf.mxu0
    %2900 = vmatprep.mubr.f32.mxu0 %v1962
    %2901 = vmatmul.mubr.f32.gmra.mxu0 %v1961
    %v2902 = vpop.f32.mrf.mxu0
    %v2903 = vadd.f32 %v2518, %v2902
    %v2904 = vpop.f32.mrf.mxu0
    %2905 = vmatprep.mubr.f32.mxu0 %v1971
    %2906 = vmatmul.mubr.f32.gmra.mxu0 %v1970
    %v2907 = vpop.f32.mrf.mxu0
    %v2908 = vadd.f32 %v2523, %v2907
    %v2909 = vpop.f32.mrf.mxu0
    %2910 = vmatprep.mubr.f32.mxu0 %v1980
    %2911 = vmatmul.mubr.f32.gmra.mxu0 %v1979
    %v2912 = vpop.f32.mrf.mxu0
    %v2913 = vadd.f32 %v2528, %v2912
    %v2914 = vpop.f32.mrf.mxu0
    %2915 = vmatprep.mubr.f32.mxu0 %v1989
    %2916 = vmatmul.mubr.f32.gmra.mxu0 %v1988
    %v2917 = vpop.f32.mrf.mxu0
    %v2918 = vadd.f32 %v2533, %v2917
    %v2919 = vpop.f32.mrf.mxu0
    %2920 = vmatprep.mubr.f32.mxu0 %v1998
    %2921 = vmatmul.mubr.f32.gmra.mxu0 %v1997
    %v2922 = vpop.f32.mrf.mxu0
    %v2923 = vadd.f32 %v2538, %v2922
    %v2924 = vpop.f32.mrf.mxu0
    %2925 = vmatprep.mubr.f32.mxu0 %v2007
    %2926 = vmatmul.mubr.f32.gmra.mxu0 %v2006
    %v2927 = vpop.f32.mrf.mxu0
    %v2928 = vadd.f32 %v2543, %v2927
    %v2929 = vpop.f32.mrf.mxu0
    %2930 = vmatprep.mubr.f32.mxu0 %v2016
    %2931 = vmatmul.mubr.f32.gmra.mxu0 %v2015
    %v2932 = vpop.f32.mrf.mxu0
    %v2933 = vadd.f32 %v2548, %v2932
    %v2934 = vpop.f32.mrf.mxu0
    %2935 = vdwg.mxu0
    %2936 = vmatprep.subr.mxu0 0.0
    %2937 = vmatpush1.msra.mxu0 %v2101
    %2938 = vmatprep.subr.mxu0 0.0
    %2939 = vmatpush1.msra.mxu0 %v2100
    %2940 = vmatprep.subr.mxu0 0.0
    %2941 = vmatpush1.msra.mxu0 %v2099
    %2942 = vmatprep.subr.mxu0 0.0
    %2943 = vmatpush1.msra.mxu0 %v2098
    %2944 = vmatprep.subr.mxu0 0.0
    %2945 = vmatpush1.msra.mxu0 %v2097
    %2946 = vmatprep.subr.mxu0 0.0
    %2947 = vmatpush1.msra.mxu0 %v2096
    %2948 = vmatprep.subr.mxu0 0.0
    %2949 = vmatpush1.msra.mxu0 %v2095
    %2950 = vmatprep.subr.mxu0 0.0
    %2951 = vmatpush1.msra.mxu0 %v2094
    %2952 = vmatprep.subr.mxu0 0.0
    %2953 = vmatpush1.msra.mxu0 %v2093
    %2954 = vmatprep.subr.mxu0 0.0
    %2955 = vmatpush1.msra.mxu0 %v2092
    %2956 = vmatprep.subr.mxu0 0.0
    %2957 = vmatpush1.msra.mxu0 %v2091
    %2958 = vmatprep.subr.mxu0 0.0
    %2959 = vmatpush1.msra.mxu0 %v2090
    %2960 = vmatprep.subr.mxu0 0.0
    %2961 = vmatpush1.msra.mxu0 %v2089
    %2962 = vmatprep.subr.mxu0 0.0
    %2963 = vmatpush1.msra.mxu0 %v2088
    %2964 = vmatprep.subr.mxu0 0.0
    %2965 = vmatpush1.msra.mxu0 %v2087
    %2966 = vmatprep.subr.mxu0 0.0
    %2967 = vmatpush1.msra.mxu0 %v2086
    %2968 = vmatprep.subr.mxu0 0.0
    %2969 = vmatpush2.msra.mxu0 %v2117
    %2970 = vmatprep.subr.mxu0 0.0
    %2971 = vmatpush2.msra.mxu0 %v2116
    %2972 = vmatprep.subr.mxu0 0.0
    %2973 = vmatpush2.msra.mxu0 %v2115
    %2974 = vmatprep.subr.mxu0 0.0
    %2975 = vmatpush2.msra.mxu0 %v2114
    %2976 = vmatprep.subr.mxu0 0.0
    %2977 = vmatpush2.msra.mxu0 %v2113
    %2978 = vmatprep.subr.mxu0 0.0
    %2979 = vmatpush2.msra.mxu0 %v2112
    %2980 = vmatprep.subr.mxu0 0.0
    %2981 = vmatpush2.msra.mxu0 %v2111
    %2982 = vmatprep.subr.mxu0 0.0
    %2983 = vmatpush2.msra.mxu0 %v2110
    %2984 = vmatprep.subr.mxu0 0.0
    %2985 = vmatpush2.msra.mxu0 %v2109
    %2986 = vmatprep.subr.mxu0 0.0
    %2987 = vmatpush2.msra.mxu0 %v2108
    %2988 = vmatprep.subr.mxu0 0.0
    %2989 = vmatpush2.msra.mxu0 %v2107
    %2990 = vmatprep.subr.mxu0 0.0
    %2991 = vmatpush2.msra.mxu0 %v2106
    %2992 = vmatprep.subr.mxu0 0.0
    %2993 = vmatpush2.msra.mxu0 %v2105
    %2994 = vmatprep.subr.mxu0 0.0
    %2995 = vmatpush2.msra.mxu0 %v2104
    %2996 = vmatprep.subr.mxu0 0.0
    %2997 = vmatpush2.msra.mxu0 %v2103
    %2998 = vmatprep.subr.mxu0 0.0
    %2999 = vmatpush2.msra.mxu0 %v2102
    %3000 = vmatprep.mubr.f32.mxu0 %v1451
    %3001 = vmatmul.mubr.f32.gmra.mxu0 %v1450
    %v3002 = vpop.f32.mrf.mxu0
    %v3003 = vadd.f32 %v2618, %v3002
    %v3004 = vpop.f32.mrf.mxu0
    %3005 = vmatprep.mubr.f32.mxu0 %v1460
    %3006 = vmatmul.mubr.f32.gmra.mxu0 %v1459
    %v3007 = vpop.f32.mrf.mxu0
    %v3008 = vadd.f32 %v2623, %v3007
    %v3009 = vpop.f32.mrf.mxu0
    %3010 = vmatprep.mubr.f32.mxu0 %v1469
    %3011 = vmatmul.mubr.f32.gmra.mxu0 %v1468
    %v3012 = vpop.f32.mrf.mxu0
    %v3013 = vadd.f32 %v2628, %v3012
    %v3014 = vpop.f32.mrf.mxu0
    %3015 = vmatprep.mubr.f32.mxu0 %v1478
    %3016 = vmatmul.mubr.f32.gmra.mxu0 %v1477
    %v3017 = vpop.f32.mrf.mxu0
    %v3018 = vadd.f32 %v2633, %v3017
    %v3019 = vpop.f32.mrf.mxu0
    %3020 = vmatprep.mubr.f32.mxu0 %v1487
    %3021 = vmatmul.mubr.f32.gmra.mxu0 %v1486
    %v3022 = vpop.f32.mrf.mxu0
    %v3023 = vadd.f32 %v2638, %v3022
    %v3024 = vpop.f32.mrf.mxu0
    %3025 = vmatprep.mubr.f32.mxu0 %v1496
    %3026 = vmatmul.mubr.f32.gmra.mxu0 %v1495
    %v3027 = vpop.f32.mrf.mxu0
    %v3028 = vadd.f32 %v2643, %v3027
    %v3029 = vpop.f32.mrf.mxu0
    %3030 = vmatprep.mubr.f32.mxu0 %v1505
    %3031 = vmatmul.mubr.f32.gmra.mxu0 %v1504
    %v3032 = vpop.f32.mrf.mxu0
    %v3033 = vadd.f32 %v2648, %v3032
    %v3034 = vpop.f32.mrf.mxu0
    %3035 = vmatprep.mubr.f32.mxu0 %v1514
    %3036 = vmatmul.mubr.f32.gmra.mxu0 %v1513
    %v3037 = vpop.f32.mrf.mxu0
    %v3038 = vadd.f32 %v2653, %v3037
    %v3039 = vpop.f32.mrf.mxu0
    %3040 = vmatprep.mubr.f32.mxu0 %v1523
    %3041 = vmatmul.mubr.f32.gmra.mxu0 %v1522
    %v3042 = vpop.f32.mrf.mxu0
    %v3043 = vadd.f32 %v2658, %v3042
    %v3044 = vpop.f32.mrf.mxu0
    %3045 = vmatprep.mubr.f32.mxu0 %v1532
    %3046 = vmatmul.mubr.f32.gmra.mxu0 %v1531
    %v3047 = vpop.f32.mrf.mxu0
    %v3048 = vadd.f32 %v2663, %v3047
    %v3049 = vpop.f32.mrf.mxu0
    %3050 = vmatprep.mubr.f32.mxu0 %v1541
    %3051 = vmatmul.mubr.f32.gmra.mxu0 %v1540
    %v3052 = vpop.f32.mrf.mxu0
    %v3053 = vadd.f32 %v2668, %v3052
    %v3054 = vpop.f32.mrf.mxu0
    %3055 = vmatprep.mubr.f32.mxu0 %v1550
    %3056 = vmatmul.mubr.f32.gmra.mxu0 %v1549
    %v3057 = vpop.f32.mrf.mxu0
    %v3058 = vadd.f32 %v2673, %v3057
    %v3059 = vpop.f32.mrf.mxu0
    %3060 = vmatprep.mubr.f32.mxu0 %v1559
    %3061 = vmatmul.mubr.f32.gmra.mxu0 %v1558
    %v3062 = vpop.f32.mrf.mxu0
    %v3063 = vadd.f32 %v2678, %v3062
    %v3064 = vpop.f32.mrf.mxu0
    %3065 = vmatprep.mubr.f32.mxu0 %v1568
    %3066 = vmatmul.mubr.f32.gmra.mxu0 %v1567
    %v3067 = vpop.f32.mrf.mxu0
    %v3068 = vadd.f32 %v2683, %v3067
    %v3069 = vpop.f32.mrf.mxu0
    %3070 = vmatprep.mubr.f32.mxu0 %v1577
    %3071 = vmatmul.mubr.f32.gmra.mxu0 %v1576
    %v3072 = vpop.f32.mrf.mxu0
    %v3073 = vadd.f32 %v2688, %v3072
    %v3074 = vpop.f32.mrf.mxu0
    %3075 = vmatprep.mubr.f32.mxu0 %v1586
    %3076 = vmatmul.mubr.f32.gmra.mxu0 %v1585
    %v3077 = vpop.f32.mrf.mxu0
    %v3078 = vadd.f32 %v2693, %v3077
    %v3079 = vpop.f32.mrf.mxu0
    %3080 = vmatprep.mubr.f32.mxu0 %v1595
    %3081 = vmatmul.mubr.f32.gmra.mxu0 %v1594
    %v3082 = vpop.f32.mrf.mxu0
    %v3083 = vadd.f32 %v2698, %v3082
    %v3084 = vpop.f32.mrf.mxu0
    %3085 = vmatprep.mubr.f32.mxu0 %v1604
    %3086 = vmatmul.mubr.f32.gmra.mxu0 %v1603
    %v3087 = vpop.f32.mrf.mxu0
    %v3088 = vadd.f32 %v2703, %v3087
    %v3089 = vpop.f32.mrf.mxu0
    %3090 = vmatprep.mubr.f32.mxu0 %v1613
    %3091 = vmatmul.mubr.f32.gmra.mxu0 %v1612
    %v3092 = vpop.f32.mrf.mxu0
    %v3093 = vadd.f32 %v2708, %v3092
    %v3094 = vpop.f32.mrf.mxu0
    %3095 = vmatprep.mubr.f32.mxu0 %v1622
    %3096 = vmatmul.mubr.f32.gmra.mxu0 %v1621
    %v3097 = vpop.f32.mrf.mxu0
    %v3098 = vadd.f32 %v2713, %v3097
    %v3099 = vpop.f32.mrf.mxu0
    %3100 = vmatprep.mubr.f32.mxu0 %v1631
    %3101 = vmatmul.mubr.f32.gmra.mxu0 %v1630
    %v3102 = vpop.f32.mrf.mxu0
    %v3103 = vadd.f32 %v2718, %v3102
    %v3104 = vpop.f32.mrf.mxu0
    %3105 = vmatprep.mubr.f32.mxu0 %v1640
    %3106 = vmatmul.mubr.f32.gmra.mxu0 %v1639
    %v3107 = vpop.f32.mrf.mxu0
    %v3108 = vadd.f32 %v2723, %v3107
    %v3109 = vpop.f32.mrf.mxu0
    %3110 = vmatprep.mubr.f32.mxu0 %v1649
    %3111 = vmatmul.mubr.f32.gmra.mxu0 %v1648
    %v3112 = vpop.f32.mrf.mxu0
    %v3113 = vadd.f32 %v2728, %v3112
    %v3114 = vpop.f32.mrf.mxu0
    %3115 = vmatprep.mubr.f32.mxu0 %v1658
    %3116 = vmatmul.mubr.f32.gmra.mxu0 %v1657
    %v3117 = vpop.f32.mrf.mxu0
    %v3118 = vadd.f32 %v2733, %v3117
    %v3119 = vpop.f32.mrf.mxu0
    %3120 = vmatprep.mubr.f32.mxu0 %v1667
    %3121 = vmatmul.mubr.f32.gmra.mxu0 %v1666
    %v3122 = vpop.f32.mrf.mxu0
    %v3123 = vadd.f32 %v2738, %v3122
    %v3124 = vpop.f32.mrf.mxu0
    %3125 = vmatprep.mubr.f32.mxu0 %v1676
    %3126 = vmatmul.mubr.f32.gmra.mxu0 %v1675
    %v3127 = vpop.f32.mrf.mxu0
    %v3128 = vadd.f32 %v2743, %v3127
    %v3129 = vpop.f32.mrf.mxu0
    %3130 = vmatprep.mubr.f32.mxu0 %v1685
    %3131 = vmatmul.mubr.f32.gmra.mxu0 %v1684
    %v3132 = vpop.f32.mrf.mxu0
    %v3133 = vadd.f32 %v2748, %v3132
    %v3134 = vpop.f32.mrf.mxu0
    %3135 = vmatprep.mubr.f32.mxu0 %v1694
    %3136 = vmatmul.mubr.f32.gmra.mxu0 %v1693
    %v3137 = vpop.f32.mrf.mxu0
    %v3138 = vadd.f32 %v2753, %v3137
    %v3139 = vpop.f32.mrf.mxu0
    %3140 = vmatprep.mubr.f32.mxu0 %v1703
    %3141 = vmatmul.mubr.f32.gmra.mxu0 %v1702
    %v3142 = vpop.f32.mrf.mxu0
    %v3143 = vadd.f32 %v2758, %v3142
    %v3144 = vpop.f32.mrf.mxu0
    %3145 = vmatprep.mubr.f32.mxu0 %v1712
    %3146 = vmatmul.mubr.f32.gmra.mxu0 %v1711
    %v3147 = vpop.f32.mrf.mxu0
    %v3148 = vadd.f32 %v2763, %v3147
    %v3149 = vpop.f32.mrf.mxu0
    %3150 = vmatprep.mubr.f32.mxu0 %v1721
    %3151 = vmatmul.mubr.f32.gmra.mxu0 %v1720
    %v3152 = vpop.f32.mrf.mxu0
    %v3153 = vadd.f32 %v2768, %v3152
    %v3154 = vpop.f32.mrf.mxu0
    %3155 = vmatprep.mubr.f32.mxu0 %v1730
    %3156 = vmatmul.mubr.f32.gmra.mxu0 %v1729
    %v3157 = vpop.f32.mrf.mxu0
    %v3158 = vadd.f32 %v2773, %v3157
    %v3159 = vpop.f32.mrf.mxu0
    %3160 = vmatprep.mubr.f32.mxu0 %v1739
    %3161 = vmatmul.mubr.f32.gmra.mxu0 %v1738
    %v3162 = vpop.f32.mrf.mxu0
    %v3163 = vadd.f32 %v2778, %v3162
    %v3164 = vpop.f32.mrf.mxu0
    %3165 = vmatprep.mubr.f32.mxu0 %v1748
    %3166 = vmatmul.mubr.f32.gmra.mxu0 %v1747
    %v3167 = vpop.f32.mrf.mxu0
    %v3168 = vadd.f32 %v2783, %v3167
    %v3169 = vpop.f32.mrf.mxu0
    %3170 = vmatprep.mubr.f32.mxu0 %v1757
    %3171 = vmatmul.mubr.f32.gmra.mxu0 %v1756
    %v3172 = vpop.f32.mrf.mxu0
    %v3173 = vadd.f32 %v2788, %v3172
    %v3174 = vpop.f32.mrf.mxu0
    %3175 = vmatprep.mubr.f32.mxu0 %v1766
    %3176 = vmatmul.mubr.f32.gmra.mxu0 %v1765
    %v3177 = vpop.f32.mrf.mxu0
    %v3178 = vadd.f32 %v2793, %v3177
    %v3179 = vpop.f32.mrf.mxu0
    %3180 = vmatprep.mubr.f32.mxu0 %v1775
    %3181 = vmatmul.mubr.f32.gmra.mxu0 %v1774
    %v3182 = vpop.f32.mrf.mxu0
    %v3183 = vadd.f32 %v2798, %v3182
    %v3184 = vpop.f32.mrf.mxu0
    %3185 = vmatprep.mubr.f32.mxu0 %v1784
    %3186 = vmatmul.mubr.f32.gmra.mxu0 %v1783
    %v3187 = vpop.f32.mrf.mxu0
    %v3188 = vadd.f32 %v2803, %v3187
    %v3189 = vpop.f32.mrf.mxu0
    %3190 = vmatprep.mubr.f32.mxu0 %v1793
    %3191 = vmatmul.mubr.f32.gmra.mxu0 %v1792
    %v3192 = vpop.f32.mrf.mxu0
    %v3193 = vadd.f32 %v2808, %v3192
    %v3194 = vpop.f32.mrf.mxu0
    %3195 = vmatprep.mubr.f32.mxu0 %v1802
    %3196 = vmatmul.mubr.f32.gmra.mxu0 %v1801
    %v3197 = vpop.f32.mrf.mxu0
    %v3198 = vadd.f32 %v2813, %v3197
    %v3199 = vpop.f32.mrf.mxu0
    %3200 = vmatprep.mubr.f32.mxu0 %v1811
    %3201 = vmatmul.mubr.f32.gmra.mxu0 %v1810
    %v3202 = vpop.f32.mrf.mxu0
    %v3203 = vadd.f32 %v2818, %v3202
    %v3204 = vpop.f32.mrf.mxu0
    %3205 = vmatprep.mubr.f32.mxu0 %v1820
    %3206 = vmatmul.mubr.f32.gmra.mxu0 %v1819
    %v3207 = vpop.f32.mrf.mxu0
    %v3208 = vadd.f32 %v2823, %v3207
    %v3209 = vpop.f32.mrf.mxu0
    %3210 = vmatprep.mubr.f32.mxu0 %v1829
    %3211 = vmatmul.mubr.f32.gmra.mxu0 %v1828
    %v3212 = vpop.f32.mrf.mxu0
    %v3213 = vadd.f32 %v2828, %v3212
    %v3214 = vpop.f32.mrf.mxu0
    %3215 = vmatprep.mubr.f32.mxu0 %v1838
    %3216 = vmatmul.mubr.f32.gmra.mxu0 %v1837
    %v3217 = vpop.f32.mrf.mxu0
    %v3218 = vadd.f32 %v2833, %v3217
    %v3219 = vpop.f32.mrf.mxu0
    %3220 = vmatprep.mubr.f32.mxu0 %v1847
    %3221 = vmatmul.mubr.f32.gmra.mxu0 %v1846
    %v3222 = vpop.f32.mrf.mxu0
    %v3223 = vadd.f32 %v2838, %v3222
    %v3224 = vpop.f32.mrf.mxu0
    %3225 = vmatprep.mubr.f32.mxu0 %v1856
    %3226 = vmatmul.mubr.f32.gmra.mxu0 %v1855
    %v3227 = vpop.f32.mrf.mxu0
    %v3228 = vadd.f32 %v2843, %v3227
    %v3229 = vpop.f32.mrf.mxu0
    %3230 = vmatprep.mubr.f32.mxu0 %v1865
    %3231 = vmatmul.mubr.f32.gmra.mxu0 %v1864
    %v3232 = vpop.f32.mrf.mxu0
    %v3233 = vadd.f32 %v2848, %v3232
    %v3234 = vpop.f32.mrf.mxu0
    %3235 = vmatprep.mubr.f32.mxu0 %v1874
    %3236 = vmatmul.mubr.f32.gmra.mxu0 %v1873
    %v3237 = vpop.f32.mrf.mxu0
    %v3238 = vadd.f32 %v2853, %v3237
    %v3239 = vpop.f32.mrf.mxu0
    %3240 = vmatprep.mubr.f32.mxu0 %v1883
    %3241 = vmatmul.mubr.f32.gmra.mxu0 %v1882
    %v3242 = vpop.f32.mrf.mxu0
    %v3243 = vadd.f32 %v2858, %v3242
    %v3244 = vpop.f32.mrf.mxu0
    %3245 = vmatprep.mubr.f32.mxu0 %v1892
    %3246 = vmatmul.mubr.f32.gmra.mxu0 %v1891
    %v3247 = vpop.f32.mrf.mxu0
    %v3248 = vadd.f32 %v2863, %v3247
    %v3249 = vpop.f32.mrf.mxu0
    %3250 = vmatprep.mubr.f32.mxu0 %v1901
    %3251 = vmatmul.mubr.f32.gmra.mxu0 %v1900
    %v3252 = vpop.f32.mrf.mxu0
    %v3253 = vadd.f32 %v2868, %v3252
    %v3254 = vpop.f32.mrf.mxu0
    %3255 = vmatprep.mubr.f32.mxu0 %v1910
    %3256 = vmatmul.mubr.f32.gmra.mxu0 %v1909
    %v3257 = vpop.f32.mrf.mxu0
    %v3258 = vadd.f32 %v2873, %v3257
    %v3259 = vpop.f32.mrf.mxu0
    %3260 = vmatprep.mubr.f32.mxu0 %v1919
    %3261 = vmatmul.mubr.f32.gmra.mxu0 %v1918
    %v3262 = vpop.f32.mrf.mxu0
    %v3263 = vadd.f32 %v2878, %v3262
    %v3264 = vpop.f32.mrf.mxu0
    %3265 = vmatprep.mubr.f32.mxu0 %v1928
    %3266 = vmatmul.mubr.f32.gmra.mxu0 %v1927
    %v3267 = vpop.f32.mrf.mxu0
    %v3268 = vadd.f32 %v2883, %v3267
    %v3269 = vpop.f32.mrf.mxu0
    %3270 = vmatprep.mubr.f32.mxu0 %v1937
    %3271 = vmatmul.mubr.f32.gmra.mxu0 %v1936
    %v3272 = vpop.f32.mrf.mxu0
    %v3273 = vadd.f32 %v2888, %v3272
    %v3274 = vpop.f32.mrf.mxu0
    %3275 = vmatprep.mubr.f32.mxu0 %v1946
    %3276 = vmatmul.mubr.f32.gmra.mxu0 %v1945
    %v3277 = vpop.f32.mrf.mxu0
    %v3278 = vadd.f32 %v2893, %v3277
    %v3279 = vpop.f32.mrf.mxu0
    %3280 = vmatprep.mubr.f32.mxu0 %v1955
    %3281 = vmatmul.mubr.f32.gmra.mxu0 %v1954
    %v3282 = vpop.f32.mrf.mxu0
    %v3283 = vadd.f32 %v2898, %v3282
    %v3284 = vpop.f32.mrf.mxu0
    %3285 = vmatprep.mubr.f32.mxu0 %v1964
    %3286 = vmatmul.mubr.f32.gmra.mxu0 %v1963
    %v3287 = vpop.f32.mrf.mxu0
    %v3288 = vadd.f32 %v2903, %v3287
    %v3289 = vpop.f32.mrf.mxu0
    %3290 = vmatprep.mubr.f32.mxu0 %v1973
    %3291 = vmatmul.mubr.f32.gmra.mxu0 %v1972
    %v3292 = vpop.f32.mrf.mxu0
    %v3293 = vadd.f32 %v2908, %v3292
    %v3294 = vpop.f32.mrf.mxu0
    %3295 = vmatprep.mubr.f32.mxu0 %v1982
    %3296 = vmatmul.mubr.f32.gmra.mxu0 %v1981
    %v3297 = vpop.f32.mrf.mxu0
    %v3298 = vadd.f32 %v2913, %v3297
    %v3299 = vpop.f32.mrf.mxu0
    %3300 = vmatprep.mubr.f32.mxu0 %v1991
    %3301 = vmatmul.mubr.f32.gmra.mxu0 %v1990
    %v3302 = vpop.f32.mrf.mxu0
    %v3303 = vadd.f32 %v2918, %v3302
    %v3304 = vpop.f32.mrf.mxu0
    %3305 = vmatprep.mubr.f32.mxu0 %v2000
    %3306 = vmatmul.mubr.f32.gmra.mxu0 %v1999
    %v3307 = vpop.f32.mrf.mxu0
    %v3308 = vadd.f32 %v2923, %v3307
    %v3309 = vpop.f32.mrf.mxu0
    %3310 = vmatprep.mubr.f32.mxu0 %v2009
    %3311 = vmatmul.mubr.f32.gmra.mxu0 %v2008
    %v3312 = vpop.f32.mrf.mxu0
    %v3313 = vadd.f32 %v2928, %v3312
    %v3314 = vpop.f32.mrf.mxu0
    %3315 = vmatprep.mubr.f32.mxu0 %v2018
    %3316 = vmatmul.mubr.f32.gmra.mxu0 %v2017
    %v3317 = vpop.f32.mrf.mxu0
    %v3318 = vadd.f32 %v2933, %v3317
    %v3319 = vpop.f32.mrf.mxu0
    %3320 = vdwg.mxu0
    %3321 = vmatprep.subr.mxu0 0.0
    %3322 = vmatpush1.msra.mxu0 %v2133
    %3323 = vmatprep.subr.mxu0 0.0
    %3324 = vmatpush1.msra.mxu0 %v2132
    %3325 = vmatprep.subr.mxu0 0.0
    %3326 = vmatpush1.msra.mxu0 %v2131
    %3327 = vmatprep.subr.mxu0 0.0
    %3328 = vmatpush1.msra.mxu0 %v2130
    %3329 = vmatprep.subr.mxu0 0.0
    %3330 = vmatpush1.msra.mxu0 %v2129
    %3331 = vmatprep.subr.mxu0 0.0
    %3332 = vmatpush1.msra.mxu0 %v2128
    %3333 = vmatprep.subr.mxu0 0.0
    %3334 = vmatpush1.msra.mxu0 %v2127
    %3335 = vmatprep.subr.mxu0 0.0
    %3336 = vmatpush1.msra.mxu0 %v2126
    %3337 = vmatprep.subr.mxu0 0.0
    %3338 = vmatpush1.msra.mxu0 %v2125
    %3339 = vmatprep.subr.mxu0 0.0
    %3340 = vmatpush1.msra.mxu0 %v2124
    %3341 = vmatprep.subr.mxu0 0.0
    %3342 = vmatpush1.msra.mxu0 %v2123
    %3343 = vmatprep.subr.mxu0 0.0
    %3344 = vmatpush1.msra.mxu0 %v2122
    %3345 = vmatprep.subr.mxu0 0.0
    %3346 = vmatpush1.msra.mxu0 %v2121
    %3347 = vmatprep.subr.mxu0 0.0
    %3348 = vmatpush1.msra.mxu0 %v2120
    %3349 = vmatprep.subr.mxu0 0.0
    %3350 = vmatpush1.msra.mxu0 %v2119
    %3351 = vmatprep.subr.mxu0 0.0
    %3352 = vmatpush1.msra.mxu0 %v2118
    %3353 = vmatprep.subr.mxu0 0.0
    %3354 = vmatpush2.msra.mxu0 %v2149
    %3355 = vmatprep.subr.mxu0 0.0
    %3356 = vmatpush2.msra.mxu0 %v2148
    %3357 = vmatprep.subr.mxu0 0.0
    %3358 = vmatpush2.msra.mxu0 %v2147
    %3359 = vmatprep.subr.mxu0 0.0
    %3360 = vmatpush2.msra.mxu0 %v2146
    %3361 = vmatprep.subr.mxu0 0.0
    %3362 = vmatpush2.msra.mxu0 %v2145
    %3363 = vmatprep.subr.mxu0 0.0
    %3364 = vmatpush2.msra.mxu0 %v2144
    %3365 = vmatprep.subr.mxu0 0.0
    %3366 = vmatpush2.msra.mxu0 %v2143
    %3367 = vmatprep.subr.mxu0 0.0
    %3368 = vmatpush2.msra.mxu0 %v2142
    %3369 = vmatprep.subr.mxu0 0.0
    %3370 = vmatpush2.msra.mxu0 %v2141
    %3371 = vmatprep.subr.mxu0 0.0
    %3372 = vmatpush2.msra.mxu0 %v2140
    %3373 = vmatprep.subr.mxu0 0.0
    %3374 = vmatpush2.msra.mxu0 %v2139
    %3375 = vmatprep.subr.mxu0 0.0
    %3376 = vmatpush2.msra.mxu0 %v2138
    %3377 = vmatprep.subr.mxu0 0.0
    %3378 = vmatpush2.msra.mxu0 %v2137
    %3379 = vmatprep.subr.mxu0 0.0
    %3380 = vmatpush2.msra.mxu0 %v2136
    %3381 = vmatprep.subr.mxu0 0.0
    %3382 = vmatpush2.msra.mxu0 %v2135
    %3383 = vmatprep.subr.mxu0 0.0
    %3384 = vmatpush2.msra.mxu0 %v2134
    %3385 = vmatprep.mubr.f32.mxu0 %v1453
    %3386 = vmatmul.mubr.f32.gmra.mxu0 %v1452
    %v3387 = vpop.f32.mrf.mxu0
    %v3388 = vadd.f32 %v3003, %v3387
    %v3389 = vpop.f32.mrf.mxu0
    %3390 = vmatprep.mubr.f32.mxu0 %v1462
    %3391 = vmatmul.mubr.f32.gmra.mxu0 %v1461
    %v3392 = vpop.f32.mrf.mxu0
    %v3393 = vadd.f32 %v3008, %v3392
    %v3394 = vpop.f32.mrf.mxu0
    %3395 = vmatprep.mubr.f32.mxu0 %v1471
    %3396 = vmatmul.mubr.f32.gmra.mxu0 %v1470
    %v3397 = vpop.f32.mrf.mxu0
    %v3398 = vadd.f32 %v3013, %v3397
    %v3399 = vpop.f32.mrf.mxu0
    %3400 = vmatprep.mubr.f32.mxu0 %v1480
    %3401 = vmatmul.mubr.f32.gmra.mxu0 %v1479
    %v3402 = vpop.f32.mrf.mxu0
    %v3403 = vadd.f32 %v3018, %v3402
    %v3404 = vpop.f32.mrf.mxu0
    %3405 = vmatprep.mubr.f32.mxu0 %v1489
    %3406 = vmatmul.mubr.f32.gmra.mxu0 %v1488
    %v3407 = vpop.f32.mrf.mxu0
    %v3408 = vadd.f32 %v3023, %v3407
    %v3409 = vpop.f32.mrf.mxu0
    %3410 = vmatprep.mubr.f32.mxu0 %v1498
    %3411 = vmatmul.mubr.f32.gmra.mxu0 %v1497
    %v3412 = vpop.f32.mrf.mxu0
    %v3413 = vadd.f32 %v3028, %v3412
    %v3414 = vpop.f32.mrf.mxu0
    %3415 = vmatprep.mubr.f32.mxu0 %v1507
    %3416 = vmatmul.mubr.f32.gmra.mxu0 %v1506
    %v3417 = vpop.f32.mrf.mxu0
    %v3418 = vadd.f32 %v3033, %v3417
    %v3419 = vpop.f32.mrf.mxu0
    %3420 = vmatprep.mubr.f32.mxu0 %v1516
    %3421 = vmatmul.mubr.f32.gmra.mxu0 %v1515
    %v3422 = vpop.f32.mrf.mxu0
    %v3423 = vadd.f32 %v3038, %v3422
    %v3424 = vpop.f32.mrf.mxu0
    %3425 = vmatprep.mubr.f32.mxu0 %v1525
    %3426 = vmatmul.mubr.f32.gmra.mxu0 %v1524
    %v3427 = vpop.f32.mrf.mxu0
    %v3428 = vadd.f32 %v3043, %v3427
    %v3429 = vpop.f32.mrf.mxu0
    %3430 = vmatprep.mubr.f32.mxu0 %v1534
    %3431 = vmatmul.mubr.f32.gmra.mxu0 %v1533
    %v3432 = vpop.f32.mrf.mxu0
    %v3433 = vadd.f32 %v3048, %v3432
    %v3434 = vpop.f32.mrf.mxu0
    %3435 = vmatprep.mubr.f32.mxu0 %v1543
    %3436 = vmatmul.mubr.f32.gmra.mxu0 %v1542
    %v3437 = vpop.f32.mrf.mxu0
    %v3438 = vadd.f32 %v3053, %v3437
    %v3439 = vpop.f32.mrf.mxu0
    %3440 = vmatprep.mubr.f32.mxu0 %v1552
    %3441 = vmatmul.mubr.f32.gmra.mxu0 %v1551
    %v3442 = vpop.f32.mrf.mxu0
    %v3443 = vadd.f32 %v3058, %v3442
    %v3444 = vpop.f32.mrf.mxu0
    %3445 = vmatprep.mubr.f32.mxu0 %v1561
    %3446 = vmatmul.mubr.f32.gmra.mxu0 %v1560
    %v3447 = vpop.f32.mrf.mxu0
    %v3448 = vadd.f32 %v3063, %v3447
    %v3449 = vpop.f32.mrf.mxu0
    %3450 = vmatprep.mubr.f32.mxu0 %v1570
    %3451 = vmatmul.mubr.f32.gmra.mxu0 %v1569
    %v3452 = vpop.f32.mrf.mxu0
    %v3453 = vadd.f32 %v3068, %v3452
    %v3454 = vpop.f32.mrf.mxu0
    %3455 = vmatprep.mubr.f32.mxu0 %v1579
    %3456 = vmatmul.mubr.f32.gmra.mxu0 %v1578
    %v3457 = vpop.f32.mrf.mxu0
    %v3458 = vadd.f32 %v3073, %v3457
    %v3459 = vpop.f32.mrf.mxu0
    %3460 = vmatprep.mubr.f32.mxu0 %v1588
    %3461 = vmatmul.mubr.f32.gmra.mxu0 %v1587
    %v3462 = vpop.f32.mrf.mxu0
    %v3463 = vadd.f32 %v3078, %v3462
    %v3464 = vpop.f32.mrf.mxu0
    %3465 = vmatprep.mubr.f32.mxu0 %v1597
    %3466 = vmatmul.mubr.f32.gmra.mxu0 %v1596
    %v3467 = vpop.f32.mrf.mxu0
    %v3468 = vadd.f32 %v3083, %v3467
    %v3469 = vpop.f32.mrf.mxu0
    %3470 = vmatprep.mubr.f32.mxu0 %v1606
    %3471 = vmatmul.mubr.f32.gmra.mxu0 %v1605
    %v3472 = vpop.f32.mrf.mxu0
    %v3473 = vadd.f32 %v3088, %v3472
    %v3474 = vpop.f32.mrf.mxu0
    %3475 = vmatprep.mubr.f32.mxu0 %v1615
    %3476 = vmatmul.mubr.f32.gmra.mxu0 %v1614
    %v3477 = vpop.f32.mrf.mxu0
    %v3478 = vadd.f32 %v3093, %v3477
    %v3479 = vpop.f32.mrf.mxu0
    %3480 = vmatprep.mubr.f32.mxu0 %v1624
    %3481 = vmatmul.mubr.f32.gmra.mxu0 %v1623
    %v3482 = vpop.f32.mrf.mxu0
    %v3483 = vadd.f32 %v3098, %v3482
    %v3484 = vpop.f32.mrf.mxu0
    %3485 = vmatprep.mubr.f32.mxu0 %v1633
    %3486 = vmatmul.mubr.f32.gmra.mxu0 %v1632
    %v3487 = vpop.f32.mrf.mxu0
    %v3488 = vadd.f32 %v3103, %v3487
    %v3489 = vpop.f32.mrf.mxu0
    %3490 = vmatprep.mubr.f32.mxu0 %v1642
    %3491 = vmatmul.mubr.f32.gmra.mxu0 %v1641
    %v3492 = vpop.f32.mrf.mxu0
    %v3493 = vadd.f32 %v3108, %v3492
    %v3494 = vpop.f32.mrf.mxu0
    %3495 = vmatprep.mubr.f32.mxu0 %v1651
    %3496 = vmatmul.mubr.f32.gmra.mxu0 %v1650
    %v3497 = vpop.f32.mrf.mxu0
    %v3498 = vadd.f32 %v3113, %v3497
    %v3499 = vpop.f32.mrf.mxu0
    %3500 = vmatprep.mubr.f32.mxu0 %v1660
    %3501 = vmatmul.mubr.f32.gmra.mxu0 %v1659
    %v3502 = vpop.f32.mrf.mxu0
    %v3503 = vadd.f32 %v3118, %v3502
    %v3504 = vpop.f32.mrf.mxu0
    %3505 = vmatprep.mubr.f32.mxu0 %v1669
    %3506 = vmatmul.mubr.f32.gmra.mxu0 %v1668
    %v3507 = vpop.f32.mrf.mxu0
    %v3508 = vadd.f32 %v3123, %v3507
    %v3509 = vpop.f32.mrf.mxu0
    %3510 = vmatprep.mubr.f32.mxu0 %v1678
    %3511 = vmatmul.mubr.f32.gmra.mxu0 %v1677
    %v3512 = vpop.f32.mrf.mxu0
    %v3513 = vadd.f32 %v3128, %v3512
    %v3514 = vpop.f32.mrf.mxu0
    %3515 = vmatprep.mubr.f32.mxu0 %v1687
    %3516 = vmatmul.mubr.f32.gmra.mxu0 %v1686
    %v3517 = vpop.f32.mrf.mxu0
    %v3518 = vadd.f32 %v3133, %v3517
    %v3519 = vpop.f32.mrf.mxu0
    %3520 = vmatprep.mubr.f32.mxu0 %v1696
    %3521 = vmatmul.mubr.f32.gmra.mxu0 %v1695
    %v3522 = vpop.f32.mrf.mxu0
    %v3523 = vadd.f32 %v3138, %v3522
    %v3524 = vpop.f32.mrf.mxu0
    %3525 = vmatprep.mubr.f32.mxu0 %v1705
    %3526 = vmatmul.mubr.f32.gmra.mxu0 %v1704
    %v3527 = vpop.f32.mrf.mxu0
    %v3528 = vadd.f32 %v3143, %v3527
    %v3529 = vpop.f32.mrf.mxu0
    %3530 = vmatprep.mubr.f32.mxu0 %v1714
    %3531 = vmatmul.mubr.f32.gmra.mxu0 %v1713
    %v3532 = vpop.f32.mrf.mxu0
    %v3533 = vadd.f32 %v3148, %v3532
    %v3534 = vpop.f32.mrf.mxu0
    %3535 = vmatprep.mubr.f32.mxu0 %v1723
    %3536 = vmatmul.mubr.f32.gmra.mxu0 %v1722
    %v3537 = vpop.f32.mrf.mxu0
    %v3538 = vadd.f32 %v3153, %v3537
    %v3539 = vpop.f32.mrf.mxu0
    %3540 = vmatprep.mubr.f32.mxu0 %v1732
    %3541 = vmatmul.mubr.f32.gmra.mxu0 %v1731
    %v3542 = vpop.f32.mrf.mxu0
    %v3543 = vadd.f32 %v3158, %v3542
    %v3544 = vpop.f32.mrf.mxu0
    %3545 = vmatprep.mubr.f32.mxu0 %v1741
    %3546 = vmatmul.mubr.f32.gmra.mxu0 %v1740
    %v3547 = vpop.f32.mrf.mxu0
    %v3548 = vadd.f32 %v3163, %v3547
    %v3549 = vpop.f32.mrf.mxu0
    %3550 = vmatprep.mubr.f32.mxu0 %v1750
    %3551 = vmatmul.mubr.f32.gmra.mxu0 %v1749
    %v3552 = vpop.f32.mrf.mxu0
    %v3553 = vadd.f32 %v3168, %v3552
    %v3554 = vpop.f32.mrf.mxu0
    %3555 = vmatprep.mubr.f32.mxu0 %v1759
    %3556 = vmatmul.mubr.f32.gmra.mxu0 %v1758
    %v3557 = vpop.f32.mrf.mxu0
    %v3558 = vadd.f32 %v3173, %v3557
    %v3559 = vpop.f32.mrf.mxu0
    %3560 = vmatprep.mubr.f32.mxu0 %v1768
    %3561 = vmatmul.mubr.f32.gmra.mxu0 %v1767
    %v3562 = vpop.f32.mrf.mxu0
    %v3563 = vadd.f32 %v3178, %v3562
    %v3564 = vpop.f32.mrf.mxu0
    %3565 = vmatprep.mubr.f32.mxu0 %v1777
    %3566 = vmatmul.mubr.f32.gmra.mxu0 %v1776
    %v3567 = vpop.f32.mrf.mxu0
    %v3568 = vadd.f32 %v3183, %v3567
    %v3569 = vpop.f32.mrf.mxu0
    %3570 = vmatprep.mubr.f32.mxu0 %v1786
    %3571 = vmatmul.mubr.f32.gmra.mxu0 %v1785
    %v3572 = vpop.f32.mrf.mxu0
    %v3573 = vadd.f32 %v3188, %v3572
    %v3574 = vpop.f32.mrf.mxu0
    %3575 = vmatprep.mubr.f32.mxu0 %v1795
    %3576 = vmatmul.mubr.f32.gmra.mxu0 %v1794
    %v3577 = vpop.f32.mrf.mxu0
    %v3578 = vadd.f32 %v3193, %v3577
    %v3579 = vpop.f32.mrf.mxu0
    %3580 = vmatprep.mubr.f32.mxu0 %v1804
    %3581 = vmatmul.mubr.f32.gmra.mxu0 %v1803
    %v3582 = vpop.f32.mrf.mxu0
    %v3583 = vadd.f32 %v3198, %v3582
    %v3584 = vpop.f32.mrf.mxu0
    %3585 = vmatprep.mubr.f32.mxu0 %v1813
    %3586 = vmatmul.mubr.f32.gmra.mxu0 %v1812
    %v3587 = vpop.f32.mrf.mxu0
    %v3588 = vadd.f32 %v3203, %v3587
    %v3589 = vpop.f32.mrf.mxu0
    %3590 = vmatprep.mubr.f32.mxu0 %v1822
    %3591 = vmatmul.mubr.f32.gmra.mxu0 %v1821
    %v3592 = vpop.f32.mrf.mxu0
    %v3593 = vadd.f32 %v3208, %v3592
    %v3594 = vpop.f32.mrf.mxu0
    %3595 = vmatprep.mubr.f32.mxu0 %v1831
    %3596 = vmatmul.mubr.f32.gmra.mxu0 %v1830
    %v3597 = vpop.f32.mrf.mxu0
    %v3598 = vadd.f32 %v3213, %v3597
    %v3599 = vpop.f32.mrf.mxu0
    %3600 = vmatprep.mubr.f32.mxu0 %v1840
    %3601 = vmatmul.mubr.f32.gmra.mxu0 %v1839
    %v3602 = vpop.f32.mrf.mxu0
    %v3603 = vadd.f32 %v3218, %v3602
    %v3604 = vpop.f32.mrf.mxu0
    %3605 = vmatprep.mubr.f32.mxu0 %v1849
    %3606 = vmatmul.mubr.f32.gmra.mxu0 %v1848
    %v3607 = vpop.f32.mrf.mxu0
    %v3608 = vadd.f32 %v3223, %v3607
    %v3609 = vpop.f32.mrf.mxu0
    %3610 = vmatprep.mubr.f32.mxu0 %v1858
    %3611 = vmatmul.mubr.f32.gmra.mxu0 %v1857
    %v3612 = vpop.f32.mrf.mxu0
    %v3613 = vadd.f32 %v3228, %v3612
    %v3614 = vpop.f32.mrf.mxu0
    %3615 = vmatprep.mubr.f32.mxu0 %v1867
    %3616 = vmatmul.mubr.f32.gmra.mxu0 %v1866
    %v3617 = vpop.f32.mrf.mxu0
    %v3618 = vadd.f32 %v3233, %v3617
    %v3619 = vpop.f32.mrf.mxu0
    %3620 = vmatprep.mubr.f32.mxu0 %v1876
    %3621 = vmatmul.mubr.f32.gmra.mxu0 %v1875
    %v3622 = vpop.f32.mrf.mxu0
    %v3623 = vadd.f32 %v3238, %v3622
    %v3624 = vpop.f32.mrf.mxu0
    %3625 = vmatprep.mubr.f32.mxu0 %v1885
    %3626 = vmatmul.mubr.f32.gmra.mxu0 %v1884
    %v3627 = vpop.f32.mrf.mxu0
    %v3628 = vadd.f32 %v3243, %v3627
    %v3629 = vpop.f32.mrf.mxu0
    %3630 = vmatprep.mubr.f32.mxu0 %v1894
    %3631 = vmatmul.mubr.f32.gmra.mxu0 %v1893
    %v3632 = vpop.f32.mrf.mxu0
    %v3633 = vadd.f32 %v3248, %v3632
    %v3634 = vpop.f32.mrf.mxu0
    %3635 = vmatprep.mubr.f32.mxu0 %v1903
    %3636 = vmatmul.mubr.f32.gmra.mxu0 %v1902
    %v3637 = vpop.f32.mrf.mxu0
    %v3638 = vadd.f32 %v3253, %v3637
    %v3639 = vpop.f32.mrf.mxu0
    %3640 = vmatprep.mubr.f32.mxu0 %v1912
    %3641 = vmatmul.mubr.f32.gmra.mxu0 %v1911
    %v3642 = vpop.f32.mrf.mxu0
    %v3643 = vadd.f32 %v3258, %v3642
    %v3644 = vpop.f32.mrf.mxu0
    %3645 = vmatprep.mubr.f32.mxu0 %v1921
    %3646 = vmatmul.mubr.f32.gmra.mxu0 %v1920
    %v3647 = vpop.f32.mrf.mxu0
    %v3648 = vadd.f32 %v3263, %v3647
    %v3649 = vpop.f32.mrf.mxu0
    %3650 = vmatprep.mubr.f32.mxu0 %v1930
    %3651 = vmatmul.mubr.f32.gmra.mxu0 %v1929
    %v3652 = vpop.f32.mrf.mxu0
    %v3653 = vadd.f32 %v3268, %v3652
    %v3654 = vpop.f32.mrf.mxu0
    %3655 = vmatprep.mubr.f32.mxu0 %v1939
    %3656 = vmatmul.mubr.f32.gmra.mxu0 %v1938
    %v3657 = vpop.f32.mrf.mxu0
    %v3658 = vadd.f32 %v3273, %v3657
    %v3659 = vpop.f32.mrf.mxu0
    %3660 = vmatprep.mubr.f32.mxu0 %v1948
    %3661 = vmatmul.mubr.f32.gmra.mxu0 %v1947
    %v3662 = vpop.f32.mrf.mxu0
    %v3663 = vadd.f32 %v3278, %v3662
    %v3664 = vpop.f32.mrf.mxu0
    %3665 = vmatprep.mubr.f32.mxu0 %v1957
    %3666 = vmatmul.mubr.f32.gmra.mxu0 %v1956
    %v3667 = vpop.f32.mrf.mxu0
    %v3668 = vadd.f32 %v3283, %v3667
    %v3669 = vpop.f32.mrf.mxu0
    %3670 = vmatprep.mubr.f32.mxu0 %v1966
    %3671 = vmatmul.mubr.f32.gmra.mxu0 %v1965
    %v3672 = vpop.f32.mrf.mxu0
    %v3673 = vadd.f32 %v3288, %v3672
    %v3674 = vpop.f32.mrf.mxu0
    %3675 = vmatprep.mubr.f32.mxu0 %v1975
    %3676 = vmatmul.mubr.f32.gmra.mxu0 %v1974
    %v3677 = vpop.f32.mrf.mxu0
    %v3678 = vadd.f32 %v3293, %v3677
    %v3679 = vpop.f32.mrf.mxu0
    %3680 = vmatprep.mubr.f32.mxu0 %v1984
    %3681 = vmatmul.mubr.f32.gmra.mxu0 %v1983
    %v3682 = vpop.f32.mrf.mxu0
    %v3683 = vadd.f32 %v3298, %v3682
    %v3684 = vpop.f32.mrf.mxu0
    %3685 = vmatprep.mubr.f32.mxu0 %v1993
    %3686 = vmatmul.mubr.f32.gmra.mxu0 %v1992
    %v3687 = vpop.f32.mrf.mxu0
    %v3688 = vadd.f32 %v3303, %v3687
    %v3689 = vpop.f32.mrf.mxu0
    %3690 = vmatprep.mubr.f32.mxu0 %v2002
    %3691 = vmatmul.mubr.f32.gmra.mxu0 %v2001
    %v3692 = vpop.f32.mrf.mxu0
    %v3693 = vadd.f32 %v3308, %v3692
    %v3694 = vpop.f32.mrf.mxu0
    %3695 = vmatprep.mubr.f32.mxu0 %v2011
    %3696 = vmatmul.mubr.f32.gmra.mxu0 %v2010
    %v3697 = vpop.f32.mrf.mxu0
    %v3698 = vadd.f32 %v3313, %v3697
    %v3699 = vpop.f32.mrf.mxu0
    %3700 = vmatprep.mubr.f32.mxu0 %v2020
    %3701 = vmatmul.mubr.f32.gmra.mxu0 %v2019
    %v3702 = vpop.f32.mrf.mxu0
    %v3703 = vadd.f32 %v3318, %v3702
    %v3704 = vpop.f32.mrf.mxu0
    %3705 = vdwg.mxu0
    %3706 = vmatprep.subr.mxu0 0.0
    %3707 = vmatpush1.msra.mxu0 %v2165
    %3708 = vmatprep.subr.mxu0 0.0
    %3709 = vmatpush1.msra.mxu0 %v2164
    %3710 = vmatprep.subr.mxu0 0.0
    %3711 = vmatpush1.msra.mxu0 %v2163
    %3712 = vmatprep.subr.mxu0 0.0
    %3713 = vmatpush1.msra.mxu0 %v2162
    %3714 = vmatprep.subr.mxu0 0.0
    %3715 = vmatpush1.msra.mxu0 %v2161
    %3716 = vmatprep.subr.mxu0 0.0
    %3717 = vmatpush1.msra.mxu0 %v2160
    %3718 = vmatprep.subr.mxu0 0.0
    %3719 = vmatpush1.msra.mxu0 %v2159
    %3720 = vmatprep.subr.mxu0 0.0
    %3721 = vmatpush1.msra.mxu0 %v2158
    %3722 = vmatprep.subr.mxu0 0.0
    %3723 = vmatpush1.msra.mxu0 %v2157
    %3724 = vmatprep.subr.mxu0 0.0
    %3725 = vmatpush1.msra.mxu0 %v2156
    %3726 = vmatprep.subr.mxu0 0.0
    %3727 = vmatpush1.msra.mxu0 %v2155
    %3728 = vmatprep.subr.mxu0 0.0
    %3729 = vmatpush1.msra.mxu0 %v2154
    %3730 = vmatprep.subr.mxu0 0.0
    %3731 = vmatpush1.msra.mxu0 %v2153
    %3732 = vmatprep.subr.mxu0 0.0
    %3733 = vmatpush1.msra.mxu0 %v2152
    %3734 = vmatprep.subr.mxu0 0.0
    %3735 = vmatpush1.msra.mxu0 %v2151
    %3736 = vmatprep.subr.mxu0 0.0
    %3737 = vmatpush1.msra.mxu0 %v2150
    %3738 = vmatprep.subr.mxu0 0.0
    %3739 = vmatpush2.msra.mxu0 0.0
    %3740 = vmatprep.subr.mxu0 0.0
    %3741 = vmatpush2.msra.mxu0 0.0
    %3742 = vmatprep.subr.mxu0 0.0
    %3743 = vmatpush2.msra.mxu0 0.0
    %3744 = vmatprep.subr.mxu0 0.0
    %3745 = vmatpush2.msra.mxu0 0.0
    %3746 = vmatprep.subr.mxu0 0.0
    %3747 = vmatpush2.msra.mxu0 0.0
    %3748 = vmatprep.subr.mxu0 0.0
    %3749 = vmatpush2.msra.mxu0 0.0
    %3750 = vmatprep.subr.mxu0 0.0
    %3751 = vmatpush2.msra.mxu0 0.0
    %3752 = vmatprep.subr.mxu0 0.0
    %3753 = vmatpush2.msra.mxu0 0.0
    %3754 = vmatprep.subr.mxu0 0.0
    %3755 = vmatpush2.msra.mxu0 0.0
    %3756 = vmatprep.subr.mxu0 0.0
    %3757 = vmatpush2.msra.mxu0 0.0
    %3758 = vmatprep.subr.mxu0 0.0
    %3759 = vmatpush2.msra.mxu0 0.0
    %3760 = vmatprep.subr.mxu0 0.0
    %3761 = vmatpush2.msra.mxu0 0.0
    %3762 = vmatprep.subr.mxu0 0.0
    %3763 = vmatpush2.msra.mxu0 0.0
    %3764 = vmatprep.subr.mxu0 0.0
    %3765 = vmatpush2.msra.mxu0 0.0
    %3766 = vmatprep.subr.mxu0 0.0
    %3767 = vmatpush2.msra.mxu0 0.0
    %3768 = vmatprep.subr.mxu0 0.0
    %3769 = vmatpush2.msra.mxu0 0.0
    %3770 = vmatprep.mubr.f32.mxu0 0.0
    %3771 = vmatmul.mubr.f32.gmra.mxu0 %v1454
    %v3772 = vpop.f32.mrf.mxu0
    %v3773 = vadd.f32 %v3388, %v3772
    %v3774 = vpop.f32.mrf.mxu0
    %3775 = vmatprep.mubr.f32.mxu0 0.0
    %3776 = vmatmul.mubr.f32.gmra.mxu0 %v1463
    %v3777 = vpop.f32.mrf.mxu0
    %v3778 = vadd.f32 %v3393, %v3777
    %v3779 = vpop.f32.mrf.mxu0
    %3780 = vmatprep.mubr.f32.mxu0 0.0
    %3781 = vmatmul.mubr.f32.gmra.mxu0 %v1472
    %v3782 = vpop.f32.mrf.mxu0
    %v3783 = vadd.f32 %v3398, %v3782
    %v3784 = vpop.f32.mrf.mxu0
    %3785 = vmatprep.mubr.f32.mxu0 0.0
    %3786 = vmatmul.mubr.f32.gmra.mxu0 %v1481
    %v3787 = vpop.f32.mrf.mxu0
    %v3788 = vadd.f32 %v3403, %v3787
    %v3789 = vpop.f32.mrf.mxu0
    %3790 = vmatprep.mubr.f32.mxu0 0.0
    %3791 = vmatmul.mubr.f32.gmra.mxu0 %v1490
    %v3792 = vpop.f32.mrf.mxu0
    %v3793 = vadd.f32 %v3408, %v3792
    %v3794 = vpop.f32.mrf.mxu0
    %3795 = vmatprep.mubr.f32.mxu0 0.0
    %3796 = vmatmul.mubr.f32.gmra.mxu0 %v1499
    %v3797 = vpop.f32.mrf.mxu0
    %v3798 = vadd.f32 %v3413, %v3797
    %v3799 = vpop.f32.mrf.mxu0
    %3800 = vmatprep.mubr.f32.mxu0 0.0
    %3801 = vmatmul.mubr.f32.gmra.mxu0 %v1508
    %v3802 = vpop.f32.mrf.mxu0
    %v3803 = vadd.f32 %v3418, %v3802
    %v3804 = vpop.f32.mrf.mxu0
    %3805 = vmatprep.mubr.f32.mxu0 0.0
    %3806 = vmatmul.mubr.f32.gmra.mxu0 %v1517
    %v3807 = vpop.f32.mrf.mxu0
    %v3808 = vadd.f32 %v3423, %v3807
    %v3809 = vpop.f32.mrf.mxu0
    %3810 = vmatprep.mubr.f32.mxu0 0.0
    %3811 = vmatmul.mubr.f32.gmra.mxu0 %v1526
    %v3812 = vpop.f32.mrf.mxu0
    %v3813 = vadd.f32 %v3428, %v3812
    %v3814 = vpop.f32.mrf.mxu0
    %3815 = vmatprep.mubr.f32.mxu0 0.0
    %3816 = vmatmul.mubr.f32.gmra.mxu0 %v1535
    %v3817 = vpop.f32.mrf.mxu0
    %v3818 = vadd.f32 %v3433, %v3817
    %v3819 = vpop.f32.mrf.mxu0
    %3820 = vmatprep.mubr.f32.mxu0 0.0
    %3821 = vmatmul.mubr.f32.gmra.mxu0 %v1544
    %v3822 = vpop.f32.mrf.mxu0
    %v3823 = vadd.f32 %v3438, %v3822
    %v3824 = vpop.f32.mrf.mxu0
    %3825 = vmatprep.mubr.f32.mxu0 0.0
    %3826 = vmatmul.mubr.f32.gmra.mxu0 %v1553
    %v3827 = vpop.f32.mrf.mxu0
    %v3828 = vadd.f32 %v3443, %v3827
    %v3829 = vpop.f32.mrf.mxu0
    %3830 = vmatprep.mubr.f32.mxu0 0.0
    %3831 = vmatmul.mubr.f32.gmra.mxu0 %v1562
    %v3832 = vpop.f32.mrf.mxu0
    %v3833 = vadd.f32 %v3448, %v3832
    %v3834 = vpop.f32.mrf.mxu0
    %3835 = vmatprep.mubr.f32.mxu0 0.0
    %3836 = vmatmul.mubr.f32.gmra.mxu0 %v1571
    %v3837 = vpop.f32.mrf.mxu0
    %v3838 = vadd.f32 %v3453, %v3837
    %v3839 = vpop.f32.mrf.mxu0
    %3840 = vmatprep.mubr.f32.mxu0 0.0
    %3841 = vmatmul.mubr.f32.gmra.mxu0 %v1580
    %v3842 = vpop.f32.mrf.mxu0
    %v3843 = vadd.f32 %v3458, %v3842
    %v3844 = vpop.f32.mrf.mxu0
    %3845 = vmatprep.mubr.f32.mxu0 0.0
    %3846 = vmatmul.mubr.f32.gmra.mxu0 %v1589
    %v3847 = vpop.f32.mrf.mxu0
    %v3848 = vadd.f32 %v3463, %v3847
    %v3849 = vpop.f32.mrf.mxu0
    %3850 = vmatprep.mubr.f32.mxu0 0.0
    %3851 = vmatmul.mubr.f32.gmra.mxu0 %v1598
    %v3852 = vpop.f32.mrf.mxu0
    %v3853 = vadd.f32 %v3468, %v3852
    %v3854 = vpop.f32.mrf.mxu0
    %3855 = vmatprep.mubr.f32.mxu0 0.0
    %3856 = vmatmul.mubr.f32.gmra.mxu0 %v1607
    %v3857 = vpop.f32.mrf.mxu0
    %v3858 = vadd.f32 %v3473, %v3857
    %v3859 = vpop.f32.mrf.mxu0
    %3860 = vmatprep.mubr.f32.mxu0 0.0
    %3861 = vmatmul.mubr.f32.gmra.mxu0 %v1616
    %v3862 = vpop.f32.mrf.mxu0
    %v3863 = vadd.f32 %v3478, %v3862
    %v3864 = vpop.f32.mrf.mxu0
    %3865 = vmatprep.mubr.f32.mxu0 0.0
    %3866 = vmatmul.mubr.f32.gmra.mxu0 %v1625
    %v3867 = vpop.f32.mrf.mxu0
    %v3868 = vadd.f32 %v3483, %v3867
    %v3869 = vpop.f32.mrf.mxu0
    %3870 = vmatprep.mubr.f32.mxu0 0.0
    %3871 = vmatmul.mubr.f32.gmra.mxu0 %v1634
    %v3872 = vpop.f32.mrf.mxu0
    %v3873 = vadd.f32 %v3488, %v3872
    %v3874 = vpop.f32.mrf.mxu0
    %3875 = vmatprep.mubr.f32.mxu0 0.0
    %3876 = vmatmul.mubr.f32.gmra.mxu0 %v1643
    %v3877 = vpop.f32.mrf.mxu0
    %v3878 = vadd.f32 %v3493, %v3877
    %v3879 = vpop.f32.mrf.mxu0
    %3880 = vmatprep.mubr.f32.mxu0 0.0
    %3881 = vmatmul.mubr.f32.gmra.mxu0 %v1652
    %v3882 = vpop.f32.mrf.mxu0
    %v3883 = vadd.f32 %v3498, %v3882
    %v3884 = vpop.f32.mrf.mxu0
    %3885 = vmatprep.mubr.f32.mxu0 0.0
    %3886 = vmatmul.mubr.f32.gmra.mxu0 %v1661
    %v3887 = vpop.f32.mrf.mxu0
    %v3888 = vadd.f32 %v3503, %v3887
    %v3889 = vpop.f32.mrf.mxu0
    %3890 = vmatprep.mubr.f32.mxu0 0.0
    %3891 = vmatmul.mubr.f32.gmra.mxu0 %v1670
    %v3892 = vpop.f32.mrf.mxu0
    %v3893 = vadd.f32 %v3508, %v3892
    %v3894 = vpop.f32.mrf.mxu0
    %3895 = vmatprep.mubr.f32.mxu0 0.0
    %3896 = vmatmul.mubr.f32.gmra.mxu0 %v1679
    %v3897 = vpop.f32.mrf.mxu0
    %v3898 = vadd.f32 %v3513, %v3897
    %v3899 = vpop.f32.mrf.mxu0
    %3900 = vmatprep.mubr.f32.mxu0 0.0
    %3901 = vmatmul.mubr.f32.gmra.mxu0 %v1688
    %v3902 = vpop.f32.mrf.mxu0
    %v3903 = vadd.f32 %v3518, %v3902
    %v3904 = vpop.f32.mrf.mxu0
    %3905 = vmatprep.mubr.f32.mxu0 0.0
    %3906 = vmatmul.mubr.f32.gmra.mxu0 %v1697
    %v3907 = vpop.f32.mrf.mxu0
    %v3908 = vadd.f32 %v3523, %v3907
    %v3909 = vpop.f32.mrf.mxu0
    %3910 = vmatprep.mubr.f32.mxu0 0.0
    %3911 = vmatmul.mubr.f32.gmra.mxu0 %v1706
    %v3912 = vpop.f32.mrf.mxu0
    %v3913 = vadd.f32 %v3528, %v3912
    %v3914 = vpop.f32.mrf.mxu0
    %3915 = vmatprep.mubr.f32.mxu0 0.0
    %3916 = vmatmul.mubr.f32.gmra.mxu0 %v1715
    %v3917 = vpop.f32.mrf.mxu0
    %v3918 = vadd.f32 %v3533, %v3917
    %v3919 = vpop.f32.mrf.mxu0
    %3920 = vmatprep.mubr.f32.mxu0 0.0
    %3921 = vmatmul.mubr.f32.gmra.mxu0 %v1724
    %v3922 = vpop.f32.mrf.mxu0
    %v3923 = vadd.f32 %v3538, %v3922
    %v3924 = vpop.f32.mrf.mxu0
    %3925 = vmatprep.mubr.f32.mxu0 0.0
    %3926 = vmatmul.mubr.f32.gmra.mxu0 %v1733
    %v3927 = vpop.f32.mrf.mxu0
    %v3928 = vadd.f32 %v3543, %v3927
    %v3929 = vpop.f32.mrf.mxu0
    %3930 = vmatprep.mubr.f32.mxu0 0.0
    %3931 = vmatmul.mubr.f32.gmra.mxu0 %v1742
    %v3932 = vpop.f32.mrf.mxu0
    %v3933 = vadd.f32 %v3548, %v3932
    %v3934 = vpop.f32.mrf.mxu0
    %3935 = vmatprep.mubr.f32.mxu0 0.0
    %3936 = vmatmul.mubr.f32.gmra.mxu0 %v1751
    %v3937 = vpop.f32.mrf.mxu0
    %v3938 = vadd.f32 %v3553, %v3937
    %v3939 = vpop.f32.mrf.mxu0
    %3940 = vmatprep.mubr.f32.mxu0 0.0
    %3941 = vmatmul.mubr.f32.gmra.mxu0 %v1760
    %v3942 = vpop.f32.mrf.mxu0
    %v3943 = vadd.f32 %v3558, %v3942
    %v3944 = vpop.f32.mrf.mxu0
    %3945 = vmatprep.mubr.f32.mxu0 0.0
    %3946 = vmatmul.mubr.f32.gmra.mxu0 %v1769
    %v3947 = vpop.f32.mrf.mxu0
    %v3948 = vadd.f32 %v3563, %v3947
    %v3949 = vpop.f32.mrf.mxu0
    %3950 = vmatprep.mubr.f32.mxu0 0.0
    %3951 = vmatmul.mubr.f32.gmra.mxu0 %v1778
    %v3952 = vpop.f32.mrf.mxu0
    %v3953 = vadd.f32 %v3568, %v3952
    %v3954 = vpop.f32.mrf.mxu0
    %3955 = vmatprep.mubr.f32.mxu0 0.0
    %3956 = vmatmul.mubr.f32.gmra.mxu0 %v1787
    %v3957 = vpop.f32.mrf.mxu0
    %v3958 = vadd.f32 %v3573, %v3957
    %v3959 = vpop.f32.mrf.mxu0
    %3960 = vmatprep.mubr.f32.mxu0 0.0
    %3961 = vmatmul.mubr.f32.gmra.mxu0 %v1796
    %v3962 = vpop.f32.mrf.mxu0
    %v3963 = vadd.f32 %v3578, %v3962
    %v3964 = vpop.f32.mrf.mxu0
    %3965 = vmatprep.mubr.f32.mxu0 0.0
    %3966 = vmatmul.mubr.f32.gmra.mxu0 %v1805
    %v3967 = vpop.f32.mrf.mxu0
    %v3968 = vadd.f32 %v3583, %v3967
    %v3969 = vpop.f32.mrf.mxu0
    %3970 = vmatprep.mubr.f32.mxu0 0.0
    %3971 = vmatmul.mubr.f32.gmra.mxu0 %v1814
    %v3972 = vpop.f32.mrf.mxu0
    %v3973 = vadd.f32 %v3588, %v3972
    %v3974 = vpop.f32.mrf.mxu0
    %3975 = vmatprep.mubr.f32.mxu0 0.0
    %3976 = vmatmul.mubr.f32.gmra.mxu0 %v1823
    %v3977 = vpop.f32.mrf.mxu0
    %v3978 = vadd.f32 %v3593, %v3977
    %v3979 = vpop.f32.mrf.mxu0
    %3980 = vmatprep.mubr.f32.mxu0 0.0
    %3981 = vmatmul.mubr.f32.gmra.mxu0 %v1832
    %v3982 = vpop.f32.mrf.mxu0
    %v3983 = vadd.f32 %v3598, %v3982
    %v3984 = vpop.f32.mrf.mxu0
    %3985 = vmatprep.mubr.f32.mxu0 0.0
    %3986 = vmatmul.mubr.f32.gmra.mxu0 %v1841
    %v3987 = vpop.f32.mrf.mxu0
    %v3988 = vadd.f32 %v3603, %v3987
    %v3989 = vpop.f32.mrf.mxu0
    %3990 = vmatprep.mubr.f32.mxu0 0.0
    %3991 = vmatmul.mubr.f32.gmra.mxu0 %v1850
    %v3992 = vpop.f32.mrf.mxu0
    %v3993 = vadd.f32 %v3608, %v3992
    %v3994 = vpop.f32.mrf.mxu0
    %3995 = vmatprep.mubr.f32.mxu0 0.0
    %3996 = vmatmul.mubr.f32.gmra.mxu0 %v1859
    %v3997 = vpop.f32.mrf.mxu0
    %v3998 = vadd.f32 %v3613, %v3997
    %v3999 = vpop.f32.mrf.mxu0
    %4000 = vmatprep.mubr.f32.mxu0 0.0
    %4001 = vmatmul.mubr.f32.gmra.mxu0 %v1868
    %v4002 = vpop.f32.mrf.mxu0
    %v4003 = vadd.f32 %v3618, %v4002
    %v4004 = vpop.f32.mrf.mxu0
    %4005 = vmatprep.mubr.f32.mxu0 0.0
    %4006 = vmatmul.mubr.f32.gmra.mxu0 %v1877
    %v4007 = vpop.f32.mrf.mxu0
    %v4008 = vadd.f32 %v3623, %v4007
    %v4009 = vpop.f32.mrf.mxu0
    %4010 = vmatprep.mubr.f32.mxu0 0.0
    %4011 = vmatmul.mubr.f32.gmra.mxu0 %v1886
    %v4012 = vpop.f32.mrf.mxu0
    %v4013 = vadd.f32 %v3628, %v4012
    %v4014 = vpop.f32.mrf.mxu0
    %4015 = vmatprep.mubr.f32.mxu0 0.0
    %4016 = vmatmul.mubr.f32.gmra.mxu0 %v1895
    %v4017 = vpop.f32.mrf.mxu0
    %v4018 = vadd.f32 %v3633, %v4017
    %v4019 = vpop.f32.mrf.mxu0
    %4020 = vmatprep.mubr.f32.mxu0 0.0
    %4021 = vmatmul.mubr.f32.gmra.mxu0 %v1904
    %v4022 = vpop.f32.mrf.mxu0
    %v4023 = vadd.f32 %v3638, %v4022
    %v4024 = vpop.f32.mrf.mxu0
    %4025 = vmatprep.mubr.f32.mxu0 0.0
    %4026 = vmatmul.mubr.f32.gmra.mxu0 %v1913
    %v4027 = vpop.f32.mrf.mxu0
    %v4028 = vadd.f32 %v3643, %v4027
    %v4029 = vpop.f32.mrf.mxu0
    %4030 = vmatprep.mubr.f32.mxu0 0.0
    %4031 = vmatmul.mubr.f32.gmra.mxu0 %v1922
    %v4032 = vpop.f32.mrf.mxu0
    %v4033 = vadd.f32 %v3648, %v4032
    %v4034 = vpop.f32.mrf.mxu0
    %4035 = vmatprep.mubr.f32.mxu0 0.0
    %4036 = vmatmul.mubr.f32.gmra.mxu0 %v1931
    %v4037 = vpop.f32.mrf.mxu0
    %v4038 = vadd.f32 %v3653, %v4037
    %v4039 = vpop.f32.mrf.mxu0
    %4040 = vmatprep.mubr.f32.mxu0 0.0
    %4041 = vmatmul.mubr.f32.gmra.mxu0 %v1940
    %v4042 = vpop.f32.mrf.mxu0
    %v4043 = vadd.f32 %v3658, %v4042
    %v4044 = vpop.f32.mrf.mxu0
    %4045 = vmatprep.mubr.f32.mxu0 0.0
    %4046 = vmatmul.mubr.f32.gmra.mxu0 %v1949
    %v4047 = vpop.f32.mrf.mxu0
    %v4048 = vadd.f32 %v3663, %v4047
    %v4049 = vpop.f32.mrf.mxu0
    %4050 = vmatprep.mubr.f32.mxu0 0.0
    %4051 = vmatmul.mubr.f32.gmra.mxu0 %v1958
    %v4052 = vpop.f32.mrf.mxu0
    %v4053 = vadd.f32 %v3668, %v4052
    %v4054 = vpop.f32.mrf.mxu0
    %4055 = vmatprep.mubr.f32.mxu0 0.0
    %4056 = vmatmul.mubr.f32.gmra.mxu0 %v1967
    %v4057 = vpop.f32.mrf.mxu0
    %v4058 = vadd.f32 %v3673, %v4057
    %v4059 = vpop.f32.mrf.mxu0
    %4060 = vmatprep.mubr.f32.mxu0 0.0
    %4061 = vmatmul.mubr.f32.gmra.mxu0 %v1976
    %v4062 = vpop.f32.mrf.mxu0
    %v4063 = vadd.f32 %v3678, %v4062
    %v4064 = vpop.f32.mrf.mxu0
    %4065 = vmatprep.mubr.f32.mxu0 0.0
    %4066 = vmatmul.mubr.f32.gmra.mxu0 %v1985
    %v4067 = vpop.f32.mrf.mxu0
    %v4068 = vadd.f32 %v3683, %v4067
    %v4069 = vpop.f32.mrf.mxu0
    %4070 = vmatprep.mubr.f32.mxu0 0.0
    %4071 = vmatmul.mubr.f32.gmra.mxu0 %v1994
    %v4072 = vpop.f32.mrf.mxu0
    %v4073 = vadd.f32 %v3688, %v4072
    %v4074 = vpop.f32.mrf.mxu0
    %4075 = vmatprep.mubr.f32.mxu0 0.0
    %4076 = vmatmul.mubr.f32.gmra.mxu0 %v2003
    %v4077 = vpop.f32.mrf.mxu0
    %v4078 = vadd.f32 %v3693, %v4077
    %v4079 = vpop.f32.mrf.mxu0
    %4080 = vmatprep.mubr.f32.mxu0 0.0
    %4081 = vmatmul.mubr.f32.gmra.mxu0 %v2012
    %v4082 = vpop.f32.mrf.mxu0
    %v4083 = vadd.f32 %v3698, %v4082
    %v4084 = vpop.f32.mrf.mxu0
    %4085 = vmatprep.mubr.f32.mxu0 0.0
    %4086 = vmatmul.mubr.f32.gmra.mxu0 %v2021
    %v4087 = vpop.f32.mrf.mxu0
    %v4088 = vadd.f32 %v3703, %v4087
    %v4089 = vpop.f32.mrf.mxu0
    %4090 = vdwg.mxu0
    %v4091 = vadd.f32 %v3773, %v3778
    %v4092 = vadd.f32 %v4091, %v3783
    %v4093 = vadd.f32 %v4092, %v3788
    %v4094 = vadd.f32 %v4093, %v3793
    %v4095 = vadd.f32 %v4094, %v3798
    %v4096 = vadd.f32 %v4095, %v3803
    %v4097 = vadd.f32 %v4096, %v3808
    %v4098 = vadd.f32 %v4097, %v3813
    %v4099 = vadd.f32 %v4098, %v3818
    %v4100 = vadd.f32 %v4099, %v3823
    %v4101 = vadd.f32 %v4100, %v3828
    %v4102 = vadd.f32 %v4101, %v3833
    %v4103 = vadd.f32 %v4102, %v3838
    %v4104 = vadd.f32 %v4103, %v3843
    %v4105 = vadd.f32 %v4104, %v3848
    %v4106 = vadd.f32 %v4105, %v3853
    %v4107 = vadd.f32 %v4106, %v3858
    %v4108 = vadd.f32 %v4107, %v3863
    %v4109 = vadd.f32 %v4108, %v3868
    %v4110 = vadd.f32 %v4109, %v3873
    %v4111 = vadd.f32 %v4110, %v3878
    %v4112 = vadd.f32 %v4111, %v3883
    %v4113 = vadd.f32 %v4112, %v3888
    %v4114 = vadd.f32 %v4113, %v3893
    %v4115 = vadd.f32 %v4114, %v3898
    %v4116 = vadd.f32 %v4115, %v3903
    %v4117 = vadd.f32 %v4116, %v3908
    %v4118 = vadd.f32 %v4117, %v3913
    %v4119 = vadd.f32 %v4118, %v3918
    %v4120 = vadd.f32 %v4119, %v3923
    %v4121 = vadd.f32 %v4120, %v3928
    %v4122 = vadd.f32 %v4121, %v3933
    %v4123 = vadd.f32 %v4122, %v3938
    %v4124 = vadd.f32 %v4123, %v3943
    %v4125 = vadd.f32 %v4124, %v3948
    %v4126 = vadd.f32 %v4125, %v3953
    %v4127 = vadd.f32 %v4126, %v3958
    %v4128 = vadd.f32 %v4127, %v3963
    %v4129 = vadd.f32 %v4128, %v3968
    %v4130 = vadd.f32 %v4129, %v3973
    %v4131 = vadd.f32 %v4130, %v3978
    %v4132 = vadd.f32 %v4131, %v3983
    %v4133 = vadd.f32 %v4132, %v3988
    %v4134 = vadd.f32 %v4133, %v3993
    %v4135 = vadd.f32 %v4134, %v3998
    %v4136 = vadd.f32 %v4135, %v4003
    %v4137 = vadd.f32 %v4136, %v4008
    %v4138 = vadd.f32 %v4137, %v4013
    %v4139 = vadd.f32 %v4138, %v4018
    %v4140 = vadd.f32 %v4139, %v4023
    %v4141 = vadd.f32 %v4140, %v4028
    %v4142 = vadd.f32 %v4141, %v4033
    %v4143 = vadd.f32 %v4142, %v4038
    %v4144 = vadd.f32 %v4143, %v4043
    %v4145 = vadd.f32 %v4144, %v4048
    %v4146 = vadd.f32 %v4145, %v4053
    %v4147 = vadd.f32 %v4146, %v4058
    %v4148 = vadd.f32 %v4147, %v4063
    %v4149 = vadd.f32 %v4148, %v4068
    %v4150 = vadd.f32 %v4149, %v4073
    %v4151 = vadd.f32 %v4150, %v4078
    %v4152 = vadd.f32 %v4151, %v4083
    %v4153 = vadd.f32 %v4152, %v4088
    %v4154 = vrot.slane %v4153, 4
    %v4155 = vadd.f32 %v4153, %v4154
    %v4156 = vrot.slane %v4155, 2
    %v4157 = vadd.f32 %v4155, %v4156
    %v4158 = vrot.slane %v4157, 1
    %v4159 = vadd.f32 %v4157, %v4158
    %v4160 = vmul.f32 %v3773, %v3773
    %v4161 = vmul.f32 %v3778, %v3778
    %v4162 = vmul.f32 %v3783, %v3783
    %v4163 = vmul.f32 %v3788, %v3788
    %v4164 = vmul.f32 %v3793, %v3793
    %v4165 = vmul.f32 %v3798, %v3798
    %v4166 = vmul.f32 %v3803, %v3803
    %v4167 = vmul.f32 %v3808, %v3808
    %v4168 = vmul.f32 %v3813, %v3813
    %v4169 = vmul.f32 %v3818, %v3818
    %v4170 = vmul.f32 %v3823, %v3823
    %v4171 = vmul.f32 %v3828, %v3828
    %v4172 = vmul.f32 %v3833, %v3833
    %v4173 = vmul.f32 %v3838, %v3838
    %v4174 = vmul.f32 %v3843, %v3843
    %v4175 = vmul.f32 %v3848, %v3848
    %v4176 = vmul.f32 %v3853, %v3853
    %v4177 = vmul.f32 %v3858, %v3858
    %v4178 = vmul.f32 %v3863, %v3863
    %v4179 = vmul.f32 %v3868, %v3868
    %v4180 = vmul.f32 %v3873, %v3873
    %v4181 = vmul.f32 %v3878, %v3878
    %v4182 = vmul.f32 %v3883, %v3883
    %v4183 = vmul.f32 %v3888, %v3888
    %v4184 = vmul.f32 %v3893, %v3893
    %v4185 = vmul.f32 %v3898, %v3898
    %v4186 = vmul.f32 %v3903, %v3903
    %v4187 = vmul.f32 %v3908, %v3908
    %v4188 = vmul.f32 %v3913, %v3913
    %v4189 = vmul.f32 %v3918, %v3918
    %v4190 = vmul.f32 %v3923, %v3923
    %v4191 = vmul.f32 %v3928, %v3928
    %v4192 = vmul.f32 %v3933, %v3933
    %v4193 = vmul.f32 %v3938, %v3938
    %v4194 = vmul.f32 %v3943, %v3943
    %v4195 = vmul.f32 %v3948, %v3948
    %v4196 = vmul.f32 %v3953, %v3953
    %v4197 = vmul.f32 %v3958, %v3958
    %v4198 = vmul.f32 %v3963, %v3963
    %v4199 = vmul.f32 %v3968, %v3968
    %v4200 = vmul.f32 %v3973, %v3973
    %v4201 = vmul.f32 %v3978, %v3978
    %v4202 = vmul.f32 %v3983, %v3983
    %v4203 = vmul.f32 %v3988, %v3988
    %v4204 = vmul.f32 %v3993, %v3993
    %v4205 = vmul.f32 %v3998, %v3998
    %v4206 = vmul.f32 %v4003, %v4003
    %v4207 = vmul.f32 %v4008, %v4008
    %v4208 = vmul.f32 %v4013, %v4013
    %v4209 = vmul.f32 %v4018, %v4018
    %v4210 = vmul.f32 %v4023, %v4023
    %v4211 = vmul.f32 %v4028, %v4028
    %v4212 = vmul.f32 %v4033, %v4033
    %v4213 = vmul.f32 %v4038, %v4038
    %v4214 = vmul.f32 %v4043, %v4043
    %v4215 = vmul.f32 %v4048, %v4048
    %v4216 = vmul.f32 %v4053, %v4053
    %v4217 = vmul.f32 %v4058, %v4058
    %v4218 = vmul.f32 %v4063, %v4063
    %v4219 = vmul.f32 %v4068, %v4068
    %v4220 = vmul.f32 %v4073, %v4073
    %v4221 = vmul.f32 %v4078, %v4078
    %v4222 = vmul.f32 %v4083, %v4083
    %v4223 = vmul.f32 %v4088, %v4088
    %v4224 = vadd.f32 %v4160, %v4161
    %v4225 = vadd.f32 %v4224, %v4162
    %v4226 = vadd.f32 %v4225, %v4163
    %v4227 = vadd.f32 %v4226, %v4164
    %v4228 = vadd.f32 %v4227, %v4165
    %v4229 = vadd.f32 %v4228, %v4166
    %v4230 = vadd.f32 %v4229, %v4167
    %v4231 = vadd.f32 %v4230, %v4168
    %v4232 = vadd.f32 %v4231, %v4169
    %v4233 = vadd.f32 %v4232, %v4170
    %v4234 = vadd.f32 %v4233, %v4171
    %v4235 = vadd.f32 %v4234, %v4172
    %v4236 = vadd.f32 %v4235, %v4173
    %v4237 = vadd.f32 %v4236, %v4174
    %v4238 = vadd.f32 %v4237, %v4175
    %v4239 = vadd.f32 %v4238, %v4176
    %v4240 = vadd.f32 %v4239, %v4177
    %v4241 = vadd.f32 %v4240, %v4178
    %v4242 = vadd.f32 %v4241, %v4179
    %v4243 = vadd.f32 %v4242, %v4180
    %v4244 = vadd.f32 %v4243, %v4181
    %v4245 = vadd.f32 %v4244, %v4182
    %v4246 = vadd.f32 %v4245, %v4183
    %v4247 = vadd.f32 %v4246, %v4184
    %v4248 = vadd.f32 %v4247, %v4185
    %v4249 = vadd.f32 %v4248, %v4186
    %v4250 = vadd.f32 %v4249, %v4187
    %v4251 = vadd.f32 %v4250, %v4188
    %v4252 = vadd.f32 %v4251, %v4189
    %v4253 = vadd.f32 %v4252, %v4190
    %v4254 = vadd.f32 %v4253, %v4191
    %v4255 = vadd.f32 %v4254, %v4192
    %v4256 = vadd.f32 %v4255, %v4193
    %v4257 = vadd.f32 %v4256, %v4194
    %v4258 = vadd.f32 %v4257, %v4195
    %v4259 = vadd.f32 %v4258, %v4196
    %v4260 = vadd.f32 %v4259, %v4197
    %v4261 = vadd.f32 %v4260, %v4198
    %v4262 = vadd.f32 %v4261, %v4199
    %v4263 = vadd.f32 %v4262, %v4200
    %v4264 = vadd.f32 %v4263, %v4201
    %v4265 = vadd.f32 %v4264, %v4202
    %v4266 = vadd.f32 %v4265, %v4203
    %v4267 = vadd.f32 %v4266, %v4204
    %v4268 = vadd.f32 %v4267, %v4205
    %v4269 = vadd.f32 %v4268, %v4206
    %v4270 = vadd.f32 %v4269, %v4207
    %v4271 = vadd.f32 %v4270, %v4208
    %v4272 = vadd.f32 %v4271, %v4209
    %v4273 = vadd.f32 %v4272, %v4210
    %v4274 = vadd.f32 %v4273, %v4211
    %v4275 = vadd.f32 %v4274, %v4212
    %v4276 = vadd.f32 %v4275, %v4213
    %v4277 = vadd.f32 %v4276, %v4214
    %v4278 = vadd.f32 %v4277, %v4215
    %v4279 = vadd.f32 %v4278, %v4216
    %v4280 = vadd.f32 %v4279, %v4217
    %v4281 = vadd.f32 %v4280, %v4218
    %v4282 = vadd.f32 %v4281, %v4219
    %v4283 = vadd.f32 %v4282, %v4220
    %v4284 = vadd.f32 %v4283, %v4221
    %v4285 = vadd.f32 %v4284, %v4222
    %v4286 = vadd.f32 %v4285, %v4223
    %v4287 = vrot.slane %v4286, 4
    %v4288 = vadd.f32 %v4286, %v4287
    %v4289 = vrot.slane %v4288, 2
    %v4290 = vadd.f32 %v4288, %v4289
    %v4291 = vrot.slane %v4290, 1
    %v4292 = vadd.f32 %v4290, %v4291
    %v4293 = vmul.f32 %v4159, 0.001953125
    %v4294 = vmul.f32 %v4292, 0.001953125
    %v4295 = vmul.f32 %v4293, %v4293
    %v4296 = vsub.f32 %v4294, %v4295
    %v4297 = vmax.f32 %v4296, 0.0
    %v4298 = vadd.f32 %v4297, 1e-05
    %v4299 = vrsqrt.pop %v4298
    %v4300 = vld [vmem:[%s2] sm:$0x1]
    %v4301 = vmul.f32 %v4299, %v4300
    %v4302 = vsub.f32 %v3773, %v4293
    %v4303 = vsub.f32 %v3778, %v4293
    %v4304 = vsub.f32 %v3783, %v4293
    %v4305 = vsub.f32 %v3788, %v4293
    %v4306 = vsub.f32 %v3793, %v4293
    %v4307 = vsub.f32 %v3798, %v4293
    %v4308 = vsub.f32 %v3803, %v4293
    %v4309 = vsub.f32 %v3808, %v4293
    %v4310 = vsub.f32 %v3813, %v4293
    %v4311 = vsub.f32 %v3818, %v4293
    %v4312 = vsub.f32 %v3823, %v4293
    %v4313 = vsub.f32 %v3828, %v4293
    %v4314 = vsub.f32 %v3833, %v4293
    %v4315 = vsub.f32 %v3838, %v4293
    %v4316 = vsub.f32 %v3843, %v4293
    %v4317 = vsub.f32 %v3848, %v4293
    %v4318 = vsub.f32 %v3853, %v4293
    %v4319 = vsub.f32 %v3858, %v4293
    %v4320 = vsub.f32 %v3863, %v4293
    %v4321 = vsub.f32 %v3868, %v4293
    %v4322 = vsub.f32 %v3873, %v4293
    %v4323 = vsub.f32 %v3878, %v4293
    %v4324 = vsub.f32 %v3883, %v4293
    %v4325 = vsub.f32 %v3888, %v4293
    %v4326 = vsub.f32 %v3893, %v4293
    %v4327 = vsub.f32 %v3898, %v4293
    %v4328 = vsub.f32 %v3903, %v4293
    %v4329 = vsub.f32 %v3908, %v4293
    %v4330 = vsub.f32 %v3913, %v4293
    %v4331 = vsub.f32 %v3918, %v4293
    %v4332 = vsub.f32 %v3923, %v4293
    %v4333 = vsub.f32 %v3928, %v4293
    %v4334 = vsub.f32 %v3933, %v4293
    %v4335 = vsub.f32 %v3938, %v4293
    %v4336 = vsub.f32 %v3943, %v4293
    %v4337 = vsub.f32 %v3948, %v4293
    %v4338 = vsub.f32 %v3953, %v4293
    %v4339 = vsub.f32 %v3958, %v4293
    %v4340 = vsub.f32 %v3963, %v4293
    %v4341 = vsub.f32 %v3968, %v4293
    %v4342 = vsub.f32 %v3973, %v4293
    %v4343 = vsub.f32 %v3978, %v4293
    %v4344 = vsub.f32 %v3983, %v4293
    %v4345 = vsub.f32 %v3988, %v4293
    %v4346 = vsub.f32 %v3993, %v4293
    %v4347 = vsub.f32 %v3998, %v4293
    %v4348 = vsub.f32 %v4003, %v4293
    %v4349 = vsub.f32 %v4008, %v4293
    %v4350 = vsub.f32 %v4013, %v4293
    %v4351 = vsub.f32 %v4018, %v4293
    %v4352 = vsub.f32 %v4023, %v4293
    %v4353 = vsub.f32 %v4028, %v4293
    %v4354 = vsub.f32 %v4033, %v4293
    %v4355 = vsub.f32 %v4038, %v4293
    %v4356 = vsub.f32 %v4043, %v4293
    %v4357 = vsub.f32 %v4048, %v4293
    %v4358 = vsub.f32 %v4053, %v4293
    %v4359 = vsub.f32 %v4058, %v4293
    %v4360 = vsub.f32 %v4063, %v4293
    %v4361 = vsub.f32 %v4068, %v4293
    %v4362 = vsub.f32 %v4073, %v4293
    %v4363 = vsub.f32 %v4078, %v4293
    %v4364 = vsub.f32 %v4083, %v4293
    %v4365 = vsub.f32 %v4088, %v4293
    %v4366 = vlaneseq
    %v4367 = vshrl.u32 %v4366, 7
    %v4368 = vsub.s32 0, %v4367
    %v4369 = vrot.slane %v4301, %v4368
    %v4370 = vmul.f32 %v4302, %v4369
    %v4371 = vmul.f32 %v4303, %v4369
    %v4372 = vmul.f32 %v4304, %v4369
    %v4373 = vmul.f32 %v4305, %v4369
    %v4374 = vmul.f32 %v4306, %v4369
    %v4375 = vmul.f32 %v4307, %v4369
    %v4376 = vmul.f32 %v4308, %v4369
    %v4377 = vmul.f32 %v4309, %v4369
    %v4378 = vmul.f32 %v4310, %v4369
    %v4379 = vmul.f32 %v4311, %v4369
    %v4380 = vmul.f32 %v4312, %v4369
    %v4381 = vmul.f32 %v4313, %v4369
    %v4382 = vmul.f32 %v4314, %v4369
    %v4383 = vmul.f32 %v4315, %v4369
    %v4384 = vmul.f32 %v4316, %v4369
    %v4385 = vmul.f32 %v4317, %v4369
    %v4386 = vmul.f32 %v4318, %v4369
    %v4387 = vmul.f32 %v4319, %v4369
    %v4388 = vmul.f32 %v4320, %v4369
    %v4389 = vmul.f32 %v4321, %v4369
    %v4390 = vmul.f32 %v4322, %v4369
    %v4391 = vmul.f32 %v4323, %v4369
    %v4392 = vmul.f32 %v4324, %v4369
    %v4393 = vmul.f32 %v4325, %v4369
    %v4394 = vmul.f32 %v4326, %v4369
    %v4395 = vmul.f32 %v4327, %v4369
    %v4396 = vmul.f32 %v4328, %v4369
    %v4397 = vmul.f32 %v4329, %v4369
    %v4398 = vmul.f32 %v4330, %v4369
    %v4399 = vmul.f32 %v4331, %v4369
    %v4400 = vmul.f32 %v4332, %v4369
    %v4401 = vmul.f32 %v4333, %v4369
    %v4402 = vmul.f32 %v4334, %v4369
    %v4403 = vmul.f32 %v4335, %v4369
    %v4404 = vmul.f32 %v4336, %v4369
    %v4405 = vmul.f32 %v4337, %v4369
    %v4406 = vmul.f32 %v4338, %v4369
    %v4407 = vmul.f32 %v4339, %v4369
    %v4408 = vmul.f32 %v4340, %v4369
    %v4409 = vmul.f32 %v4341, %v4369
    %v4410 = vmul.f32 %v4342, %v4369
    %v4411 = vmul.f32 %v4343, %v4369
    %v4412 = vmul.f32 %v4344, %v4369
    %v4413 = vmul.f32 %v4345, %v4369
    %v4414 = vmul.f32 %v4346, %v4369
    %v4415 = vmul.f32 %v4347, %v4369
    %v4416 = vmul.f32 %v4348, %v4369
    %v4417 = vmul.f32 %v4349, %v4369
    %v4418 = vmul.f32 %v4350, %v4369
    %v4419 = vmul.f32 %v4351, %v4369
    %v4420 = vmul.f32 %v4352, %v4369
    %v4421 = vmul.f32 %v4353, %v4369
    %v4422 = vmul.f32 %v4354, %v4369
    %v4423 = vmul.f32 %v4355, %v4369
    %v4424 = vmul.f32 %v4356, %v4369
    %v4425 = vmul.f32 %v4357, %v4369
    %v4426 = vmul.f32 %v4358, %v4369
    %v4427 = vmul.f32 %v4359, %v4369
    %v4428 = vmul.f32 %v4360, %v4369
    %v4429 = vmul.f32 %v4361, %v4369
    %v4430 = vmul.f32 %v4362, %v4369
    %v4431 = vmul.f32 %v4363, %v4369
    %v4432 = vmul.f32 %v4364, %v4369
    %v4433 = vmul.f32 %v4365, %v4369
    %v4434 = vld [vmem:[%s3] sm:$0x1]
    %v4436 = vlaneseq
    %v4437 = vshrl.u32 %v4436, 7
    %v4438 = vsub.s32 0, %v4437
    %v4439 = vrot.slane %v4434, %v4438
    %v4441 = vadd.f32 %v4370, %v4439
    %v4442 = vadd.f32 %v4371, %v4439
    %v4443 = vadd.f32 %v4372, %v4439
    %v4444 = vadd.f32 %v4373, %v4439
    %v4445 = vadd.f32 %v4374, %v4439
    %v4446 = vadd.f32 %v4375, %v4439
    %v4447 = vadd.f32 %v4376, %v4439
    %v4448 = vadd.f32 %v4377, %v4439
    %v4449 = vadd.f32 %v4378, %v4439
    %v4450 = vadd.f32 %v4379, %v4439
    %v4451 = vadd.f32 %v4380, %v4439
    %v4452 = vadd.f32 %v4381, %v4439
    %v4453 = vadd.f32 %v4382, %v4439
    %v4454 = vadd.f32 %v4383, %v4439
    %v4455 = vadd.f32 %v4384, %v4439
    %v4456 = vadd.f32 %v4385, %v4439
    %v4457 = vadd.f32 %v4386, %v4439
    %v4458 = vadd.f32 %v4387, %v4439
    %v4459 = vadd.f32 %v4388, %v4439
    %v4460 = vadd.f32 %v4389, %v4439
    %v4461 = vadd.f32 %v4390, %v4439
    %v4462 = vadd.f32 %v4391, %v4439
    %v4463 = vadd.f32 %v4392, %v4439
    %v4464 = vadd.f32 %v4393, %v4439
    %v4465 = vadd.f32 %v4394, %v4439
    %v4466 = vadd.f32 %v4395, %v4439
    %v4467 = vadd.f32 %v4396, %v4439
    %v4468 = vadd.f32 %v4397, %v4439
    %v4469 = vadd.f32 %v4398, %v4439
    %v4470 = vadd.f32 %v4399, %v4439
    %v4471 = vadd.f32 %v4400, %v4439
    %v4472 = vadd.f32 %v4401, %v4439
    %v4473 = vadd.f32 %v4402, %v4439
    %v4474 = vadd.f32 %v4403, %v4439
    %v4475 = vadd.f32 %v4404, %v4439
    %v4476 = vadd.f32 %v4405, %v4439
    %v4477 = vadd.f32 %v4406, %v4439
    %v4478 = vadd.f32 %v4407, %v4439
    %v4479 = vadd.f32 %v4408, %v4439
    %v4480 = vadd.f32 %v4409, %v4439
    %v4481 = vadd.f32 %v4410, %v4439
    %v4482 = vadd.f32 %v4411, %v4439
    %v4483 = vadd.f32 %v4412, %v4439
    %v4484 = vadd.f32 %v4413, %v4439
    %v4485 = vadd.f32 %v4414, %v4439
    %v4486 = vadd.f32 %v4415, %v4439
    %v4487 = vadd.f32 %v4416, %v4439
    %v4488 = vadd.f32 %v4417, %v4439
    %v4489 = vadd.f32 %v4418, %v4439
    %v4490 = vadd.f32 %v4419, %v4439
    %v4491 = vadd.f32 %v4420, %v4439
    %v4492 = vadd.f32 %v4421, %v4439
    %v4493 = vadd.f32 %v4422, %v4439
    %v4494 = vadd.f32 %v4423, %v4439
    %v4495 = vadd.f32 %v4424, %v4439
    %v4496 = vadd.f32 %v4425, %v4439
    %v4497 = vadd.f32 %v4426, %v4439
    %v4498 = vadd.f32 %v4427, %v4439
    %v4499 = vadd.f32 %v4428, %v4439
    %v4500 = vadd.f32 %v4429, %v4439
    %v4501 = vadd.f32 %v4430, %v4439
    %v4502 = vadd.f32 %v4431, %v4439
    %v4503 = vadd.f32 %v4432, %v4439
    %v4504 = vadd.f32 %v4433, %v4439
    %v4505 = vmax.f32 %v4441, 0.0
    %v4506 = vmax.f32 %v4442, 0.0
    %v4507 = vmax.f32 %v4443, 0.0
    %v4508 = vmax.f32 %v4444, 0.0
    %v4509 = vmax.f32 %v4445, 0.0
    %v4510 = vmax.f32 %v4446, 0.0
    %v4511 = vmax.f32 %v4447, 0.0
    %v4512 = vmax.f32 %v4448, 0.0
    %v4513 = vmax.f32 %v4449, 0.0
    %v4514 = vmax.f32 %v4450, 0.0
    %v4515 = vmax.f32 %v4451, 0.0
    %v4516 = vmax.f32 %v4452, 0.0
    %v4517 = vmax.f32 %v4453, 0.0
    %v4518 = vmax.f32 %v4454, 0.0
    %v4519 = vmax.f32 %v4455, 0.0
    %v4520 = vmax.f32 %v4456, 0.0
    %v4521 = vmax.f32 %v4457, 0.0
    %v4522 = vmax.f32 %v4458, 0.0
    %v4523 = vmax.f32 %v4459, 0.0
    %v4524 = vmax.f32 %v4460, 0.0
    %v4525 = vmax.f32 %v4461, 0.0
    %v4526 = vmax.f32 %v4462, 0.0
    %v4527 = vmax.f32 %v4463, 0.0
    %v4528 = vmax.f32 %v4464, 0.0
    %v4529 = vmax.f32 %v4465, 0.0
    %v4530 = vmax.f32 %v4466, 0.0
    %v4531 = vmax.f32 %v4467, 0.0
    %v4532 = vmax.f32 %v4468, 0.0
    %v4533 = vmax.f32 %v4469, 0.0
    %v4534 = vmax.f32 %v4470, 0.0
    %v4535 = vmax.f32 %v4471, 0.0
    %v4536 = vmax.f32 %v4472, 0.0
    %v4537 = vmax.f32 %v4473, 0.0
    %v4538 = vmax.f32 %v4474, 0.0
    %v4539 = vmax.f32 %v4475, 0.0
    %v4540 = vmax.f32 %v4476, 0.0
    %v4541 = vmax.f32 %v4477, 0.0
    %v4542 = vmax.f32 %v4478, 0.0
    %v4543 = vmax.f32 %v4479, 0.0
    %v4544 = vmax.f32 %v4480, 0.0
    %v4545 = vmax.f32 %v4481, 0.0
    %v4546 = vmax.f32 %v4482, 0.0
    %v4547 = vmax.f32 %v4483, 0.0
    %v4548 = vmax.f32 %v4484, 0.0
    %v4549 = vmax.f32 %v4485, 0.0
    %v4550 = vmax.f32 %v4486, 0.0
    %v4551 = vmax.f32 %v4487, 0.0
    %v4552 = vmax.f32 %v4488, 0.0
    %v4553 = vmax.f32 %v4489, 0.0
    %v4554 = vmax.f32 %v4490, 0.0
    %v4555 = vmax.f32 %v4491, 0.0
    %v4556 = vmax.f32 %v4492, 0.0
    %v4557 = vmax.f32 %v4493, 0.0
    %v4558 = vmax.f32 %v4494, 0.0
    %v4559 = vmax.f32 %v4495, 0.0
    %v4560 = vmax.f32 %v4496, 0.0
    %v4561 = vmax.f32 %v4497, 0.0
    %v4562 = vmax.f32 %v4498, 0.0
    %v4563 = vmax.f32 %v4499, 0.0
    %v4564 = vmax.f32 %v4500, 0.0
    %v4565 = vmax.f32 %v4501, 0.0
    %v4566 = vmax.f32 %v4502, 0.0
    %v4567 = vmax.f32 %v4503, 0.0
    %v4568 = vmax.f32 %v4504, 0.0
    %4569 = vst [vmem:[#allocation3] sm:$0xff] 0.0
    %4570 = vst [vmem:[#allocation3 + $0x8] sm:$0xff] 0.0
    %4571 = vst [vmem:[#allocation3 + $0x10] sm:$0x3] 0.0
    %4572 = vst [vmem:[#allocation3 + $0x18] sm:$0xff] 0.0
    %4573 = vst [vmem:[#allocation3 + $0x20] sm:$0xff] 0.0
    %4574 = vst [vmem:[#allocation3 + $0x28] sm:$0x3] 0.0
    %4575 = vst [vmem:[#allocation3 + $0x30] sm:$0xff] 0.0
    %4576 = vst [vmem:[#allocation3 + $0x38] sm:$0xff] 0.0
    %4577 = vst [vmem:[#allocation3 + $0x40] sm:$0x3] 0.0
    %4578 = vst [vmem:[#allocation3 + $0x48] sm:$0xff] 0.0
    %4579 = vst [vmem:[#allocation3 + $0x50] sm:$0xff] 0.0
    %4580 = vst [vmem:[#allocation3 + $0x58] sm:$0x3] 0.0
    %4581 = vst [vmem:[#allocation3 + $0x60] sm:$0xff] 0.0
    %4582 = vst [vmem:[#allocation3 + $0x68] sm:$0xff] 0.0
    %4583 = vst [vmem:[#allocation3 + $0x70] sm:$0x3] 0.0
    %4584 = vst [vmem:[#allocation3 + $0x78] sm:$0xff] 0.0
    %4585 = vst [vmem:[#allocation3 + $0x80] sm:$0xff] 0.0
    %4586 = vst [vmem:[#allocation3 + $0x88] sm:$0x3] 0.0
    %4587 = vst [vmem:[#allocation3 + $0x90] sm:$0xff] 0.0
    %4588 = vst [vmem:[#allocation3 + $0x98] sm:$0xff] 0.0
    %4589 = vst [vmem:[#allocation3 + $0xa0] sm:$0x3] 0.0
    %4590 = vst [vmem:[#allocation3 + $0xa8] sm:$0xff] 0.0
    %4591 = vst [vmem:[#allocation3 + $0xb0] sm:$0xff] 0.0
    %4592 = vst [vmem:[#allocation3 + $0xb8] sm:$0x3] 0.0
    %4593 = vst [vmem:[#allocation3 + $0xc0] sm:$0xff] 0.0
    %4594 = vst [vmem:[#allocation3 + $0xc8] sm:$0xff] 0.0
    %4595 = vst [vmem:[#allocation3 + $0xd0] sm:$0x3] 0.0
    %4596 = vst [vmem:[#allocation3 + $0xd8] sm:$0xff] 0.0
    %4597 = vst [vmem:[#allocation3 + $0xe0] sm:$0xff] 0.0
    %4598 = vst [vmem:[#allocation3 + $0xe8] sm:$0x3] 0.0
    %4599 = vst [vmem:[#allocation3 + $0xf0] sm:$0xff] 0.0
    %4600 = vst [vmem:[#allocation3 + $0xf8] sm:$0xff] 0.0
    %4601 = vst [vmem:[#allocation3 + $0x100] sm:$0x3] 0.0
    %4602 = vst [vmem:[#allocation3 + $0x108] sm:$0xff] 0.0
    %4603 = vst [vmem:[#allocation3 + $0x110] sm:$0xff] 0.0
    %4604 = vst [vmem:[#allocation3 + $0x118] sm:$0x3] 0.0
    %4605 = vst [vmem:[#allocation3 + $0x120] sm:$0xff] 0.0
    %4606 = vst [vmem:[#allocation3 + $0x128] sm:$0xff] 0.0
    %4607 = vst [vmem:[#allocation3 + $0x130] sm:$0x3] 0.0
    %4608 = vst [vmem:[#allocation3 + $0x138] sm:$0xff] 0.0
    %4609 = vst [vmem:[#allocation3 + $0x140] sm:$0xff] 0.0
    %4610 = vst [vmem:[#allocation3 + $0x148] sm:$0x3] 0.0
    %4611 = vst [vmem:[#allocation3 + $0x150] sm:$0xff] 0.0
    %4612 = vst [vmem:[#allocation3 + $0x158] sm:$0xff] 0.0
    %4613 = vst [vmem:[#allocation3 + $0x160] sm:$0x3] 0.0
    %4614 = vst [vmem:[#allocation3 + $0x168] sm:$0xff] 0.0
    %4615 = vst [vmem:[#allocation3 + $0x170] sm:$0xff] 0.0
    %4616 = vst [vmem:[#allocation3 + $0x178] sm:$0x3] 0.0
    %4617 = vst [vmem:[#allocation3 + $0x180] sm:$0xff] 0.0
    %4618 = vst [vmem:[#allocation3 + $0x188] sm:$0xff] 0.0
    %4619 = vst [vmem:[#allocation3 + $0x190] sm:$0x3] 0.0
    %4620 = vst [vmem:[#allocation3 + $0x198] sm:$0xff] 0.0
    %4621 = vst [vmem:[#allocation3 + $0x1a0] sm:$0xff] 0.0
    %4622 = vst [vmem:[#allocation3 + $0x1a8] sm:$0x3] 0.0
    %4623 = vst [vmem:[#allocation3 + $0x1b0] sm:$0xff] 0.0
    %4624 = vst [vmem:[#allocation3 + $0x1b8] sm:$0xff] 0.0
    %4625 = vst [vmem:[#allocation3 + $0x1c0] sm:$0x3] 0.0
    %4626 = vst [vmem:[#allocation3 + $0x1c8] sm:$0xff] 0.0
    %4627 = vst [vmem:[#allocation3 + $0x1d0] sm:$0xff] 0.0
    %4628 = vst [vmem:[#allocation3 + $0x1d8] sm:$0x3] 0.0
    %4629 = vst [vmem:[#allocation3 + $0x1e0] sm:$0xff] 0.0
    %4630 = vst [vmem:[#allocation3 + $0x1e8] sm:$0xff] 0.0
    %4631 = vst [vmem:[#allocation3 + $0x1f0] sm:$0x3] 0.0
    %4632 = vst [vmem:[#allocation3 + $0x1f8] sm:$0xff] 0.0
    %4633 = vst [vmem:[#allocation3 + $0x200] sm:$0xff] 0.0
    %4634 = vst [vmem:[#allocation3 + $0x208] sm:$0x3] 0.0
    %4635 = vst [vmem:[#allocation3 + $0x210] sm:$0xff] 0.0
    %4636 = vst [vmem:[#allocation3 + $0x218] sm:$0xff] 0.0
    %4637 = vst [vmem:[#allocation3 + $0x220] sm:$0x3] 0.0
    %4638 = vst [vmem:[#allocation3 + $0x228] sm:$0xff] 0.0
    %4639 = vst [vmem:[#allocation3 + $0x230] sm:$0xff] 0.0
    %4640 = vst [vmem:[#allocation3 + $0x238] sm:$0x3] 0.0
    %4641 = vst [vmem:[#allocation3 + $0x240] sm:$0xff] 0.0
    %4642 = vst [vmem:[#allocation3 + $0x248] sm:$0xff] 0.0
    %4643 = vst [vmem:[#allocation3 + $0x250] sm:$0x3] 0.0
    %4644 = vst [vmem:[#allocation3 + $0x258] sm:$0xff] 0.0
    %4645 = vst [vmem:[#allocation3 + $0x260] sm:$0xff] 0.0
    %4646 = vst [vmem:[#allocation3 + $0x268] sm:$0x3] 0.0
    %4647 = vst [vmem:[#allocation3 + $0x270] sm:$0xff] 0.0
    %4648 = vst [vmem:[#allocation3 + $0x278] sm:$0xff] 0.0
    %4649 = vst [vmem:[#allocation3 + $0x280] sm:$0x3] 0.0
    %4650 = vst [vmem:[#allocation3 + $0x288] sm:$0xff] 0.0
    %4651 = vst [vmem:[#allocation3 + $0x290] sm:$0xff] 0.0
    %4652 = vst [vmem:[#allocation3 + $0x298] sm:$0x3] 0.0
    %4653 = vst [vmem:[#allocation3 + $0x2a0] sm:$0xff] 0.0
    %4654 = vst [vmem:[#allocation3 + $0x2a8] sm:$0xff] 0.0
    %4655 = vst [vmem:[#allocation3 + $0x2b0] sm:$0x3] 0.0
    %4656 = vst [vmem:[#allocation3 + $0x2b8] sm:$0xff] 0.0
    %4657 = vst [vmem:[#allocation3 + $0x2c0] sm:$0xff] 0.0
    %4658 = vst [vmem:[#allocation3 + $0x2c8] sm:$0x3] 0.0
    %4659 = vst [vmem:[#allocation3 + $0x2d0] sm:$0xff] 0.0
    %4660 = vst [vmem:[#allocation3 + $0x2d8] sm:$0xff] 0.0
    %4661 = vst [vmem:[#allocation3 + $0x2e0] sm:$0x3] 0.0
    %4662 = vst [vmem:[#allocation3 + $0x2e8] sm:$0xff] 0.0
    %4663 = vst [vmem:[#allocation3 + $0x2f0] sm:$0xff] 0.0
    %4664 = vst [vmem:[#allocation3 + $0x2f8] sm:$0x3] 0.0
    %4665 = vst [vmem:[#allocation3 + $0x300] sm:$0xff] 0.0
    %4666 = vst [vmem:[#allocation3 + $0x308] sm:$0xff] 0.0
    %4667 = vst [vmem:[#allocation3 + $0x310] sm:$0x3] 0.0
    %4668 = vst [vmem:[#allocation3 + $0x318] sm:$0xff] 0.0
    %4669 = vst [vmem:[#allocation3 + $0x320] sm:$0xff] 0.0
    %4670 = vst [vmem:[#allocation3 + $0x328] sm:$0x3] 0.0
    %4671 = vst [vmem:[#allocation3 + $0x330] sm:$0xff] 0.0
    %4672 = vst [vmem:[#allocation3 + $0x338] sm:$0xff] 0.0
    %4673 = vst [vmem:[#allocation3 + $0x340] sm:$0x3] 0.0
    %4674 = vst [vmem:[#allocation3 + $0x348] sm:$0xff] 0.0
    %4675 = vst [vmem:[#allocation3 + $0x350] sm:$0xff] 0.0
    %4676 = vst [vmem:[#allocation3 + $0x358] sm:$0x3] 0.0
    %s4677 = scalar_lea.vmem [#allocation3], 24
    %4678 = vst [vmem:[%s4677 + $0x1] sm:$0xff] %v4505
    %4679 = vst [vmem:[%s4677 + $0x9] sm:$0xff] %v4506
    %4680 = vst [vmem:[%s4677 + $0x19] sm:$0xff] %v4507
    %4681 = vst [vmem:[%s4677 + $0x21] sm:$0xff] %v4508
    %4682 = vst [vmem:[%s4677 + $0x31] sm:$0xff] %v4509
    %4683 = vst [vmem:[%s4677 + $0x39] sm:$0xff] %v4510
    %4684 = vst [vmem:[%s4677 + $0x49] sm:$0xff] %v4511
    %4685 = vst [vmem:[%s4677 + $0x51] sm:$0xff] %v4512
    %4686 = vst [vmem:[%s4677 + $0x61] sm:$0xff] %v4513
    %4687 = vst [vmem:[%s4677 + $0x69] sm:$0xff] %v4514
    %4688 = vst [vmem:[%s4677 + $0x79] sm:$0xff] %v4515
    %4689 = vst [vmem:[%s4677 + $0x81] sm:$0xff] %v4516
    %4690 = vst [vmem:[%s4677 + $0x91] sm:$0xff] %v4517
    %4691 = vst [vmem:[%s4677 + $0x99] sm:$0xff] %v4518
    %4692 = vst [vmem:[%s4677 + $0xa9] sm:$0xff] %v4519
    %4693 = vst [vmem:[%s4677 + $0xb1] sm:$0xff] %v4520
    %4694 = vst [vmem:[%s4677 + $0xc1] sm:$0xff] %v4521
    %4695 = vst [vmem:[%s4677 + $0xc9] sm:$0xff] %v4522
    %4696 = vst [vmem:[%s4677 + $0xd9] sm:$0xff] %v4523
    %4697 = vst [vmem:[%s4677 + $0xe1] sm:$0xff] %v4524
    %4698 = vst [vmem:[%s4677 + $0xf1] sm:$0xff] %v4525
    %4699 = vst [vmem:[%s4677 + $0xf9] sm:$0xff] %v4526
    %4700 = vst [vmem:[%s4677 + $0x109] sm:$0xff] %v4527
    %4701 = vst [vmem:[%s4677 + $0x111] sm:$0xff] %v4528
    %4702 = vst [vmem:[%s4677 + $0x121] sm:$0xff] %v4529
    %4703 = vst [vmem:[%s4677 + $0x129] sm:$0xff] %v4530
    %4704 = vst [vmem:[%s4677 + $0x139] sm:$0xff] %v4531
    %4705 = vst [vmem:[%s4677 + $0x141] sm:$0xff] %v4532
    %4706 = vst [vmem:[%s4677 + $0x151] sm:$0xff] %v4533
    %4707 = vst [vmem:[%s4677 + $0x159] sm:$0xff] %v4534
    %4708 = vst [vmem:[%s4677 + $0x169] sm:$0xff] %v4535
    %4709 = vst [vmem:[%s4677 + $0x171] sm:$0xff] %v4536
    %4710 = vst [vmem:[%s4677 + $0x1b1] sm:$0xff] %v4537
    %4711 = vst [vmem:[%s4677 + $0x1b9] sm:$0xff] %v4538
    %4712 = vst [vmem:[%s4677 + $0x1c9] sm:$0xff] %v4539
    %4713 = vst [vmem:[%s4677 + $0x1d1] sm:$0xff] %v4540
    %4714 = vst [vmem:[%s4677 + $0x1e1] sm:$0xff] %v4541
    %4715 = vst [vmem:[%s4677 + $0x1e9] sm:$0xff] %v4542
    %4716 = vst [vmem:[%s4677 + $0x1f9] sm:$0xff] %v4543
    %4717 = vst [vmem:[%s4677 + $0x201] sm:$0xff] %v4544
    %4718 = vst [vmem:[%s4677 + $0x211] sm:$0xff] %v4545
    %4719 = vst [vmem:[%s4677 + $0x219] sm:$0xff] %v4546
    %4720 = vst [vmem:[%s4677 + $0x229] sm:$0xff] %v4547
    %4721 = vst [vmem:[%s4677 + $0x231] sm:$0xff] %v4548
    %4722 = vst [vmem:[%s4677 + $0x241] sm:$0xff] %v4549
    %4723 = vst [vmem:[%s4677 + $0x249] sm:$0xff] %v4550
    %4724 = vst [vmem:[%s4677 + $0x259] sm:$0xff] %v4551
    %4725 = vst [vmem:[%s4677 + $0x261] sm:$0xff] %v4552
    %4726 = vst [vmem:[%s4677 + $0x271] sm:$0xff] %v4553
    %4727 = vst [vmem:[%s4677 + $0x279] sm:$0xff] %v4554
    %4728 = vst [vmem:[%s4677 + $0x289] sm:$0xff] %v4555
    %4729 = vst [vmem:[%s4677 + $0x291] sm:$0xff] %v4556
    %4730 = vst [vmem:[%s4677 + $0x2a1] sm:$0xff] %v4557
    %4731 = vst [vmem:[%s4677 + $0x2a9] sm:$0xff] %v4558
    %4732 = vst [vmem:[%s4677 + $0x2b9] sm:$0xff] %v4559
    %4733 = vst [vmem:[%s4677 + $0x2c1] sm:$0xff] %v4560
    %4734 = vst [vmem:[%s4677 + $0x2d1] sm:$0xff] %v4561
    %4735 = vst [vmem:[%s4677 + $0x2d9] sm:$0xff] %v4562
    %4736 = vst [vmem:[%s4677 + $0x2e9] sm:$0xff] %v4563
    %4737 = vst [vmem:[%s4677 + $0x2f1] sm:$0xff] %v4564
    %4738 = vst [vmem:[%s4677 + $0x301] sm:$0xff] %v4565
    %4739 = vst [vmem:[%s4677 + $0x309] sm:$0xff] %v4566
    %4740 = vst [vmem:[%s4677 + $0x319] sm:$0xff] %v4567
    %4741 = vst [vmem:[%s4677 + $0x321] sm:$0xff] %v4568
    %v4742 = vld [vmem:[#allocation3] sm:$0xff]
    %v4743 = vld [vmem:[#allocation3 + $0x8] sm:$0xff]
    %v4744 = vld [vmem:[#allocation3 + $0x18] sm:$0xff]
    %v4745 = vld [vmem:[#allocation3 + $0x20] sm:$0xff]
    %v4746 = vld [vmem:[#allocation3 + $0x30] sm:$0xff]
    %v4747 = vld [vmem:[#allocation3 + $0x38] sm:$0xff]
    %v4748 = vld [vmem:[#allocation3 + $0x48] sm:$0xff]
    %v4749 = vld [vmem:[#allocation3 + $0x50] sm:$0xff]
    %v4750 = vld [vmem:[#allocation3 + $0x60] sm:$0xff]
    %v4751 = vld [vmem:[#allocation3 + $0x68] sm:$0xff]
    %v4752 = vld [vmem:[#allocation3 + $0x78] sm:$0xff]
    %v4753 = vld [vmem:[#allocation3 + $0x80] sm:$0xff]
    %v4754 = vld [vmem:[#allocation3 + $0x90] sm:$0xff]
    %v4755 = vld [vmem:[#allocation3 + $0x98] sm:$0xff]
    %v4756 = vld [vmem:[#allocation3 + $0xa8] sm:$0xff]
    %v4757 = vld [vmem:[#allocation3 + $0xb0] sm:$0xff]
    %v4758 = vld [vmem:[#allocation3 + $0xc0] sm:$0xff]
    %v4759 = vld [vmem:[#allocation3 + $0xc8] sm:$0xff]
    %v4760 = vld [vmem:[#allocation3 + $0xd8] sm:$0xff]
    %v4761 = vld [vmem:[#allocation3 + $0xe0] sm:$0xff]
    %v4762 = vld [vmem:[#allocation3 + $0xf0] sm:$0xff]
    %v4763 = vld [vmem:[#allocation3 + $0xf8] sm:$0xff]
    %v4764 = vld [vmem:[#allocation3 + $0x108] sm:$0xff]
    %v4765 = vld [vmem:[#allocation3 + $0x110] sm:$0xff]
    %v4766 = vld [vmem:[#allocation3 + $0x120] sm:$0xff]
    %v4767 = vld [vmem:[#allocation3 + $0x128] sm:$0xff]
    %v4768 = vld [vmem:[#allocation3 + $0x138] sm:$0xff]
    %v4769 = vld [vmem:[#allocation3 + $0x140] sm:$0xff]
    %v4770 = vld [vmem:[#allocation3 + $0x150] sm:$0xff]
    %v4771 = vld [vmem:[#allocation3 + $0x158] sm:$0xff]
    %v4772 = vld [vmem:[#allocation3 + $0x168] sm:$0xff]
    %v4773 = vld [vmem:[#allocation3 + $0x170] sm:$0xff]
    %v4774 = vld [vmem:[#allocation3 + $0x1b0] sm:$0xff]
    %v4775 = vld [vmem:[#allocation3 + $0x1b8] sm:$0xff]
    %v4776 = vld [vmem:[#allocation3 + $0x1c8] sm:$0xff]
    %v4777 = vld [vmem:[#allocation3 + $0x1d0] sm:$0xff]
    %v4778 = vld [vmem:[#allocation3 + $0x1e0] sm:$0xff]
    %v4779 = vld [vmem:[#allocation3 + $0x1e8] sm:$0xff]
    %v4780 = vld [vmem:[#allocation3 + $0x1f8] sm:$0xff]
    %v4781 = vld [vmem:[#allocation3 + $0x200] sm:$0xff]
    %v4782 = vld [vmem:[#allocation3 + $0x210] sm:$0xff]
    %v4783 = vld [vmem:[#allocation3 + $0x218] sm:$0xff]
    %v4784 = vld [vmem:[#allocation3 + $0x228] sm:$0xff]
    %v4785 = vld [vmem:[#allocation3 + $0x230] sm:$0xff]
    %v4786 = vld [vmem:[#allocation3 + $0x240] sm:$0xff]
    %v4787 = vld [vmem:[#allocation3 + $0x248] sm:$0xff]
    %v4788 = vld [vmem:[#allocation3 + $0x258] sm:$0xff]
    %v4789 = vld [vmem:[#allocation3 + $0x260] sm:$0xff]
    %v4790 = vld [vmem:[#allocation3 + $0x270] sm:$0xff]
    %v4791 = vld [vmem:[#allocation3 + $0x278] sm:$0xff]
    %v4792 = vld [vmem:[#allocation3 + $0x288] sm:$0xff]
    %v4793 = vld [vmem:[#allocation3 + $0x290] sm:$0xff]
    %v4794 = vld [vmem:[#allocation3 + $0x2a0] sm:$0xff]
    %v4795 = vld [vmem:[#allocation3 + $0x2a8] sm:$0xff]
    %v4796 = vld [vmem:[#allocation3 + $0x2b8] sm:$0xff]
    %v4797 = vld [vmem:[#allocation3 + $0x2c0] sm:$0xff]
    %v4798 = vld [vmem:[#allocation3 + $0x2d0] sm:$0xff]
    %v4799 = vld [vmem:[#allocation3 + $0x2d8] sm:$0xff]
    %v4800 = vld [vmem:[#allocation3 + $0x2e8] sm:$0xff]
    %v4801 = vld [vmem:[#allocation3 + $0x2f0] sm:$0xff]
    %v4802 = vld [vmem:[#allocation3 + $0x300] sm:$0xff]
    %v4803 = vld [vmem:[#allocation3 + $0x308] sm:$0xff]
    %v4804 = vld [vmem:[#allocation3 + $0x318] sm:$0xff]
    %v4805 = vld [vmem:[#allocation3 + $0x320] sm:$0xff]
    %4806 = vst [vmem:[#allocation4] sm:$0xff] %v4742
    %4807 = vst [vmem:[#allocation4 + $0x48] sm:$0xff] %v4743
    %4808 = vst [vmem:[#allocation4 + $0x90] sm:$0xff] %v4744
    %4809 = vst [vmem:[#allocation4 + $0xd8] sm:$0xff] %v4745
    %4810 = vst [vmem:[#allocation4 + $0x120] sm:$0xff] %v4746
    %4811 = vst [vmem:[#allocation4 + $0x168] sm:$0xff] %v4747
    %4812 = vst [vmem:[#allocation4 + $0x1b0] sm:$0xff] %v4748
    %4813 = vst [vmem:[#allocation4 + $0x1f8] sm:$0xff] %v4749
    %4814 = vst [vmem:[#allocation4 + $0x240] sm:$0xff] %v4750
    %4815 = vst [vmem:[#allocation4 + $0x288] sm:$0xff] %v4751
    %4816 = vst [vmem:[#allocation4 + $0x2d0] sm:$0xff] %v4752
    %4817 = vst [vmem:[#allocation4 + $0x318] sm:$0xff] %v4753
    %4818 = vst [vmem:[#allocation4 + $0x360] sm:$0xff] %v4754
    %4819 = vst [vmem:[#allocation4 + $0x3a8] sm:$0xff] %v4755
    %4820 = vst [vmem:[#allocation4 + $0x3f0] sm:$0xff] %v4756
    %4821 = vst [vmem:[#allocation4 + $0x438] sm:$0xff] %v4757
    %4822 = vst [vmem:[#allocation4 + $0x480] sm:$0xff] %v4758
    %4823 = vst [vmem:[#allocation4 + $0x4c8] sm:$0xff] %v4759
    %4824 = vst [vmem:[#allocation4 + $0x510] sm:$0xff] %v4760
    %4825 = vst [vmem:[#allocation4 + $0x558] sm:$0xff] %v4761
    %4826 = vst [vmem:[#allocation4 + $0x5a0] sm:$0xff] %v4762
    %4827 = vst [vmem:[#allocation4 + $0x5e8] sm:$0xff] %v4763
    %4828 = vst [vmem:[#allocation4 + $0x630] sm:$0xff] %v4764
    %4829 = vst [vmem:[#allocation4 + $0x678] sm:$0xff] %v4765
    %4830 = vst [vmem:[#allocation4 + $0x6c0] sm:$0xff] %v4766
    %4831 = vst [vmem:[#allocation4 + $0x708] sm:$0xff] %v4767
    %4832 = vst [vmem:[#allocation4 + $0x750] sm:$0xff] %v4768
    %4833 = vst [vmem:[#allocation4 + $0x798] sm:$0xff] %v4769
    %4834 = vst [vmem:[#allocation4 + $0x7e0] sm:$0xff] %v4770
    %4835 = vst [vmem:[#allocation4 + $0x828] sm:$0xff] %v4771
    %4836 = vst [vmem:[#allocation4 + $0x870] sm:$0xff] %v4772
    %4837 = vst [vmem:[#allocation4 + $0x8b8] sm:$0xff] %v4773
    %4838 = vst [vmem:[#allocation4 + $0x900] sm:$0xff] %v4774
    %4839 = vst [vmem:[#allocation4 + $0x948] sm:$0xff] %v4775
    %4840 = vst [vmem:[#allocation4 + $0x990] sm:$0xff] %v4776
    %4841 = vst [vmem:[#allocation4 + $0x9d8] sm:$0xff] %v4777
    %4842 = vst [vmem:[#allocation4 + $0xa20] sm:$0xff] %v4778
    %4843 = vst [vmem:[#allocation4 + $0xa68] sm:$0xff] %v4779
    %4844 = vst [vmem:[#allocation4 + $0xab0] sm:$0xff] %v4780
    %4845 = vst [vmem:[#allocation4 + $0xaf8] sm:$0xff] %v4781
    %4846 = vst [vmem:[#allocation4 + $0xb40] sm:$0xff] %v4782
    %4847 = vst [vmem:[#allocation4 + $0xb88] sm:$0xff] %v4783
    %4848 = vst [vmem:[#allocation4 + $0xbd0] sm:$0xff] %v4784
    %4849 = vst [vmem:[#allocation4 + $0xc18] sm:$0xff] %v4785
    %4850 = vst [vmem:[#allocation4 + $0xc60] sm:$0xff] %v4786
    %4851 = vst [vmem:[#allocation4 + $0xca8] sm:$0xff] %v4787
    %4852 = vst [vmem:[#allocation4 + $0xcf0] sm:$0xff] %v4788
    %4853 = vst [vmem:[#allocation4 + $0xd38] sm:$0xff] %v4789
    %4854 = vst [vmem:[#allocation4 + $0xd80] sm:$0xff] %v4790
    %4855 = vst [vmem:[#allocation4 + $0xdc8] sm:$0xff] %v4791
    %4856 = vst [vmem:[#allocation4 + $0xe10] sm:$0xff] %v4792
    %4857 = vst [vmem:[#allocation4 + $0xe58] sm:$0xff] %v4793
    %4858 = vst [vmem:[#allocation4 + $0xea0] sm:$0xff] %v4794
    %4859 = vst [vmem:[#allocation4 + $0xee8] sm:$0xff] %v4795
    %4860 = vst [vmem:[#allocation4 + $0xf30] sm:$0xff] %v4796
    %4861 = vst [vmem:[#allocation4 + $0xf78] sm:$0xff] %v4797
    %4862 = vst [vmem:[#allocation4 + $0xfc0] sm:$0xff] %v4798
    %4863 = vst [vmem:[#allocation4 + $0x1008] sm:$0xff] %v4799
    %4864 = vst [vmem:[#allocation4 + $0x1050] sm:$0xff] %v4800
    %4865 = vst [vmem:[#allocation4 + $0x1098] sm:$0xff] %v4801
    %4866 = vst [vmem:[#allocation4 + $0x10e0] sm:$0xff] %v4802
    %4867 = vst [vmem:[#allocation4 + $0x1128] sm:$0xff] %v4803
    %4868 = vst [vmem:[#allocation4 + $0x1170] sm:$0xff] %v4804
    %4869 = vst [vmem:[#allocation4 + $0x11b8] sm:$0xff] %v4805
    %v4870 = vld [vmem:[#allocation3 + $0x1] sm:$0xff]
    %v4871 = vld [vmem:[#allocation3 + $0x9] sm:$0xff]
    %v4872 = vld [vmem:[#allocation3 + $0x19] sm:$0xff]
    %v4873 = vld [vmem:[#allocation3 + $0x21] sm:$0xff]
    %v4874 = vld [vmem:[#allocation3 + $0x31] sm:$0xff]
    %v4875 = vld [vmem:[#allocation3 + $0x39] sm:$0xff]
    %v4876 = vld [vmem:[#allocation3 + $0x49] sm:$0xff]
    %v4877 = vld [vmem:[#allocation3 + $0x51] sm:$0xff]
    %v4878 = vld [vmem:[#allocation3 + $0x61] sm:$0xff]
    %v4879 = vld [vmem:[#allocation3 + $0x69] sm:$0xff]
    %v4880 = vld [vmem:[#allocation3 + $0x79] sm:$0xff]
    %v4881 = vld [vmem:[#allocation3 + $0x81] sm:$0xff]
    %v4882 = vld [vmem:[#allocation3 + $0x91] sm:$0xff]
    %v4883 = vld [vmem:[#allocation3 + $0x99] sm:$0xff]
    %v4884 = vld [vmem:[#allocation3 + $0xa9] sm:$0xff]
    %v4885 = vld [vmem:[#allocation3 + $0xb1] sm:$0xff]
    %v4886 = vld [vmem:[#allocation3 + $0xc1] sm:$0xff]
    %v4887 = vld [vmem:[#allocation3 + $0xc9] sm:$0xff]
    %v4888 = vld [vmem:[#allocation3 + $0xd9] sm:$0xff]
    %v4889 = vld [vmem:[#allocation3 + $0xe1] sm:$0xff]
    %v4890 = vld [vmem:[#allocation3 + $0xf1] sm:$0xff]
    %v4891 = vld [vmem:[#allocation3 + $0xf9] sm:$0xff]
    %v4892 = vld [vmem:[#allocation3 + $0x109] sm:$0xff]
    %v4893 = vld [vmem:[#allocation3 + $0x111] sm:$0xff]
    %v4894 = vld [vmem:[#allocation3 + $0x121] sm:$0xff]
    %v4895 = vld [vmem:[#allocation3 + $0x129] sm:$0xff]
    %v4896 = vld [vmem:[#allocation3 + $0x139] sm:$0xff]
    %v4897 = vld [vmem:[#allocation3 + $0x141] sm:$0xff]
    %v4898 = vld [vmem:[#allocation3 + $0x151] sm:$0xff]
    %v4899 = vld [vmem:[#allocation3 + $0x159] sm:$0xff]
    %v4900 = vld [vmem:[#allocation3 + $0x169] sm:$0xff]
    %v4901 = vld [vmem:[#allocation3 + $0x171] sm:$0xff]
    %v4902 = vld [vmem:[#allocation3 + $0x1b1] sm:$0xff]
    %v4903 = vld [vmem:[#allocation3 + $0x1b9] sm:$0xff]
    %v4904 = vld [vmem:[#allocation3 + $0x1c9] sm:$0xff]
    %v4905 = vld [vmem:[#allocation3 + $0x1d1] sm:$0xff]
    %v4906 = vld [vmem:[#allocation3 + $0x1e1] sm:$0xff]
    %v4907 = vld [vmem:[#allocation3 + $0x1e9] sm:$0xff]
    %v4908 = vld [vmem:[#allocation3 + $0x1f9] sm:$0xff]
    %v4909 = vld [vmem:[#allocation3 + $0x201] sm:$0xff]
    %v4910 = vld [vmem:[#allocation3 + $0x211] sm:$0xff]
    %v4911 = vld [vmem:[#allocation3 + $0x219] sm:$0xff]
    %v4912 = vld [vmem:[#allocation3 + $0x229] sm:$0xff]
    %v4913 = vld [vmem:[#allocation3 + $0x231] sm:$0xff]
    %v4914 = vld [vmem:[#allocation3 + $0x241] sm:$0xff]
    %v4915 = vld [vmem:[#allocation3 + $0x249] sm:$0xff]
    %v4916 = vld [vmem:[#allocation3 + $0x259] sm:$0xff]
    %v4917 = vld [vmem:[#allocation3 + $0x261] sm:$0xff]
    %v4918 = vld [vmem:[#allocation3 + $0x271] sm:$0xff]
    %v4919 = vld [vmem:[#allocation3 + $0x279] sm:$0xff]
    %v4920 = vld [vmem:[#allocation3 + $0x289] sm:$0xff]
    %v4921 = vld [vmem:[#allocation3 + $0x291] sm:$0xff]
    %v4922 = vld [vmem:[#allocation3 + $0x2a1] sm:$0xff]
    %v4923 = vld [vmem:[#allocation3 + $0x2a9] sm:$0xff]
    %v4924 = vld [vmem:[#allocation3 + $0x2b9] sm:$0xff]
    %v4925 = vld [vmem:[#allocation3 + $0x2c1] sm:$0xff]
    %v4926 = vld [vmem:[#allocation3 + $0x2d1] sm:$0xff]
    %v4927 = vld [vmem:[#allocation3 + $0x2d9] sm:$0xff]
    %v4928 = vld [vmem:[#allocation3 + $0x2e9] sm:$0xff]
    %v4929 = vld [vmem:[#allocation3 + $0x2f1] sm:$0xff]
    %v4930 = vld [vmem:[#allocation3 + $0x301] sm:$0xff]
    %v4931 = vld [vmem:[#allocation3 + $0x309] sm:$0xff]
    %v4932 = vld [vmem:[#allocation3 + $0x319] sm:$0xff]
    %v4933 = vld [vmem:[#allocation3 + $0x321] sm:$0xff]
    %4934 = vst [vmem:[#allocation4 + $0x8] sm:$0xff] %v4870
    %4935 = vst [vmem:[#allocation4 + $0x50] sm:$0xff] %v4871
    %4936 = vst [vmem:[#allocation4 + $0x98] sm:$0xff] %v4872
    %4937 = vst [vmem:[#allocation4 + $0xe0] sm:$0xff] %v4873
    %4938 = vst [vmem:[#allocation4 + $0x128] sm:$0xff] %v4874
    %4939 = vst [vmem:[#allocation4 + $0x170] sm:$0xff] %v4875
    %4940 = vst [vmem:[#allocation4 + $0x1b8] sm:$0xff] %v4876
    %4941 = vst [vmem:[#allocation4 + $0x200] sm:$0xff] %v4877
    %4942 = vst [vmem:[#allocation4 + $0x248] sm:$0xff] %v4878
    %4943 = vst [vmem:[#allocation4 + $0x290] sm:$0xff] %v4879
    %4944 = vst [vmem:[#allocation4 + $0x2d8] sm:$0xff] %v4880
    %4945 = vst [vmem:[#allocation4 + $0x320] sm:$0xff] %v4881
    %4946 = vst [vmem:[#allocation4 + $0x368] sm:$0xff] %v4882
    %4947 = vst [vmem:[#allocation4 + $0x3b0] sm:$0xff] %v4883
    %4948 = vst [vmem:[#allocation4 + $0x3f8] sm:$0xff] %v4884
    %4949 = vst [vmem:[#allocation4 + $0x440] sm:$0xff] %v4885
    %4950 = vst [vmem:[#allocation4 + $0x488] sm:$0xff] %v4886
    %4951 = vst [vmem:[#allocation4 + $0x4d0] sm:$0xff] %v4887
    %4952 = vst [vmem:[#allocation4 + $0x518] sm:$0xff] %v4888
    %4953 = vst [vmem:[#allocation4 + $0x560] sm:$0xff] %v4889
    %4954 = vst [vmem:[#allocation4 + $0x5a8] sm:$0xff] %v4890
    %4955 = vst [vmem:[#allocation4 + $0x5f0] sm:$0xff] %v4891
    %4956 = vst [vmem:[#allocation4 + $0x638] sm:$0xff] %v4892
    %4957 = vst [vmem:[#allocation4 + $0x680] sm:$0xff] %v4893
    %4958 = vst [vmem:[#allocation4 + $0x6c8] sm:$0xff] %v4894
    %4959 = vst [vmem:[#allocation4 + $0x710] sm:$0xff] %v4895
    %4960 = vst [vmem:[#allocation4 + $0x758] sm:$0xff] %v4896
    %4961 = vst [vmem:[#allocation4 + $0x7a0] sm:$0xff] %v4897
    %4962 = vst [vmem:[#allocation4 + $0x7e8] sm:$0xff] %v4898
    %4963 = vst [vmem:[#allocation4 + $0x830] sm:$0xff] %v4899
    %4964 = vst [vmem:[#allocation4 + $0x878] sm:$0xff] %v4900
    %4965 = vst [vmem:[#allocation4 + $0x8c0] sm:$0xff] %v4901
    %4966 = vst [vmem:[#allocation4 + $0x908] sm:$0xff] %v4902
    %4967 = vst [vmem:[#allocation4 + $0x950] sm:$0xff] %v4903
    %4968 = vst [vmem:[#allocation4 + $0x998] sm:$0xff] %v4904
    %4969 = vst [vmem:[#allocation4 + $0x9e0] sm:$0xff] %v4905
    %4970 = vst [vmem:[#allocation4 + $0xa28] sm:$0xff] %v4906
    %4971 = vst [vmem:[#allocation4 + $0xa70] sm:$0xff] %v4907
    %4972 = vst [vmem:[#allocation4 + $0xab8] sm:$0xff] %v4908
    %4973 = vst [vmem:[#allocation4 + $0xb00] sm:$0xff] %v4909
    %4974 = vst [vmem:[#allocation4 + $0xb48] sm:$0xff] %v4910
    %4975 = vst [vmem:[#allocation4 + $0xb90] sm:$0xff] %v4911
    %4976 = vst [vmem:[#allocation4 + $0xbd8] sm:$0xff] %v4912
    %4977 = vst [vmem:[#allocation4 + $0xc20] sm:$0xff] %v4913
    %4978 = vst [vmem:[#allocation4 + $0xc68] sm:$0xff] %v4914
    %4979 = vst [vmem:[#allocation4 + $0xcb0] sm:$0xff] %v4915
    %4980 = vst [vmem:[#allocation4 + $0xcf8] sm:$0xff] %v4916
    %4981 = vst [vmem:[#allocation4 + $0xd40] sm:$0xff] %v4917
    %4982 = vst [vmem:[#allocation4 + $0xd88] sm:$0xff] %v4918
    %4983 = vst [vmem:[#allocation4 + $0xdd0] sm:$0xff] %v4919
    %4984 = vst [vmem:[#allocation4 + $0xe18] sm:$0xff] %v4920
    %4985 = vst [vmem:[#allocation4 + $0xe60] sm:$0xff] %v4921
    %4986 = vst [vmem:[#allocation4 + $0xea8] sm:$0xff] %v4922
    %4987 = vst [vmem:[#allocation4 + $0xef0] sm:$0xff] %v4923
    %4988 = vst [vmem:[#allocation4 + $0xf38] sm:$0xff] %v4924
    %4989 = vst [vmem:[#allocation4 + $0xf80] sm:$0xff] %v4925
    %4990 = vst [vmem:[#allocation4 + $0xfc8] sm:$0xff] %v4926
    %4991 = vst [vmem:[#allocation4 + $0x1010] sm:$0xff] %v4927
    %4992 = vst [vmem:[#allocation4 + $0x1058] sm:$0xff] %v4928
    %4993 = vst [vmem:[#allocation4 + $0x10a0] sm:$0xff] %v4929
    %4994 = vst [vmem:[#allocation4 + $0x10e8] sm:$0xff] %v4930
    %4995 = vst [vmem:[#allocation4 + $0x1130] sm:$0xff] %v4931
    %4996 = vst [vmem:[#allocation4 + $0x1178] sm:$0xff] %v4932
    %4997 = vst [vmem:[#allocation4 + $0x11c0] sm:$0xff] %v4933
    %v4998 = vld [vmem:[#allocation3 + $0x2] sm:$0xff]
    %v4999 = vld [vmem:[#allocation3 + $0xa] sm:$0xff]
    %v5000 = vld [vmem:[#allocation3 + $0x1a] sm:$0xff]
    %v5001 = vld [vmem:[#allocation3 + $0x22] sm:$0xff]
    %v5002 = vld [vmem:[#allocation3 + $0x32] sm:$0xff]
    %v5003 = vld [vmem:[#allocation3 + $0x3a] sm:$0xff]
    %v5004 = vld [vmem:[#allocation3 + $0x4a] sm:$0xff]
    %v5005 = vld [vmem:[#allocation3 + $0x52] sm:$0xff]
    %v5006 = vld [vmem:[#allocation3 + $0x62] sm:$0xff]
    %v5007 = vld [vmem:[#allocation3 + $0x6a] sm:$0xff]
    %v5008 = vld [vmem:[#allocation3 + $0x7a] sm:$0xff]
    %v5009 = vld [vmem:[#allocation3 + $0x82] sm:$0xff]
    %v5010 = vld [vmem:[#allocation3 + $0x92] sm:$0xff]
    %v5011 = vld [vmem:[#allocation3 + $0x9a] sm:$0xff]
    %v5012 = vld [vmem:[#allocation3 + $0xaa] sm:$0xff]
    %v5013 = vld [vmem:[#allocation3 + $0xb2] sm:$0xff]
    %v5014 = vld [vmem:[#allocation3 + $0xc2] sm:$0xff]
    %v5015 = vld [vmem:[#allocation3 + $0xca] sm:$0xff]
    %v5016 = vld [vmem:[#allocation3 + $0xda] sm:$0xff]
    %v5017 = vld [vmem:[#allocation3 + $0xe2] sm:$0xff]
    %v5018 = vld [vmem:[#allocation3 + $0xf2] sm:$0xff]
    %v5019 = vld [vmem:[#allocation3 + $0xfa] sm:$0xff]
    %v5020 = vld [vmem:[#allocation3 + $0x10a] sm:$0xff]
    %v5021 = vld [vmem:[#allocation3 + $0x112] sm:$0xff]
    %v5022 = vld [vmem:[#allocation3 + $0x122] sm:$0xff]
    %v5023 = vld [vmem:[#allocation3 + $0x12a] sm:$0xff]
    %v5024 = vld [vmem:[#allocation3 + $0x13a] sm:$0xff]
    %v5025 = vld [vmem:[#allocation3 + $0x142] sm:$0xff]
    %v5026 = vld [vmem:[#allocation3 + $0x152] sm:$0xff]
    %v5027 = vld [vmem:[#allocation3 + $0x15a] sm:$0xff]
    %v5028 = vld [vmem:[#allocation3 + $0x16a] sm:$0xff]
    %v5029 = vld [vmem:[#allocation3 + $0x172] sm:$0xff]
    %v5030 = vld [vmem:[#allocation3 + $0x1b2] sm:$0xff]
    %v5031 = vld [vmem:[#allocation3 + $0x1ba] sm:$0xff]
    %v5032 = vld [vmem:[#allocation3 + $0x1ca] sm:$0xff]
    %v5033 = vld [vmem:[#allocation3 + $0x1d2] sm:$0xff]
    %v5034 = vld [vmem:[#allocation3 + $0x1e2] sm:$0xff]
    %v5035 = vld [vmem:[#allocation3 + $0x1ea] sm:$0xff]
    %v5036 = vld [vmem:[#allocation3 + $0x1fa] sm:$0xff]
    %v5037 = vld [vmem:[#allocation3 + $0x202] sm:$0xff]
    %v5038 = vld [vmem:[#allocation3 + $0x212] sm:$0xff]
    %v5039 = vld [vmem:[#allocation3 + $0x21a] sm:$0xff]
    %v5040 = vld [vmem:[#allocation3 + $0x22a] sm:$0xff]
    %v5041 = vld [vmem:[#allocation3 + $0x232] sm:$0xff]
    %v5042 = vld [vmem:[#allocation3 + $0x242] sm:$0xff]
    %v5043 = vld [vmem:[#allocation3 + $0x24a] sm:$0xff]
    %v5044 = vld [vmem:[#allocation3 + $0x25a] sm:$0xff]
    %v5045 = vld [vmem:[#allocation3 + $0x262] sm:$0xff]
    %v5046 = vld [vmem:[#allocation3 + $0x272] sm:$0xff]
    %v5047 = vld [vmem:[#allocation3 + $0x27a] sm:$0xff]
    %v5048 = vld [vmem:[#allocation3 + $0x28a] sm:$0xff]
    %v5049 = vld [vmem:[#allocation3 + $0x292] sm:$0xff]
    %v5050 = vld [vmem:[#allocation3 + $0x2a2] sm:$0xff]
    %v5051 = vld [vmem:[#allocation3 + $0x2aa] sm:$0xff]
    %v5052 = vld [vmem:[#allocation3 + $0x2ba] sm:$0xff]
    %v5053 = vld [vmem:[#allocation3 + $0x2c2] sm:$0xff]
    %v5054 = vld [vmem:[#allocation3 + $0x2d2] sm:$0xff]
    %v5055 = vld [vmem:[#allocation3 + $0x2da] sm:$0xff]
    %v5056 = vld [vmem:[#allocation3 + $0x2ea] sm:$0xff]
    %v5057 = vld [vmem:[#allocation3 + $0x2f2] sm:$0xff]
    %v5058 = vld [vmem:[#allocation3 + $0x302] sm:$0xff]
    %v5059 = vld [vmem:[#allocation3 + $0x30a] sm:$0xff]
    %v5060 = vld [vmem:[#allocation3 + $0x31a] sm:$0xff]
    %v5061 = vld [vmem:[#allocation3 + $0x322] sm:$0xff]
    %5062 = vst [vmem:[#allocation4 + $0x10] sm:$0xff] %v4998
    %5063 = vst [vmem:[#allocation4 + $0x58] sm:$0xff] %v4999
    %5064 = vst [vmem:[#allocation4 + $0xa0] sm:$0xff] %v5000
    %5065 = vst [vmem:[#allocation4 + $0xe8] sm:$0xff] %v5001
    %5066 = vst [vmem:[#allocation4 + $0x130] sm:$0xff] %v5002
    %5067 = vst [vmem:[#allocation4 + $0x178] sm:$0xff] %v5003
    %5068 = vst [vmem:[#allocation4 + $0x1c0] sm:$0xff] %v5004
    %5069 = vst [vmem:[#allocation4 + $0x208] sm:$0xff] %v5005
    %5070 = vst [vmem:[#allocation4 + $0x250] sm:$0xff] %v5006
    %5071 = vst [vmem:[#allocation4 + $0x298] sm:$0xff] %v5007
    %5072 = vst [vmem:[#allocation4 + $0x2e0] sm:$0xff] %v5008
    %5073 = vst [vmem:[#allocation4 + $0x328] sm:$0xff] %v5009
    %5074 = vst [vmem:[#allocation4 + $0x370] sm:$0xff] %v5010
    %5075 = vst [vmem:[#allocation4 + $0x3b8] sm:$0xff] %v5011
    %5076 = vst [vmem:[#allocation4 + $0x400] sm:$0xff] %v5012
    %5077 = vst [vmem:[#allocation4 + $0x448] sm:$0xff] %v5013
    %5078 = vst [vmem:[#allocation4 + $0x490] sm:$0xff] %v5014
    %5079 = vst [vmem:[#allocation4 + $0x4d8] sm:$0xff] %v5015
    %5080 = vst [vmem:[#allocation4 + $0x520] sm:$0xff] %v5016
    %5081 = vst [vmem:[#allocation4 + $0x568] sm:$0xff] %v5017
    %5082 = vst [vmem:[#allocation4 + $0x5b0] sm:$0xff] %v5018
    %5083 = vst [vmem:[#allocation4 + $0x5f8] sm:$0xff] %v5019
    %5084 = vst [vmem:[#allocation4 + $0x640] sm:$0xff] %v5020
    %5085 = vst [vmem:[#allocation4 + $0x688] sm:$0xff] %v5021
    %5086 = vst [vmem:[#allocation4 + $0x6d0] sm:$0xff] %v5022
    %5087 = vst [vmem:[#allocation4 + $0x718] sm:$0xff] %v5023
    %5088 = vst [vmem:[#allocation4 + $0x760] sm:$0xff] %v5024
    %5089 = vst [vmem:[#allocation4 + $0x7a8] sm:$0xff] %v5025
    %5090 = vst [vmem:[#allocation4 + $0x7f0] sm:$0xff] %v5026
    %5091 = vst [vmem:[#allocation4 + $0x838] sm:$0xff] %v5027
    %5092 = vst [vmem:[#allocation4 + $0x880] sm:$0xff] %v5028
    %5093 = vst [vmem:[#allocation4 + $0x8c8] sm:$0xff] %v5029
    %5094 = vst [vmem:[#allocation4 + $0x910] sm:$0xff] %v5030
    %5095 = vst [vmem:[#allocation4 + $0x958] sm:$0xff] %v5031
    %5096 = vst [vmem:[#allocation4 + $0x9a0] sm:$0xff] %v5032
    %5097 = vst [vmem:[#allocation4 + $0x9e8] sm:$0xff] %v5033
    %5098 = vst [vmem:[#allocation4 + $0xa30] sm:$0xff] %v5034
    %5099 = vst [vmem:[#allocation4 + $0xa78] sm:$0xff] %v5035
    %5100 = vst [vmem:[#allocation4 + $0xac0] sm:$0xff] %v5036
    %5101 = vst [vmem:[#allocation4 + $0xb08] sm:$0xff] %v5037
    %5102 = vst [vmem:[#allocation4 + $0xb50] sm:$0xff] %v5038
    %5103 = vst [vmem:[#allocation4 + $0xb98] sm:$0xff] %v5039
    %5104 = vst [vmem:[#allocation4 + $0xbe0] sm:$0xff] %v5040
    %5105 = vst [vmem:[#allocation4 + $0xc28] sm:$0xff] %v5041
    %5106 = vst [vmem:[#allocation4 + $0xc70] sm:$0xff] %v5042
    %5107 = vst [vmem:[#allocation4 + $0xcb8] sm:$0xff] %v5043
    %5108 = vst [vmem:[#allocation4 + $0xd00] sm:$0xff] %v5044
    %5109 = vst [vmem:[#allocation4 + $0xd48] sm:$0xff] %v5045
    %5110 = vst [vmem:[#allocation4 + $0xd90] sm:$0xff] %v5046
    %5111 = vst [vmem:[#allocation4 + $0xdd8] sm:$0xff] %v5047
    %5112 = vst [vmem:[#allocation4 + $0xe20] sm:$0xff] %v5048
    %5113 = vst [vmem:[#allocation4 + $0xe68] sm:$0xff] %v5049
    %5114 = vst [vmem:[#allocation4 + $0xeb0] sm:$0xff] %v5050
    %5115 = vst [vmem:[#allocation4 + $0xef8] sm:$0xff] %v5051
    %5116 = vst [vmem:[#allocation4 + $0xf40] sm:$0xff] %v5052
    %5117 = vst [vmem:[#allocation4 + $0xf88] sm:$0xff] %v5053
    %5118 = vst [vmem:[#allocation4 + $0xfd0] sm:$0xff] %v5054
    %5119 = vst [vmem:[#allocation4 + $0x1018] sm:$0xff] %v5055
    %5120 = vst [vmem:[#allocation4 + $0x1060] sm:$0xff] %v5056
    %5121 = vst [vmem:[#allocation4 + $0x10a8] sm:$0xff] %v5057
    %5122 = vst [vmem:[#allocation4 + $0x10f0] sm:$0xff] %v5058
    %5123 = vst [vmem:[#allocation4 + $0x1138] sm:$0xff] %v5059
    %5124 = vst [vmem:[#allocation4 + $0x1180] sm:$0xff] %v5060
    %5125 = vst [vmem:[#allocation4 + $0x11c8] sm:$0xff] %v5061
    %v5126 = vld [vmem:[%s4677] sm:$0xff]
    %v5127 = vld [vmem:[%s4677 + $0x8] sm:$0xff]
    %v5128 = vld [vmem:[%s4677 + $0x18] sm:$0xff]
    %v5129 = vld [vmem:[%s4677 + $0x20] sm:$0xff]
    %v5130 = vld [vmem:[%s4677 + $0x30] sm:$0xff]
    %v5131 = vld [vmem:[%s4677 + $0x38] sm:$0xff]
    %v5132 = vld [vmem:[%s4677 + $0x48] sm:$0xff]
    %v5133 = vld [vmem:[%s4677 + $0x50] sm:$0xff]
    %v5134 = vld [vmem:[%s4677 + $0x60] sm:$0xff]
    %v5135 = vld [vmem:[%s4677 + $0x68] sm:$0xff]
    %v5136 = vld [vmem:[%s4677 + $0x78] sm:$0xff]
    %v5137 = vld [vmem:[%s4677 + $0x80] sm:$0xff]
    %v5138 = vld [vmem:[%s4677 + $0x90] sm:$0xff]
    %v5139 = vld [vmem:[%s4677 + $0x98] sm:$0xff]
    %v5140 = vld [vmem:[%s4677 + $0xa8] sm:$0xff]
    %v5141 = vld [vmem:[%s4677 + $0xb0] sm:$0xff]
    %v5142 = vld [vmem:[%s4677 + $0xc0] sm:$0xff]
    %v5143 = vld [vmem:[%s4677 + $0xc8] sm:$0xff]
    %v5144 = vld [vmem:[%s4677 + $0xd8] sm:$0xff]
    %v5145 = vld [vmem:[%s4677 + $0xe0] sm:$0xff]
    %v5146 = vld [vmem:[%s4677 + $0xf0] sm:$0xff]
    %v5147 = vld [vmem:[%s4677 + $0xf8] sm:$0xff]
    %v5148 = vld [vmem:[%s4677 + $0x108] sm:$0xff]
    %v5149 = vld [vmem:[%s4677 + $0x110] sm:$0xff]
    %v5150 = vld [vmem:[%s4677 + $0x120] sm:$0xff]
    %v5151 = vld [vmem:[%s4677 + $0x128] sm:$0xff]
    %v5152 = vld [vmem:[%s4677 + $0x138] sm:$0xff]
    %v5153 = vld [vmem:[%s4677 + $0x140] sm:$0xff]
    %v5154 = vld [vmem:[%s4677 + $0x150] sm:$0xff]
    %v5155 = vld [vmem:[%s4677 + $0x158] sm:$0xff]
    %v5156 = vld [vmem:[%s4677 + $0x168] sm:$0xff]
    %v5157 = vld [vmem:[%s4677 + $0x170] sm:$0xff]
    %v5158 = vld [vmem:[%s4677 + $0x1b0] sm:$0xff]
    %v5159 = vld [vmem:[%s4677 + $0x1b8] sm:$0xff]
    %v5160 = vld [vmem:[%s4677 + $0x1c8] sm:$0xff]
    %v5161 = vld [vmem:[%s4677 + $0x1d0] sm:$0xff]
    %v5162 = vld [vmem:[%s4677 + $0x1e0] sm:$0xff]
    %v5163 = vld [vmem:[%s4677 + $0x1e8] sm:$0xff]
    %v5164 = vld [vmem:[%s4677 + $0x1f8] sm:$0xff]
    %v5165 = vld [vmem:[%s4677 + $0x200] sm:$0xff]
    %v5166 = vld [vmem:[%s4677 + $0x210] sm:$0xff]
    %v5167 = vld [vmem:[%s4677 + $0x218] sm:$0xff]
    %v5168 = vld [vmem:[%s4677 + $0x228] sm:$0xff]
    %v5169 = vld [vmem:[%s4677 + $0x230] sm:$0xff]
    %v5170 = vld [vmem:[%s4677 + $0x240] sm:$0xff]
    %v5171 = vld [vmem:[%s4677 + $0x248] sm:$0xff]
    %v5172 = vld [vmem:[%s4677 + $0x258] sm:$0xff]
    %v5173 = vld [vmem:[%s4677 + $0x260] sm:$0xff]
    %v5174 = vld [vmem:[%s4677 + $0x270] sm:$0xff]
    %v5175 = vld [vmem:[%s4677 + $0x278] sm:$0xff]
    %v5176 = vld [vmem:[%s4677 + $0x288] sm:$0xff]
    %v5177 = vld [vmem:[%s4677 + $0x290] sm:$0xff]
    %v5178 = vld [vmem:[%s4677 + $0x2a0] sm:$0xff]
    %v5179 = vld [vmem:[%s4677 + $0x2a8] sm:$0xff]
    %v5180 = vld [vmem:[%s4677 + $0x2b8] sm:$0xff]
    %v5181 = vld [vmem:[%s4677 + $0x2c0] sm:$0xff]
    %v5182 = vld [vmem:[%s4677 + $0x2d0] sm:$0xff]
    %v5183 = vld [vmem:[%s4677 + $0x2d8] sm:$0xff]
    %v5184 = vld [vmem:[%s4677 + $0x2e8] sm:$0xff]
    %v5185 = vld [vmem:[%s4677 + $0x2f0] sm:$0xff]
    %v5186 = vld [vmem:[%s4677 + $0x300] sm:$0xff]
    %v5187 = vld [vmem:[%s4677 + $0x308] sm:$0xff]
    %v5188 = vld [vmem:[%s4677 + $0x318] sm:$0xff]
    %v5189 = vld [vmem:[%s4677 + $0x320] sm:$0xff]
    %5190 = vst [vmem:[#allocation4 + $0x18] sm:$0xff] %v5126
    %5191 = vst [vmem:[#allocation4 + $0x60] sm:$0xff] %v5127
    %5192 = vst [vmem:[#allocation4 + $0xa8] sm:$0xff] %v5128
    %5193 = vst [vmem:[#allocation4 + $0xf0] sm:$0xff] %v5129
    %5194 = vst [vmem:[#allocation4 + $0x138] sm:$0xff] %v5130
    %5195 = vst [vmem:[#allocation4 + $0x180] sm:$0xff] %v5131
    %5196 = vst [vmem:[#allocation4 + $0x1c8] sm:$0xff] %v5132
    %5197 = vst [vmem:[#allocation4 + $0x210] sm:$0xff] %v5133
    %5198 = vst [vmem:[#allocation4 + $0x258] sm:$0xff] %v5134
    %5199 = vst [vmem:[#allocation4 + $0x2a0] sm:$0xff] %v5135
    %5200 = vst [vmem:[#allocation4 + $0x2e8] sm:$0xff] %v5136
    %5201 = vst [vmem:[#allocation4 + $0x330] sm:$0xff] %v5137
    %5202 = vst [vmem:[#allocation4 + $0x378] sm:$0xff] %v5138
    %5203 = vst [vmem:[#allocation4 + $0x3c0] sm:$0xff] %v5139
    %5204 = vst [vmem:[#allocation4 + $0x408] sm:$0xff] %v5140
    %5205 = vst [vmem:[#allocation4 + $0x450] sm:$0xff] %v5141
    %5206 = vst [vmem:[#allocation4 + $0x498] sm:$0xff] %v5142
    %5207 = vst [vmem:[#allocation4 + $0x4e0] sm:$0xff] %v5143
    %5208 = vst [vmem:[#allocation4 + $0x528] sm:$0xff] %v5144
    %5209 = vst [vmem:[#allocation4 + $0x570] sm:$0xff] %v5145
    %5210 = vst [vmem:[#allocation4 + $0x5b8] sm:$0xff] %v5146
    %5211 = vst [vmem:[#allocation4 + $0x600] sm:$0xff] %v5147
    %5212 = vst [vmem:[#allocation4 + $0x648] sm:$0xff] %v5148
    %5213 = vst [vmem:[#allocation4 + $0x690] sm:$0xff] %v5149
    %5214 = vst [vmem:[#allocation4 + $0x6d8] sm:$0xff] %v5150
    %5215 = vst [vmem:[#allocation4 + $0x720] sm:$0xff] %v5151
    %5216 = vst [vmem:[#allocation4 + $0x768] sm:$0xff] %v5152
    %5217 = vst [vmem:[#allocation4 + $0x7b0] sm:$0xff] %v5153
    %5218 = vst [vmem:[#allocation4 + $0x7f8] sm:$0xff] %v5154
    %5219 = vst [vmem:[#allocation4 + $0x840] sm:$0xff] %v5155
    %5220 = vst [vmem:[#allocation4 + $0x888] sm:$0xff] %v5156
    %5221 = vst [vmem:[#allocation4 + $0x8d0] sm:$0xff] %v5157
    %5222 = vst [vmem:[#allocation4 + $0x918] sm:$0xff] %v5158
    %5223 = vst [vmem:[#allocation4 + $0x960] sm:$0xff] %v5159
    %5224 = vst [vmem:[#allocation4 + $0x9a8] sm:$0xff] %v5160
    %5225 = vst [vmem:[#allocation4 + $0x9f0] sm:$0xff] %v5161
    %5226 = vst [vmem:[#allocation4 + $0xa38] sm:$0xff] %v5162
    %5227 = vst [vmem:[#allocation4 + $0xa80] sm:$0xff] %v5163
    %5228 = vst [vmem:[#allocation4 + $0xac8] sm:$0xff] %v5164
    %5229 = vst [vmem:[#allocation4 + $0xb10] sm:$0xff] %v5165
    %5230 = vst [vmem:[#allocation4 + $0xb58] sm:$0xff] %v5166
    %5231 = vst [vmem:[#allocation4 + $0xba0] sm:$0xff] %v5167
    %5232 = vst [vmem:[#allocation4 + $0xbe8] sm:$0xff] %v5168
    %5233 = vst [vmem:[#allocation4 + $0xc30] sm:$0xff] %v5169
    %5234 = vst [vmem:[#allocation4 + $0xc78] sm:$0xff] %v5170
    %5235 = vst [vmem:[#allocation4 + $0xcc0] sm:$0xff] %v5171
    %5236 = vst [vmem:[#allocation4 + $0xd08] sm:$0xff] %v5172
    %5237 = vst [vmem:[#allocation4 + $0xd50] sm:$0xff] %v5173
    %5238 = vst [vmem:[#allocation4 + $0xd98] sm:$0xff] %v5174
    %5239 = vst [vmem:[#allocation4 + $0xde0] sm:$0xff] %v5175
    %5240 = vst [vmem:[#allocation4 + $0xe28] sm:$0xff] %v5176
    %5241 = vst [vmem:[#allocation4 + $0xe70] sm:$0xff] %v5177
    %5242 = vst [vmem:[#allocation4 + $0xeb8] sm:$0xff] %v5178
    %5243 = vst [vmem:[#allocation4 + $0xf00] sm:$0xff] %v5179
    %5244 = vst [vmem:[#allocation4 + $0xf48] sm:$0xff] %v5180
    %5245 = vst [vmem:[#allocation4 + $0xf90] sm:$0xff] %v5181
    %5246 = vst [vmem:[#allocation4 + $0xfd8] sm:$0xff] %v5182
    %5247 = vst [vmem:[#allocation4 + $0x1020] sm:$0xff] %v5183
    %5248 = vst [vmem:[#allocation4 + $0x1068] sm:$0xff] %v5184
    %5249 = vst [vmem:[#allocation4 + $0x10b0] sm:$0xff] %v5185
    %5250 = vst [vmem:[#allocation4 + $0x10f8] sm:$0xff] %v5186
    %5251 = vst [vmem:[#allocation4 + $0x1140] sm:$0xff] %v5187
    %5252 = vst [vmem:[#allocation4 + $0x1188] sm:$0xff] %v5188
    %5253 = vst [vmem:[#allocation4 + $0x11d0] sm:$0xff] %v5189
    %v5254 = vld [vmem:[%s4677 + $0x1] sm:$0xff]
    %v5255 = vld [vmem:[%s4677 + $0x9] sm:$0xff]
    %v5256 = vld [vmem:[%s4677 + $0x19] sm:$0xff]
    %v5257 = vld [vmem:[%s4677 + $0x21] sm:$0xff]
    %v5258 = vld [vmem:[%s4677 + $0x31] sm:$0xff]
    %v5259 = vld [vmem:[%s4677 + $0x39] sm:$0xff]
    %v5260 = vld [vmem:[%s4677 + $0x49] sm:$0xff]
    %v5261 = vld [vmem:[%s4677 + $0x51] sm:$0xff]
    %v5262 = vld [vmem:[%s4677 + $0x61] sm:$0xff]
    %v5263 = vld [vmem:[%s4677 + $0x69] sm:$0xff]
    %v5264 = vld [vmem:[%s4677 + $0x79] sm:$0xff]
    %v5265 = vld [vmem:[%s4677 + $0x81] sm:$0xff]
    %v5266 = vld [vmem:[%s4677 + $0x91] sm:$0xff]
    %v5267 = vld [vmem:[%s4677 + $0x99] sm:$0xff]
    %v5268 = vld [vmem:[%s4677 + $0xa9] sm:$0xff]
    %v5269 = vld [vmem:[%s4677 + $0xb1] sm:$0xff]
    %v5270 = vld [vmem:[%s4677 + $0xc1] sm:$0xff]
    %v5271 = vld [vmem:[%s4677 + $0xc9] sm:$0xff]
    %v5272 = vld [vmem:[%s4677 + $0xd9] sm:$0xff]
    %v5273 = vld [vmem:[%s4677 + $0xe1] sm:$0xff]
    %v5274 = vld [vmem:[%s4677 + $0xf1] sm:$0xff]
    %v5275 = vld [vmem:[%s4677 + $0xf9] sm:$0xff]
    %v5276 = vld [vmem:[%s4677 + $0x109] sm:$0xff]
    %v5277 = vld [vmem:[%s4677 + $0x111] sm:$0xff]
    %v5278 = vld [vmem:[%s4677 + $0x121] sm:$0xff]
    %v5279 = vld [vmem:[%s4677 + $0x129] sm:$0xff]
    %v5280 = vld [vmem:[%s4677 + $0x139] sm:$0xff]
    %v5281 = vld [vmem:[%s4677 + $0x141] sm:$0xff]
    %v5282 = vld [vmem:[%s4677 + $0x151] sm:$0xff]
    %v5283 = vld [vmem:[%s4677 + $0x159] sm:$0xff]
    %v5284 = vld [vmem:[%s4677 + $0x169] sm:$0xff]
    %v5285 = vld [vmem:[%s4677 + $0x171] sm:$0xff]
    %v5286 = vld [vmem:[%s4677 + $0x1b1] sm:$0xff]
    %v5287 = vld [vmem:[%s4677 + $0x1b9] sm:$0xff]
    %v5288 = vld [vmem:[%s4677 + $0x1c9] sm:$0xff]
    %v5289 = vld [vmem:[%s4677 + $0x1d1] sm:$0xff]
    %v5290 = vld [vmem:[%s4677 + $0x1e1] sm:$0xff]
    %v5291 = vld [vmem:[%s4677 + $0x1e9] sm:$0xff]
    %v5292 = vld [vmem:[%s4677 + $0x1f9] sm:$0xff]
    %v5293 = vld [vmem:[%s4677 + $0x201] sm:$0xff]
    %v5294 = vld [vmem:[%s4677 + $0x211] sm:$0xff]
    %v5295 = vld [vmem:[%s4677 + $0x219] sm:$0xff]
    %v5296 = vld [vmem:[%s4677 + $0x229] sm:$0xff]
    %v5297 = vld [vmem:[%s4677 + $0x231] sm:$0xff]
    %v5298 = vld [vmem:[%s4677 + $0x241] sm:$0xff]
    %v5299 = vld [vmem:[%s4677 + $0x249] sm:$0xff]
    %v5300 = vld [vmem:[%s4677 + $0x259] sm:$0xff]
    %v5301 = vld [vmem:[%s4677 + $0x261] sm:$0xff]
    %v5302 = vld [vmem:[%s4677 + $0x271] sm:$0xff]
    %v5303 = vld [vmem:[%s4677 + $0x279] sm:$0xff]
    %v5304 = vld [vmem:[%s4677 + $0x289] sm:$0xff]
    %v5305 = vld [vmem:[%s4677 + $0x291] sm:$0xff]
    %v5306 = vld [vmem:[%s4677 + $0x2a1] sm:$0xff]
    %v5307 = vld [vmem:[%s4677 + $0x2a9] sm:$0xff]
    %v5308 = vld [vmem:[%s4677 + $0x2b9] sm:$0xff]
    %v5309 = vld [vmem:[%s4677 + $0x2c1] sm:$0xff]
    %v5310 = vld [vmem:[%s4677 + $0x2d1] sm:$0xff]
    %v5311 = vld [vmem:[%s4677 + $0x2d9] sm:$0xff]
    %v5312 = vld [vmem:[%s4677 + $0x2e9] sm:$0xff]
    %v5313 = vld [vmem:[%s4677 + $0x2f1] sm:$0xff]
    %v5314 = vld [vmem:[%s4677 + $0x301] sm:$0xff]
    %v5315 = vld [vmem:[%s4677 + $0x309] sm:$0xff]
    %v5316 = vld [vmem:[%s4677 + $0x319] sm:$0xff]
    %v5317 = vld [vmem:[%s4677 + $0x321] sm:$0xff]
    %5318 = vst [vmem:[#allocation4 + $0x20] sm:$0xff] %v5254
    %5319 = vst [vmem:[#allocation4 + $0x68] sm:$0xff] %v5255
    %5320 = vst [vmem:[#allocation4 + $0xb0] sm:$0xff] %v5256
    %5321 = vst [vmem:[#allocation4 + $0xf8] sm:$0xff] %v5257
    %5322 = vst [vmem:[#allocation4 + $0x140] sm:$0xff] %v5258
    %5323 = vst [vmem:[#allocation4 + $0x188] sm:$0xff] %v5259
    %5324 = vst [vmem:[#allocation4 + $0x1d0] sm:$0xff] %v5260
    %5325 = vst [vmem:[#allocation4 + $0x218] sm:$0xff] %v5261
    %5326 = vst [vmem:[#allocation4 + $0x260] sm:$0xff] %v5262
    %5327 = vst [vmem:[#allocation4 + $0x2a8] sm:$0xff] %v5263
    %5328 = vst [vmem:[#allocation4 + $0x2f0] sm:$0xff] %v5264
    %5329 = vst [vmem:[#allocation4 + $0x338] sm:$0xff] %v5265
    %5330 = vst [vmem:[#allocation4 + $0x380] sm:$0xff] %v5266
    %5331 = vst [vmem:[#allocation4 + $0x3c8] sm:$0xff] %v5267
    %5332 = vst [vmem:[#allocation4 + $0x410] sm:$0xff] %v5268
    %5333 = vst [vmem:[#allocation4 + $0x458] sm:$0xff] %v5269
    %5334 = vst [vmem:[#allocation4 + $0x4a0] sm:$0xff] %v5270
    %5335 = vst [vmem:[#allocation4 + $0x4e8] sm:$0xff] %v5271
    %5336 = vst [vmem:[#allocation4 + $0x530] sm:$0xff] %v5272
    %5337 = vst [vmem:[#allocation4 + $0x578] sm:$0xff] %v5273
    %5338 = vst [vmem:[#allocation4 + $0x5c0] sm:$0xff] %v5274
    %5339 = vst [vmem:[#allocation4 + $0x608] sm:$0xff] %v5275
    %5340 = vst [vmem:[#allocation4 + $0x650] sm:$0xff] %v5276
    %5341 = vst [vmem:[#allocation4 + $0x698] sm:$0xff] %v5277
    %5342 = vst [vmem:[#allocation4 + $0x6e0] sm:$0xff] %v5278
    %5343 = vst [vmem:[#allocation4 + $0x728] sm:$0xff] %v5279
    %5344 = vst [vmem:[#allocation4 + $0x770] sm:$0xff] %v5280
    %5345 = vst [vmem:[#allocation4 + $0x7b8] sm:$0xff] %v5281
    %5346 = vst [vmem:[#allocation4 + $0x800] sm:$0xff] %v5282
    %5347 = vst [vmem:[#allocation4 + $0x848] sm:$0xff] %v5283
    %5348 = vst [vmem:[#allocation4 + $0x890] sm:$0xff] %v5284
    %5349 = vst [vmem:[#allocation4 + $0x8d8] sm:$0xff] %v5285
    %5350 = vst [vmem:[#allocation4 + $0x920] sm:$0xff] %v5286
    %5351 = vst [vmem:[#allocation4 + $0x968] sm:$0xff] %v5287
    %5352 = vst [vmem:[#allocation4 + $0x9b0] sm:$0xff] %v5288
    %5353 = vst [vmem:[#allocation4 + $0x9f8] sm:$0xff] %v5289
    %5354 = vst [vmem:[#allocation4 + $0xa40] sm:$0xff] %v5290
    %5355 = vst [vmem:[#allocation4 + $0xa88] sm:$0xff] %v5291
    %5356 = vst [vmem:[#allocation4 + $0xad0] sm:$0xff] %v5292
    %5357 = vst [vmem:[#allocation4 + $0xb18] sm:$0xff] %v5293
    %5358 = vst [vmem:[#allocation4 + $0xb60] sm:$0xff] %v5294
    %5359 = vst [vmem:[#allocation4 + $0xba8] sm:$0xff] %v5295
    %5360 = vst [vmem:[#allocation4 + $0xbf0] sm:$0xff] %v5296
    %5361 = vst [vmem:[#allocation4 + $0xc38] sm:$0xff] %v5297
    %5362 = vst [vmem:[#allocation4 + $0xc80] sm:$0xff] %v5298
    %5363 = vst [vmem:[#allocation4 + $0xcc8] sm:$0xff] %v5299
    %5364 = vst [vmem:[#allocation4 + $0xd10] sm:$0xff] %v5300
    %5365 = vst [vmem:[#allocation4 + $0xd58] sm:$0xff] %v5301
    %5366 = vst [vmem:[#allocation4 + $0xda0] sm:$0xff] %v5302
    %5367 = vst [vmem:[#allocation4 + $0xde8] sm:$0xff] %v5303
    %5368 = vst [vmem:[#allocation4 + $0xe30] sm:$0xff] %v5304
    %5369 = vst [vmem:[#allocation4 + $0xe78] sm:$0xff] %v5305
    %5370 = vst [vmem:[#allocation4 + $0xec0] sm:$0xff] %v5306
    %5371 = vst [vmem:[#allocation4 + $0xf08] sm:$0xff] %v5307
    %5372 = vst [vmem:[#allocation4 + $0xf50] sm:$0xff] %v5308
    %5373 = vst [vmem:[#allocation4 + $0xf98] sm:$0xff] %v5309
    %5374 = vst [vmem:[#allocation4 + $0xfe0] sm:$0xff] %v5310
    %5375 = vst [vmem:[#allocation4 + $0x1028] sm:$0xff] %v5311
    %5376 = vst [vmem:[#allocation4 + $0x1070] sm:$0xff] %v5312
    %5377 = vst [vmem:[#allocation4 + $0x10b8] sm:$0xff] %v5313
    %5378 = vst [vmem:[#allocation4 + $0x1100] sm:$0xff] %v5314
    %5379 = vst [vmem:[#allocation4 + $0x1148] sm:$0xff] %v5315
    %5380 = vst [vmem:[#allocation4 + $0x1190] sm:$0xff] %v5316
    %5381 = vst [vmem:[#allocation4 + $0x11d8] sm:$0xff] %v5317
    %v5382 = vld [vmem:[%s4677 + $0x2] sm:$0xff]
    %v5383 = vld [vmem:[%s4677 + $0xa] sm:$0xff]
    %v5384 = vld [vmem:[%s4677 + $0x1a] sm:$0xff]
    %v5385 = vld [vmem:[%s4677 + $0x22] sm:$0xff]
    %v5386 = vld [vmem:[%s4677 + $0x32] sm:$0xff]
    %v5387 = vld [vmem:[%s4677 + $0x3a] sm:$0xff]
    %v5388 = vld [vmem:[%s4677 + $0x4a] sm:$0xff]
    %v5389 = vld [vmem:[%s4677 + $0x52] sm:$0xff]
    %v5390 = vld [vmem:[%s4677 + $0x62] sm:$0xff]
    %v5391 = vld [vmem:[%s4677 + $0x6a] sm:$0xff]
    %v5392 = vld [vmem:[%s4677 + $0x7a] sm:$0xff]
    %v5393 = vld [vmem:[%s4677 + $0x82] sm:$0xff]
    %v5394 = vld [vmem:[%s4677 + $0x92] sm:$0xff]
    %v5395 = vld [vmem:[%s4677 + $0x9a] sm:$0xff]
    %v5396 = vld [vmem:[%s4677 + $0xaa] sm:$0xff]
    %v5397 = vld [vmem:[%s4677 + $0xb2] sm:$0xff]
    %v5398 = vld [vmem:[%s4677 + $0xc2] sm:$0xff]
    %v5399 = vld [vmem:[%s4677 + $0xca] sm:$0xff]
    %v5400 = vld [vmem:[%s4677 + $0xda] sm:$0xff]
    %v5401 = vld [vmem:[%s4677 + $0xe2] sm:$0xff]
    %v5402 = vld [vmem:[%s4677 + $0xf2] sm:$0xff]
    %v5403 = vld [vmem:[%s4677 + $0xfa] sm:$0xff]
    %v5404 = vld [vmem:[%s4677 + $0x10a] sm:$0xff]
    %v5405 = vld [vmem:[%s4677 + $0x112] sm:$0xff]
    %v5406 = vld [vmem:[%s4677 + $0x122] sm:$0xff]
    %v5407 = vld [vmem:[%s4677 + $0x12a] sm:$0xff]
    %v5408 = vld [vmem:[%s4677 + $0x13a] sm:$0xff]
    %v5409 = vld [vmem:[%s4677 + $0x142] sm:$0xff]
    %v5410 = vld [vmem:[%s4677 + $0x152] sm:$0xff]
    %v5411 = vld [vmem:[%s4677 + $0x15a] sm:$0xff]
    %v5412 = vld [vmem:[%s4677 + $0x16a] sm:$0xff]
    %v5413 = vld [vmem:[%s4677 + $0x172] sm:$0xff]
    %v5414 = vld [vmem:[%s4677 + $0x1b2] sm:$0xff]
    %v5415 = vld [vmem:[%s4677 + $0x1ba] sm:$0xff]
    %v5416 = vld [vmem:[%s4677 + $0x1ca] sm:$0xff]
    %v5417 = vld [vmem:[%s4677 + $0x1d2] sm:$0xff]
    %v5418 = vld [vmem:[%s4677 + $0x1e2] sm:$0xff]
    %v5419 = vld [vmem:[%s4677 + $0x1ea] sm:$0xff]
    %v5420 = vld [vmem:[%s4677 + $0x1fa] sm:$0xff]
    %v5421 = vld [vmem:[%s4677 + $0x202] sm:$0xff]
    %v5422 = vld [vmem:[%s4677 + $0x212] sm:$0xff]
    %v5423 = vld [vmem:[%s4677 + $0x21a] sm:$0xff]
    %v5424 = vld [vmem:[%s4677 + $0x22a] sm:$0xff]
    %v5425 = vld [vmem:[%s4677 + $0x232] sm:$0xff]
    %v5426 = vld [vmem:[%s4677 + $0x242] sm:$0xff]
    %v5427 = vld [vmem:[%s4677 + $0x24a] sm:$0xff]
    %v5428 = vld [vmem:[%s4677 + $0x25a] sm:$0xff]
    %v5429 = vld [vmem:[%s4677 + $0x262] sm:$0xff]
    %v5430 = vld [vmem:[%s4677 + $0x272] sm:$0xff]
    %v5431 = vld [vmem:[%s4677 + $0x27a] sm:$0xff]
    %v5432 = vld [vmem:[%s4677 + $0x28a] sm:$0xff]
    %v5433 = vld [vmem:[%s4677 + $0x292] sm:$0xff]
    %v5434 = vld [vmem:[%s4677 + $0x2a2] sm:$0xff]
    %v5435 = vld [vmem:[%s4677 + $0x2aa] sm:$0xff]
    %v5436 = vld [vmem:[%s4677 + $0x2ba] sm:$0xff]
    %v5437 = vld [vmem:[%s4677 + $0x2c2] sm:$0xff]
    %v5438 = vld [vmem:[%s4677 + $0x2d2] sm:$0xff]
    %v5439 = vld [vmem:[%s4677 + $0x2da] sm:$0xff]
    %v5440 = vld [vmem:[%s4677 + $0x2ea] sm:$0xff]
    %v5441 = vld [vmem:[%s4677 + $0x2f2] sm:$0xff]
    %v5442 = vld [vmem:[%s4677 + $0x302] sm:$0xff]
    %v5443 = vld [vmem:[%s4677 + $0x30a] sm:$0xff]
    %v5444 = vld [vmem:[%s4677 + $0x31a] sm:$0xff]
    %v5445 = vld [vmem:[%s4677 + $0x322] sm:$0xff]
    %5446 = vst [vmem:[#allocation4 + $0x28] sm:$0xff] %v5382
    %5447 = vst [vmem:[#allocation4 + $0x70] sm:$0xff] %v5383
    %5448 = vst [vmem:[#allocation4 + $0xb8] sm:$0xff] %v5384
    %5449 = vst [vmem:[#allocation4 + $0x100] sm:$0xff] %v5385
    %5450 = vst [vmem:[#allocation4 + $0x148] sm:$0xff] %v5386
    %5451 = vst [vmem:[#allocation4 + $0x190] sm:$0xff] %v5387
    %5452 = vst [vmem:[#allocation4 + $0x1d8] sm:$0xff] %v5388
    %5453 = vst [vmem:[#allocation4 + $0x220] sm:$0xff] %v5389
    %5454 = vst [vmem:[#allocation4 + $0x268] sm:$0xff] %v5390
    %5455 = vst [vmem:[#allocation4 + $0x2b0] sm:$0xff] %v5391
    %5456 = vst [vmem:[#allocation4 + $0x2f8] sm:$0xff] %v5392
    %5457 = vst [vmem:[#allocation4 + $0x340] sm:$0xff] %v5393
    %5458 = vst [vmem:[#allocation4 + $0x388] sm:$0xff] %v5394
    %5459 = vst [vmem:[#allocation4 + $0x3d0] sm:$0xff] %v5395
    %5460 = vst [vmem:[#allocation4 + $0x418] sm:$0xff] %v5396
    %5461 = vst [vmem:[#allocation4 + $0x460] sm:$0xff] %v5397
    %5462 = vst [vmem:[#allocation4 + $0x4a8] sm:$0xff] %v5398
    %5463 = vst [vmem:[#allocation4 + $0x4f0] sm:$0xff] %v5399
    %5464 = vst [vmem:[#allocation4 + $0x538] sm:$0xff] %v5400
    %5465 = vst [vmem:[#allocation4 + $0x580] sm:$0xff] %v5401
    %5466 = vst [vmem:[#allocation4 + $0x5c8] sm:$0xff] %v5402
    %5467 = vst [vmem:[#allocation4 + $0x610] sm:$0xff] %v5403
    %5468 = vst [vmem:[#allocation4 + $0x658] sm:$0xff] %v5404
    %5469 = vst [vmem:[#allocation4 + $0x6a0] sm:$0xff] %v5405
    %5470 = vst [vmem:[#allocation4 + $0x6e8] sm:$0xff] %v5406
    %5471 = vst [vmem:[#allocation4 + $0x730] sm:$0xff] %v5407
    %5472 = vst [vmem:[#allocation4 + $0x778] sm:$0xff] %v5408
    %5473 = vst [vmem:[#allocation4 + $0x7c0] sm:$0xff] %v5409
    %5474 = vst [vmem:[#allocation4 + $0x808] sm:$0xff] %v5410
    %5475 = vst [vmem:[#allocation4 + $0x850] sm:$0xff] %v5411
    %5476 = vst [vmem:[#allocation4 + $0x898] sm:$0xff] %v5412
    %5477 = vst [vmem:[#allocation4 + $0x8e0] sm:$0xff] %v5413
    %5478 = vst [vmem:[#allocation4 + $0x928] sm:$0xff] %v5414
    %5479 = vst [vmem:[#allocation4 + $0x970] sm:$0xff] %v5415
    %5480 = vst [vmem:[#allocation4 + $0x9b8] sm:$0xff] %v5416
    %5481 = vst [vmem:[#allocation4 + $0xa00] sm:$0xff] %v5417
    %5482 = vst [vmem:[#allocation4 + $0xa48] sm:$0xff] %v5418
    %5483 = vst [vmem:[#allocation4 + $0xa90] sm:$0xff] %v5419
    %5484 = vst [vmem:[#allocation4 + $0xad8] sm:$0xff] %v5420
    %5485 = vst [vmem:[#allocation4 + $0xb20] sm:$0xff] %v5421
    %5486 = vst [vmem:[#allocation4 + $0xb68] sm:$0xff] %v5422
    %5487 = vst [vmem:[#allocation4 + $0xbb0] sm:$0xff] %v5423
    %5488 = vst [vmem:[#allocation4 + $0xbf8] sm:$0xff] %v5424
    %5489 = vst [vmem:[#allocation4 + $0xc40] sm:$0xff] %v5425
    %5490 = vst [vmem:[#allocation4 + $0xc88] sm:$0xff] %v5426
    %5491 = vst [vmem:[#allocation4 + $0xcd0] sm:$0xff] %v5427
    %5492 = vst [vmem:[#allocation4 + $0xd18] sm:$0xff] %v5428
    %5493 = vst [vmem:[#allocation4 + $0xd60] sm:$0xff] %v5429
    %5494 = vst [vmem:[#allocation4 + $0xda8] sm:$0xff] %v5430
    %5495 = vst [vmem:[#allocation4 + $0xdf0] sm:$0xff] %v5431
    %5496 = vst [vmem:[#allocation4 + $0xe38] sm:$0xff] %v5432
    %5497 = vst [vmem:[#allocation4 + $0xe80] sm:$0xff] %v5433
    %5498 = vst [vmem:[#allocation4 + $0xec8] sm:$0xff] %v5434
    %5499 = vst [vmem:[#allocation4 + $0xf10] sm:$0xff] %v5435
    %5500 = vst [vmem:[#allocation4 + $0xf58] sm:$0xff] %v5436
    %5501 = vst [vmem:[#allocation4 + $0xfa0] sm:$0xff] %v5437
    %5502 = vst [vmem:[#allocation4 + $0xfe8] sm:$0xff] %v5438
    %5503 = vst [vmem:[#allocation4 + $0x1030] sm:$0xff] %v5439
    %5504 = vst [vmem:[#allocation4 + $0x1078] sm:$0xff] %v5440
    %5505 = vst [vmem:[#allocation4 + $0x10c0] sm:$0xff] %v5441
    %5506 = vst [vmem:[#allocation4 + $0x1108] sm:$0xff] %v5442
    %5507 = vst [vmem:[#allocation4 + $0x1150] sm:$0xff] %v5443
    %5508 = vst [vmem:[#allocation4 + $0x1198] sm:$0xff] %v5444
    %5509 = vst [vmem:[#allocation4 + $0x11e0] sm:$0xff] %v5445
    %s5510 = scalar_lea.vmem [#allocation3], 48
    %v5511 = vld [vmem:[%s5510] sm:$0xff]
    %v5512 = vld [vmem:[%s5510 + $0x8] sm:$0xff]
    %v5513 = vld [vmem:[%s5510 + $0x18] sm:$0xff]
    %v5514 = vld [vmem:[%s5510 + $0x20] sm:$0xff]
    %v5515 = vld [vmem:[%s5510 + $0x30] sm:$0xff]
    %v5516 = vld [vmem:[%s5510 + $0x38] sm:$0xff]
    %v5517 = vld [vmem:[%s5510 + $0x48] sm:$0xff]
    %v5518 = vld [vmem:[%s5510 + $0x50] sm:$0xff]
    %v5519 = vld [vmem:[%s5510 + $0x60] sm:$0xff]
    %v5520 = vld [vmem:[%s5510 + $0x68] sm:$0xff]
    %v5521 = vld [vmem:[%s5510 + $0x78] sm:$0xff]
    %v5522 = vld [vmem:[%s5510 + $0x80] sm:$0xff]
    %v5523 = vld [vmem:[%s5510 + $0x90] sm:$0xff]
    %v5524 = vld [vmem:[%s5510 + $0x98] sm:$0xff]
    %v5525 = vld [vmem:[%s5510 + $0xa8] sm:$0xff]
    %v5526 = vld [vmem:[%s5510 + $0xb0] sm:$0xff]
    %v5527 = vld [vmem:[%s5510 + $0xc0] sm:$0xff]
    %v5528 = vld [vmem:[%s5510 + $0xc8] sm:$0xff]
    %v5529 = vld [vmem:[%s5510 + $0xd8] sm:$0xff]
    %v5530 = vld [vmem:[%s5510 + $0xe0] sm:$0xff]
    %v5531 = vld [vmem:[%s5510 + $0xf0] sm:$0xff]
    %v5532 = vld [vmem:[%s5510 + $0xf8] sm:$0xff]
    %v5533 = vld [vmem:[%s5510 + $0x108] sm:$0xff]
    %v5534 = vld [vmem:[%s5510 + $0x110] sm:$0xff]
    %v5535 = vld [vmem:[%s5510 + $0x120] sm:$0xff]
    %v5536 = vld [vmem:[%s5510 + $0x128] sm:$0xff]
    %v5537 = vld [vmem:[%s5510 + $0x138] sm:$0xff]
    %v5538 = vld [vmem:[%s5510 + $0x140] sm:$0xff]
    %v5539 = vld [vmem:[%s5510 + $0x150] sm:$0xff]
    %v5540 = vld [vmem:[%s5510 + $0x158] sm:$0xff]
    %v5541 = vld [vmem:[%s5510 + $0x168] sm:$0xff]
    %v5542 = vld [vmem:[%s5510 + $0x170] sm:$0xff]
    %v5543 = vld [vmem:[%s5510 + $0x1b0] sm:$0xff]
    %v5544 = vld [vmem:[%s5510 + $0x1b8] sm:$0xff]
    %v5545 = vld [vmem:[%s5510 + $0x1c8] sm:$0xff]
    %v5546 = vld [vmem:[%s5510 + $0x1d0] sm:$0xff]
    %v5547 = vld [vmem:[%s5510 + $0x1e0] sm:$0xff]
    %v5548 = vld [vmem:[%s5510 + $0x1e8] sm:$0xff]
    %v5549 = vld [vmem:[%s5510 + $0x1f8] sm:$0xff]
    %v5550 = vld [vmem:[%s5510 + $0x200] sm:$0xff]
    %v5551 = vld [vmem:[%s5510 + $0x210] sm:$0xff]
    %v5552 = vld [vmem:[%s5510 + $0x218] sm:$0xff]
    %v5553 = vld [vmem:[%s5510 + $0x228] sm:$0xff]
    %v5554 = vld [vmem:[%s5510 + $0x230] sm:$0xff]
    %v5555 = vld [vmem:[%s5510 + $0x240] sm:$0xff]
    %v5556 = vld [vmem:[%s5510 + $0x248] sm:$0xff]
    %v5557 = vld [vmem:[%s5510 + $0x258] sm:$0xff]
    %v5558 = vld [vmem:[%s5510 + $0x260] sm:$0xff]
    %v5559 = vld [vmem:[%s5510 + $0x270] sm:$0xff]
    %v5560 = vld [vmem:[%s5510 + $0x278] sm:$0xff]
    %v5561 = vld [vmem:[%s5510 + $0x288] sm:$0xff]
    %v5562 = vld [vmem:[%s5510 + $0x290] sm:$0xff]
    %v5563 = vld [vmem:[%s5510 + $0x2a0] sm:$0xff]
    %v5564 = vld [vmem:[%s5510 + $0x2a8] sm:$0xff]
    %v5565 = vld [vmem:[%s5510 + $0x2b8] sm:$0xff]
    %v5566 = vld [vmem:[%s5510 + $0x2c0] sm:$0xff]
    %v5567 = vld [vmem:[%s5510 + $0x2d0] sm:$0xff]
    %v5568 = vld [vmem:[%s5510 + $0x2d8] sm:$0xff]
    %v5569 = vld [vmem:[%s5510 + $0x2e8] sm:$0xff]
    %v5570 = vld [vmem:[%s5510 + $0x2f0] sm:$0xff]
    %v5571 = vld [vmem:[%s5510 + $0x300] sm:$0xff]
    %v5572 = vld [vmem:[%s5510 + $0x308] sm:$0xff]
    %v5573 = vld [vmem:[%s5510 + $0x318] sm:$0xff]
    %v5574 = vld [vmem:[%s5510 + $0x320] sm:$0xff]
    %5575 = vst [vmem:[#allocation4 + $0x30] sm:$0xff] %v5511
    %5576 = vst [vmem:[#allocation4 + $0x78] sm:$0xff] %v5512
    %5577 = vst [vmem:[#allocation4 + $0xc0] sm:$0xff] %v5513
    %5578 = vst [vmem:[#allocation4 + $0x108] sm:$0xff] %v5514
    %5579 = vst [vmem:[#allocation4 + $0x150] sm:$0xff] %v5515
    %5580 = vst [vmem:[#allocation4 + $0x198] sm:$0xff] %v5516
    %5581 = vst [vmem:[#allocation4 + $0x1e0] sm:$0xff] %v5517
    %5582 = vst [vmem:[#allocation4 + $0x228] sm:$0xff] %v5518
    %5583 = vst [vmem:[#allocation4 + $0x270] sm:$0xff] %v5519
    %5584 = vst [vmem:[#allocation4 + $0x2b8] sm:$0xff] %v5520
    %5585 = vst [vmem:[#allocation4 + $0x300] sm:$0xff] %v5521
    %5586 = vst [vmem:[#allocation4 + $0x348] sm:$0xff] %v5522
    %5587 = vst [vmem:[#allocation4 + $0x390] sm:$0xff] %v5523
    %5588 = vst [vmem:[#allocation4 + $0x3d8] sm:$0xff] %v5524
    %5589 = vst [vmem:[#allocation4 + $0x420] sm:$0xff] %v5525
    %5590 = vst [vmem:[#allocation4 + $0x468] sm:$0xff] %v5526
    %5591 = vst [vmem:[#allocation4 + $0x4b0] sm:$0xff] %v5527
    %5592 = vst [vmem:[#allocation4 + $0x4f8] sm:$0xff] %v5528
    %5593 = vst [vmem:[#allocation4 + $0x540] sm:$0xff] %v5529
    %5594 = vst [vmem:[#allocation4 + $0x588] sm:$0xff] %v5530
    %5595 = vst [vmem:[#allocation4 + $0x5d0] sm:$0xff] %v5531
    %5596 = vst [vmem:[#allocation4 + $0x618] sm:$0xff] %v5532
    %5597 = vst [vmem:[#allocation4 + $0x660] sm:$0xff] %v5533
    %5598 = vst [vmem:[#allocation4 + $0x6a8] sm:$0xff] %v5534
    %5599 = vst [vmem:[#allocation4 + $0x6f0] sm:$0xff] %v5535
    %5600 = vst [vmem:[#allocation4 + $0x738] sm:$0xff] %v5536
    %5601 = vst [vmem:[#allocation4 + $0x780] sm:$0xff] %v5537
    %5602 = vst [vmem:[#allocation4 + $0x7c8] sm:$0xff] %v5538
    %5603 = vst [vmem:[#allocation4 + $0x810] sm:$0xff] %v5539
    %5604 = vst [vmem:[#allocation4 + $0x858] sm:$0xff] %v5540
    %5605 = vst [vmem:[#allocation4 + $0x8a0] sm:$0xff] %v5541
    %5606 = vst [vmem:[#allocation4 + $0x8e8] sm:$0xff] %v5542
    %5607 = vst [vmem:[#allocation4 + $0x930] sm:$0xff] %v5543
    %5608 = vst [vmem:[#allocation4 + $0x978] sm:$0xff] %v5544
    %5609 = vst [vmem:[#allocation4 + $0x9c0] sm:$0xff] %v5545
    %5610 = vst [vmem:[#allocation4 + $0xa08] sm:$0xff] %v5546
    %5611 = vst [vmem:[#allocation4 + $0xa50] sm:$0xff] %v5547
    %5612 = vst [vmem:[#allocation4 + $0xa98] sm:$0xff] %v5548
    %5613 = vst [vmem:[#allocation4 + $0xae0] sm:$0xff] %v5549
    %5614 = vst [vmem:[#allocation4 + $0xb28] sm:$0xff] %v5550
    %5615 = vst [vmem:[#allocation4 + $0xb70] sm:$0xff] %v5551
    %5616 = vst [vmem:[#allocation4 + $0xbb8] sm:$0xff] %v5552
    %5617 = vst [vmem:[#allocation4 + $0xc00] sm:$0xff] %v5553
    %5618 = vst [vmem:[#allocation4 + $0xc48] sm:$0xff] %v5554
    %5619 = vst [vmem:[#allocation4 + $0xc90] sm:$0xff] %v5555
    %5620 = vst [vmem:[#allocation4 + $0xcd8] sm:$0xff] %v5556
    %5621 = vst [vmem:[#allocation4 + $0xd20] sm:$0xff] %v5557
    %5622 = vst [vmem:[#allocation4 + $0xd68] sm:$0xff] %v5558
    %5623 = vst [vmem:[#allocation4 + $0xdb0] sm:$0xff] %v5559
    %5624 = vst [vmem:[#allocation4 + $0xdf8] sm:$0xff] %v5560
    %5625 = vst [vmem:[#allocation4 + $0xe40] sm:$0xff] %v5561
    %5626 = vst [vmem:[#allocation4 + $0xe88] sm:$0xff] %v5562
    %5627 = vst [vmem:[#allocation4 + $0xed0] sm:$0xff] %v5563
    %5628 = vst [vmem:[#allocation4 + $0xf18] sm:$0xff] %v5564
    %5629 = vst [vmem:[#allocation4 + $0xf60] sm:$0xff] %v5565
    %5630 = vst [vmem:[#allocation4 + $0xfa8] sm:$0xff] %v5566
    %5631 = vst [vmem:[#allocation4 + $0xff0] sm:$0xff] %v5567
    %5632 = vst [vmem:[#allocation4 + $0x1038] sm:$0xff] %v5568
    %5633 = vst [vmem:[#allocation4 + $0x1080] sm:$0xff] %v5569
    %5634 = vst [vmem:[#allocation4 + $0x10c8] sm:$0xff] %v5570
    %5635 = vst [vmem:[#allocation4 + $0x1110] sm:$0xff] %v5571
    %5636 = vst [vmem:[#allocation4 + $0x1158] sm:$0xff] %v5572
    %5637 = vst [vmem:[#allocation4 + $0x11a0] sm:$0xff] %v5573
    %5638 = vst [vmem:[#allocation4 + $0x11e8] sm:$0xff] %v5574
    %v5639 = vld [vmem:[%s5510 + $0x1] sm:$0xff]
    %v5640 = vld [vmem:[%s5510 + $0x9] sm:$0xff]
    %v5641 = vld [vmem:[%s5510 + $0x19] sm:$0xff]
    %v5642 = vld [vmem:[%s5510 + $0x21] sm:$0xff]
    %v5643 = vld [vmem:[%s5510 + $0x31] sm:$0xff]
    %v5644 = vld [vmem:[%s5510 + $0x39] sm:$0xff]
    %v5645 = vld [vmem:[%s5510 + $0x49] sm:$0xff]
    %v5646 = vld [vmem:[%s5510 + $0x51] sm:$0xff]
    %v5647 = vld [vmem:[%s5510 + $0x61] sm:$0xff]
    %v5648 = vld [vmem:[%s5510 + $0x69] sm:$0xff]
    %v5649 = vld [vmem:[%s5510 + $0x79] sm:$0xff]
    %v5650 = vld [vmem:[%s5510 + $0x81] sm:$0xff]
    %v5651 = vld [vmem:[%s5510 + $0x91] sm:$0xff]
    %v5652 = vld [vmem:[%s5510 + $0x99] sm:$0xff]
    %v5653 = vld [vmem:[%s5510 + $0xa9] sm:$0xff]
    %v5654 = vld [vmem:[%s5510 + $0xb1] sm:$0xff]
    %v5655 = vld [vmem:[%s5510 + $0xc1] sm:$0xff]
    %v5656 = vld [vmem:[%s5510 + $0xc9] sm:$0xff]
    %v5657 = vld [vmem:[%s5510 + $0xd9] sm:$0xff]
    %v5658 = vld [vmem:[%s5510 + $0xe1] sm:$0xff]
    %v5659 = vld [vmem:[%s5510 + $0xf1] sm:$0xff]
    %v5660 = vld [vmem:[%s5510 + $0xf9] sm:$0xff]
    %v5661 = vld [vmem:[%s5510 + $0x109] sm:$0xff]
    %v5662 = vld [vmem:[%s5510 + $0x111] sm:$0xff]
    %v5663 = vld [vmem:[%s5510 + $0x121] sm:$0xff]
    %v5664 = vld [vmem:[%s5510 + $0x129] sm:$0xff]
    %v5665 = vld [vmem:[%s5510 + $0x139] sm:$0xff]
    %v5666 = vld [vmem:[%s5510 + $0x141] sm:$0xff]
    %v5667 = vld [vmem:[%s5510 + $0x151] sm:$0xff]
    %v5668 = vld [vmem:[%s5510 + $0x159] sm:$0xff]
    %v5669 = vld [vmem:[%s5510 + $0x169] sm:$0xff]
    %v5670 = vld [vmem:[%s5510 + $0x171] sm:$0xff]
    %v5671 = vld [vmem:[%s5510 + $0x1b1] sm:$0xff]
    %v5672 = vld [vmem:[%s5510 + $0x1b9] sm:$0xff]
    %v5673 = vld [vmem:[%s5510 + $0x1c9] sm:$0xff]
    %v5674 = vld [vmem:[%s5510 + $0x1d1] sm:$0xff]
    %v5675 = vld [vmem:[%s5510 + $0x1e1] sm:$0xff]
    %v5676 = vld [vmem:[%s5510 + $0x1e9] sm:$0xff]
    %v5677 = vld [vmem:[%s5510 + $0x1f9] sm:$0xff]
    %v5678 = vld [vmem:[%s5510 + $0x201] sm:$0xff]
    %v5679 = vld [vmem:[%s5510 + $0x211] sm:$0xff]
    %v5680 = vld [vmem:[%s5510 + $0x219] sm:$0xff]
    %v5681 = vld [vmem:[%s5510 + $0x229] sm:$0xff]
    %v5682 = vld [vmem:[%s5510 + $0x231] sm:$0xff]
    %v5683 = vld [vmem:[%s5510 + $0x241] sm:$0xff]
    %v5684 = vld [vmem:[%s5510 + $0x249] sm:$0xff]
    %v5685 = vld [vmem:[%s5510 + $0x259] sm:$0xff]
    %v5686 = vld [vmem:[%s5510 + $0x261] sm:$0xff]
    %v5687 = vld [vmem:[%s5510 + $0x271] sm:$0xff]
    %v5688 = vld [vmem:[%s5510 + $0x279] sm:$0xff]
    %v5689 = vld [vmem:[%s5510 + $0x289] sm:$0xff]
    %v5690 = vld [vmem:[%s5510 + $0x291] sm:$0xff]
    %v5691 = vld [vmem:[%s5510 + $0x2a1] sm:$0xff]
    %v5692 = vld [vmem:[%s5510 + $0x2a9] sm:$0xff]
    %v5693 = vld [vmem:[%s5510 + $0x2b9] sm:$0xff]
    %v5694 = vld [vmem:[%s5510 + $0x2c1] sm:$0xff]
    %v5695 = vld [vmem:[%s5510 + $0x2d1] sm:$0xff]
    %v5696 = vld [vmem:[%s5510 + $0x2d9] sm:$0xff]
    %v5697 = vld [vmem:[%s5510 + $0x2e9] sm:$0xff]
    %v5698 = vld [vmem:[%s5510 + $0x2f1] sm:$0xff]
    %v5699 = vld [vmem:[%s5510 + $0x301] sm:$0xff]
    %v5700 = vld [vmem:[%s5510 + $0x309] sm:$0xff]
    %v5701 = vld [vmem:[%s5510 + $0x319] sm:$0xff]
    %v5702 = vld [vmem:[%s5510 + $0x321] sm:$0xff]
    %5703 = vst [vmem:[#allocation4 + $0x38] sm:$0xff] %v5639
    %5704 = vst [vmem:[#allocation4 + $0x80] sm:$0xff] %v5640
    %5705 = vst [vmem:[#allocation4 + $0xc8] sm:$0xff] %v5641
    %5706 = vst [vmem:[#allocation4 + $0x110] sm:$0xff] %v5642
    %5707 = vst [vmem:[#allocation4 + $0x158] sm:$0xff] %v5643
    %5708 = vst [vmem:[#allocation4 + $0x1a0] sm:$0xff] %v5644
    %5709 = vst [vmem:[#allocation4 + $0x1e8] sm:$0xff] %v5645
    %5710 = vst [vmem:[#allocation4 + $0x230] sm:$0xff] %v5646
    %5711 = vst [vmem:[#allocation4 + $0x278] sm:$0xff] %v5647
    %5712 = vst [vmem:[#allocation4 + $0x2c0] sm:$0xff] %v5648
    %5713 = vst [vmem:[#allocation4 + $0x308] sm:$0xff] %v5649
    %5714 = vst [vmem:[#allocation4 + $0x350] sm:$0xff] %v5650
    %5715 = vst [vmem:[#allocation4 + $0x398] sm:$0xff] %v5651
    %5716 = vst [vmem:[#allocation4 + $0x3e0] sm:$0xff] %v5652
    %5717 = vst [vmem:[#allocation4 + $0x428] sm:$0xff] %v5653
    %5718 = vst [vmem:[#allocation4 + $0x470] sm:$0xff] %v5654
    %5719 = vst [vmem:[#allocation4 + $0x4b8] sm:$0xff] %v5655
    %5720 = vst [vmem:[#allocation4 + $0x500] sm:$0xff] %v5656
    %5721 = vst [vmem:[#allocation4 + $0x548] sm:$0xff] %v5657
    %5722 = vst [vmem:[#allocation4 + $0x590] sm:$0xff] %v5658
    %5723 = vst [vmem:[#allocation4 + $0x5d8] sm:$0xff] %v5659
    %5724 = vst [vmem:[#allocation4 + $0x620] sm:$0xff] %v5660
    %5725 = vst [vmem:[#allocation4 + $0x668] sm:$0xff] %v5661
    %5726 = vst [vmem:[#allocation4 + $0x6b0] sm:$0xff] %v5662
    %5727 = vst [vmem:[#allocation4 + $0x6f8] sm:$0xff] %v5663
    %5728 = vst [vmem:[#allocation4 + $0x740] sm:$0xff] %v5664
    %5729 = vst [vmem:[#allocation4 + $0x788] sm:$0xff] %v5665
    %5730 = vst [vmem:[#allocation4 + $0x7d0] sm:$0xff] %v5666
    %5731 = vst [vmem:[#allocation4 + $0x818] sm:$0xff] %v5667
    %5732 = vst [vmem:[#allocation4 + $0x860] sm:$0xff] %v5668
    %5733 = vst [vmem:[#allocation4 + $0x8a8] sm:$0xff] %v5669
    %5734 = vst [vmem:[#allocation4 + $0x8f0] sm:$0xff] %v5670
    %5735 = vst [vmem:[#allocation4 + $0x938] sm:$0xff] %v5671
    %5736 = vst [vmem:[#allocation4 + $0x980] sm:$0xff] %v5672
    %5737 = vst [vmem:[#allocation4 + $0x9c8] sm:$0xff] %v5673
    %5738 = vst [vmem:[#allocation4 + $0xa10] sm:$0xff] %v5674
    %5739 = vst [vmem:[#allocation4 + $0xa58] sm:$0xff] %v5675
    %5740 = vst [vmem:[#allocation4 + $0xaa0] sm:$0xff] %v5676
    %5741 = vst [vmem:[#allocation4 + $0xae8] sm:$0xff] %v5677
    %5742 = vst [vmem:[#allocation4 + $0xb30] sm:$0xff] %v5678
    %5743 = vst [vmem:[#allocation4 + $0xb78] sm:$0xff] %v5679
    %5744 = vst [vmem:[#allocation4 + $0xbc0] sm:$0xff] %v5680
    %5745 = vst [vmem:[#allocation4 + $0xc08] sm:$0xff] %v5681
    %5746 = vst [vmem:[#allocation4 + $0xc50] sm:$0xff] %v5682
    %5747 = vst [vmem:[#allocation4 + $0xc98] sm:$0xff] %v5683
    %5748 = vst [vmem:[#allocation4 + $0xce0] sm:$0xff] %v5684
    %5749 = vst [vmem:[#allocation4 + $0xd28] sm:$0xff] %v5685
    %5750 = vst [vmem:[#allocation4 + $0xd70] sm:$0xff] %v5686
    %5751 = vst [vmem:[#allocation4 + $0xdb8] sm:$0xff] %v5687
    %5752 = vst [vmem:[#allocation4 + $0xe00] sm:$0xff] %v5688
    %5753 = vst [vmem:[#allocation4 + $0xe48] sm:$0xff] %v5689
    %5754 = vst [vmem:[#allocation4 + $0xe90] sm:$0xff] %v5690
    %5755 = vst [vmem:[#allocation4 + $0xed8] sm:$0xff] %v5691
    %5756 = vst [vmem:[#allocation4 + $0xf20] sm:$0xff] %v5692
    %5757 = vst [vmem:[#allocation4 + $0xf68] sm:$0xff] %v5693
    %5758 = vst [vmem:[#allocation4 + $0xfb0] sm:$0xff] %v5694
    %5759 = vst [vmem:[#allocation4 + $0xff8] sm:$0xff] %v5695
    %5760 = vst [vmem:[#allocation4 + $0x1040] sm:$0xff] %v5696
    %5761 = vst [vmem:[#allocation4 + $0x1088] sm:$0xff] %v5697
    %5762 = vst [vmem:[#allocation4 + $0x10d0] sm:$0xff] %v5698
    %5763 = vst [vmem:[#allocation4 + $0x1118] sm:$0xff] %v5699
    %5764 = vst [vmem:[#allocation4 + $0x1160] sm:$0xff] %v5700
    %5765 = vst [vmem:[#allocation4 + $0x11a8] sm:$0xff] %v5701
    %5766 = vst [vmem:[#allocation4 + $0x11f0] sm:$0xff] %v5702
    %v5767 = vld [vmem:[%s5510 + $0x2] sm:$0xff]
    %v5768 = vld [vmem:[%s5510 + $0xa] sm:$0xff]
    %v5769 = vld [vmem:[%s5510 + $0x1a] sm:$0xff]
    %v5770 = vld [vmem:[%s5510 + $0x22] sm:$0xff]
    %v5771 = vld [vmem:[%s5510 + $0x32] sm:$0xff]
    %v5772 = vld [vmem:[%s5510 + $0x3a] sm:$0xff]
    %v5773 = vld [vmem:[%s5510 + $0x4a] sm:$0xff]
    %v5774 = vld [vmem:[%s5510 + $0x52] sm:$0xff]
    %v5775 = vld [vmem:[%s5510 + $0x62] sm:$0xff]
    %v5776 = vld [vmem:[%s5510 + $0x6a] sm:$0xff]
    %v5777 = vld [vmem:[%s5510 + $0x7a] sm:$0xff]
    %v5778 = vld [vmem:[%s5510 + $0x82] sm:$0xff]
    %v5779 = vld [vmem:[%s5510 + $0x92] sm:$0xff]
    %v5780 = vld [vmem:[%s5510 + $0x9a] sm:$0xff]
    %v5781 = vld [vmem:[%s5510 + $0xaa] sm:$0xff]
    %v5782 = vld [vmem:[%s5510 + $0xb2] sm:$0xff]
    %v5783 = vld [vmem:[%s5510 + $0xc2] sm:$0xff]
    %v5784 = vld [vmem:[%s5510 + $0xca] sm:$0xff]
    %v5785 = vld [vmem:[%s5510 + $0xda] sm:$0xff]
    %v5786 = vld [vmem:[%s5510 + $0xe2] sm:$0xff]
    %v5787 = vld [vmem:[%s5510 + $0xf2] sm:$0xff]
    %v5788 = vld [vmem:[%s5510 + $0xfa] sm:$0xff]
    %v5789 = vld [vmem:[%s5510 + $0x10a] sm:$0xff]
    %v5790 = vld [vmem:[%s5510 + $0x112] sm:$0xff]
    %v5791 = vld [vmem:[%s5510 + $0x122] sm:$0xff]
    %v5792 = vld [vmem:[%s5510 + $0x12a] sm:$0xff]
    %v5793 = vld [vmem:[%s5510 + $0x13a] sm:$0xff]
    %v5794 = vld [vmem:[%s5510 + $0x142] sm:$0xff]
    %v5795 = vld [vmem:[%s5510 + $0x152] sm:$0xff]
    %v5796 = vld [vmem:[%s5510 + $0x15a] sm:$0xff]
    %v5797 = vld [vmem:[%s5510 + $0x16a] sm:$0xff]
    %v5798 = vld [vmem:[%s5510 + $0x172] sm:$0xff]
    %v5799 = vld [vmem:[%s5510 + $0x1b2] sm:$0xff]
    %v5800 = vld [vmem:[%s5510 + $0x1ba] sm:$0xff]
    %v5801 = vld [vmem:[%s5510 + $0x1ca] sm:$0xff]
    %v5802 = vld [vmem:[%s5510 + $0x1d2] sm:$0xff]
    %v5803 = vld [vmem:[%s5510 + $0x1e2] sm:$0xff]
    %v5804 = vld [vmem:[%s5510 + $0x1ea] sm:$0xff]
    %v5805 = vld [vmem:[%s5510 + $0x1fa] sm:$0xff]
    %v5806 = vld [vmem:[%s5510 + $0x202] sm:$0xff]
    %v5807 = vld [vmem:[%s5510 + $0x212] sm:$0xff]
    %v5808 = vld [vmem:[%s5510 + $0x21a] sm:$0xff]
    %v5809 = vld [vmem:[%s5510 + $0x22a] sm:$0xff]
    %v5810 = vld [vmem:[%s5510 + $0x232] sm:$0xff]
    %v5811 = vld [vmem:[%s5510 + $0x242] sm:$0xff]
    %v5812 = vld [vmem:[%s5510 + $0x24a] sm:$0xff]
    %v5813 = vld [vmem:[%s5510 + $0x25a] sm:$0xff]
    %v5814 = vld [vmem:[%s5510 + $0x262] sm:$0xff]
    %v5815 = vld [vmem:[%s5510 + $0x272] sm:$0xff]
    %v5816 = vld [vmem:[%s5510 + $0x27a] sm:$0xff]
    %v5817 = vld [vmem:[%s5510 + $0x28a] sm:$0xff]
    %v5818 = vld [vmem:[%s5510 + $0x292] sm:$0xff]
    %v5819 = vld [vmem:[%s5510 + $0x2a2] sm:$0xff]
    %v5820 = vld [vmem:[%s5510 + $0x2aa] sm:$0xff]
    %v5821 = vld [vmem:[%s5510 + $0x2ba] sm:$0xff]
    %v5822 = vld [vmem:[%s5510 + $0x2c2] sm:$0xff]
    %v5823 = vld [vmem:[%s5510 + $0x2d2] sm:$0xff]
    %v5824 = vld [vmem:[%s5510 + $0x2da] sm:$0xff]
    %v5825 = vld [vmem:[%s5510 + $0x2ea] sm:$0xff]
    %v5826 = vld [vmem:[%s5510 + $0x2f2] sm:$0xff]
    %v5827 = vld [vmem:[%s5510 + $0x302] sm:$0xff]
    %v5828 = vld [vmem:[%s5510 + $0x30a] sm:$0xff]
    %v5829 = vld [vmem:[%s5510 + $0x31a] sm:$0xff]
    %v5830 = vld [vmem:[%s5510 + $0x322] sm:$0xff]
    %5831 = vst [vmem:[#allocation4 + $0x40] sm:$0xff] %v5767
    %5832 = vst [vmem:[#allocation4 + $0x88] sm:$0xff] %v5768
    %5833 = vst [vmem:[#allocation4 + $0xd0] sm:$0xff] %v5769
    %5834 = vst [vmem:[#allocation4 + $0x118] sm:$0xff] %v5770
    %5835 = vst [vmem:[#allocation4 + $0x160] sm:$0xff] %v5771
    %5836 = vst [vmem:[#allocation4 + $0x1a8] sm:$0xff] %v5772
    %5837 = vst [vmem:[#allocation4 + $0x1f0] sm:$0xff] %v5773
    %5838 = vst [vmem:[#allocation4 + $0x238] sm:$0xff] %v5774
    %5839 = vst [vmem:[#allocation4 + $0x280] sm:$0xff] %v5775
    %5840 = vst [vmem:[#allocation4 + $0x2c8] sm:$0xff] %v5776
    %5841 = vst [vmem:[#allocation4 + $0x310] sm:$0xff] %v5777
    %5842 = vst [vmem:[#allocation4 + $0x358] sm:$0xff] %v5778
    %5843 = vst [vmem:[#allocation4 + $0x3a0] sm:$0xff] %v5779
    %5844 = vst [vmem:[#allocation4 + $0x3e8] sm:$0xff] %v5780
    %5845 = vst [vmem:[#allocation4 + $0x430] sm:$0xff] %v5781
    %5846 = vst [vmem:[#allocation4 + $0x478] sm:$0xff] %v5782
    %5847 = vst [vmem:[#allocation4 + $0x4c0] sm:$0xff] %v5783
    %5848 = vst [vmem:[#allocation4 + $0x508] sm:$0xff] %v5784
    %5849 = vst [vmem:[#allocation4 + $0x550] sm:$0xff] %v5785
    %5850 = vst [vmem:[#allocation4 + $0x598] sm:$0xff] %v5786
    %5851 = vst [vmem:[#allocation4 + $0x5e0] sm:$0xff] %v5787
    %5852 = vst [vmem:[#allocation4 + $0x628] sm:$0xff] %v5788
    %5853 = vst [vmem:[#allocation4 + $0x670] sm:$0xff] %v5789
    %5854 = vst [vmem:[#allocation4 + $0x6b8] sm:$0xff] %v5790
    %5855 = vst [vmem:[#allocation4 + $0x700] sm:$0xff] %v5791
    %5856 = vst [vmem:[#allocation4 + $0x748] sm:$0xff] %v5792
    %5857 = vst [vmem:[#allocation4 + $0x790] sm:$0xff] %v5793
    %5858 = vst [vmem:[#allocation4 + $0x7d8] sm:$0xff] %v5794
    %5859 = vst [vmem:[#allocation4 + $0x820] sm:$0xff] %v5795
    %5860 = vst [vmem:[#allocation4 + $0x868] sm:$0xff] %v5796
    %5861 = vst [vmem:[#allocation4 + $0x8b0] sm:$0xff] %v5797
    %5862 = vst [vmem:[#allocation4 + $0x8f8] sm:$0xff] %v5798
    %5863 = vst [vmem:[#allocation4 + $0x940] sm:$0xff] %v5799
    %5864 = vst [vmem:[#allocation4 + $0x988] sm:$0xff] %v5800
    %5865 = vst [vmem:[#allocation4 + $0x9d0] sm:$0xff] %v5801
    %5866 = vst [vmem:[#allocation4 + $0xa18] sm:$0xff] %v5802
    %5867 = vst [vmem:[#allocation4 + $0xa60] sm:$0xff] %v5803
    %5868 = vst [vmem:[#allocation4 + $0xaa8] sm:$0xff] %v5804
    %5869 = vst [vmem:[#allocation4 + $0xaf0] sm:$0xff] %v5805
    %5870 = vst [vmem:[#allocation4 + $0xb38] sm:$0xff] %v5806
    %5871 = vst [vmem:[#allocation4 + $0xb80] sm:$0xff] %v5807
    %5872 = vst [vmem:[#allocation4 + $0xbc8] sm:$0xff] %v5808
    %5873 = vst [vmem:[#allocation4 + $0xc10] sm:$0xff] %v5809
    %5874 = vst [vmem:[#allocation4 + $0xc58] sm:$0xff] %v5810
    %5875 = vst [vmem:[#allocation4 + $0xca0] sm:$0xff] %v5811
    %5876 = vst [vmem:[#allocation4 + $0xce8] sm:$0xff] %v5812
    %5877 = vst [vmem:[#allocation4 + $0xd30] sm:$0xff] %v5813
    %5878 = vst [vmem:[#allocation4 + $0xd78] sm:$0xff] %v5814
    %5879 = vst [vmem:[#allocation4 + $0xdc0] sm:$0xff] %v5815
    %5880 = vst [vmem:[#allocation4 + $0xe08] sm:$0xff] %v5816
    %5881 = vst [vmem:[#allocation4 + $0xe50] sm:$0xff] %v5817
    %5882 = vst [vmem:[#allocation4 + $0xe98] sm:$0xff] %v5818
    %5883 = vst [vmem:[#allocation4 + $0xee0] sm:$0xff] %v5819
    %5884 = vst [vmem:[#allocation4 + $0xf28] sm:$0xff] %v5820
    %5885 = vst [vmem:[#allocation4 + $0xf70] sm:$0xff] %v5821
    %5886 = vst [vmem:[#allocation4 + $0xfb8] sm:$0xff] %v5822
    %5887 = vst [vmem:[#allocation4 + $0x1000] sm:$0xff] %v5823
    %5888 = vst [vmem:[#allocation4 + $0x1048] sm:$0xff] %v5824
    %5889 = vst [vmem:[#allocation4 + $0x1090] sm:$0xff] %v5825
    %5890 = vst [vmem:[#allocation4 + $0x10d8] sm:$0xff] %v5826
    %5891 = vst [vmem:[#allocation4 + $0x1120] sm:$0xff] %v5827
    %5892 = vst [vmem:[#allocation4 + $0x1168] sm:$0xff] %v5828
    %5893 = vst [vmem:[#allocation4 + $0x11b0] sm:$0xff] %v5829
    %5894 = vst [vmem:[#allocation4 + $0x11f8] sm:$0xff] %v5830
    %v5895 = vld [vmem:[#allocation4] sm:$0xff]
    %v5896 = vld [vmem:[#allocation4 + $0x8] sm:$0xff]
    %v5897 = vld [vmem:[#allocation4 + $0x10] sm:$0xff]
    %v5898 = vld [vmem:[#allocation4 + $0x18] sm:$0xff]
    %v5899 = vld [vmem:[#allocation4 + $0x20] sm:$0xff]
    %v5900 = vld [vmem:[#allocation4 + $0x28] sm:$0xff]
    %v5901 = vld [vmem:[#allocation4 + $0x30] sm:$0xff]
    %v5902 = vld [vmem:[#allocation4 + $0x38] sm:$0xff]
    %v5903 = vld [vmem:[#allocation4 + $0x40] sm:$0xff]
    %v5904 = vld [vmem:[#allocation4 + $0x48] sm:$0xff]
    %v5905 = vld [vmem:[#allocation4 + $0x50] sm:$0xff]
    %v5906 = vld [vmem:[#allocation4 + $0x58] sm:$0xff]
    %v5907 = vld [vmem:[#allocation4 + $0x60] sm:$0xff]
    %v5908 = vld [vmem:[#allocation4 + $0x68] sm:$0xff]
    %v5909 = vld [vmem:[#allocation4 + $0x70] sm:$0xff]
    %v5910 = vld [vmem:[#allocation4 + $0x78] sm:$0xff]
    %v5911 = vld [vmem:[#allocation4 + $0x80] sm:$0xff]
    %v5912 = vld [vmem:[#allocation4 + $0x88] sm:$0xff]
    %v5913 = vld [vmem:[#allocation4 + $0x90] sm:$0xff]
    %v5914 = vld [vmem:[#allocation4 + $0x98] sm:$0xff]
    %v5915 = vld [vmem:[#allocation4 + $0xa0] sm:$0xff]
    %v5916 = vld [vmem:[#allocation4 + $0xa8] sm:$0xff]
    %v5917 = vld [vmem:[#allocation4 + $0xb0] sm:$0xff]
    %v5918 = vld [vmem:[#allocation4 + $0xb8] sm:$0xff]
    %v5919 = vld [vmem:[#allocation4 + $0xc0] sm:$0xff]
    %v5920 = vld [vmem:[#allocation4 + $0xc8] sm:$0xff]
    %v5921 = vld [vmem:[#allocation4 + $0xd0] sm:$0xff]
    %v5922 = vld [vmem:[#allocation4 + $0xd8] sm:$0xff]
    %v5923 = vld [vmem:[#allocation4 + $0xe0] sm:$0xff]
    %v5924 = vld [vmem:[#allocation4 + $0xe8] sm:$0xff]
    %v5925 = vld [vmem:[#allocation4 + $0xf0] sm:$0xff]
    %v5926 = vld [vmem:[#allocation4 + $0xf8] sm:$0xff]
    %v5927 = vld [vmem:[#allocation4 + $0x100] sm:$0xff]
    %v5928 = vld [vmem:[#allocation4 + $0x108] sm:$0xff]
    %v5929 = vld [vmem:[#allocation4 + $0x110] sm:$0xff]
    %v5930 = vld [vmem:[#allocation4 + $0x118] sm:$0xff]
    %v5931 = vld [vmem:[#allocation4 + $0x120] sm:$0xff]
    %v5932 = vld [vmem:[#allocation4 + $0x128] sm:$0xff]
    %v5933 = vld [vmem:[#allocation4 + $0x130] sm:$0xff]
    %v5934 = vld [vmem:[#allocation4 + $0x138] sm:$0xff]
    %v5935 = vld [vmem:[#allocation4 + $0x140] sm:$0xff]
    %v5936 = vld [vmem:[#allocation4 + $0x148] sm:$0xff]
    %v5937 = vld [vmem:[#allocation4 + $0x150] sm:$0xff]
    %v5938 = vld [vmem:[#allocation4 + $0x158] sm:$0xff]
    %v5939 = vld [vmem:[#allocation4 + $0x160] sm:$0xff]
    %v5940 = vld [vmem:[#allocation4 + $0x168] sm:$0xff]
    %v5941 = vld [vmem:[#allocation4 + $0x170] sm:$0xff]
    %v5942 = vld [vmem:[#allocation4 + $0x178] sm:$0xff]
    %v5943 = vld [vmem:[#allocation4 + $0x180] sm:$0xff]
    %v5944 = vld [vmem:[#allocation4 + $0x188] sm:$0xff]
    %v5945 = vld [vmem:[#allocation4 + $0x190] sm:$0xff]
    %v5946 = vld [vmem:[#allocation4 + $0x198] sm:$0xff]
    %v5947 = vld [vmem:[#allocation4 + $0x1a0] sm:$0xff]
    %v5948 = vld [vmem:[#allocation4 + $0x1a8] sm:$0xff]
    %v5949 = vld [vmem:[#allocation4 + $0x1b0] sm:$0xff]
    %v5950 = vld [vmem:[#allocation4 + $0x1b8] sm:$0xff]
    %v5951 = vld [vmem:[#allocation4 + $0x1c0] sm:$0xff]
    %v5952 = vld [vmem:[#allocation4 + $0x1c8] sm:$0xff]
    %v5953 = vld [vmem:[#allocation4 + $0x1d0] sm:$0xff]
    %v5954 = vld [vmem:[#allocation4 + $0x1d8] sm:$0xff]
    %v5955 = vld [vmem:[#allocation4 + $0x1e0] sm:$0xff]
    %v5956 = vld [vmem:[#allocation4 + $0x1e8] sm:$0xff]
    %v5957 = vld [vmem:[#allocation4 + $0x1f0] sm:$0xff]
    %v5958 = vld [vmem:[#allocation4 + $0x1f8] sm:$0xff]
    %v5959 = vld [vmem:[#allocation4 + $0x200] sm:$0xff]
    %v5960 = vld [vmem:[#allocation4 + $0x208] sm:$0xff]
    %v5961 = vld [vmem:[#allocation4 + $0x210] sm:$0xff]
    %v5962 = vld [vmem:[#allocation4 + $0x218] sm:$0xff]
    %v5963 = vld [vmem:[#allocation4 + $0x220] sm:$0xff]
    %v5964 = vld [vmem:[#allocation4 + $0x228] sm:$0xff]
    %v5965 = vld [vmem:[#allocation4 + $0x230] sm:$0xff]
    %v5966 = vld [vmem:[#allocation4 + $0x238] sm:$0xff]
    %v5967 = vld [vmem:[#allocation4 + $0x240] sm:$0xff]
    %v5968 = vld [vmem:[#allocation4 + $0x248] sm:$0xff]
    %v5969 = vld [vmem:[#allocation4 + $0x250] sm:$0xff]
    %v5970 = vld [vmem:[#allocation4 + $0x258] sm:$0xff]
    %v5971 = vld [vmem:[#allocation4 + $0x260] sm:$0xff]
    %v5972 = vld [vmem:[#allocation4 + $0x268] sm:$0xff]
    %v5973 = vld [vmem:[#allocation4 + $0x270] sm:$0xff]
    %v5974 = vld [vmem:[#allocation4 + $0x278] sm:$0xff]
    %v5975 = vld [vmem:[#allocation4 + $0x280] sm:$0xff]
    %v5976 = vld [vmem:[#allocation4 + $0x288] sm:$0xff]
    %v5977 = vld [vmem:[#allocation4 + $0x290] sm:$0xff]
    %v5978 = vld [vmem:[#allocation4 + $0x298] sm:$0xff]
    %v5979 = vld [vmem:[#allocation4 + $0x2a0] sm:$0xff]
    %v5980 = vld [vmem:[#allocation4 + $0x2a8] sm:$0xff]
    %v5981 = vld [vmem:[#allocation4 + $0x2b0] sm:$0xff]
    %v5982 = vld [vmem:[#allocation4 + $0x2b8] sm:$0xff]
    %v5983 = vld [vmem:[#allocation4 + $0x2c0] sm:$0xff]
    %v5984 = vld [vmem:[#allocation4 + $0x2c8] sm:$0xff]
    %v5985 = vld [vmem:[#allocation4 + $0x2d0] sm:$0xff]
    %v5986 = vld [vmem:[#allocation4 + $0x2d8] sm:$0xff]
    %v5987 = vld [vmem:[#allocation4 + $0x2e0] sm:$0xff]
    %v5988 = vld [vmem:[#allocation4 + $0x2e8] sm:$0xff]
    %v5989 = vld [vmem:[#allocation4 + $0x2f0] sm:$0xff]
    %v5990 = vld [vmem:[#allocation4 + $0x2f8] sm:$0xff]
    %v5991 = vld [vmem:[#allocation4 + $0x300] sm:$0xff]
    %v5992 = vld [vmem:[#allocation4 + $0x308] sm:$0xff]
    %v5993 = vld [vmem:[#allocation4 + $0x310] sm:$0xff]
    %v5994 = vld [vmem:[#allocation4 + $0x318] sm:$0xff]
    %v5995 = vld [vmem:[#allocation4 + $0x320] sm:$0xff]
    %v5996 = vld [vmem:[#allocation4 + $0x328] sm:$0xff]
    %v5997 = vld [vmem:[#allocation4 + $0x330] sm:$0xff]
    %v5998 = vld [vmem:[#allocation4 + $0x338] sm:$0xff]
    %v5999 = vld [vmem:[#allocation4 + $0x340] sm:$0xff]
    %v6000 = vld [vmem:[#allocation4 + $0x348] sm:$0xff]
    %v6001 = vld [vmem:[#allocation4 + $0x350] sm:$0xff]
    %v6002 = vld [vmem:[#allocation4 + $0x358] sm:$0xff]
    %v6003 = vld [vmem:[#allocation4 + $0x360] sm:$0xff]
    %v6004 = vld [vmem:[#allocation4 + $0x368] sm:$0xff]
    %v6005 = vld [vmem:[#allocation4 + $0x370] sm:$0xff]
    %v6006 = vld [vmem:[#allocation4 + $0x378] sm:$0xff]
    %v6007 = vld [vmem:[#allocation4 + $0x380] sm:$0xff]
    %v6008 = vld [vmem:[#allocation4 + $0x388] sm:$0xff]
    %v6009 = vld [vmem:[#allocation4 + $0x390] sm:$0xff]
    %v6010 = vld [vmem:[#allocation4 + $0x398] sm:$0xff]
    %v6011 = vld [vmem:[#allocation4 + $0x3a0] sm:$0xff]
    %v6012 = vld [vmem:[#allocation4 + $0x3a8] sm:$0xff]
    %v6013 = vld [vmem:[#allocation4 + $0x3b0] sm:$0xff]
    %v6014 = vld [vmem:[#allocation4 + $0x3b8] sm:$0xff]
    %v6015 = vld [vmem:[#allocation4 + $0x3c0] sm:$0xff]
    %v6016 = vld [vmem:[#allocation4 + $0x3c8] sm:$0xff]
    %v6017 = vld [vmem:[#allocation4 + $0x3d0] sm:$0xff]
    %v6018 = vld [vmem:[#allocation4 + $0x3d8] sm:$0xff]
    %v6019 = vld [vmem:[#allocation4 + $0x3e0] sm:$0xff]
    %v6020 = vld [vmem:[#allocation4 + $0x3e8] sm:$0xff]
    %v6021 = vld [vmem:[#allocation4 + $0x3f0] sm:$0xff]
    %v6022 = vld [vmem:[#allocation4 + $0x3f8] sm:$0xff]
    %v6023 = vld [vmem:[#allocation4 + $0x400] sm:$0xff]
    %v6024 = vld [vmem:[#allocation4 + $0x408] sm:$0xff]
    %v6025 = vld [vmem:[#allocation4 + $0x410] sm:$0xff]
    %v6026 = vld [vmem:[#allocation4 + $0x418] sm:$0xff]
    %v6027 = vld [vmem:[#allocation4 + $0x420] sm:$0xff]
    %v6028 = vld [vmem:[#allocation4 + $0x428] sm:$0xff]
    %v6029 = vld [vmem:[#allocation4 + $0x430] sm:$0xff]
    %v6030 = vld [vmem:[#allocation4 + $0x438] sm:$0xff]
    %v6031 = vld [vmem:[#allocation4 + $0x440] sm:$0xff]
    %v6032 = vld [vmem:[#allocation4 + $0x448] sm:$0xff]
    %v6033 = vld [vmem:[#allocation4 + $0x450] sm:$0xff]
    %v6034 = vld [vmem:[#allocation4 + $0x458] sm:$0xff]
    %v6035 = vld [vmem:[#allocation4 + $0x460] sm:$0xff]
    %v6036 = vld [vmem:[#allocation4 + $0x468] sm:$0xff]
    %v6037 = vld [vmem:[#allocation4 + $0x470] sm:$0xff]
    %v6038 = vld [vmem:[#allocation4 + $0x478] sm:$0xff]
    %v6039 = vld [vmem:[#allocation4 + $0x480] sm:$0xff]
    %v6040 = vld [vmem:[#allocation4 + $0x488] sm:$0xff]
    %v6041 = vld [vmem:[#allocation4 + $0x490] sm:$0xff]
    %v6042 = vld [vmem:[#allocation4 + $0x498] sm:$0xff]
    %v6043 = vld [vmem:[#allocation4 + $0x4a0] sm:$0xff]
    %v6044 = vld [vmem:[#allocation4 + $0x4a8] sm:$0xff]
    %v6045 = vld [vmem:[#allocation4 + $0x4b0] sm:$0xff]
    %v6046 = vld [vmem:[#allocation4 + $0x4b8] sm:$0xff]
    %v6047 = vld [vmem:[#allocation4 + $0x4c0] sm:$0xff]
    %v6048 = vld [vmem:[#allocation4 + $0x4c8] sm:$0xff]
    %v6049 = vld [vmem:[#allocation4 + $0x4d0] sm:$0xff]
    %v6050 = vld [vmem:[#allocation4 + $0x4d8] sm:$0xff]
    %v6051 = vld [vmem:[#allocation4 + $0x4e0] sm:$0xff]
    %v6052 = vld [vmem:[#allocation4 + $0x4e8] sm:$0xff]
    %v6053 = vld [vmem:[#allocation4 + $0x4f0] sm:$0xff]
    %v6054 = vld [vmem:[#allocation4 + $0x4f8] sm:$0xff]
    %v6055 = vld [vmem:[#allocation4 + $0x500] sm:$0xff]
    %v6056 = vld [vmem:[#allocation4 + $0x508] sm:$0xff]
    %v6057 = vld [vmem:[#allocation4 + $0x510] sm:$0xff]
    %v6058 = vld [vmem:[#allocation4 + $0x518] sm:$0xff]
    %v6059 = vld [vmem:[#allocation4 + $0x520] sm:$0xff]
    %v6060 = vld [vmem:[#allocation4 + $0x528] sm:$0xff]
    %v6061 = vld [vmem:[#allocation4 + $0x530] sm:$0xff]
    %v6062 = vld [vmem:[#allocation4 + $0x538] sm:$0xff]
    %v6063 = vld [vmem:[#allocation4 + $0x540] sm:$0xff]
    %v6064 = vld [vmem:[#allocation4 + $0x548] sm:$0xff]
    %v6065 = vld [vmem:[#allocation4 + $0x550] sm:$0xff]
    %v6066 = vld [vmem:[#allocation4 + $0x558] sm:$0xff]
    %v6067 = vld [vmem:[#allocation4 + $0x560] sm:$0xff]
    %v6068 = vld [vmem:[#allocation4 + $0x568] sm:$0xff]
    %v6069 = vld [vmem:[#allocation4 + $0x570] sm:$0xff]
    %v6070 = vld [vmem:[#allocation4 + $0x578] sm:$0xff]
    %v6071 = vld [vmem:[#allocation4 + $0x580] sm:$0xff]
    %v6072 = vld [vmem:[#allocation4 + $0x588] sm:$0xff]
    %v6073 = vld [vmem:[#allocation4 + $0x590] sm:$0xff]
    %v6074 = vld [vmem:[#allocation4 + $0x598] sm:$0xff]
    %v6075 = vld [vmem:[#allocation4 + $0x5a0] sm:$0xff]
    %v6076 = vld [vmem:[#allocation4 + $0x5a8] sm:$0xff]
    %v6077 = vld [vmem:[#allocation4 + $0x5b0] sm:$0xff]
    %v6078 = vld [vmem:[#allocation4 + $0x5b8] sm:$0xff]
    %v6079 = vld [vmem:[#allocation4 + $0x5c0] sm:$0xff]
    %v6080 = vld [vmem:[#allocation4 + $0x5c8] sm:$0xff]
    %v6081 = vld [vmem:[#allocation4 + $0x5d0] sm:$0xff]
    %v6082 = vld [vmem:[#allocation4 + $0x5d8] sm:$0xff]
    %v6083 = vld [vmem:[#allocation4 + $0x5e0] sm:$0xff]
    %v6084 = vld [vmem:[#allocation4 + $0x5e8] sm:$0xff]
    %v6085 = vld [vmem:[#allocation4 + $0x5f0] sm:$0xff]
    %v6086 = vld [vmem:[#allocation4 + $0x5f8] sm:$0xff]
    %v6087 = vld [vmem:[#allocation4 + $0x600] sm:$0xff]
    %v6088 = vld [vmem:[#allocation4 + $0x608] sm:$0xff]
    %v6089 = vld [vmem:[#allocation4 + $0x610] sm:$0xff]
    %v6090 = vld [vmem:[#allocation4 + $0x618] sm:$0xff]
    %v6091 = vld [vmem:[#allocation4 + $0x620] sm:$0xff]
    %v6092 = vld [vmem:[#allocation4 + $0x628] sm:$0xff]
    %v6093 = vld [vmem:[#allocation4 + $0x630] sm:$0xff]
    %v6094 = vld [vmem:[#allocation4 + $0x638] sm:$0xff]
    %v6095 = vld [vmem:[#allocation4 + $0x640] sm:$0xff]
    %v6096 = vld [vmem:[#allocation4 + $0x648] sm:$0xff]
    %v6097 = vld [vmem:[#allocation4 + $0x650] sm:$0xff]
    %v6098 = vld [vmem:[#allocation4 + $0x658] sm:$0xff]
    %v6099 = vld [vmem:[#allocation4 + $0x660] sm:$0xff]
    %v6100 = vld [vmem:[#allocation4 + $0x668] sm:$0xff]
    %v6101 = vld [vmem:[#allocation4 + $0x670] sm:$0xff]
    %v6102 = vld [vmem:[#allocation4 + $0x678] sm:$0xff]
    %v6103 = vld [vmem:[#allocation4 + $0x680] sm:$0xff]
    %v6104 = vld [vmem:[#allocation4 + $0x688] sm:$0xff]
    %v6105 = vld [vmem:[#allocation4 + $0x690] sm:$0xff]
    %v6106 = vld [vmem:[#allocation4 + $0x698] sm:$0xff]
    %v6107 = vld [vmem:[#allocation4 + $0x6a0] sm:$0xff]
    %v6108 = vld [vmem:[#allocation4 + $0x6a8] sm:$0xff]
    %v6109 = vld [vmem:[#allocation4 + $0x6b0] sm:$0xff]
    %v6110 = vld [vmem:[#allocation4 + $0x6b8] sm:$0xff]
    %v6111 = vld [vmem:[#allocation4 + $0x6c0] sm:$0xff]
    %v6112 = vld [vmem:[#allocation4 + $0x6c8] sm:$0xff]
    %v6113 = vld [vmem:[#allocation4 + $0x6d0] sm:$0xff]
    %v6114 = vld [vmem:[#allocation4 + $0x6d8] sm:$0xff]
    %v6115 = vld [vmem:[#allocation4 + $0x6e0] sm:$0xff]
    %v6116 = vld [vmem:[#allocation4 + $0x6e8] sm:$0xff]
    %v6117 = vld [vmem:[#allocation4 + $0x6f0] sm:$0xff]
    %v6118 = vld [vmem:[#allocation4 + $0x6f8] sm:$0xff]
    %v6119 = vld [vmem:[#allocation4 + $0x700] sm:$0xff]
    %v6120 = vld [vmem:[#allocation4 + $0x708] sm:$0xff]
    %v6121 = vld [vmem:[#allocation4 + $0x710] sm:$0xff]
    %v6122 = vld [vmem:[#allocation4 + $0x718] sm:$0xff]
    %v6123 = vld [vmem:[#allocation4 + $0x720] sm:$0xff]
    %v6124 = vld [vmem:[#allocation4 + $0x728] sm:$0xff]
    %v6125 = vld [vmem:[#allocation4 + $0x730] sm:$0xff]
    %v6126 = vld [vmem:[#allocation4 + $0x738] sm:$0xff]
    %v6127 = vld [vmem:[#allocation4 + $0x740] sm:$0xff]
    %v6128 = vld [vmem:[#allocation4 + $0x748] sm:$0xff]
    %v6129 = vld [vmem:[#allocation4 + $0x750] sm:$0xff]
    %v6130 = vld [vmem:[#allocation4 + $0x758] sm:$0xff]
    %v6131 = vld [vmem:[#allocation4 + $0x760] sm:$0xff]
    %v6132 = vld [vmem:[#allocation4 + $0x768] sm:$0xff]
    %v6133 = vld [vmem:[#allocation4 + $0x770] sm:$0xff]
    %v6134 = vld [vmem:[#allocation4 + $0x778] sm:$0xff]
    %v6135 = vld [vmem:[#allocation4 + $0x780] sm:$0xff]
    %v6136 = vld [vmem:[#allocation4 + $0x788] sm:$0xff]
    %v6137 = vld [vmem:[#allocation4 + $0x790] sm:$0xff]
    %v6138 = vld [vmem:[#allocation4 + $0x798] sm:$0xff]
    %v6139 = vld [vmem:[#allocation4 + $0x7a0] sm:$0xff]
    %v6140 = vld [vmem:[#allocation4 + $0x7a8] sm:$0xff]
    %v6141 = vld [vmem:[#allocation4 + $0x7b0] sm:$0xff]
    %v6142 = vld [vmem:[#allocation4 + $0x7b8] sm:$0xff]
    %v6143 = vld [vmem:[#allocation4 + $0x7c0] sm:$0xff]
    %v6144 = vld [vmem:[#allocation4 + $0x7c8] sm:$0xff]
    %v6145 = vld [vmem:[#allocation4 + $0x7d0] sm:$0xff]
    %v6146 = vld [vmem:[#allocation4 + $0x7d8] sm:$0xff]
    %v6147 = vld [vmem:[#allocation4 + $0x7e0] sm:$0xff]
    %v6148 = vld [vmem:[#allocation4 + $0x7e8] sm:$0xff]
    %v6149 = vld [vmem:[#allocation4 + $0x7f0] sm:$0xff]
    %v6150 = vld [vmem:[#allocation4 + $0x7f8] sm:$0xff]
    %v6151 = vld [vmem:[#allocation4 + $0x800] sm:$0xff]
    %v6152 = vld [vmem:[#allocation4 + $0x808] sm:$0xff]
    %v6153 = vld [vmem:[#allocation4 + $0x810] sm:$0xff]
    %v6154 = vld [vmem:[#allocation4 + $0x818] sm:$0xff]
    %v6155 = vld [vmem:[#allocation4 + $0x820] sm:$0xff]
    %v6156 = vld [vmem:[#allocation4 + $0x828] sm:$0xff]
    %v6157 = vld [vmem:[#allocation4 + $0x830] sm:$0xff]
    %v6158 = vld [vmem:[#allocation4 + $0x838] sm:$0xff]
    %v6159 = vld [vmem:[#allocation4 + $0x840] sm:$0xff]
    %v6160 = vld [vmem:[#allocation4 + $0x848] sm:$0xff]
    %v6161 = vld [vmem:[#allocation4 + $0x850] sm:$0xff]
    %v6162 = vld [vmem:[#allocation4 + $0x858] sm:$0xff]
    %v6163 = vld [vmem:[#allocation4 + $0x860] sm:$0xff]
    %v6164 = vld [vmem:[#allocation4 + $0x868] sm:$0xff]
    %v6165 = vld [vmem:[#allocation4 + $0x870] sm:$0xff]
    %v6166 = vld [vmem:[#allocation4 + $0x878] sm:$0xff]
    %v6167 = vld [vmem:[#allocation4 + $0x880] sm:$0xff]
    %v6168 = vld [vmem:[#allocation4 + $0x888] sm:$0xff]
    %v6169 = vld [vmem:[#allocation4 + $0x890] sm:$0xff]
    %v6170 = vld [vmem:[#allocation4 + $0x898] sm:$0xff]
    %v6171 = vld [vmem:[#allocation4 + $0x8a0] sm:$0xff]
    %v6172 = vld [vmem:[#allocation4 + $0x8a8] sm:$0xff]
    %v6173 = vld [vmem:[#allocation4 + $0x8b0] sm:$0xff]
    %v6174 = vld [vmem:[#allocation4 + $0x8b8] sm:$0xff]
    %v6175 = vld [vmem:[#allocation4 + $0x8c0] sm:$0xff]
    %v6176 = vld [vmem:[#allocation4 + $0x8c8] sm:$0xff]
    %v6177 = vld [vmem:[#allocation4 + $0x8d0] sm:$0xff]
    %v6178 = vld [vmem:[#allocation4 + $0x8d8] sm:$0xff]
    %v6179 = vld [vmem:[#allocation4 + $0x8e0] sm:$0xff]
    %v6180 = vld [vmem:[#allocation4 + $0x8e8] sm:$0xff]
    %v6181 = vld [vmem:[#allocation4 + $0x8f0] sm:$0xff]
    %v6182 = vld [vmem:[#allocation4 + $0x8f8] sm:$0xff]
    %v6183 = vld [vmem:[#allocation4 + $0x900] sm:$0xff]
    %v6184 = vld [vmem:[#allocation4 + $0x908] sm:$0xff]
    %v6185 = vld [vmem:[#allocation4 + $0x910] sm:$0xff]
    %v6186 = vld [vmem:[#allocation4 + $0x918] sm:$0xff]
    %v6187 = vld [vmem:[#allocation4 + $0x920] sm:$0xff]
    %v6188 = vld [vmem:[#allocation4 + $0x928] sm:$0xff]
    %v6189 = vld [vmem:[#allocation4 + $0x930] sm:$0xff]
    %v6190 = vld [vmem:[#allocation4 + $0x938] sm:$0xff]
    %v6191 = vld [vmem:[#allocation4 + $0x940] sm:$0xff]
    %v6192 = vld [vmem:[#allocation4 + $0x948] sm:$0xff]
    %v6193 = vld [vmem:[#allocation4 + $0x950] sm:$0xff]
    %v6194 = vld [vmem:[#allocation4 + $0x958] sm:$0xff]
    %v6195 = vld [vmem:[#allocation4 + $0x960] sm:$0xff]
    %v6196 = vld [vmem:[#allocation4 + $0x968] sm:$0xff]
    %v6197 = vld [vmem:[#allocation4 + $0x970] sm:$0xff]
    %v6198 = vld [vmem:[#allocation4 + $0x978] sm:$0xff]
    %v6199 = vld [vmem:[#allocation4 + $0x980] sm:$0xff]
    %v6200 = vld [vmem:[#allocation4 + $0x988] sm:$0xff]
    %v6201 = vld [vmem:[#allocation4 + $0x990] sm:$0xff]
    %v6202 = vld [vmem:[#allocation4 + $0x998] sm:$0xff]
    %v6203 = vld [vmem:[#allocation4 + $0x9a0] sm:$0xff]
    %v6204 = vld [vmem:[#allocation4 + $0x9a8] sm:$0xff]
    %v6205 = vld [vmem:[#allocation4 + $0x9b0] sm:$0xff]
    %v6206 = vld [vmem:[#allocation4 + $0x9b8] sm:$0xff]
    %v6207 = vld [vmem:[#allocation4 + $0x9c0] sm:$0xff]
    %v6208 = vld [vmem:[#allocation4 + $0x9c8] sm:$0xff]
    %v6209 = vld [vmem:[#allocation4 + $0x9d0] sm:$0xff]
    %v6210 = vld [vmem:[#allocation4 + $0x9d8] sm:$0xff]
    %v6211 = vld [vmem:[#allocation4 + $0x9e0] sm:$0xff]
    %v6212 = vld [vmem:[#allocation4 + $0x9e8] sm:$0xff]
    %v6213 = vld [vmem:[#allocation4 + $0x9f0] sm:$0xff]
    %v6214 = vld [vmem:[#allocation4 + $0x9f8] sm:$0xff]
    %v6215 = vld [vmem:[#allocation4 + $0xa00] sm:$0xff]
    %v6216 = vld [vmem:[#allocation4 + $0xa08] sm:$0xff]
    %v6217 = vld [vmem:[#allocation4 + $0xa10] sm:$0xff]
    %v6218 = vld [vmem:[#allocation4 + $0xa18] sm:$0xff]
    %v6219 = vld [vmem:[#allocation4 + $0xa20] sm:$0xff]
    %v6220 = vld [vmem:[#allocation4 + $0xa28] sm:$0xff]
    %v6221 = vld [vmem:[#allocation4 + $0xa30] sm:$0xff]
    %v6222 = vld [vmem:[#allocation4 + $0xa38] sm:$0xff]
    %v6223 = vld [vmem:[#allocation4 + $0xa40] sm:$0xff]
    %v6224 = vld [vmem:[#allocation4 + $0xa48] sm:$0xff]
    %v6225 = vld [vmem:[#allocation4 + $0xa50] sm:$0xff]
    %v6226 = vld [vmem:[#allocation4 + $0xa58] sm:$0xff]
    %v6227 = vld [vmem:[#allocation4 + $0xa60] sm:$0xff]
    %v6228 = vld [vmem:[#allocation4 + $0xa68] sm:$0xff]
    %v6229 = vld [vmem:[#allocation4 + $0xa70] sm:$0xff]
    %v6230 = vld [vmem:[#allocation4 + $0xa78] sm:$0xff]
    %v6231 = vld [vmem:[#allocation4 + $0xa80] sm:$0xff]
    %v6232 = vld [vmem:[#allocation4 + $0xa88] sm:$0xff]
    %v6233 = vld [vmem:[#allocation4 + $0xa90] sm:$0xff]
    %v6234 = vld [vmem:[#allocation4 + $0xa98] sm:$0xff]
    %v6235 = vld [vmem:[#allocation4 + $0xaa0] sm:$0xff]
    %v6236 = vld [vmem:[#allocation4 + $0xaa8] sm:$0xff]
    %v6237 = vld [vmem:[#allocation4 + $0xab0] sm:$0xff]
    %v6238 = vld [vmem:[#allocation4 + $0xab8] sm:$0xff]
    %v6239 = vld [vmem:[#allocation4 + $0xac0] sm:$0xff]
    %v6240 = vld [vmem:[#allocation4 + $0xac8] sm:$0xff]
    %v6241 = vld [vmem:[#allocation4 + $0xad0] sm:$0xff]
    %v6242 = vld [vmem:[#allocation4 + $0xad8] sm:$0xff]
    %v6243 = vld [vmem:[#allocation4 + $0xae0] sm:$0xff]
    %v6244 = vld [vmem:[#allocation4 + $0xae8] sm:$0xff]
    %v6245 = vld [vmem:[#allocation4 + $0xaf0] sm:$0xff]
    %v6246 = vld [vmem:[#allocation4 + $0xaf8] sm:$0xff]
    %v6247 = vld [vmem:[#allocation4 + $0xb00] sm:$0xff]
    %v6248 = vld [vmem:[#allocation4 + $0xb08] sm:$0xff]
    %v6249 = vld [vmem:[#allocation4 + $0xb10] sm:$0xff]
    %v6250 = vld [vmem:[#allocation4 + $0xb18] sm:$0xff]
    %v6251 = vld [vmem:[#allocation4 + $0xb20] sm:$0xff]
    %v6252 = vld [vmem:[#allocation4 + $0xb28] sm:$0xff]
    %v6253 = vld [vmem:[#allocation4 + $0xb30] sm:$0xff]
    %v6254 = vld [vmem:[#allocation4 + $0xb38] sm:$0xff]
    %v6255 = vld [vmem:[#allocation4 + $0xb40] sm:$0xff]
    %v6256 = vld [vmem:[#allocation4 + $0xb48] sm:$0xff]
    %v6257 = vld [vmem:[#allocation4 + $0xb50] sm:$0xff]
    %v6258 = vld [vmem:[#allocation4 + $0xb58] sm:$0xff]
    %v6259 = vld [vmem:[#allocation4 + $0xb60] sm:$0xff]
    %v6260 = vld [vmem:[#allocation4 + $0xb68] sm:$0xff]
    %v6261 = vld [vmem:[#allocation4 + $0xb70] sm:$0xff]
    %v6262 = vld [vmem:[#allocation4 + $0xb78] sm:$0xff]
    %v6263 = vld [vmem:[#allocation4 + $0xb80] sm:$0xff]
    %v6264 = vld [vmem:[#allocation4 + $0xb88] sm:$0xff]
    %v6265 = vld [vmem:[#allocation4 + $0xb90] sm:$0xff]
    %v6266 = vld [vmem:[#allocation4 + $0xb98] sm:$0xff]
    %v6267 = vld [vmem:[#allocation4 + $0xba0] sm:$0xff]
    %v6268 = vld [vmem:[#allocation4 + $0xba8] sm:$0xff]
    %v6269 = vld [vmem:[#allocation4 + $0xbb0] sm:$0xff]
    %v6270 = vld [vmem:[#allocation4 + $0xbb8] sm:$0xff]
    %v6271 = vld [vmem:[#allocation4 + $0xbc0] sm:$0xff]
    %v6272 = vld [vmem:[#allocation4 + $0xbc8] sm:$0xff]
    %v6273 = vld [vmem:[#allocation4 + $0xbd0] sm:$0xff]
    %v6274 = vld [vmem:[#allocation4 + $0xbd8] sm:$0xff]
    %v6275 = vld [vmem:[#allocation4 + $0xbe0] sm:$0xff]
    %v6276 = vld [vmem:[#allocation4 + $0xbe8] sm:$0xff]
    %v6277 = vld [vmem:[#allocation4 + $0xbf0] sm:$0xff]
    %v6278 = vld [vmem:[#allocation4 + $0xbf8] sm:$0xff]
    %v6279 = vld [vmem:[#allocation4 + $0xc00] sm:$0xff]
    %v6280 = vld [vmem:[#allocation4 + $0xc08] sm:$0xff]
    %v6281 = vld [vmem:[#allocation4 + $0xc10] sm:$0xff]
    %v6282 = vld [vmem:[#allocation4 + $0xc18] sm:$0xff]
    %v6283 = vld [vmem:[#allocation4 + $0xc20] sm:$0xff]
    %v6284 = vld [vmem:[#allocation4 + $0xc28] sm:$0xff]
    %v6285 = vld [vmem:[#allocation4 + $0xc30] sm:$0xff]
    %v6286 = vld [vmem:[#allocation4 + $0xc38] sm:$0xff]
    %v6287 = vld [vmem:[#allocation4 + $0xc40] sm:$0xff]
    %v6288 = vld [vmem:[#allocation4 + $0xc48] sm:$0xff]
    %v6289 = vld [vmem:[#allocation4 + $0xc50] sm:$0xff]
    %v6290 = vld [vmem:[#allocation4 + $0xc58] sm:$0xff]
    %v6291 = vld [vmem:[#allocation4 + $0xc60] sm:$0xff]
    %v6292 = vld [vmem:[#allocation4 + $0xc68] sm:$0xff]
    %v6293 = vld [vmem:[#allocation4 + $0xc70] sm:$0xff]
    %v6294 = vld [vmem:[#allocation4 + $0xc78] sm:$0xff]
    %v6295 = vld [vmem:[#allocation4 + $0xc80] sm:$0xff]
    %v6296 = vld [vmem:[#allocation4 + $0xc88] sm:$0xff]
    %v6297 = vld [vmem:[#allocation4 + $0xc90] sm:$0xff]
    %v6298 = vld [vmem:[#allocation4 + $0xc98] sm:$0xff]
    %v6299 = vld [vmem:[#allocation4 + $0xca0] sm:$0xff]
    %v6300 = vld [vmem:[#allocation4 + $0xca8] sm:$0xff]
    %v6301 = vld [vmem:[#allocation4 + $0xcb0] sm:$0xff]
    %v6302 = vld [vmem:[#allocation4 + $0xcb8] sm:$0xff]
    %v6303 = vld [vmem:[#allocation4 + $0xcc0] sm:$0xff]
    %v6304 = vld [vmem:[#allocation4 + $0xcc8] sm:$0xff]
    %v6305 = vld [vmem:[#allocation4 + $0xcd0] sm:$0xff]
    %v6306 = vld [vmem:[#allocation4 + $0xcd8] sm:$0xff]
    %v6307 = vld [vmem:[#allocation4 + $0xce0] sm:$0xff]
    %v6308 = vld [vmem:[#allocation4 + $0xce8] sm:$0xff]
    %v6309 = vld [vmem:[#allocation4 + $0xcf0] sm:$0xff]
    %v6310 = vld [vmem:[#allocation4 + $0xcf8] sm:$0xff]
    %v6311 = vld [vmem:[#allocation4 + $0xd00] sm:$0xff]
    %v6312 = vld [vmem:[#allocation4 + $0xd08] sm:$0xff]
    %v6313 = vld [vmem:[#allocation4 + $0xd10] sm:$0xff]
    %v6314 = vld [vmem:[#allocation4 + $0xd18] sm:$0xff]
    %v6315 = vld [vmem:[#allocation4 + $0xd20] sm:$0xff]
    %v6316 = vld [vmem:[#allocation4 + $0xd28] sm:$0xff]
    %v6317 = vld [vmem:[#allocation4 + $0xd30] sm:$0xff]
    %v6318 = vld [vmem:[#allocation4 + $0xd38] sm:$0xff]
    %v6319 = vld [vmem:[#allocation4 + $0xd40] sm:$0xff]
    %v6320 = vld [vmem:[#allocation4 + $0xd48] sm:$0xff]
    %v6321 = vld [vmem:[#allocation4 + $0xd50] sm:$0xff]
    %v6322 = vld [vmem:[#allocation4 + $0xd58] sm:$0xff]
    %v6323 = vld [vmem:[#allocation4 + $0xd60] sm:$0xff]
    %v6324 = vld [vmem:[#allocation4 + $0xd68] sm:$0xff]
    %v6325 = vld [vmem:[#allocation4 + $0xd70] sm:$0xff]
    %v6326 = vld [vmem:[#allocation4 + $0xd78] sm:$0xff]
    %v6327 = vld [vmem:[#allocation4 + $0xd80] sm:$0xff]
    %v6328 = vld [vmem:[#allocation4 + $0xd88] sm:$0xff]
    %v6329 = vld [vmem:[#allocation4 + $0xd90] sm:$0xff]
    %v6330 = vld [vmem:[#allocation4 + $0xd98] sm:$0xff]
    %v6331 = vld [vmem:[#allocation4 + $0xda0] sm:$0xff]
    %v6332 = vld [vmem:[#allocation4 + $0xda8] sm:$0xff]
    %v6333 = vld [vmem:[#allocation4 + $0xdb0] sm:$0xff]
    %v6334 = vld [vmem:[#allocation4 + $0xdb8] sm:$0xff]
    %v6335 = vld [vmem:[#allocation4 + $0xdc0] sm:$0xff]
    %v6336 = vld [vmem:[#allocation4 + $0xdc8] sm:$0xff]
    %v6337 = vld [vmem:[#allocation4 + $0xdd0] sm:$0xff]
    %v6338 = vld [vmem:[#allocation4 + $0xdd8] sm:$0xff]
    %v6339 = vld [vmem:[#allocation4 + $0xde0] sm:$0xff]
    %v6340 = vld [vmem:[#allocation4 + $0xde8] sm:$0xff]
    %v6341 = vld [vmem:[#allocation4 + $0xdf0] sm:$0xff]
    %v6342 = vld [vmem:[#allocation4 + $0xdf8] sm:$0xff]
    %v6343 = vld [vmem:[#allocation4 + $0xe00] sm:$0xff]
    %v6344 = vld [vmem:[#allocation4 + $0xe08] sm:$0xff]
    %v6345 = vld [vmem:[#allocation4 + $0xe10] sm:$0xff]
    %v6346 = vld [vmem:[#allocation4 + $0xe18] sm:$0xff]
    %v6347 = vld [vmem:[#allocation4 + $0xe20] sm:$0xff]
    %v6348 = vld [vmem:[#allocation4 + $0xe28] sm:$0xff]
    %v6349 = vld [vmem:[#allocation4 + $0xe30] sm:$0xff]
    %v6350 = vld [vmem:[#allocation4 + $0xe38] sm:$0xff]
    %v6351 = vld [vmem:[#allocation4 + $0xe40] sm:$0xff]
    %v6352 = vld [vmem:[#allocation4 + $0xe48] sm:$0xff]
    %v6353 = vld [vmem:[#allocation4 + $0xe50] sm:$0xff]
    %v6354 = vld [vmem:[#allocation4 + $0xe58] sm:$0xff]
    %v6355 = vld [vmem:[#allocation4 + $0xe60] sm:$0xff]
    %v6356 = vld [vmem:[#allocation4 + $0xe68] sm:$0xff]
    %v6357 = vld [vmem:[#allocation4 + $0xe70] sm:$0xff]
    %v6358 = vld [vmem:[#allocation4 + $0xe78] sm:$0xff]
    %v6359 = vld [vmem:[#allocation4 + $0xe80] sm:$0xff]
    %v6360 = vld [vmem:[#allocation4 + $0xe88] sm:$0xff]
    %v6361 = vld [vmem:[#allocation4 + $0xe90] sm:$0xff]
    %v6362 = vld [vmem:[#allocation4 + $0xe98] sm:$0xff]
    %v6363 = vld [vmem:[#allocation4 + $0xea0] sm:$0xff]
    %v6364 = vld [vmem:[#allocation4 + $0xea8] sm:$0xff]
    %v6365 = vld [vmem:[#allocation4 + $0xeb0] sm:$0xff]
    %v6366 = vld [vmem:[#allocation4 + $0xeb8] sm:$0xff]
    %v6367 = vld [vmem:[#allocation4 + $0xec0] sm:$0xff]
    %v6368 = vld [vmem:[#allocation4 + $0xec8] sm:$0xff]
    %v6369 = vld [vmem:[#allocation4 + $0xed0] sm:$0xff]
    %v6370 = vld [vmem:[#allocation4 + $0xed8] sm:$0xff]
    %v6371 = vld [vmem:[#allocation4 + $0xee0] sm:$0xff]
    %v6372 = vld [vmem:[#allocation4 + $0xee8] sm:$0xff]
    %v6373 = vld [vmem:[#allocation4 + $0xef0] sm:$0xff]
    %v6374 = vld [vmem:[#allocation4 + $0xef8] sm:$0xff]
    %v6375 = vld [vmem:[#allocation4 + $0xf00] sm:$0xff]
    %v6376 = vld [vmem:[#allocation4 + $0xf08] sm:$0xff]
    %v6377 = vld [vmem:[#allocation4 + $0xf10] sm:$0xff]
    %v6378 = vld [vmem:[#allocation4 + $0xf18] sm:$0xff]
    %v6379 = vld [vmem:[#allocation4 + $0xf20] sm:$0xff]
    %v6380 = vld [vmem:[#allocation4 + $0xf28] sm:$0xff]
    %v6381 = vld [vmem:[#allocation4 + $0xf30] sm:$0xff]
    %v6382 = vld [vmem:[#allocation4 + $0xf38] sm:$0xff]
    %v6383 = vld [vmem:[#allocation4 + $0xf40] sm:$0xff]
    %v6384 = vld [vmem:[#allocation4 + $0xf48] sm:$0xff]
    %v6385 = vld [vmem:[#allocation4 + $0xf50] sm:$0xff]
    %v6386 = vld [vmem:[#allocation4 + $0xf58] sm:$0xff]
    %v6387 = vld [vmem:[#allocation4 + $0xf60] sm:$0xff]
    %v6388 = vld [vmem:[#allocation4 + $0xf68] sm:$0xff]
    %v6389 = vld [vmem:[#allocation4 + $0xf70] sm:$0xff]
    %v6390 = vld [vmem:[#allocation4 + $0xf78] sm:$0xff]
    %v6391 = vld [vmem:[#allocation4 + $0xf80] sm:$0xff]
    %v6392 = vld [vmem:[#allocation4 + $0xf88] sm:$0xff]
    %v6393 = vld [vmem:[#allocation4 + $0xf90] sm:$0xff]
    %v6394 = vld [vmem:[#allocation4 + $0xf98] sm:$0xff]
    %v6395 = vld [vmem:[#allocation4 + $0xfa0] sm:$0xff]
    %v6396 = vld [vmem:[#allocation4 + $0xfa8] sm:$0xff]
    %v6397 = vld [vmem:[#allocation4 + $0xfb0] sm:$0xff]
    %v6398 = vld [vmem:[#allocation4 + $0xfb8] sm:$0xff]
    %v6399 = vld [vmem:[#allocation4 + $0xfc0] sm:$0xff]
    %v6400 = vld [vmem:[#allocation4 + $0xfc8] sm:$0xff]
    %v6401 = vld [vmem:[#allocation4 + $0xfd0] sm:$0xff]
    %v6402 = vld [vmem:[#allocation4 + $0xfd8] sm:$0xff]
    %v6403 = vld [vmem:[#allocation4 + $0xfe0] sm:$0xff]
    %v6404 = vld [vmem:[#allocation4 + $0xfe8] sm:$0xff]
    %v6405 = vld [vmem:[#allocation4 + $0xff0] sm:$0xff]
    %v6406 = vld [vmem:[#allocation4 + $0xff8] sm:$0xff]
    %v6407 = vld [vmem:[#allocation4 + $0x1000] sm:$0xff]
    %v6408 = vld [vmem:[#allocation4 + $0x1008] sm:$0xff]
    %v6409 = vld [vmem:[#allocation4 + $0x1010] sm:$0xff]
    %v6410 = vld [vmem:[#allocation4 + $0x1018] sm:$0xff]
    %v6411 = vld [vmem:[#allocation4 + $0x1020] sm:$0xff]
    %v6412 = vld [vmem:[#allocation4 + $0x1028] sm:$0xff]
    %v6413 = vld [vmem:[#allocation4 + $0x1030] sm:$0xff]
    %v6414 = vld [vmem:[#allocation4 + $0x1038] sm:$0xff]
    %v6415 = vld [vmem:[#allocation4 + $0x1040] sm:$0xff]
    %v6416 = vld [vmem:[#allocation4 + $0x1048] sm:$0xff]
    %v6417 = vld [vmem:[#allocation4 + $0x1050] sm:$0xff]
    %v6418 = vld [vmem:[#allocation4 + $0x1058] sm:$0xff]
    %v6419 = vld [vmem:[#allocation4 + $0x1060] sm:$0xff]
    %v6420 = vld [vmem:[#allocation4 + $0x1068] sm:$0xff]
    %v6421 = vld [vmem:[#allocation4 + $0x1070] sm:$0xff]
    %v6422 = vld [vmem:[#allocation4 + $0x1078] sm:$0xff]
    %v6423 = vld [vmem:[#allocation4 + $0x1080] sm:$0xff]
    %v6424 = vld [vmem:[#allocation4 + $0x1088] sm:$0xff]
    %v6425 = vld [vmem:[#allocation4 + $0x1090] sm:$0xff]
    %v6426 = vld [vmem:[#allocation4 + $0x1098] sm:$0xff]
    %v6427 = vld [vmem:[#allocation4 + $0x10a0] sm:$0xff]
    %v6428 = vld [vmem:[#allocation4 + $0x10a8] sm:$0xff]
    %v6429 = vld [vmem:[#allocation4 + $0x10b0] sm:$0xff]
    %v6430 = vld [vmem:[#allocation4 + $0x10b8] sm:$0xff]
    %v6431 = vld [vmem:[#allocation4 + $0x10c0] sm:$0xff]
    %v6432 = vld [vmem:[#allocation4 + $0x10c8] sm:$0xff]
    %v6433 = vld [vmem:[#allocation4 + $0x10d0] sm:$0xff]
    %v6434 = vld [vmem:[#allocation4 + $0x10d8] sm:$0xff]
    %v6435 = vld [vmem:[#allocation4 + $0x10e0] sm:$0xff]
    %v6436 = vld [vmem:[#allocation4 + $0x10e8] sm:$0xff]
    %v6437 = vld [vmem:[#allocation4 + $0x10f0] sm:$0xff]
    %v6438 = vld [vmem:[#allocation4 + $0x10f8] sm:$0xff]
    %v6439 = vld [vmem:[#allocation4 + $0x1100] sm:$0xff]
    %v6440 = vld [vmem:[#allocation4 + $0x1108] sm:$0xff]
    %v6441 = vld [vmem:[#allocation4 + $0x1110] sm:$0xff]
    %v6442 = vld [vmem:[#allocation4 + $0x1118] sm:$0xff]
    %v6443 = vld [vmem:[#allocation4 + $0x1120] sm:$0xff]
    %v6444 = vld [vmem:[#allocation4 + $0x1128] sm:$0xff]
    %v6445 = vld [vmem:[#allocation4 + $0x1130] sm:$0xff]
    %v6446 = vld [vmem:[#allocation4 + $0x1138] sm:$0xff]
    %v6447 = vld [vmem:[#allocation4 + $0x1140] sm:$0xff]
    %v6448 = vld [vmem:[#allocation4 + $0x1148] sm:$0xff]
    %v6449 = vld [vmem:[#allocation4 + $0x1150] sm:$0xff]
    %v6450 = vld [vmem:[#allocation4 + $0x1158] sm:$0xff]
    %v6451 = vld [vmem:[#allocation4 + $0x1160] sm:$0xff]
    %v6452 = vld [vmem:[#allocation4 + $0x1168] sm:$0xff]
    %v6453 = vld [vmem:[#allocation4 + $0x1170] sm:$0xff]
    %v6454 = vld [vmem:[#allocation4 + $0x1178] sm:$0xff]
    %v6455 = vld [vmem:[#allocation4 + $0x1180] sm:$0xff]
    %v6456 = vld [vmem:[#allocation4 + $0x1188] sm:$0xff]
    %v6457 = vld [vmem:[#allocation4 + $0x1190] sm:$0xff]
    %v6458 = vld [vmem:[#allocation4 + $0x1198] sm:$0xff]
    %v6459 = vld [vmem:[#allocation4 + $0x11a0] sm:$0xff]
    %v6460 = vld [vmem:[#allocation4 + $0x11a8] sm:$0xff]
    %v6461 = vld [vmem:[#allocation4 + $0x11b0] sm:$0xff]
    %v6462 = vld [vmem:[#allocation4 + $0x11b8] sm:$0xff]
    %v6463 = vld [vmem:[#allocation4 + $0x11c0] sm:$0xff]
    %v6464 = vld [vmem:[#allocation4 + $0x11c8] sm:$0xff]
    %v6465 = vld [vmem:[#allocation4 + $0x11d0] sm:$0xff]
    %v6466 = vld [vmem:[#allocation4 + $0x11d8] sm:$0xff]
    %v6467 = vld [vmem:[#allocation4 + $0x11e0] sm:$0xff]
    %v6468 = vld [vmem:[#allocation4 + $0x11e8] sm:$0xff]
    %v6469 = vld [vmem:[#allocation4 + $0x11f0] sm:$0xff]
    %v6470 = vld [vmem:[#allocation4 + $0x11f8] sm:$0xff]
    %v6471 = vld [vmem:[#allocation8] sm:$0xff]
    %v6472 = vld [vmem:[#allocation8 + $0x8] sm:$0xff]
    %v6473 = vld [vmem:[#allocation8 + $0x10] sm:$0xff]
    %v6474 = vld [vmem:[#allocation8 + $0x18] sm:$0xff]
    %v6475 = vld [vmem:[#allocation8 + $0x20] sm:$0xff]
    %v6476 = vld [vmem:[#allocation8 + $0x28] sm:$0xff]
    %v6477 = vld [vmem:[#allocation8 + $0x30] sm:$0xff]
    %v6478 = vld [vmem:[#allocation8 + $0x38] sm:$0xff]
    %v6479 = vld [vmem:[#allocation8 + $0x40] sm:$0xff]
    %v6480 = vld [vmem:[#allocation8 + $0x48] sm:$0xff]
    %v6481 = vld [vmem:[#allocation8 + $0x50] sm:$0xff]
    %v6482 = vld [vmem:[#allocation8 + $0x58] sm:$0xff]
    %v6483 = vld [vmem:[#allocation8 + $0x60] sm:$0xff]
    %v6484 = vld [vmem:[#allocation8 + $0x68] sm:$0xff]
    %v6485 = vld [vmem:[#allocation8 + $0x70] sm:$0xff]
    %v6486 = vld [vmem:[#allocation8 + $0x78] sm:$0xff]
    %v6487 = vld [vmem:[#allocation8 + $0x80] sm:$0xff]
    %v6488 = vld [vmem:[#allocation8 + $0x88] sm:$0xff]
    %v6489 = vld [vmem:[#allocation8 + $0x90] sm:$0xff]
    %v6490 = vld [vmem:[#allocation8 + $0x98] sm:$0xff]
    %v6491 = vld [vmem:[#allocation8 + $0xa0] sm:$0xff]
    %v6492 = vld [vmem:[#allocation8 + $0xa8] sm:$0xff]
    %v6493 = vld [vmem:[#allocation8 + $0xb0] sm:$0xff]
    %v6494 = vld [vmem:[#allocation8 + $0xb8] sm:$0xff]
    %v6495 = vld [vmem:[#allocation8 + $0xc0] sm:$0xff]
    %v6496 = vld [vmem:[#allocation8 + $0xc8] sm:$0xff]
    %v6497 = vld [vmem:[#allocation8 + $0xd0] sm:$0xff]
    %v6498 = vld [vmem:[#allocation8 + $0xd8] sm:$0xff]
    %v6499 = vld [vmem:[#allocation8 + $0xe0] sm:$0xff]
    %v6500 = vld [vmem:[#allocation8 + $0xe8] sm:$0xff]
    %v6501 = vld [vmem:[#allocation8 + $0xf0] sm:$0xff]
    %v6502 = vld [vmem:[#allocation8 + $0xf8] sm:$0xff]
    %v6503 = vld [vmem:[#allocation8 + $0x100] sm:$0xff]
    %v6504 = vld [vmem:[#allocation8 + $0x108] sm:$0xff]
    %v6505 = vld [vmem:[#allocation8 + $0x110] sm:$0xff]
    %v6506 = vld [vmem:[#allocation8 + $0x118] sm:$0xff]
    %v6507 = vld [vmem:[#allocation8 + $0x120] sm:$0xff]
    %v6508 = vld [vmem:[#allocation8 + $0x128] sm:$0xff]
    %v6509 = vld [vmem:[#allocation8 + $0x130] sm:$0xff]
    %v6510 = vld [vmem:[#allocation8 + $0x138] sm:$0xff]
    %v6511 = vld [vmem:[#allocation8 + $0x140] sm:$0xff]
    %v6512 = vld [vmem:[#allocation8 + $0x148] sm:$0xff]
    %v6513 = vld [vmem:[#allocation8 + $0x150] sm:$0xff]
    %v6514 = vld [vmem:[#allocation8 + $0x158] sm:$0xff]
    %v6515 = vld [vmem:[#allocation8 + $0x160] sm:$0xff]
    %v6516 = vld [vmem:[#allocation8 + $0x168] sm:$0xff]
    %v6517 = vld [vmem:[#allocation8 + $0x170] sm:$0xff]
    %v6518 = vld [vmem:[#allocation8 + $0x178] sm:$0xff]
    %v6519 = vld [vmem:[#allocation8 + $0x180] sm:$0xff]
    %v6520 = vld [vmem:[#allocation8 + $0x188] sm:$0xff]
    %v6521 = vld [vmem:[#allocation8 + $0x190] sm:$0xff]
    %v6522 = vld [vmem:[#allocation8 + $0x198] sm:$0xff]
    %v6523 = vld [vmem:[#allocation8 + $0x1a0] sm:$0xff]
    %v6524 = vld [vmem:[#allocation8 + $0x1a8] sm:$0xff]
    %v6525 = vld [vmem:[#allocation8 + $0x1b0] sm:$0xff]
    %v6526 = vld [vmem:[#allocation8 + $0x1b8] sm:$0xff]
    %v6527 = vld [vmem:[#allocation8 + $0x1c0] sm:$0xff]
    %v6528 = vld [vmem:[#allocation8 + $0x1c8] sm:$0xff]
    %v6529 = vld [vmem:[#allocation8 + $0x1d0] sm:$0xff]
    %v6530 = vld [vmem:[#allocation8 + $0x1d8] sm:$0xff]
    %v6531 = vld [vmem:[#allocation8 + $0x1e0] sm:$0xff]
    %v6532 = vld [vmem:[#allocation8 + $0x1e8] sm:$0xff]
    %v6533 = vld [vmem:[#allocation8 + $0x1f0] sm:$0xff]
    %v6534 = vld [vmem:[#allocation8 + $0x1f8] sm:$0xff]
    %v6535 = vld [vmem:[#allocation8 + $0x200] sm:$0xff]
    %v6536 = vld [vmem:[#allocation8 + $0x208] sm:$0xff]
    %v6537 = vld [vmem:[#allocation8 + $0x210] sm:$0xff]
    %v6538 = vld [vmem:[#allocation8 + $0x218] sm:$0xff]
    %v6539 = vld [vmem:[#allocation8 + $0x220] sm:$0xff]
    %v6540 = vld [vmem:[#allocation8 + $0x228] sm:$0xff]
    %v6541 = vld [vmem:[#allocation8 + $0x230] sm:$0xff]
    %v6542 = vld [vmem:[#allocation8 + $0x238] sm:$0xff]
    %v6543 = vld [vmem:[#allocation8 + $0x240] sm:$0xff]
    %v6544 = vld [vmem:[#allocation8 + $0x248] sm:$0xff]
    %v6545 = vld [vmem:[#allocation8 + $0x250] sm:$0xff]
    %v6546 = vld [vmem:[#allocation8 + $0x258] sm:$0xff]
    %v6547 = vld [vmem:[#allocation8 + $0x260] sm:$0xff]
    %v6548 = vld [vmem:[#allocation8 + $0x268] sm:$0xff]
    %v6549 = vld [vmem:[#allocation8 + $0x270] sm:$0xff]
    %v6550 = vld [vmem:[#allocation8 + $0x278] sm:$0xff]
    %v6551 = vld [vmem:[#allocation8 + $0x280] sm:$0xff]
    %v6552 = vld [vmem:[#allocation8 + $0x288] sm:$0xff]
    %v6553 = vld [vmem:[#allocation8 + $0x290] sm:$0xff]
    %v6554 = vld [vmem:[#allocation8 + $0x298] sm:$0xff]
    %v6555 = vld [vmem:[#allocation8 + $0x2a0] sm:$0xff]
    %v6556 = vld [vmem:[#allocation8 + $0x2a8] sm:$0xff]
    %v6557 = vld [vmem:[#allocation8 + $0x2b0] sm:$0xff]
    %v6558 = vld [vmem:[#allocation8 + $0x2b8] sm:$0xff]
    %v6559 = vld [vmem:[#allocation8 + $0x2c0] sm:$0xff]
    %v6560 = vld [vmem:[#allocation8 + $0x2c8] sm:$0xff]
    %v6561 = vld [vmem:[#allocation8 + $0x2d0] sm:$0xff]
    %v6562 = vld [vmem:[#allocation8 + $0x2d8] sm:$0xff]
    %v6563 = vld [vmem:[#allocation8 + $0x2e0] sm:$0xff]
    %v6564 = vld [vmem:[#allocation8 + $0x2e8] sm:$0xff]
    %v6565 = vld [vmem:[#allocation8 + $0x2f0] sm:$0xff]
    %v6566 = vld [vmem:[#allocation8 + $0x2f8] sm:$0xff]
    %v6567 = vld [vmem:[#allocation8 + $0x300] sm:$0xff]
    %v6568 = vld [vmem:[#allocation8 + $0x308] sm:$0xff]
    %v6569 = vld [vmem:[#allocation8 + $0x310] sm:$0xff]
    %v6570 = vld [vmem:[#allocation8 + $0x318] sm:$0xff]
    %v6571 = vld [vmem:[#allocation8 + $0x320] sm:$0xff]
    %v6572 = vld [vmem:[#allocation8 + $0x328] sm:$0xff]
    %v6573 = vld [vmem:[#allocation8 + $0x330] sm:$0xff]
    %v6574 = vld [vmem:[#allocation8 + $0x338] sm:$0xff]
    %v6575 = vld [vmem:[#allocation8 + $0x340] sm:$0xff]
    %v6576 = vld [vmem:[#allocation8 + $0x348] sm:$0xff]
    %v6577 = vld [vmem:[#allocation8 + $0x350] sm:$0xff]
    %v6578 = vld [vmem:[#allocation8 + $0x358] sm:$0xff]
    %v6579 = vld [vmem:[#allocation8 + $0x360] sm:$0xff]
    %v6580 = vld [vmem:[#allocation8 + $0x368] sm:$0xff]
    %v6581 = vld [vmem:[#allocation8 + $0x370] sm:$0xff]
    %v6582 = vld [vmem:[#allocation8 + $0x378] sm:$0xff]
    %v6583 = vld [vmem:[#allocation8 + $0x380] sm:$0xff]
    %v6584 = vld [vmem:[#allocation8 + $0x388] sm:$0xff]
    %v6585 = vld [vmem:[#allocation8 + $0x390] sm:$0xff]
    %v6586 = vld [vmem:[#allocation8 + $0x398] sm:$0xff]
    %v6587 = vld [vmem:[#allocation8 + $0x3a0] sm:$0xff]
    %v6588 = vld [vmem:[#allocation8 + $0x3a8] sm:$0xff]
    %v6589 = vld [vmem:[#allocation8 + $0x3b0] sm:$0xff]
    %v6590 = vld [vmem:[#allocation8 + $0x3b8] sm:$0xff]
    %v6591 = vld [vmem:[#allocation8 + $0x3c0] sm:$0xff]
    %v6592 = vld [vmem:[#allocation8 + $0x3c8] sm:$0xff]
    %v6593 = vld [vmem:[#allocation8 + $0x3d0] sm:$0xff]
    %v6594 = vld [vmem:[#allocation8 + $0x3d8] sm:$0xff]
    %v6595 = vld [vmem:[#allocation8 + $0x3e0] sm:$0xff]
    %v6596 = vld [vmem:[#allocation8 + $0x3e8] sm:$0xff]
    %v6597 = vld [vmem:[#allocation8 + $0x3f0] sm:$0xff]
    %v6598 = vld [vmem:[#allocation8 + $0x3f8] sm:$0xff]
    %v6599 = vld [vmem:[#allocation8 + $0x400] sm:$0xff]
    %v6600 = vld [vmem:[#allocation8 + $0x408] sm:$0xff]
    %v6601 = vld [vmem:[#allocation8 + $0x410] sm:$0xff]
    %v6602 = vld [vmem:[#allocation8 + $0x418] sm:$0xff]
    %v6603 = vld [vmem:[#allocation8 + $0x420] sm:$0xff]
    %v6604 = vld [vmem:[#allocation8 + $0x428] sm:$0xff]
    %v6605 = vld [vmem:[#allocation8 + $0x430] sm:$0xff]
    %v6606 = vld [vmem:[#allocation8 + $0x438] sm:$0xff]
    %v6607 = vld [vmem:[#allocation8 + $0x440] sm:$0xff]
    %v6608 = vld [vmem:[#allocation8 + $0x448] sm:$0xff]
    %v6609 = vld [vmem:[#allocation8 + $0x450] sm:$0xff]
    %v6610 = vld [vmem:[#allocation8 + $0x458] sm:$0xff]
    %v6611 = vld [vmem:[#allocation8 + $0x460] sm:$0xff]
    %v6612 = vld [vmem:[#allocation8 + $0x468] sm:$0xff]
    %v6613 = vld [vmem:[#allocation8 + $0x470] sm:$0xff]
    %v6614 = vld [vmem:[#allocation8 + $0x478] sm:$0xff]
    %6615 = vmatprep.subr.mxu0 0.0
    %6616 = vmatpush1.msra.mxu0 %v6486
    %6617 = vmatprep.subr.mxu0 0.0
    %6618 = vmatpush1.msra.mxu0 %v6485
    %6619 = vmatprep.subr.mxu0 0.0
    %6620 = vmatpush1.msra.mxu0 %v6484
    %6621 = vmatprep.subr.mxu0 0.0
    %6622 = vmatpush1.msra.mxu0 %v6483
    %6623 = vmatprep.subr.mxu0 0.0
    %6624 = vmatpush1.msra.mxu0 %v6482
    %6625 = vmatprep.subr.mxu0 0.0
    %6626 = vmatpush1.msra.mxu0 %v6481
    %6627 = vmatprep.subr.mxu0 0.0
    %6628 = vmatpush1.msra.mxu0 %v6480
    %6629 = vmatprep.subr.mxu0 0.0
    %6630 = vmatpush1.msra.mxu0 %v6479
    %6631 = vmatprep.subr.mxu0 0.0
    %6632 = vmatpush1.msra.mxu0 %v6478
    %6633 = vmatprep.subr.mxu0 0.0
    %6634 = vmatpush1.msra.mxu0 %v6477
    %6635 = vmatprep.subr.mxu0 0.0
    %6636 = vmatpush1.msra.mxu0 %v6476
    %6637 = vmatprep.subr.mxu0 0.0
    %6638 = vmatpush1.msra.mxu0 %v6475
    %6639 = vmatprep.subr.mxu0 0.0
    %6640 = vmatpush1.msra.mxu0 %v6474
    %6641 = vmatprep.subr.mxu0 0.0
    %6642 = vmatpush1.msra.mxu0 %v6473
    %6643 = vmatprep.subr.mxu0 0.0
    %6644 = vmatpush1.msra.mxu0 %v6472
    %6645 = vmatprep.subr.mxu0 0.0
    %6646 = vmatpush1.msra.mxu0 %v6471
    %6647 = vmatprep.subr.mxu0 0.0
    %6648 = vmatpush2.msra.mxu0 %v6502
    %6649 = vmatprep.subr.mxu0 0.0
    %6650 = vmatpush2.msra.mxu0 %v6501
    %6651 = vmatprep.subr.mxu0 0.0
    %6652 = vmatpush2.msra.mxu0 %v6500
    %6653 = vmatprep.subr.mxu0 0.0
    %6654 = vmatpush2.msra.mxu0 %v6499
    %6655 = vmatprep.subr.mxu0 0.0
    %6656 = vmatpush2.msra.mxu0 %v6498
    %6657 = vmatprep.subr.mxu0 0.0
    %6658 = vmatpush2.msra.mxu0 %v6497
    %6659 = vmatprep.subr.mxu0 0.0
    %6660 = vmatpush2.msra.mxu0 %v6496
    %6661 = vmatprep.subr.mxu0 0.0
    %6662 = vmatpush2.msra.mxu0 %v6495
    %6663 = vmatprep.subr.mxu0 0.0
    %6664 = vmatpush2.msra.mxu0 %v6494
    %6665 = vmatprep.subr.mxu0 0.0
    %6666 = vmatpush2.msra.mxu0 %v6493
    %6667 = vmatprep.subr.mxu0 0.0
    %6668 = vmatpush2.msra.mxu0 %v6492
    %6669 = vmatprep.subr.mxu0 0.0
    %6670 = vmatpush2.msra.mxu0 %v6491
    %6671 = vmatprep.subr.mxu0 0.0
    %6672 = vmatpush2.msra.mxu0 %v6490
    %6673 = vmatprep.subr.mxu0 0.0
    %6674 = vmatpush2.msra.mxu0 %v6489
    %6675 = vmatprep.subr.mxu0 0.0
    %6676 = vmatpush2.msra.mxu0 %v6488
    %6677 = vmatprep.subr.mxu0 0.0
    %6678 = vmatpush2.msra.mxu0 %v6487
    %6679 = vmatprep.mubr.f32.mxu0 %v5896
    %6680 = vmatmul.mubr.f32.gmra.mxu0 %v5895
    %v6681 = vpop.f32.mrf.mxu0
    %v6682 = vadd.f32 0.0, %v6681
    %v6683 = vpop.f32.mrf.mxu0
    %6684 = vmatprep.mubr.f32.mxu0 %v5905
    %6685 = vmatmul.mubr.f32.gmra.mxu0 %v5904
    %v6686 = vpop.f32.mrf.mxu0
    %v6687 = vadd.f32 0.0, %v6686
    %v6688 = vpop.f32.mrf.mxu0
    %6689 = vmatprep.mubr.f32.mxu0 %v5914
    %6690 = vmatmul.mubr.f32.gmra.mxu0 %v5913
    %v6691 = vpop.f32.mrf.mxu0
    %v6692 = vadd.f32 0.0, %v6691
    %v6693 = vpop.f32.mrf.mxu0
    %6694 = vmatprep.mubr.f32.mxu0 %v5923
    %6695 = vmatmul.mubr.f32.gmra.mxu0 %v5922
    %v6696 = vpop.f32.mrf.mxu0
    %v6697 = vadd.f32 0.0, %v6696
    %v6698 = vpop.f32.mrf.mxu0
    %6699 = vmatprep.mubr.f32.mxu0 %v5932
    %6700 = vmatmul.mubr.f32.gmra.mxu0 %v5931
    %v6701 = vpop.f32.mrf.mxu0
    %v6702 = vadd.f32 0.0, %v6701
    %v6703 = vpop.f32.mrf.mxu0
    %6704 = vmatprep.mubr.f32.mxu0 %v5941
    %6705 = vmatmul.mubr.f32.gmra.mxu0 %v5940
    %v6706 = vpop.f32.mrf.mxu0
    %v6707 = vadd.f32 0.0, %v6706
    %v6708 = vpop.f32.mrf.mxu0
    %6709 = vmatprep.mubr.f32.mxu0 %v5950
    %6710 = vmatmul.mubr.f32.gmra.mxu0 %v5949
    %v6711 = vpop.f32.mrf.mxu0
    %v6712 = vadd.f32 0.0, %v6711
    %v6713 = vpop.f32.mrf.mxu0
    %6714 = vmatprep.mubr.f32.mxu0 %v5959
    %6715 = vmatmul.mubr.f32.gmra.mxu0 %v5958
    %v6716 = vpop.f32.mrf.mxu0
    %v6717 = vadd.f32 0.0, %v6716
    %v6718 = vpop.f32.mrf.mxu0
    %6719 = vmatprep.mubr.f32.mxu0 %v5968
    %6720 = vmatmul.mubr.f32.gmra.mxu0 %v5967
    %v6721 = vpop.f32.mrf.mxu0
    %v6722 = vadd.f32 0.0, %v6721
    %v6723 = vpop.f32.mrf.mxu0
    %6724 = vmatprep.mubr.f32.mxu0 %v5977
    %6725 = vmatmul.mubr.f32.gmra.mxu0 %v5976
    %v6726 = vpop.f32.mrf.mxu0
    %v6727 = vadd.f32 0.0, %v6726
    %v6728 = vpop.f32.mrf.mxu0
    %6729 = vmatprep.mubr.f32.mxu0 %v5986
    %6730 = vmatmul.mubr.f32.gmra.mxu0 %v5985
    %v6731 = vpop.f32.mrf.mxu0
    %v6732 = vadd.f32 0.0, %v6731
    %v6733 = vpop.f32.mrf.mxu0
    %6734 = vmatprep.mubr.f32.mxu0 %v5995
    %6735 = vmatmul.mubr.f32.gmra.mxu0 %v5994
    %v6736 = vpop.f32.mrf.mxu0
    %v6737 = vadd.f32 0.0, %v6736
    %v6738 = vpop.f32.mrf.mxu0
    %6739 = vmatprep.mubr.f32.mxu0 %v6004
    %6740 = vmatmul.mubr.f32.gmra.mxu0 %v6003
    %v6741 = vpop.f32.mrf.mxu0
    %v6742 = vadd.f32 0.0, %v6741
    %v6743 = vpop.f32.mrf.mxu0
    %6744 = vmatprep.mubr.f32.mxu0 %v6013
    %6745 = vmatmul.mubr.f32.gmra.mxu0 %v6012
    %v6746 = vpop.f32.mrf.mxu0
    %v6747 = vadd.f32 0.0, %v6746
    %v6748 = vpop.f32.mrf.mxu0
    %6749 = vmatprep.mubr.f32.mxu0 %v6022
    %6750 = vmatmul.mubr.f32.gmra.mxu0 %v6021
    %v6751 = vpop.f32.mrf.mxu0
    %v6752 = vadd.f32 0.0, %v6751
    %v6753 = vpop.f32.mrf.mxu0
    %6754 = vmatprep.mubr.f32.mxu0 %v6031
    %6755 = vmatmul.mubr.f32.gmra.mxu0 %v6030
    %v6756 = vpop.f32.mrf.mxu0
    %v6757 = vadd.f32 0.0, %v6756
    %v6758 = vpop.f32.mrf.mxu0
    %6759 = vmatprep.mubr.f32.mxu0 %v6040
    %6760 = vmatmul.mubr.f32.gmra.mxu0 %v6039
    %v6761 = vpop.f32.mrf.mxu0
    %v6762 = vadd.f32 0.0, %v6761
    %v6763 = vpop.f32.mrf.mxu0
    %6764 = vmatprep.mubr.f32.mxu0 %v6049
    %6765 = vmatmul.mubr.f32.gmra.mxu0 %v6048
    %v6766 = vpop.f32.mrf.mxu0
    %v6767 = vadd.f32 0.0, %v6766
    %v6768 = vpop.f32.mrf.mxu0
    %6769 = vmatprep.mubr.f32.mxu0 %v6058
    %6770 = vmatmul.mubr.f32.gmra.mxu0 %v6057
    %v6771 = vpop.f32.mrf.mxu0
    %v6772 = vadd.f32 0.0, %v6771
    %v6773 = vpop.f32.mrf.mxu0
    %6774 = vmatprep.mubr.f32.mxu0 %v6067
    %6775 = vmatmul.mubr.f32.gmra.mxu0 %v6066
    %v6776 = vpop.f32.mrf.mxu0
    %v6777 = vadd.f32 0.0, %v6776
    %v6778 = vpop.f32.mrf.mxu0
    %6779 = vmatprep.mubr.f32.mxu0 %v6076
    %6780 = vmatmul.mubr.f32.gmra.mxu0 %v6075
    %v6781 = vpop.f32.mrf.mxu0
    %v6782 = vadd.f32 0.0, %v6781
    %v6783 = vpop.f32.mrf.mxu0
    %6784 = vmatprep.mubr.f32.mxu0 %v6085
    %6785 = vmatmul.mubr.f32.gmra.mxu0 %v6084
    %v6786 = vpop.f32.mrf.mxu0
    %v6787 = vadd.f32 0.0, %v6786
    %v6788 = vpop.f32.mrf.mxu0
    %6789 = vmatprep.mubr.f32.mxu0 %v6094
    %6790 = vmatmul.mubr.f32.gmra.mxu0 %v6093
    %v6791 = vpop.f32.mrf.mxu0
    %v6792 = vadd.f32 0.0, %v6791
    %v6793 = vpop.f32.mrf.mxu0
    %6794 = vmatprep.mubr.f32.mxu0 %v6103
    %6795 = vmatmul.mubr.f32.gmra.mxu0 %v6102
    %v6796 = vpop.f32.mrf.mxu0
    %v6797 = vadd.f32 0.0, %v6796
    %v6798 = vpop.f32.mrf.mxu0
    %6799 = vmatprep.mubr.f32.mxu0 %v6112
    %6800 = vmatmul.mubr.f32.gmra.mxu0 %v6111
    %v6801 = vpop.f32.mrf.mxu0
    %v6802 = vadd.f32 0.0, %v6801
    %v6803 = vpop.f32.mrf.mxu0
    %6804 = vmatprep.mubr.f32.mxu0 %v6121
    %6805 = vmatmul.mubr.f32.gmra.mxu0 %v6120
    %v6806 = vpop.f32.mrf.mxu0
    %v6807 = vadd.f32 0.0, %v6806
    %v6808 = vpop.f32.mrf.mxu0
    %6809 = vmatprep.mubr.f32.mxu0 %v6130
    %6810 = vmatmul.mubr.f32.gmra.mxu0 %v6129
    %v6811 = vpop.f32.mrf.mxu0
    %v6812 = vadd.f32 0.0, %v6811
    %v6813 = vpop.f32.mrf.mxu0
    %6814 = vmatprep.mubr.f32.mxu0 %v6139
    %6815 = vmatmul.mubr.f32.gmra.mxu0 %v6138
    %v6816 = vpop.f32.mrf.mxu0
    %v6817 = vadd.f32 0.0, %v6816
    %v6818 = vpop.f32.mrf.mxu0
    %6819 = vmatprep.mubr.f32.mxu0 %v6148
    %6820 = vmatmul.mubr.f32.gmra.mxu0 %v6147
    %v6821 = vpop.f32.mrf.mxu0
    %v6822 = vadd.f32 0.0, %v6821
    %v6823 = vpop.f32.mrf.mxu0
    %6824 = vmatprep.mubr.f32.mxu0 %v6157
    %6825 = vmatmul.mubr.f32.gmra.mxu0 %v6156
    %v6826 = vpop.f32.mrf.mxu0
    %v6827 = vadd.f32 0.0, %v6826
    %v6828 = vpop.f32.mrf.mxu0
    %6829 = vmatprep.mubr.f32.mxu0 %v6166
    %6830 = vmatmul.mubr.f32.gmra.mxu0 %v6165
    %v6831 = vpop.f32.mrf.mxu0
    %v6832 = vadd.f32 0.0, %v6831
    %v6833 = vpop.f32.mrf.mxu0
    %6834 = vmatprep.mubr.f32.mxu0 %v6175
    %6835 = vmatmul.mubr.f32.gmra.mxu0 %v6174
    %v6836 = vpop.f32.mrf.mxu0
    %v6837 = vadd.f32 0.0, %v6836
    %v6838 = vpop.f32.mrf.mxu0
    %6839 = vmatprep.mubr.f32.mxu0 %v6184
    %6840 = vmatmul.mubr.f32.gmra.mxu0 %v6183
    %v6841 = vpop.f32.mrf.mxu0
    %v6842 = vadd.f32 0.0, %v6841
    %v6843 = vpop.f32.mrf.mxu0
    %6844 = vmatprep.mubr.f32.mxu0 %v6193
    %6845 = vmatmul.mubr.f32.gmra.mxu0 %v6192
    %v6846 = vpop.f32.mrf.mxu0
    %v6847 = vadd.f32 0.0, %v6846
    %v6848 = vpop.f32.mrf.mxu0
    %6849 = vmatprep.mubr.f32.mxu0 %v6202
    %6850 = vmatmul.mubr.f32.gmra.mxu0 %v6201
    %v6851 = vpop.f32.mrf.mxu0
    %v6852 = vadd.f32 0.0, %v6851
    %v6853 = vpop.f32.mrf.mxu0
    %6854 = vmatprep.mubr.f32.mxu0 %v6211
    %6855 = vmatmul.mubr.f32.gmra.mxu0 %v6210
    %v6856 = vpop.f32.mrf.mxu0
    %v6857 = vadd.f32 0.0, %v6856
    %v6858 = vpop.f32.mrf.mxu0
    %6859 = vmatprep.mubr.f32.mxu0 %v6220
    %6860 = vmatmul.mubr.f32.gmra.mxu0 %v6219
    %v6861 = vpop.f32.mrf.mxu0
    %v6862 = vadd.f32 0.0, %v6861
    %v6863 = vpop.f32.mrf.mxu0
    %6864 = vmatprep.mubr.f32.mxu0 %v6229
    %6865 = vmatmul.mubr.f32.gmra.mxu0 %v6228
    %v6866 = vpop.f32.mrf.mxu0
    %v6867 = vadd.f32 0.0, %v6866
    %v6868 = vpop.f32.mrf.mxu0
    %6869 = vmatprep.mubr.f32.mxu0 %v6238
    %6870 = vmatmul.mubr.f32.gmra.mxu0 %v6237
    %v6871 = vpop.f32.mrf.mxu0
    %v6872 = vadd.f32 0.0, %v6871
    %v6873 = vpop.f32.mrf.mxu0
    %6874 = vmatprep.mubr.f32.mxu0 %v6247
    %6875 = vmatmul.mubr.f32.gmra.mxu0 %v6246
    %v6876 = vpop.f32.mrf.mxu0
    %v6877 = vadd.f32 0.0, %v6876
    %v6878 = vpop.f32.mrf.mxu0
    %6879 = vmatprep.mubr.f32.mxu0 %v6256
    %6880 = vmatmul.mubr.f32.gmra.mxu0 %v6255
    %v6881 = vpop.f32.mrf.mxu0
    %v6882 = vadd.f32 0.0, %v6881
    %v6883 = vpop.f32.mrf.mxu0
    %6884 = vmatprep.mubr.f32.mxu0 %v6265
    %6885 = vmatmul.mubr.f32.gmra.mxu0 %v6264
    %v6886 = vpop.f32.mrf.mxu0
    %v6887 = vadd.f32 0.0, %v6886
    %v6888 = vpop.f32.mrf.mxu0
    %6889 = vmatprep.mubr.f32.mxu0 %v6274
    %6890 = vmatmul.mubr.f32.gmra.mxu0 %v6273
    %v6891 = vpop.f32.mrf.mxu0
    %v6892 = vadd.f32 0.0, %v6891
    %v6893 = vpop.f32.mrf.mxu0
    %6894 = vmatprep.mubr.f32.mxu0 %v6283
    %6895 = vmatmul.mubr.f32.gmra.mxu0 %v6282
    %v6896 = vpop.f32.mrf.mxu0
    %v6897 = vadd.f32 0.0, %v6896
    %v6898 = vpop.f32.mrf.mxu0
    %6899 = vmatprep.mubr.f32.mxu0 %v6292
    %6900 = vmatmul.mubr.f32.gmra.mxu0 %v6291
    %v6901 = vpop.f32.mrf.mxu0
    %v6902 = vadd.f32 0.0, %v6901
    %v6903 = vpop.f32.mrf.mxu0
    %6904 = vmatprep.mubr.f32.mxu0 %v6301
    %6905 = vmatmul.mubr.f32.gmra.mxu0 %v6300
    %v6906 = vpop.f32.mrf.mxu0
    %v6907 = vadd.f32 0.0, %v6906
    %v6908 = vpop.f32.mrf.mxu0
    %6909 = vmatprep.mubr.f32.mxu0 %v6310
    %6910 = vmatmul.mubr.f32.gmra.mxu0 %v6309
    %v6911 = vpop.f32.mrf.mxu0
    %v6912 = vadd.f32 0.0, %v6911
    %v6913 = vpop.f32.mrf.mxu0
    %6914 = vmatprep.mubr.f32.mxu0 %v6319
    %6915 = vmatmul.mubr.f32.gmra.mxu0 %v6318
    %v6916 = vpop.f32.mrf.mxu0
    %v6917 = vadd.f32 0.0, %v6916
    %v6918 = vpop.f32.mrf.mxu0
    %6919 = vmatprep.mubr.f32.mxu0 %v6328
    %6920 = vmatmul.mubr.f32.gmra.mxu0 %v6327
    %v6921 = vpop.f32.mrf.mxu0
    %v6922 = vadd.f32 0.0, %v6921
    %v6923 = vpop.f32.mrf.mxu0
    %6924 = vmatprep.mubr.f32.mxu0 %v6337
    %6925 = vmatmul.mubr.f32.gmra.mxu0 %v6336
    %v6926 = vpop.f32.mrf.mxu0
    %v6927 = vadd.f32 0.0, %v6926
    %v6928 = vpop.f32.mrf.mxu0
    %6929 = vmatprep.mubr.f32.mxu0 %v6346
    %6930 = vmatmul.mubr.f32.gmra.mxu0 %v6345
    %v6931 = vpop.f32.mrf.mxu0
    %v6932 = vadd.f32 0.0, %v6931
    %v6933 = vpop.f32.mrf.mxu0
    %6934 = vmatprep.mubr.f32.mxu0 %v6355
    %6935 = vmatmul.mubr.f32.gmra.mxu0 %v6354
    %v6936 = vpop.f32.mrf.mxu0
    %v6937 = vadd.f32 0.0, %v6936
    %v6938 = vpop.f32.mrf.mxu0
    %6939 = vmatprep.mubr.f32.mxu0 %v6364
    %6940 = vmatmul.mubr.f32.gmra.mxu0 %v6363
    %v6941 = vpop.f32.mrf.mxu0
    %v6942 = vadd.f32 0.0, %v6941
    %v6943 = vpop.f32.mrf.mxu0
    %6944 = vmatprep.mubr.f32.mxu0 %v6373
    %6945 = vmatmul.mubr.f32.gmra.mxu0 %v6372
    %v6946 = vpop.f32.mrf.mxu0
    %v6947 = vadd.f32 0.0, %v6946
    %v6948 = vpop.f32.mrf.mxu0
    %6949 = vmatprep.mubr.f32.mxu0 %v6382
    %6950 = vmatmul.mubr.f32.gmra.mxu0 %v6381
    %v6951 = vpop.f32.mrf.mxu0
    %v6952 = vadd.f32 0.0, %v6951
    %v6953 = vpop.f32.mrf.mxu0
    %6954 = vmatprep.mubr.f32.mxu0 %v6391
    %6955 = vmatmul.mubr.f32.gmra.mxu0 %v6390
    %v6956 = vpop.f32.mrf.mxu0
    %v6957 = vadd.f32 0.0, %v6956
    %v6958 = vpop.f32.mrf.mxu0
    %6959 = vmatprep.mubr.f32.mxu0 %v6400
    %6960 = vmatmul.mubr.f32.gmra.mxu0 %v6399
    %v6961 = vpop.f32.mrf.mxu0
    %v6962 = vadd.f32 0.0, %v6961
    %v6963 = vpop.f32.mrf.mxu0
    %6964 = vmatprep.mubr.f32.mxu0 %v6409
    %6965 = vmatmul.mubr.f32.gmra.mxu0 %v6408
    %v6966 = vpop.f32.mrf.mxu0
    %v6967 = vadd.f32 0.0, %v6966
    %v6968 = vpop.f32.mrf.mxu0
    %6969 = vmatprep.mubr.f32.mxu0 %v6418
    %6970 = vmatmul.mubr.f32.gmra.mxu0 %v6417
    %v6971 = vpop.f32.mrf.mxu0
    %v6972 = vadd.f32 0.0, %v6971
    %v6973 = vpop.f32.mrf.mxu0
    %6974 = vmatprep.mubr.f32.mxu0 %v6427
    %6975 = vmatmul.mubr.f32.gmra.mxu0 %v6426
    %v6976 = vpop.f32.mrf.mxu0
    %v6977 = vadd.f32 0.0, %v6976
    %v6978 = vpop.f32.mrf.mxu0
    %6979 = vmatprep.mubr.f32.mxu0 %v6436
    %6980 = vmatmul.mubr.f32.gmra.mxu0 %v6435
    %v6981 = vpop.f32.mrf.mxu0
    %v6982 = vadd.f32 0.0, %v6981
    %v6983 = vpop.f32.mrf.mxu0
    %6984 = vmatprep.mubr.f32.mxu0 %v6445
    %6985 = vmatmul.mubr.f32.gmra.mxu0 %v6444
    %v6986 = vpop.f32.mrf.mxu0
    %v6987 = vadd.f32 0.0, %v6986
    %v6988 = vpop.f32.mrf.mxu0
    %6989 = vmatprep.mubr.f32.mxu0 %v6454
    %6990 = vmatmul.mubr.f32.gmra.mxu0 %v6453
    %v6991 = vpop.f32.mrf.mxu0
    %v6992 = vadd.f32 0.0, %v6991
    %v6993 = vpop.f32.mrf.mxu0
    %6994 = vmatprep.mubr.f32.mxu0 %v6463
    %6995 = vmatmul.mubr.f32.gmra.mxu0 %v6462
    %v6996 = vpop.f32.mrf.mxu0
    %v6997 = vadd.f32 0.0, %v6996
    %v6998 = vpop.f32.mrf.mxu0
    %6999 = vdwg.mxu0
    %7000 = vmatprep.subr.mxu0 0.0
    %7001 = vmatpush1.msra.mxu0 %v6518
    %7002 = vmatprep.subr.mxu0 0.0
    %7003 = vmatpush1.msra.mxu0 %v6517
    %7004 = vmatprep.subr.mxu0 0.0
    %7005 = vmatpush1.msra.mxu0 %v6516
    %7006 = vmatprep.subr.mxu0 0.0
    %7007 = vmatpush1.msra.mxu0 %v6515
    %7008 = vmatprep.subr.mxu0 0.0
    %7009 = vmatpush1.msra.mxu0 %v6514
    %7010 = vmatprep.subr.mxu0 0.0
    %7011 = vmatpush1.msra.mxu0 %v6513
    %7012 = vmatprep.subr.mxu0 0.0
    %7013 = vmatpush1.msra.mxu0 %v6512
    %7014 = vmatprep.subr.mxu0 0.0
    %7015 = vmatpush1.msra.mxu0 %v6511
    %7016 = vmatprep.subr.mxu0 0.0
    %7017 = vmatpush1.msra.mxu0 %v6510
    %7018 = vmatprep.subr.mxu0 0.0
    %7019 = vmatpush1.msra.mxu0 %v6509
    %7020 = vmatprep.subr.mxu0 0.0
    %7021 = vmatpush1.msra.mxu0 %v6508
    %7022 = vmatprep.subr.mxu0 0.0
    %7023 = vmatpush1.msra.mxu0 %v6507
    %7024 = vmatprep.subr.mxu0 0.0
    %7025 = vmatpush1.msra.mxu0 %v6506
    %7026 = vmatprep.subr.mxu0 0.0
    %7027 = vmatpush1.msra.mxu0 %v6505
    %7028 = vmatprep.subr.mxu0 0.0
    %7029 = vmatpush1.msra.mxu0 %v6504
    %7030 = vmatprep.subr.mxu0 0.0
    %7031 = vmatpush1.msra.mxu0 %v6503
    %7032 = vmatprep.subr.mxu0 0.0
    %7033 = vmatpush2.msra.mxu0 %v6534
    %7034 = vmatprep.subr.mxu0 0.0
    %7035 = vmatpush2.msra.mxu0 %v6533
    %7036 = vmatprep.subr.mxu0 0.0
    %7037 = vmatpush2.msra.mxu0 %v6532
    %7038 = vmatprep.subr.mxu0 0.0
    %7039 = vmatpush2.msra.mxu0 %v6531
    %7040 = vmatprep.subr.mxu0 0.0
    %7041 = vmatpush2.msra.mxu0 %v6530
    %7042 = vmatprep.subr.mxu0 0.0
    %7043 = vmatpush2.msra.mxu0 %v6529
    %7044 = vmatprep.subr.mxu0 0.0
    %7045 = vmatpush2.msra.mxu0 %v6528
    %7046 = vmatprep.subr.mxu0 0.0
    %7047 = vmatpush2.msra.mxu0 %v6527
    %7048 = vmatprep.subr.mxu0 0.0
    %7049 = vmatpush2.msra.mxu0 %v6526
    %7050 = vmatprep.subr.mxu0 0.0
    %7051 = vmatpush2.msra.mxu0 %v6525
    %7052 = vmatprep.subr.mxu0 0.0
    %7053 = vmatpush2.msra.mxu0 %v6524
    %7054 = vmatprep.subr.mxu0 0.0
    %7055 = vmatpush2.msra.mxu0 %v6523
    %7056 = vmatprep.subr.mxu0 0.0
    %7057 = vmatpush2.msra.mxu0 %v6522
    %7058 = vmatprep.subr.mxu0 0.0
    %7059 = vmatpush2.msra.mxu0 %v6521
    %7060 = vmatprep.subr.mxu0 0.0
    %7061 = vmatpush2.msra.mxu0 %v6520
    %7062 = vmatprep.subr.mxu0 0.0
    %7063 = vmatpush2.msra.mxu0 %v6519
    %7064 = vmatprep.mubr.f32.mxu0 %v5898
    %7065 = vmatmul.mubr.f32.gmra.mxu0 %v5897
    %v7066 = vpop.f32.mrf.mxu0
    %v7067 = vadd.f32 %v6682, %v7066
    %v7068 = vpop.f32.mrf.mxu0
    %7069 = vmatprep.mubr.f32.mxu0 %v5907
    %7070 = vmatmul.mubr.f32.gmra.mxu0 %v5906
    %v7071 = vpop.f32.mrf.mxu0
    %v7072 = vadd.f32 %v6687, %v7071
    %v7073 = vpop.f32.mrf.mxu0
    %7074 = vmatprep.mubr.f32.mxu0 %v5916
    %7075 = vmatmul.mubr.f32.gmra.mxu0 %v5915
    %v7076 = vpop.f32.mrf.mxu0
    %v7077 = vadd.f32 %v6692, %v7076
    %v7078 = vpop.f32.mrf.mxu0
    %7079 = vmatprep.mubr.f32.mxu0 %v5925
    %7080 = vmatmul.mubr.f32.gmra.mxu0 %v5924
    %v7081 = vpop.f32.mrf.mxu0
    %v7082 = vadd.f32 %v6697, %v7081
    %v7083 = vpop.f32.mrf.mxu0
    %7084 = vmatprep.mubr.f32.mxu0 %v5934
    %7085 = vmatmul.mubr.f32.gmra.mxu0 %v5933
    %v7086 = vpop.f32.mrf.mxu0
    %v7087 = vadd.f32 %v6702, %v7086
    %v7088 = vpop.f32.mrf.mxu0
    %7089 = vmatprep.mubr.f32.mxu0 %v5943
    %7090 = vmatmul.mubr.f32.gmra.mxu0 %v5942
    %v7091 = vpop.f32.mrf.mxu0
    %v7092 = vadd.f32 %v6707, %v7091
    %v7093 = vpop.f32.mrf.mxu0
    %7094 = vmatprep.mubr.f32.mxu0 %v5952
    %7095 = vmatmul.mubr.f32.gmra.mxu0 %v5951
    %v7096 = vpop.f32.mrf.mxu0
    %v7097 = vadd.f32 %v6712, %v7096
    %v7098 = vpop.f32.mrf.mxu0
    %7099 = vmatprep.mubr.f32.mxu0 %v5961
    %7100 = vmatmul.mubr.f32.gmra.mxu0 %v5960
    %v7101 = vpop.f32.mrf.mxu0
    %v7102 = vadd.f32 %v6717, %v7101
    %v7103 = vpop.f32.mrf.mxu0
    %7104 = vmatprep.mubr.f32.mxu0 %v5970
    %7105 = vmatmul.mubr.f32.gmra.mxu0 %v5969
    %v7106 = vpop.f32.mrf.mxu0
    %v7107 = vadd.f32 %v6722, %v7106
    %v7108 = vpop.f32.mrf.mxu0
    %7109 = vmatprep.mubr.f32.mxu0 %v5979
    %7110 = vmatmul.mubr.f32.gmra.mxu0 %v5978
    %v7111 = vpop.f32.mrf.mxu0
    %v7112 = vadd.f32 %v6727, %v7111
    %v7113 = vpop.f32.mrf.mxu0
    %7114 = vmatprep.mubr.f32.mxu0 %v5988
    %7115 = vmatmul.mubr.f32.gmra.mxu0 %v5987
    %v7116 = vpop.f32.mrf.mxu0
    %v7117 = vadd.f32 %v6732, %v7116
    %v7118 = vpop.f32.mrf.mxu0
    %7119 = vmatprep.mubr.f32.mxu0 %v5997
    %7120 = vmatmul.mubr.f32.gmra.mxu0 %v5996
    %v7121 = vpop.f32.mrf.mxu0
    %v7122 = vadd.f32 %v6737, %v7121
    %v7123 = vpop.f32.mrf.mxu0
    %7124 = vmatprep.mubr.f32.mxu0 %v6006
    %7125 = vmatmul.mubr.f32.gmra.mxu0 %v6005
    %v7126 = vpop.f32.mrf.mxu0
    %v7127 = vadd.f32 %v6742, %v7126
    %v7128 = vpop.f32.mrf.mxu0
    %7129 = vmatprep.mubr.f32.mxu0 %v6015
    %7130 = vmatmul.mubr.f32.gmra.mxu0 %v6014
    %v7131 = vpop.f32.mrf.mxu0
    %v7132 = vadd.f32 %v6747, %v7131
    %v7133 = vpop.f32.mrf.mxu0
    %7134 = vmatprep.mubr.f32.mxu0 %v6024
    %7135 = vmatmul.mubr.f32.gmra.mxu0 %v6023
    %v7136 = vpop.f32.mrf.mxu0
    %v7137 = vadd.f32 %v6752, %v7136
    %v7138 = vpop.f32.mrf.mxu0
    %7139 = vmatprep.mubr.f32.mxu0 %v6033
    %7140 = vmatmul.mubr.f32.gmra.mxu0 %v6032
    %v7141 = vpop.f32.mrf.mxu0
    %v7142 = vadd.f32 %v6757, %v7141
    %v7143 = vpop.f32.mrf.mxu0
    %7144 = vmatprep.mubr.f32.mxu0 %v6042
    %7145 = vmatmul.mubr.f32.gmra.mxu0 %v6041
    %v7146 = vpop.f32.mrf.mxu0
    %v7147 = vadd.f32 %v6762, %v7146
    %v7148 = vpop.f32.mrf.mxu0
    %7149 = vmatprep.mubr.f32.mxu0 %v6051
    %7150 = vmatmul.mubr.f32.gmra.mxu0 %v6050
    %v7151 = vpop.f32.mrf.mxu0
    %v7152 = vadd.f32 %v6767, %v7151
    %v7153 = vpop.f32.mrf.mxu0
    %7154 = vmatprep.mubr.f32.mxu0 %v6060
    %7155 = vmatmul.mubr.f32.gmra.mxu0 %v6059
    %v7156 = vpop.f32.mrf.mxu0
    %v7157 = vadd.f32 %v6772, %v7156
    %v7158 = vpop.f32.mrf.mxu0
    %7159 = vmatprep.mubr.f32.mxu0 %v6069
    %7160 = vmatmul.mubr.f32.gmra.mxu0 %v6068
    %v7161 = vpop.f32.mrf.mxu0
    %v7162 = vadd.f32 %v6777, %v7161
    %v7163 = vpop.f32.mrf.mxu0
    %7164 = vmatprep.mubr.f32.mxu0 %v6078
    %7165 = vmatmul.mubr.f32.gmra.mxu0 %v6077
    %v7166 = vpop.f32.mrf.mxu0
    %v7167 = vadd.f32 %v6782, %v7166
    %v7168 = vpop.f32.mrf.mxu0
    %7169 = vmatprep.mubr.f32.mxu0 %v6087
    %7170 = vmatmul.mubr.f32.gmra.mxu0 %v6086
    %v7171 = vpop.f32.mrf.mxu0
    %v7172 = vadd.f32 %v6787, %v7171
    %v7173 = vpop.f32.mrf.mxu0
    %7174 = vmatprep.mubr.f32.mxu0 %v6096
    %7175 = vmatmul.mubr.f32.gmra.mxu0 %v6095
    %v7176 = vpop.f32.mrf.mxu0
    %v7177 = vadd.f32 %v6792, %v7176
    %v7178 = vpop.f32.mrf.mxu0
    %7179 = vmatprep.mubr.f32.mxu0 %v6105
    %7180 = vmatmul.mubr.f32.gmra.mxu0 %v6104
    %v7181 = vpop.f32.mrf.mxu0
    %v7182 = vadd.f32 %v6797, %v7181
    %v7183 = vpop.f32.mrf.mxu0
    %7184 = vmatprep.mubr.f32.mxu0 %v6114
    %7185 = vmatmul.mubr.f32.gmra.mxu0 %v6113
    %v7186 = vpop.f32.mrf.mxu0
    %v7187 = vadd.f32 %v6802, %v7186
    %v7188 = vpop.f32.mrf.mxu0
    %7189 = vmatprep.mubr.f32.mxu0 %v6123
    %7190 = vmatmul.mubr.f32.gmra.mxu0 %v6122
    %v7191 = vpop.f32.mrf.mxu0
    %v7192 = vadd.f32 %v6807, %v7191
    %v7193 = vpop.f32.mrf.mxu0
    %7194 = vmatprep.mubr.f32.mxu0 %v6132
    %7195 = vmatmul.mubr.f32.gmra.mxu0 %v6131
    %v7196 = vpop.f32.mrf.mxu0
    %v7197 = vadd.f32 %v6812, %v7196
    %v7198 = vpop.f32.mrf.mxu0
    %7199 = vmatprep.mubr.f32.mxu0 %v6141
    %7200 = vmatmul.mubr.f32.gmra.mxu0 %v6140
    %v7201 = vpop.f32.mrf.mxu0
    %v7202 = vadd.f32 %v6817, %v7201
    %v7203 = vpop.f32.mrf.mxu0
    %7204 = vmatprep.mubr.f32.mxu0 %v6150
    %7205 = vmatmul.mubr.f32.gmra.mxu0 %v6149
    %v7206 = vpop.f32.mrf.mxu0
    %v7207 = vadd.f32 %v6822, %v7206
    %v7208 = vpop.f32.mrf.mxu0
    %7209 = vmatprep.mubr.f32.mxu0 %v6159
    %7210 = vmatmul.mubr.f32.gmra.mxu0 %v6158
    %v7211 = vpop.f32.mrf.mxu0
    %v7212 = vadd.f32 %v6827, %v7211
    %v7213 = vpop.f32.mrf.mxu0
    %7214 = vmatprep.mubr.f32.mxu0 %v6168
    %7215 = vmatmul.mubr.f32.gmra.mxu0 %v6167
    %v7216 = vpop.f32.mrf.mxu0
    %v7217 = vadd.f32 %v6832, %v7216
    %v7218 = vpop.f32.mrf.mxu0
    %7219 = vmatprep.mubr.f32.mxu0 %v6177
    %7220 = vmatmul.mubr.f32.gmra.mxu0 %v6176
    %v7221 = vpop.f32.mrf.mxu0
    %v7222 = vadd.f32 %v6837, %v7221
    %v7223 = vpop.f32.mrf.mxu0
    %7224 = vmatprep.mubr.f32.mxu0 %v6186
    %7225 = vmatmul.mubr.f32.gmra.mxu0 %v6185
    %v7226 = vpop.f32.mrf.mxu0
    %v7227 = vadd.f32 %v6842, %v7226
    %v7228 = vpop.f32.mrf.mxu0
    %7229 = vmatprep.mubr.f32.mxu0 %v6195
    %7230 = vmatmul.mubr.f32.gmra.mxu0 %v6194
    %v7231 = vpop.f32.mrf.mxu0
    %v7232 = vadd.f32 %v6847, %v7231
    %v7233 = vpop.f32.mrf.mxu0
    %7234 = vmatprep.mubr.f32.mxu0 %v6204
    %7235 = vmatmul.mubr.f32.gmra.mxu0 %v6203
    %v7236 = vpop.f32.mrf.mxu0
    %v7237 = vadd.f32 %v6852, %v7236
    %v7238 = vpop.f32.mrf.mxu0
    %7239 = vmatprep.mubr.f32.mxu0 %v6213
    %7240 = vmatmul.mubr.f32.gmra.mxu0 %v6212
    %v7241 = vpop.f32.mrf.mxu0
    %v7242 = vadd.f32 %v6857, %v7241
    %v7243 = vpop.f32.mrf.mxu0
    %7244 = vmatprep.mubr.f32.mxu0 %v6222
    %7245 = vmatmul.mubr.f32.gmra.mxu0 %v6221
    %v7246 = vpop.f32.mrf.mxu0
    %v7247 = vadd.f32 %v6862, %v7246
    %v7248 = vpop.f32.mrf.mxu0
    %7249 = vmatprep.mubr.f32.mxu0 %v6231
    %7250 = vmatmul.mubr.f32.gmra.mxu0 %v6230
    %v7251 = vpop.f32.mrf.mxu0
    %v7252 = vadd.f32 %v6867, %v7251
    %v7253 = vpop.f32.mrf.mxu0
    %7254 = vmatprep.mubr.f32.mxu0 %v6240
    %7255 = vmatmul.mubr.f32.gmra.mxu0 %v6239
    %v7256 = vpop.f32.mrf.mxu0
    %v7257 = vadd.f32 %v6872, %v7256
    %v7258 = vpop.f32.mrf.mxu0
    %7259 = vmatprep.mubr.f32.mxu0 %v6249
    %7260 = vmatmul.mubr.f32.gmra.mxu0 %v6248
    %v7261 = vpop.f32.mrf.mxu0
    %v7262 = vadd.f32 %v6877, %v7261
    %v7263 = vpop.f32.mrf.mxu0
    %7264 = vmatprep.mubr.f32.mxu0 %v6258
    %7265 = vmatmul.mubr.f32.gmra.mxu0 %v6257
    %v7266 = vpop.f32.mrf.mxu0
    %v7267 = vadd.f32 %v6882, %v7266
    %v7268 = vpop.f32.mrf.mxu0
    %7269 = vmatprep.mubr.f32.mxu0 %v6267
    %7270 = vmatmul.mubr.f32.gmra.mxu0 %v6266
    %v7271 = vpop.f32.mrf.mxu0
    %v7272 = vadd.f32 %v6887, %v7271
    %v7273 = vpop.f32.mrf.mxu0
    %7274 = vmatprep.mubr.f32.mxu0 %v6276
    %7275 = vmatmul.mubr.f32.gmra.mxu0 %v6275
    %v7276 = vpop.f32.mrf.mxu0
    %v7277 = vadd.f32 %v6892, %v7276
    %v7278 = vpop.f32.mrf.mxu0
    %7279 = vmatprep.mubr.f32.mxu0 %v6285
    %7280 = vmatmul.mubr.f32.gmra.mxu0 %v6284
    %v7281 = vpop.f32.mrf.mxu0
    %v7282 = vadd.f32 %v6897, %v7281
    %v7283 = vpop.f32.mrf.mxu0
    %7284 = vmatprep.mubr.f32.mxu0 %v6294
    %7285 = vmatmul.mubr.f32.gmra.mxu0 %v6293
    %v7286 = vpop.f32.mrf.mxu0
    %v7287 = vadd.f32 %v6902, %v7286
    %v7288 = vpop.f32.mrf.mxu0
    %7289 = vmatprep.mubr.f32.mxu0 %v6303
    %7290 = vmatmul.mubr.f32.gmra.mxu0 %v6302
    %v7291 = vpop.f32.mrf.mxu0
    %v7292 = vadd.f32 %v6907, %v7291
    %v7293 = vpop.f32.mrf.mxu0
    %7294 = vmatprep.mubr.f32.mxu0 %v6312
    %7295 = vmatmul.mubr.f32.gmra.mxu0 %v6311
    %v7296 = vpop.f32.mrf.mxu0
    %v7297 = vadd.f32 %v6912, %v7296
    %v7298 = vpop.f32.mrf.mxu0
    %7299 = vmatprep.mubr.f32.mxu0 %v6321
    %7300 = vmatmul.mubr.f32.gmra.mxu0 %v6320
    %v7301 = vpop.f32.mrf.mxu0
    %v7302 = vadd.f32 %v6917, %v7301
    %v7303 = vpop.f32.mrf.mxu0
    %7304 = vmatprep.mubr.f32.mxu0 %v6330
    %7305 = vmatmul.mubr.f32.gmra.mxu0 %v6329
    %v7306 = vpop.f32.mrf.mxu0
    %v7307 = vadd.f32 %v6922, %v7306
    %v7308 = vpop.f32.mrf.mxu0
    %7309 = vmatprep.mubr.f32.mxu0 %v6339
    %7310 = vmatmul.mubr.f32.gmra.mxu0 %v6338
    %v7311 = vpop.f32.mrf.mxu0
    %v7312 = vadd.f32 %v6927, %v7311
    %v7313 = vpop.f32.mrf.mxu0
    %7314 = vmatprep.mubr.f32.mxu0 %v6348
    %7315 = vmatmul.mubr.f32.gmra.mxu0 %v6347
    %v7316 = vpop.f32.mrf.mxu0
    %v7317 = vadd.f32 %v6932, %v7316
    %v7318 = vpop.f32.mrf.mxu0
    %7319 = vmatprep.mubr.f32.mxu0 %v6357
    %7320 = vmatmul.mubr.f32.gmra.mxu0 %v6356
    %v7321 = vpop.f32.mrf.mxu0
    %v7322 = vadd.f32 %v6937, %v7321
    %v7323 = vpop.f32.mrf.mxu0
    %7324 = vmatprep.mubr.f32.mxu0 %v6366
    %7325 = vmatmul.mubr.f32.gmra.mxu0 %v6365
    %v7326 = vpop.f32.mrf.mxu0
    %v7327 = vadd.f32 %v6942, %v7326
    %v7328 = vpop.f32.mrf.mxu0
    %7329 = vmatprep.mubr.f32.mxu0 %v6375
    %7330 = vmatmul.mubr.f32.gmra.mxu0 %v6374
    %v7331 = vpop.f32.mrf.mxu0
    %v7332 = vadd.f32 %v6947, %v7331
    %v7333 = vpop.f32.mrf.mxu0
    %7334 = vmatprep.mubr.f32.mxu0 %v6384
    %7335 = vmatmul.mubr.f32.gmra.mxu0 %v6383
    %v7336 = vpop.f32.mrf.mxu0
    %v7337 = vadd.f32 %v6952, %v7336
    %v7338 = vpop.f32.mrf.mxu0
    %7339 = vmatprep.mubr.f32.mxu0 %v6393
    %7340 = vmatmul.mubr.f32.gmra.mxu0 %v6392
    %v7341 = vpop.f32.mrf.mxu0
    %v7342 = vadd.f32 %v6957, %v7341
    %v7343 = vpop.f32.mrf.mxu0
    %7344 = vmatprep.mubr.f32.mxu0 %v6402
    %7345 = vmatmul.mubr.f32.gmra.mxu0 %v6401
    %v7346 = vpop.f32.mrf.mxu0
    %v7347 = vadd.f32 %v6962, %v7346
    %v7348 = vpop.f32.mrf.mxu0
    %7349 = vmatprep.mubr.f32.mxu0 %v6411
    %7350 = vmatmul.mubr.f32.gmra.mxu0 %v6410
    %v7351 = vpop.f32.mrf.mxu0
    %v7352 = vadd.f32 %v6967, %v7351
    %v7353 = vpop.f32.mrf.mxu0
    %7354 = vmatprep.mubr.f32.mxu0 %v6420
    %7355 = vmatmul.mubr.f32.gmra.mxu0 %v6419
    %v7356 = vpop.f32.mrf.mxu0
    %v7357 = vadd.f32 %v6972, %v7356
    %v7358 = vpop.f32.mrf.mxu0
    %7359 = vmatprep.mubr.f32.mxu0 %v6429
    %7360 = vmatmul.mubr.f32.gmra.mxu0 %v6428
    %v7361 = vpop.f32.mrf.mxu0
    %v7362 = vadd.f32 %v6977, %v7361
    %v7363 = vpop.f32.mrf.mxu0
    %7364 = vmatprep.mubr.f32.mxu0 %v6438
    %7365 = vmatmul.mubr.f32.gmra.mxu0 %v6437
    %v7366 = vpop.f32.mrf.mxu0
    %v7367 = vadd.f32 %v6982, %v7366
    %v7368 = vpop.f32.mrf.mxu0
    %7369 = vmatprep.mubr.f32.mxu0 %v6447
    %7370 = vmatmul.mubr.f32.gmra.mxu0 %v6446
    %v7371 = vpop.f32.mrf.mxu0
    %v7372 = vadd.f32 %v6987, %v7371
    %v7373 = vpop.f32.mrf.mxu0
    %7374 = vmatprep.mubr.f32.mxu0 %v6456
    %7375 = vmatmul.mubr.f32.gmra.mxu0 %v6455
    %v7376 = vpop.f32.mrf.mxu0
    %v7377 = vadd.f32 %v6992, %v7376
    %v7378 = vpop.f32.mrf.mxu0
    %7379 = vmatprep.mubr.f32.mxu0 %v6465
    %7380 = vmatmul.mubr.f32.gmra.mxu0 %v6464
    %v7381 = vpop.f32.mrf.mxu0
    %v7382 = vadd.f32 %v6997, %v7381
    %v7383 = vpop.f32.mrf.mxu0
    %7384 = vdwg.mxu0
    %7385 = vmatprep.subr.mxu0 0.0
    %7386 = vmatpush1.msra.mxu0 %v6550
    %7387 = vmatprep.subr.mxu0 0.0
    %7388 = vmatpush1.msra.mxu0 %v6549
    %7389 = vmatprep.subr.mxu0 0.0
    %7390 = vmatpush1.msra.mxu0 %v6548
    %7391 = vmatprep.subr.mxu0 0.0
    %7392 = vmatpush1.msra.mxu0 %v6547
    %7393 = vmatprep.subr.mxu0 0.0
    %7394 = vmatpush1.msra.mxu0 %v6546
    %7395 = vmatprep.subr.mxu0 0.0
    %7396 = vmatpush1.msra.mxu0 %v6545
    %7397 = vmatprep.subr.mxu0 0.0
    %7398 = vmatpush1.msra.mxu0 %v6544
    %7399 = vmatprep.subr.mxu0 0.0
    %7400 = vmatpush1.msra.mxu0 %v6543
    %7401 = vmatprep.subr.mxu0 0.0
    %7402 = vmatpush1.msra.mxu0 %v6542
    %7403 = vmatprep.subr.mxu0 0.0
    %7404 = vmatpush1.msra.mxu0 %v6541
    %7405 = vmatprep.subr.mxu0 0.0
    %7406 = vmatpush1.msra.mxu0 %v6540
    %7407 = vmatprep.subr.mxu0 0.0
    %7408 = vmatpush1.msra.mxu0 %v6539
    %7409 = vmatprep.subr.mxu0 0.0
    %7410 = vmatpush1.msra.mxu0 %v6538
    %7411 = vmatprep.subr.mxu0 0.0
    %7412 = vmatpush1.msra.mxu0 %v6537
    %7413 = vmatprep.subr.mxu0 0.0
    %7414 = vmatpush1.msra.mxu0 %v6536
    %7415 = vmatprep.subr.mxu0 0.0
    %7416 = vmatpush1.msra.mxu0 %v6535
    %7417 = vmatprep.subr.mxu0 0.0
    %7418 = vmatpush2.msra.mxu0 %v6566
    %7419 = vmatprep.subr.mxu0 0.0
    %7420 = vmatpush2.msra.mxu0 %v6565
    %7421 = vmatprep.subr.mxu0 0.0
    %7422 = vmatpush2.msra.mxu0 %v6564
    %7423 = vmatprep.subr.mxu0 0.0
    %7424 = vmatpush2.msra.mxu0 %v6563
    %7425 = vmatprep.subr.mxu0 0.0
    %7426 = vmatpush2.msra.mxu0 %v6562
    %7427 = vmatprep.subr.mxu0 0.0
    %7428 = vmatpush2.msra.mxu0 %v6561
    %7429 = vmatprep.subr.mxu0 0.0
    %7430 = vmatpush2.msra.mxu0 %v6560
    %7431 = vmatprep.subr.mxu0 0.0
    %7432 = vmatpush2.msra.mxu0 %v6559
    %7433 = vmatprep.subr.mxu0 0.0
    %7434 = vmatpush2.msra.mxu0 %v6558
    %7435 = vmatprep.subr.mxu0 0.0
    %7436 = vmatpush2.msra.mxu0 %v6557
    %7437 = vmatprep.subr.mxu0 0.0
    %7438 = vmatpush2.msra.mxu0 %v6556
    %7439 = vmatprep.subr.mxu0 0.0
    %7440 = vmatpush2.msra.mxu0 %v6555
    %7441 = vmatprep.subr.mxu0 0.0
    %7442 = vmatpush2.msra.mxu0 %v6554
    %7443 = vmatprep.subr.mxu0 0.0
    %7444 = vmatpush2.msra.mxu0 %v6553
    %7445 = vmatprep.subr.mxu0 0.0
    %7446 = vmatpush2.msra.mxu0 %v6552
    %7447 = vmatprep.subr.mxu0 0.0
    %7448 = vmatpush2.msra.mxu0 %v6551
    %7449 = vmatprep.mubr.f32.mxu0 %v5900
    %7450 = vmatmul.mubr.f32.gmra.mxu0 %v5899
    %v7451 = vpop.f32.mrf.mxu0
    %v7452 = vadd.f32 %v7067, %v7451
    %v7453 = vpop.f32.mrf.mxu0
    %7454 = vmatprep.mubr.f32.mxu0 %v5909
    %7455 = vmatmul.mubr.f32.gmra.mxu0 %v5908
    %v7456 = vpop.f32.mrf.mxu0
    %v7457 = vadd.f32 %v7072, %v7456
    %v7458 = vpop.f32.mrf.mxu0
    %7459 = vmatprep.mubr.f32.mxu0 %v5918
    %7460 = vmatmul.mubr.f32.gmra.mxu0 %v5917
    %v7461 = vpop.f32.mrf.mxu0
    %v7462 = vadd.f32 %v7077, %v7461
    %v7463 = vpop.f32.mrf.mxu0
    %7464 = vmatprep.mubr.f32.mxu0 %v5927
    %7465 = vmatmul.mubr.f32.gmra.mxu0 %v5926
    %v7466 = vpop.f32.mrf.mxu0
    %v7467 = vadd.f32 %v7082, %v7466
    %v7468 = vpop.f32.mrf.mxu0
    %7469 = vmatprep.mubr.f32.mxu0 %v5936
    %7470 = vmatmul.mubr.f32.gmra.mxu0 %v5935
    %v7471 = vpop.f32.mrf.mxu0
    %v7472 = vadd.f32 %v7087, %v7471
    %v7473 = vpop.f32.mrf.mxu0
    %7474 = vmatprep.mubr.f32.mxu0 %v5945
    %7475 = vmatmul.mubr.f32.gmra.mxu0 %v5944
    %v7476 = vpop.f32.mrf.mxu0
    %v7477 = vadd.f32 %v7092, %v7476
    %v7478 = vpop.f32.mrf.mxu0
    %7479 = vmatprep.mubr.f32.mxu0 %v5954
    %7480 = vmatmul.mubr.f32.gmra.mxu0 %v5953
    %v7481 = vpop.f32.mrf.mxu0
    %v7482 = vadd.f32 %v7097, %v7481
    %v7483 = vpop.f32.mrf.mxu0
    %7484 = vmatprep.mubr.f32.mxu0 %v5963
    %7485 = vmatmul.mubr.f32.gmra.mxu0 %v5962
    %v7486 = vpop.f32.mrf.mxu0
    %v7487 = vadd.f32 %v7102, %v7486
    %v7488 = vpop.f32.mrf.mxu0
    %7489 = vmatprep.mubr.f32.mxu0 %v5972
    %7490 = vmatmul.mubr.f32.gmra.mxu0 %v5971
    %v7491 = vpop.f32.mrf.mxu0
    %v7492 = vadd.f32 %v7107, %v7491
    %v7493 = vpop.f32.mrf.mxu0
    %7494 = vmatprep.mubr.f32.mxu0 %v5981
    %7495 = vmatmul.mubr.f32.gmra.mxu0 %v5980
    %v7496 = vpop.f32.mrf.mxu0
    %v7497 = vadd.f32 %v7112, %v7496
    %v7498 = vpop.f32.mrf.mxu0
    %7499 = vmatprep.mubr.f32.mxu0 %v5990
    %7500 = vmatmul.mubr.f32.gmra.mxu0 %v5989
    %v7501 = vpop.f32.mrf.mxu0
    %v7502 = vadd.f32 %v7117, %v7501
    %v7503 = vpop.f32.mrf.mxu0
    %7504 = vmatprep.mubr.f32.mxu0 %v5999
    %7505 = vmatmul.mubr.f32.gmra.mxu0 %v5998
    %v7506 = vpop.f32.mrf.mxu0
    %v7507 = vadd.f32 %v7122, %v7506
    %v7508 = vpop.f32.mrf.mxu0
    %7509 = vmatprep.mubr.f32.mxu0 %v6008
    %7510 = vmatmul.mubr.f32.gmra.mxu0 %v6007
    %v7511 = vpop.f32.mrf.mxu0
    %v7512 = vadd.f32 %v7127, %v7511
    %v7513 = vpop.f32.mrf.mxu0
    %7514 = vmatprep.mubr.f32.mxu0 %v6017
    %7515 = vmatmul.mubr.f32.gmra.mxu0 %v6016
    %v7516 = vpop.f32.mrf.mxu0
    %v7517 = vadd.f32 %v7132, %v7516
    %v7518 = vpop.f32.mrf.mxu0
    %7519 = vmatprep.mubr.f32.mxu0 %v6026
    %7520 = vmatmul.mubr.f32.gmra.mxu0 %v6025
    %v7521 = vpop.f32.mrf.mxu0
    %v7522 = vadd.f32 %v7137, %v7521
    %v7523 = vpop.f32.mrf.mxu0
    %7524 = vmatprep.mubr.f32.mxu0 %v6035
    %7525 = vmatmul.mubr.f32.gmra.mxu0 %v6034
    %v7526 = vpop.f32.mrf.mxu0
    %v7527 = vadd.f32 %v7142, %v7526
    %v7528 = vpop.f32.mrf.mxu0
    %7529 = vmatprep.mubr.f32.mxu0 %v6044
    %7530 = vmatmul.mubr.f32.gmra.mxu0 %v6043
    %v7531 = vpop.f32.mrf.mxu0
    %v7532 = vadd.f32 %v7147, %v7531
    %v7533 = vpop.f32.mrf.mxu0
    %7534 = vmatprep.mubr.f32.mxu0 %v6053
    %7535 = vmatmul.mubr.f32.gmra.mxu0 %v6052
    %v7536 = vpop.f32.mrf.mxu0
    %v7537 = vadd.f32 %v7152, %v7536
    %v7538 = vpop.f32.mrf.mxu0
    %7539 = vmatprep.mubr.f32.mxu0 %v6062
    %7540 = vmatmul.mubr.f32.gmra.mxu0 %v6061
    %v7541 = vpop.f32.mrf.mxu0
    %v7542 = vadd.f32 %v7157, %v7541
    %v7543 = vpop.f32.mrf.mxu0
    %7544 = vmatprep.mubr.f32.mxu0 %v6071
    %7545 = vmatmul.mubr.f32.gmra.mxu0 %v6070
    %v7546 = vpop.f32.mrf.mxu0
    %v7547 = vadd.f32 %v7162, %v7546
    %v7548 = vpop.f32.mrf.mxu0
    %7549 = vmatprep.mubr.f32.mxu0 %v6080
    %7550 = vmatmul.mubr.f32.gmra.mxu0 %v6079
    %v7551 = vpop.f32.mrf.mxu0
    %v7552 = vadd.f32 %v7167, %v7551
    %v7553 = vpop.f32.mrf.mxu0
    %7554 = vmatprep.mubr.f32.mxu0 %v6089
    %7555 = vmatmul.mubr.f32.gmra.mxu0 %v6088
    %v7556 = vpop.f32.mrf.mxu0
    %v7557 = vadd.f32 %v7172, %v7556
    %v7558 = vpop.f32.mrf.mxu0
    %7559 = vmatprep.mubr.f32.mxu0 %v6098
    %7560 = vmatmul.mubr.f32.gmra.mxu0 %v6097
    %v7561 = vpop.f32.mrf.mxu0
    %v7562 = vadd.f32 %v7177, %v7561
    %v7563 = vpop.f32.mrf.mxu0
    %7564 = vmatprep.mubr.f32.mxu0 %v6107
    %7565 = vmatmul.mubr.f32.gmra.mxu0 %v6106
    %v7566 = vpop.f32.mrf.mxu0
    %v7567 = vadd.f32 %v7182, %v7566
    %v7568 = vpop.f32.mrf.mxu0
    %7569 = vmatprep.mubr.f32.mxu0 %v6116
    %7570 = vmatmul.mubr.f32.gmra.mxu0 %v6115
    %v7571 = vpop.f32.mrf.mxu0
    %v7572 = vadd.f32 %v7187, %v7571
    %v7573 = vpop.f32.mrf.mxu0
    %7574 = vmatprep.mubr.f32.mxu0 %v6125
    %7575 = vmatmul.mubr.f32.gmra.mxu0 %v6124
    %v7576 = vpop.f32.mrf.mxu0
    %v7577 = vadd.f32 %v7192, %v7576
    %v7578 = vpop.f32.mrf.mxu0
    %7579 = vmatprep.mubr.f32.mxu0 %v6134
    %7580 = vmatmul.mubr.f32.gmra.mxu0 %v6133
    %v7581 = vpop.f32.mrf.mxu0
    %v7582 = vadd.f32 %v7197, %v7581
    %v7583 = vpop.f32.mrf.mxu0
    %7584 = vmatprep.mubr.f32.mxu0 %v6143
    %7585 = vmatmul.mubr.f32.gmra.mxu0 %v6142
    %v7586 = vpop.f32.mrf.mxu0
    %v7587 = vadd.f32 %v7202, %v7586
    %v7588 = vpop.f32.mrf.mxu0
    %7589 = vmatprep.mubr.f32.mxu0 %v6152
    %7590 = vmatmul.mubr.f32.gmra.mxu0 %v6151
    %v7591 = vpop.f32.mrf.mxu0
    %v7592 = vadd.f32 %v7207, %v7591
    %v7593 = vpop.f32.mrf.mxu0
    %7594 = vmatprep.mubr.f32.mxu0 %v6161
    %7595 = vmatmul.mubr.f32.gmra.mxu0 %v6160
    %v7596 = vpop.f32.mrf.mxu0
    %v7597 = vadd.f32 %v7212, %v7596
    %v7598 = vpop.f32.mrf.mxu0
    %7599 = vmatprep.mubr.f32.mxu0 %v6170
    %7600 = vmatmul.mubr.f32.gmra.mxu0 %v6169
    %v7601 = vpop.f32.mrf.mxu0
    %v7602 = vadd.f32 %v7217, %v7601
    %v7603 = vpop.f32.mrf.mxu0
    %7604 = vmatprep.mubr.f32.mxu0 %v6179
    %7605 = vmatmul.mubr.f32.gmra.mxu0 %v6178
    %v7606 = vpop.f32.mrf.mxu0
    %v7607 = vadd.f32 %v7222, %v7606
    %v7608 = vpop.f32.mrf.mxu0
    %7609 = vmatprep.mubr.f32.mxu0 %v6188
    %7610 = vmatmul.mubr.f32.gmra.mxu0 %v6187
    %v7611 = vpop.f32.mrf.mxu0
    %v7612 = vadd.f32 %v7227, %v7611
    %v7613 = vpop.f32.mrf.mxu0
    %7614 = vmatprep.mubr.f32.mxu0 %v6197
    %7615 = vmatmul.mubr.f32.gmra.mxu0 %v6196
    %v7616 = vpop.f32.mrf.mxu0
    %v7617 = vadd.f32 %v7232, %v7616
    %v7618 = vpop.f32.mrf.mxu0
    %7619 = vmatprep.mubr.f32.mxu0 %v6206
    %7620 = vmatmul.mubr.f32.gmra.mxu0 %v6205
    %v7621 = vpop.f32.mrf.mxu0
    %v7622 = vadd.f32 %v7237, %v7621
    %v7623 = vpop.f32.mrf.mxu0
    %7624 = vmatprep.mubr.f32.mxu0 %v6215
    %7625 = vmatmul.mubr.f32.gmra.mxu0 %v6214
    %v7626 = vpop.f32.mrf.mxu0
    %v7627 = vadd.f32 %v7242, %v7626
    %v7628 = vpop.f32.mrf.mxu0
    %7629 = vmatprep.mubr.f32.mxu0 %v6224
    %7630 = vmatmul.mubr.f32.gmra.mxu0 %v6223
    %v7631 = vpop.f32.mrf.mxu0
    %v7632 = vadd.f32 %v7247, %v7631
    %v7633 = vpop.f32.mrf.mxu0
    %7634 = vmatprep.mubr.f32.mxu0 %v6233
    %7635 = vmatmul.mubr.f32.gmra.mxu0 %v6232
    %v7636 = vpop.f32.mrf.mxu0
    %v7637 = vadd.f32 %v7252, %v7636
    %v7638 = vpop.f32.mrf.mxu0
    %7639 = vmatprep.mubr.f32.mxu0 %v6242
    %7640 = vmatmul.mubr.f32.gmra.mxu0 %v6241
    %v7641 = vpop.f32.mrf.mxu0
    %v7642 = vadd.f32 %v7257, %v7641
    %v7643 = vpop.f32.mrf.mxu0
    %7644 = vmatprep.mubr.f32.mxu0 %v6251
    %7645 = vmatmul.mubr.f32.gmra.mxu0 %v6250
    %v7646 = vpop.f32.mrf.mxu0
    %v7647 = vadd.f32 %v7262, %v7646
    %v7648 = vpop.f32.mrf.mxu0
    %7649 = vmatprep.mubr.f32.mxu0 %v6260
    %7650 = vmatmul.mubr.f32.gmra.mxu0 %v6259
    %v7651 = vpop.f32.mrf.mxu0
    %v7652 = vadd.f32 %v7267, %v7651
    %v7653 = vpop.f32.mrf.mxu0
    %7654 = vmatprep.mubr.f32.mxu0 %v6269
    %7655 = vmatmul.mubr.f32.gmra.mxu0 %v6268
    %v7656 = vpop.f32.mrf.mxu0
    %v7657 = vadd.f32 %v7272, %v7656
    %v7658 = vpop.f32.mrf.mxu0
    %7659 = vmatprep.mubr.f32.mxu0 %v6278
    %7660 = vmatmul.mubr.f32.gmra.mxu0 %v6277
    %v7661 = vpop.f32.mrf.mxu0
    %v7662 = vadd.f32 %v7277, %v7661
    %v7663 = vpop.f32.mrf.mxu0
    %7664 = vmatprep.mubr.f32.mxu0 %v6287
    %7665 = vmatmul.mubr.f32.gmra.mxu0 %v6286
    %v7666 = vpop.f32.mrf.mxu0
    %v7667 = vadd.f32 %v7282, %v7666
    %v7668 = vpop.f32.mrf.mxu0
    %7669 = vmatprep.mubr.f32.mxu0 %v6296
    %7670 = vmatmul.mubr.f32.gmra.mxu0 %v6295
    %v7671 = vpop.f32.mrf.mxu0
    %v7672 = vadd.f32 %v7287, %v7671
    %v7673 = vpop.f32.mrf.mxu0
    %7674 = vmatprep.mubr.f32.mxu0 %v6305
    %7675 = vmatmul.mubr.f32.gmra.mxu0 %v6304
    %v7676 = vpop.f32.mrf.mxu0
    %v7677 = vadd.f32 %v7292, %v7676
    %v7678 = vpop.f32.mrf.mxu0
    %7679 = vmatprep.mubr.f32.mxu0 %v6314
    %7680 = vmatmul.mubr.f32.gmra.mxu0 %v6313
    %v7681 = vpop.f32.mrf.mxu0
    %v7682 = vadd.f32 %v7297, %v7681
    %v7683 = vpop.f32.mrf.mxu0
    %7684 = vmatprep.mubr.f32.mxu0 %v6323
    %7685 = vmatmul.mubr.f32.gmra.mxu0 %v6322
    %v7686 = vpop.f32.mrf.mxu0
    %v7687 = vadd.f32 %v7302, %v7686
    %v7688 = vpop.f32.mrf.mxu0
    %7689 = vmatprep.mubr.f32.mxu0 %v6332
    %7690 = vmatmul.mubr.f32.gmra.mxu0 %v6331
    %v7691 = vpop.f32.mrf.mxu0
    %v7692 = vadd.f32 %v7307, %v7691
    %v7693 = vpop.f32.mrf.mxu0
    %7694 = vmatprep.mubr.f32.mxu0 %v6341
    %7695 = vmatmul.mubr.f32.gmra.mxu0 %v6340
    %v7696 = vpop.f32.mrf.mxu0
    %v7697 = vadd.f32 %v7312, %v7696
    %v7698 = vpop.f32.mrf.mxu0
    %7699 = vmatprep.mubr.f32.mxu0 %v6350
    %7700 = vmatmul.mubr.f32.gmra.mxu0 %v6349
    %v7701 = vpop.f32.mrf.mxu0
    %v7702 = vadd.f32 %v7317, %v7701
    %v7703 = vpop.f32.mrf.mxu0
    %7704 = vmatprep.mubr.f32.mxu0 %v6359
    %7705 = vmatmul.mubr.f32.gmra.mxu0 %v6358
    %v7706 = vpop.f32.mrf.mxu0
    %v7707 = vadd.f32 %v7322, %v7706
    %v7708 = vpop.f32.mrf.mxu0
    %7709 = vmatprep.mubr.f32.mxu0 %v6368
    %7710 = vmatmul.mubr.f32.gmra.mxu0 %v6367
    %v7711 = vpop.f32.mrf.mxu0
    %v7712 = vadd.f32 %v7327, %v7711
    %v7713 = vpop.f32.mrf.mxu0
    %7714 = vmatprep.mubr.f32.mxu0 %v6377
    %7715 = vmatmul.mubr.f32.gmra.mxu0 %v6376
    %v7716 = vpop.f32.mrf.mxu0
    %v7717 = vadd.f32 %v7332, %v7716
    %v7718 = vpop.f32.mrf.mxu0
    %7719 = vmatprep.mubr.f32.mxu0 %v6386
    %7720 = vmatmul.mubr.f32.gmra.mxu0 %v6385
    %v7721 = vpop.f32.mrf.mxu0
    %v7722 = vadd.f32 %v7337, %v7721
    %v7723 = vpop.f32.mrf.mxu0
    %7724 = vmatprep.mubr.f32.mxu0 %v6395
    %7725 = vmatmul.mubr.f32.gmra.mxu0 %v6394
    %v7726 = vpop.f32.mrf.mxu0
    %v7727 = vadd.f32 %v7342, %v7726
    %v7728 = vpop.f32.mrf.mxu0
    %7729 = vmatprep.mubr.f32.mxu0 %v6404
    %7730 = vmatmul.mubr.f32.gmra.mxu0 %v6403
    %v7731 = vpop.f32.mrf.mxu0
    %v7732 = vadd.f32 %v7347, %v7731
    %v7733 = vpop.f32.mrf.mxu0
    %7734 = vmatprep.mubr.f32.mxu0 %v6413
    %7735 = vmatmul.mubr.f32.gmra.mxu0 %v6412
    %v7736 = vpop.f32.mrf.mxu0
    %v7737 = vadd.f32 %v7352, %v7736
    %v7738 = vpop.f32.mrf.mxu0
    %7739 = vmatprep.mubr.f32.mxu0 %v6422
    %7740 = vmatmul.mubr.f32.gmra.mxu0 %v6421
    %v7741 = vpop.f32.mrf.mxu0
    %v7742 = vadd.f32 %v7357, %v7741
    %v7743 = vpop.f32.mrf.mxu0
    %7744 = vmatprep.mubr.f32.mxu0 %v6431
    %7745 = vmatmul.mubr.f32.gmra.mxu0 %v6430
    %v7746 = vpop.f32.mrf.mxu0
    %v7747 = vadd.f32 %v7362, %v7746
    %v7748 = vpop.f32.mrf.mxu0
    %7749 = vmatprep.mubr.f32.mxu0 %v6440
    %7750 = vmatmul.mubr.f32.gmra.mxu0 %v6439
    %v7751 = vpop.f32.mrf.mxu0
    %v7752 = vadd.f32 %v7367, %v7751
    %v7753 = vpop.f32.mrf.mxu0
    %7754 = vmatprep.mubr.f32.mxu0 %v6449
    %7755 = vmatmul.mubr.f32.gmra.mxu0 %v6448
    %v7756 = vpop.f32.mrf.mxu0
    %v7757 = vadd.f32 %v7372, %v7756
    %v7758 = vpop.f32.mrf.mxu0
    %7759 = vmatprep.mubr.f32.mxu0 %v6458
    %7760 = vmatmul.mubr.f32.gmra.mxu0 %v6457
    %v7761 = vpop.f32.mrf.mxu0
    %v7762 = vadd.f32 %v7377, %v7761
    %v7763 = vpop.f32.mrf.mxu0
    %7764 = vmatprep.mubr.f32.mxu0 %v6467
    %7765 = vmatmul.mubr.f32.gmra.mxu0 %v6466
    %v7766 = vpop.f32.mrf.mxu0
    %v7767 = vadd.f32 %v7382, %v7766
    %v7768 = vpop.f32.mrf.mxu0
    %7769 = vdwg.mxu0
    %7770 = vmatprep.subr.mxu0 0.0
    %7771 = vmatpush1.msra.mxu0 %v6582
    %7772 = vmatprep.subr.mxu0 0.0
    %7773 = vmatpush1.msra.mxu0 %v6581
    %7774 = vmatprep.subr.mxu0 0.0
    %7775 = vmatpush1.msra.mxu0 %v6580
    %7776 = vmatprep.subr.mxu0 0.0
    %7777 = vmatpush1.msra.mxu0 %v6579
    %7778 = vmatprep.subr.mxu0 0.0
    %7779 = vmatpush1.msra.mxu0 %v6578
    %7780 = vmatprep.subr.mxu0 0.0
    %7781 = vmatpush1.msra.mxu0 %v6577
    %7782 = vmatprep.subr.mxu0 0.0
    %7783 = vmatpush1.msra.mxu0 %v6576
    %7784 = vmatprep.subr.mxu0 0.0
    %7785 = vmatpush1.msra.mxu0 %v6575
    %7786 = vmatprep.subr.mxu0 0.0
    %7787 = vmatpush1.msra.mxu0 %v6574
    %7788 = vmatprep.subr.mxu0 0.0
    %7789 = vmatpush1.msra.mxu0 %v6573
    %7790 = vmatprep.subr.mxu0 0.0
    %7791 = vmatpush1.msra.mxu0 %v6572
    %7792 = vmatprep.subr.mxu0 0.0
    %7793 = vmatpush1.msra.mxu0 %v6571
    %7794 = vmatprep.subr.mxu0 0.0
    %7795 = vmatpush1.msra.mxu0 %v6570
    %7796 = vmatprep.subr.mxu0 0.0
    %7797 = vmatpush1.msra.mxu0 %v6569
    %7798 = vmatprep.subr.mxu0 0.0
    %7799 = vmatpush1.msra.mxu0 %v6568
    %7800 = vmatprep.subr.mxu0 0.0
    %7801 = vmatpush1.msra.mxu0 %v6567
    %7802 = vmatprep.subr.mxu0 0.0
    %7803 = vmatpush2.msra.mxu0 %v6598
    %7804 = vmatprep.subr.mxu0 0.0
    %7805 = vmatpush2.msra.mxu0 %v6597
    %7806 = vmatprep.subr.mxu0 0.0
    %7807 = vmatpush2.msra.mxu0 %v6596
    %7808 = vmatprep.subr.mxu0 0.0
    %7809 = vmatpush2.msra.mxu0 %v6595
    %7810 = vmatprep.subr.mxu0 0.0
    %7811 = vmatpush2.msra.mxu0 %v6594
    %7812 = vmatprep.subr.mxu0 0.0
    %7813 = vmatpush2.msra.mxu0 %v6593
    %7814 = vmatprep.subr.mxu0 0.0
    %7815 = vmatpush2.msra.mxu0 %v6592
    %7816 = vmatprep.subr.mxu0 0.0
    %7817 = vmatpush2.msra.mxu0 %v6591
    %7818 = vmatprep.subr.mxu0 0.0
    %7819 = vmatpush2.msra.mxu0 %v6590
    %7820 = vmatprep.subr.mxu0 0.0
    %7821 = vmatpush2.msra.mxu0 %v6589
    %7822 = vmatprep.subr.mxu0 0.0
    %7823 = vmatpush2.msra.mxu0 %v6588
    %7824 = vmatprep.subr.mxu0 0.0
    %7825 = vmatpush2.msra.mxu0 %v6587
    %7826 = vmatprep.subr.mxu0 0.0
    %7827 = vmatpush2.msra.mxu0 %v6586
    %7828 = vmatprep.subr.mxu0 0.0
    %7829 = vmatpush2.msra.mxu0 %v6585
    %7830 = vmatprep.subr.mxu0 0.0
    %7831 = vmatpush2.msra.mxu0 %v6584
    %7832 = vmatprep.subr.mxu0 0.0
    %7833 = vmatpush2.msra.mxu0 %v6583
    %7834 = vmatprep.mubr.f32.mxu0 %v5902
    %7835 = vmatmul.mubr.f32.gmra.mxu0 %v5901
    %v7836 = vpop.f32.mrf.mxu0
    %v7837 = vadd.f32 %v7452, %v7836
    %v7838 = vpop.f32.mrf.mxu0
    %7839 = vmatprep.mubr.f32.mxu0 %v5911
    %7840 = vmatmul.mubr.f32.gmra.mxu0 %v5910
    %v7841 = vpop.f32.mrf.mxu0
    %v7842 = vadd.f32 %v7457, %v7841
    %v7843 = vpop.f32.mrf.mxu0
    %7844 = vmatprep.mubr.f32.mxu0 %v5920
    %7845 = vmatmul.mubr.f32.gmra.mxu0 %v5919
    %v7846 = vpop.f32.mrf.mxu0
    %v7847 = vadd.f32 %v7462, %v7846
    %v7848 = vpop.f32.mrf.mxu0
    %7849 = vmatprep.mubr.f32.mxu0 %v5929
    %7850 = vmatmul.mubr.f32.gmra.mxu0 %v5928
    %v7851 = vpop.f32.mrf.mxu0
    %v7852 = vadd.f32 %v7467, %v7851
    %v7853 = vpop.f32.mrf.mxu0
    %7854 = vmatprep.mubr.f32.mxu0 %v5938
    %7855 = vmatmul.mubr.f32.gmra.mxu0 %v5937
    %v7856 = vpop.f32.mrf.mxu0
    %v7857 = vadd.f32 %v7472, %v7856
    %v7858 = vpop.f32.mrf.mxu0
    %7859 = vmatprep.mubr.f32.mxu0 %v5947
    %7860 = vmatmul.mubr.f32.gmra.mxu0 %v5946
    %v7861 = vpop.f32.mrf.mxu0
    %v7862 = vadd.f32 %v7477, %v7861
    %v7863 = vpop.f32.mrf.mxu0
    %7864 = vmatprep.mubr.f32.mxu0 %v5956
    %7865 = vmatmul.mubr.f32.gmra.mxu0 %v5955
    %v7866 = vpop.f32.mrf.mxu0
    %v7867 = vadd.f32 %v7482, %v7866
    %v7868 = vpop.f32.mrf.mxu0
    %7869 = vmatprep.mubr.f32.mxu0 %v5965
    %7870 = vmatmul.mubr.f32.gmra.mxu0 %v5964
    %v7871 = vpop.f32.mrf.mxu0
    %v7872 = vadd.f32 %v7487, %v7871
    %v7873 = vpop.f32.mrf.mxu0
    %7874 = vmatprep.mubr.f32.mxu0 %v5974
    %7875 = vmatmul.mubr.f32.gmra.mxu0 %v5973
    %v7876 = vpop.f32.mrf.mxu0
    %v7877 = vadd.f32 %v7492, %v7876
    %v7878 = vpop.f32.mrf.mxu0
    %7879 = vmatprep.mubr.f32.mxu0 %v5983
    %7880 = vmatmul.mubr.f32.gmra.mxu0 %v5982
    %v7881 = vpop.f32.mrf.mxu0
    %v7882 = vadd.f32 %v7497, %v7881
    %v7883 = vpop.f32.mrf.mxu0
    %7884 = vmatprep.mubr.f32.mxu0 %v5992
    %7885 = vmatmul.mubr.f32.gmra.mxu0 %v5991
    %v7886 = vpop.f32.mrf.mxu0
    %v7887 = vadd.f32 %v7502, %v7886
    %v7888 = vpop.f32.mrf.mxu0
    %7889 = vmatprep.mubr.f32.mxu0 %v6001
    %7890 = vmatmul.mubr.f32.gmra.mxu0 %v6000
    %v7891 = vpop.f32.mrf.mxu0
    %v7892 = vadd.f32 %v7507, %v7891
    %v7893 = vpop.f32.mrf.mxu0
    %7894 = vmatprep.mubr.f32.mxu0 %v6010
    %7895 = vmatmul.mubr.f32.gmra.mxu0 %v6009
    %v7896 = vpop.f32.mrf.mxu0
    %v7897 = vadd.f32 %v7512, %v7896
    %v7898 = vpop.f32.mrf.mxu0
    %7899 = vmatprep.mubr.f32.mxu0 %v6019
    %7900 = vmatmul.mubr.f32.gmra.mxu0 %v6018
    %v7901 = vpop.f32.mrf.mxu0
    %v7902 = vadd.f32 %v7517, %v7901
    %v7903 = vpop.f32.mrf.mxu0
    %7904 = vmatprep.mubr.f32.mxu0 %v6028
    %7905 = vmatmul.mubr.f32.gmra.mxu0 %v6027
    %v7906 = vpop.f32.mrf.mxu0
    %v7907 = vadd.f32 %v7522, %v7906
    %v7908 = vpop.f32.mrf.mxu0
    %7909 = vmatprep.mubr.f32.mxu0 %v6037
    %7910 = vmatmul.mubr.f32.gmra.mxu0 %v6036
    %v7911 = vpop.f32.mrf.mxu0
    %v7912 = vadd.f32 %v7527, %v7911
    %v7913 = vpop.f32.mrf.mxu0
    %7914 = vmatprep.mubr.f32.mxu0 %v6046
    %7915 = vmatmul.mubr.f32.gmra.mxu0 %v6045
    %v7916 = vpop.f32.mrf.mxu0
    %v7917 = vadd.f32 %v7532, %v7916
    %v7918 = vpop.f32.mrf.mxu0
    %7919 = vmatprep.mubr.f32.mxu0 %v6055
    %7920 = vmatmul.mubr.f32.gmra.mxu0 %v6054
    %v7921 = vpop.f32.mrf.mxu0
    %v7922 = vadd.f32 %v7537, %v7921
    %v7923 = vpop.f32.mrf.mxu0
    %7924 = vmatprep.mubr.f32.mxu0 %v6064
    %7925 = vmatmul.mubr.f32.gmra.mxu0 %v6063
    %v7926 = vpop.f32.mrf.mxu0
    %v7927 = vadd.f32 %v7542, %v7926
    %v7928 = vpop.f32.mrf.mxu0
    %7929 = vmatprep.mubr.f32.mxu0 %v6073
    %7930 = vmatmul.mubr.f32.gmra.mxu0 %v6072
    %v7931 = vpop.f32.mrf.mxu0
    %v7932 = vadd.f32 %v7547, %v7931
    %v7933 = vpop.f32.mrf.mxu0
    %7934 = vmatprep.mubr.f32.mxu0 %v6082
    %7935 = vmatmul.mubr.f32.gmra.mxu0 %v6081
    %v7936 = vpop.f32.mrf.mxu0
    %v7937 = vadd.f32 %v7552, %v7936
    %v7938 = vpop.f32.mrf.mxu0
    %7939 = vmatprep.mubr.f32.mxu0 %v6091
    %7940 = vmatmul.mubr.f32.gmra.mxu0 %v6090
    %v7941 = vpop.f32.mrf.mxu0
    %v7942 = vadd.f32 %v7557, %v7941
    %v7943 = vpop.f32.mrf.mxu0
    %7944 = vmatprep.mubr.f32.mxu0 %v6100
    %7945 = vmatmul.mubr.f32.gmra.mxu0 %v6099
    %v7946 = vpop.f32.mrf.mxu0
    %v7947 = vadd.f32 %v7562, %v7946
    %v7948 = vpop.f32.mrf.mxu0
    %7949 = vmatprep.mubr.f32.mxu0 %v6109
    %7950 = vmatmul.mubr.f32.gmra.mxu0 %v6108
    %v7951 = vpop.f32.mrf.mxu0
    %v7952 = vadd.f32 %v7567, %v7951
    %v7953 = vpop.f32.mrf.mxu0
    %7954 = vmatprep.mubr.f32.mxu0 %v6118
    %7955 = vmatmul.mubr.f32.gmra.mxu0 %v6117
    %v7956 = vpop.f32.mrf.mxu0
    %v7957 = vadd.f32 %v7572, %v7956
    %v7958 = vpop.f32.mrf.mxu0
    %7959 = vmatprep.mubr.f32.mxu0 %v6127
    %7960 = vmatmul.mubr.f32.gmra.mxu0 %v6126
    %v7961 = vpop.f32.mrf.mxu0
    %v7962 = vadd.f32 %v7577, %v7961
    %v7963 = vpop.f32.mrf.mxu0
    %7964 = vmatprep.mubr.f32.mxu0 %v6136
    %7965 = vmatmul.mubr.f32.gmra.mxu0 %v6135
    %v7966 = vpop.f32.mrf.mxu0
    %v7967 = vadd.f32 %v7582, %v7966
    %v7968 = vpop.f32.mrf.mxu0
    %7969 = vmatprep.mubr.f32.mxu0 %v6145
    %7970 = vmatmul.mubr.f32.gmra.mxu0 %v6144
    %v7971 = vpop.f32.mrf.mxu0
    %v7972 = vadd.f32 %v7587, %v7971
    %v7973 = vpop.f32.mrf.mxu0
    %7974 = vmatprep.mubr.f32.mxu0 %v6154
    %7975 = vmatmul.mubr.f32.gmra.mxu0 %v6153
    %v7976 = vpop.f32.mrf.mxu0
    %v7977 = vadd.f32 %v7592, %v7976
    %v7978 = vpop.f32.mrf.mxu0
    %7979 = vmatprep.mubr.f32.mxu0 %v6163
    %7980 = vmatmul.mubr.f32.gmra.mxu0 %v6162
    %v7981 = vpop.f32.mrf.mxu0
    %v7982 = vadd.f32 %v7597, %v7981
    %v7983 = vpop.f32.mrf.mxu0
    %7984 = vmatprep.mubr.f32.mxu0 %v6172
    %7985 = vmatmul.mubr.f32.gmra.mxu0 %v6171
    %v7986 = vpop.f32.mrf.mxu0
    %v7987 = vadd.f32 %v7602, %v7986
    %v7988 = vpop.f32.mrf.mxu0
    %7989 = vmatprep.mubr.f32.mxu0 %v6181
    %7990 = vmatmul.mubr.f32.gmra.mxu0 %v6180
    %v7991 = vpop.f32.mrf.mxu0
    %v7992 = vadd.f32 %v7607, %v7991
    %v7993 = vpop.f32.mrf.mxu0
    %7994 = vmatprep.mubr.f32.mxu0 %v6190
    %7995 = vmatmul.mubr.f32.gmra.mxu0 %v6189
    %v7996 = vpop.f32.mrf.mxu0
    %v7997 = vadd.f32 %v7612, %v7996
    %v7998 = vpop.f32.mrf.mxu0
    %7999 = vmatprep.mubr.f32.mxu0 %v6199
    %8000 = vmatmul.mubr.f32.gmra.mxu0 %v6198
    %v8001 = vpop.f32.mrf.mxu0
    %v8002 = vadd.f32 %v7617, %v8001
    %v8003 = vpop.f32.mrf.mxu0
    %8004 = vmatprep.mubr.f32.mxu0 %v6208
    %8005 = vmatmul.mubr.f32.gmra.mxu0 %v6207
    %v8006 = vpop.f32.mrf.mxu0
    %v8007 = vadd.f32 %v7622, %v8006
    %v8008 = vpop.f32.mrf.mxu0
    %8009 = vmatprep.mubr.f32.mxu0 %v6217
    %8010 = vmatmul.mubr.f32.gmra.mxu0 %v6216
    %v8011 = vpop.f32.mrf.mxu0
    %v8012 = vadd.f32 %v7627, %v8011
    %v8013 = vpop.f32.mrf.mxu0
    %8014 = vmatprep.mubr.f32.mxu0 %v6226
    %8015 = vmatmul.mubr.f32.gmra.mxu0 %v6225
    %v8016 = vpop.f32.mrf.mxu0
    %v8017 = vadd.f32 %v7632, %v8016
    %v8018 = vpop.f32.mrf.mxu0
    %8019 = vmatprep.mubr.f32.mxu0 %v6235
    %8020 = vmatmul.mubr.f32.gmra.mxu0 %v6234
    %v8021 = vpop.f32.mrf.mxu0
    %v8022 = vadd.f32 %v7637, %v8021
    %v8023 = vpop.f32.mrf.mxu0
    %8024 = vmatprep.mubr.f32.mxu0 %v6244
    %8025 = vmatmul.mubr.f32.gmra.mxu0 %v6243
    %v8026 = vpop.f32.mrf.mxu0
    %v8027 = vadd.f32 %v7642, %v8026
    %v8028 = vpop.f32.mrf.mxu0
    %8029 = vmatprep.mubr.f32.mxu0 %v6253
    %8030 = vmatmul.mubr.f32.gmra.mxu0 %v6252
    %v8031 = vpop.f32.mrf.mxu0
    %v8032 = vadd.f32 %v7647, %v8031
    %v8033 = vpop.f32.mrf.mxu0
    %8034 = vmatprep.mubr.f32.mxu0 %v6262
    %8035 = vmatmul.mubr.f32.gmra.mxu0 %v6261
    %v8036 = vpop.f32.mrf.mxu0
    %v8037 = vadd.f32 %v7652, %v8036
    %v8038 = vpop.f32.mrf.mxu0
    %8039 = vmatprep.mubr.f32.mxu0 %v6271
    %8040 = vmatmul.mubr.f32.gmra.mxu0 %v6270
    %v8041 = vpop.f32.mrf.mxu0
    %v8042 = vadd.f32 %v7657, %v8041
    %v8043 = vpop.f32.mrf.mxu0
    %8044 = vmatprep.mubr.f32.mxu0 %v6280
    %8045 = vmatmul.mubr.f32.gmra.mxu0 %v6279
    %v8046 = vpop.f32.mrf.mxu0
    %v8047 = vadd.f32 %v7662, %v8046
    %v8048 = vpop.f32.mrf.mxu0
    %8049 = vmatprep.mubr.f32.mxu0 %v6289
    %8050 = vmatmul.mubr.f32.gmra.mxu0 %v6288
    %v8051 = vpop.f32.mrf.mxu0
    %v8052 = vadd.f32 %v7667, %v8051
    %v8053 = vpop.f32.mrf.mxu0
    %8054 = vmatprep.mubr.f32.mxu0 %v6298
    %8055 = vmatmul.mubr.f32.gmra.mxu0 %v6297
    %v8056 = vpop.f32.mrf.mxu0
    %v8057 = vadd.f32 %v7672, %v8056
    %v8058 = vpop.f32.mrf.mxu0
    %8059 = vmatprep.mubr.f32.mxu0 %v6307
    %8060 = vmatmul.mubr.f32.gmra.mxu0 %v6306
    %v8061 = vpop.f32.mrf.mxu0
    %v8062 = vadd.f32 %v7677, %v8061
    %v8063 = vpop.f32.mrf.mxu0
    %8064 = vmatprep.mubr.f32.mxu0 %v6316
    %8065 = vmatmul.mubr.f32.gmra.mxu0 %v6315
    %v8066 = vpop.f32.mrf.mxu0
    %v8067 = vadd.f32 %v7682, %v8066
    %v8068 = vpop.f32.mrf.mxu0
    %8069 = vmatprep.mubr.f32.mxu0 %v6325
    %8070 = vmatmul.mubr.f32.gmra.mxu0 %v6324
    %v8071 = vpop.f32.mrf.mxu0
    %v8072 = vadd.f32 %v7687, %v8071
    %v8073 = vpop.f32.mrf.mxu0
    %8074 = vmatprep.mubr.f32.mxu0 %v6334
    %8075 = vmatmul.mubr.f32.gmra.mxu0 %v6333
    %v8076 = vpop.f32.mrf.mxu0
    %v8077 = vadd.f32 %v7692, %v8076
    %v8078 = vpop.f32.mrf.mxu0
    %8079 = vmatprep.mubr.f32.mxu0 %v6343
    %8080 = vmatmul.mubr.f32.gmra.mxu0 %v6342
    %v8081 = vpop.f32.mrf.mxu0
    %v8082 = vadd.f32 %v7697, %v8081
    %v8083 = vpop.f32.mrf.mxu0
    %8084 = vmatprep.mubr.f32.mxu0 %v6352
    %8085 = vmatmul.mubr.f32.gmra.mxu0 %v6351
    %v8086 = vpop.f32.mrf.mxu0
    %v8087 = vadd.f32 %v7702, %v8086
    %v8088 = vpop.f32.mrf.mxu0
    %8089 = vmatprep.mubr.f32.mxu0 %v6361
    %8090 = vmatmul.mubr.f32.gmra.mxu0 %v6360
    %v8091 = vpop.f32.mrf.mxu0
    %v8092 = vadd.f32 %v7707, %v8091
    %v8093 = vpop.f32.mrf.mxu0
    %8094 = vmatprep.mubr.f32.mxu0 %v6370
    %8095 = vmatmul.mubr.f32.gmra.mxu0 %v6369
    %v8096 = vpop.f32.mrf.mxu0
    %v8097 = vadd.f32 %v7712, %v8096
    %v8098 = vpop.f32.mrf.mxu0
    %8099 = vmatprep.mubr.f32.mxu0 %v6379
    %8100 = vmatmul.mubr.f32.gmra.mxu0 %v6378
    %v8101 = vpop.f32.mrf.mxu0
    %v8102 = vadd.f32 %v7717, %v8101
    %v8103 = vpop.f32.mrf.mxu0
    %8104 = vmatprep.mubr.f32.mxu0 %v6388
    %8105 = vmatmul.mubr.f32.gmra.mxu0 %v6387
    %v8106 = vpop.f32.mrf.mxu0
    %v8107 = vadd.f32 %v7722, %v8106
    %v8108 = vpop.f32.mrf.mxu0
    %8109 = vmatprep.mubr.f32.mxu0 %v6397
    %8110 = vmatmul.mubr.f32.gmra.mxu0 %v6396
    %v8111 = vpop.f32.mrf.mxu0
    %v8112 = vadd.f32 %v7727, %v8111
    %v8113 = vpop.f32.mrf.mxu0
    %8114 = vmatprep.mubr.f32.mxu0 %v6406
    %8115 = vmatmul.mubr.f32.gmra.mxu0 %v6405
    %v8116 = vpop.f32.mrf.mxu0
    %v8117 = vadd.f32 %v7732, %v8116
    %v8118 = vpop.f32.mrf.mxu0
    %8119 = vmatprep.mubr.f32.mxu0 %v6415
    %8120 = vmatmul.mubr.f32.gmra.mxu0 %v6414
    %v8121 = vpop.f32.mrf.mxu0
    %v8122 = vadd.f32 %v7737, %v8121
    %v8123 = vpop.f32.mrf.mxu0
    %8124 = vmatprep.mubr.f32.mxu0 %v6424
    %8125 = vmatmul.mubr.f32.gmra.mxu0 %v6423
    %v8126 = vpop.f32.mrf.mxu0
    %v8127 = vadd.f32 %v7742, %v8126
    %v8128 = vpop.f32.mrf.mxu0
    %8129 = vmatprep.mubr.f32.mxu0 %v6433
    %8130 = vmatmul.mubr.f32.gmra.mxu0 %v6432
    %v8131 = vpop.f32.mrf.mxu0
    %v8132 = vadd.f32 %v7747, %v8131
    %v8133 = vpop.f32.mrf.mxu0
    %8134 = vmatprep.mubr.f32.mxu0 %v6442
    %8135 = vmatmul.mubr.f32.gmra.mxu0 %v6441
    %v8136 = vpop.f32.mrf.mxu0
    %v8137 = vadd.f32 %v7752, %v8136
    %v8138 = vpop.f32.mrf.mxu0
    %8139 = vmatprep.mubr.f32.mxu0 %v6451
    %8140 = vmatmul.mubr.f32.gmra.mxu0 %v6450
    %v8141 = vpop.f32.mrf.mxu0
    %v8142 = vadd.f32 %v7757, %v8141
    %v8143 = vpop.f32.mrf.mxu0
    %8144 = vmatprep.mubr.f32.mxu0 %v6460
    %8145 = vmatmul.mubr.f32.gmra.mxu0 %v6459
    %v8146 = vpop.f32.mrf.mxu0
    %v8147 = vadd.f32 %v7762, %v8146
    %v8148 = vpop.f32.mrf.mxu0
    %8149 = vmatprep.mubr.f32.mxu0 %v6469
    %8150 = vmatmul.mubr.f32.gmra.mxu0 %v6468
    %v8151 = vpop.f32.mrf.mxu0
    %v8152 = vadd.f32 %v7767, %v8151
    %v8153 = vpop.f32.mrf.mxu0
    %8154 = vdwg.mxu0
    %8155 = vmatprep.subr.mxu0 0.0
    %8156 = vmatpush1.msra.mxu0 %v6614
    %8157 = vmatprep.subr.mxu0 0.0
    %8158 = vmatpush1.msra.mxu0 %v6613
    %8159 = vmatprep.subr.mxu0 0.0
    %8160 = vmatpush1.msra.mxu0 %v6612
    %8161 = vmatprep.subr.mxu0 0.0
    %8162 = vmatpush1.msra.mxu0 %v6611
    %8163 = vmatprep.subr.mxu0 0.0
    %8164 = vmatpush1.msra.mxu0 %v6610
    %8165 = vmatprep.subr.mxu0 0.0
    %8166 = vmatpush1.msra.mxu0 %v6609
    %8167 = vmatprep.subr.mxu0 0.0
    %8168 = vmatpush1.msra.mxu0 %v6608
    %8169 = vmatprep.subr.mxu0 0.0
    %8170 = vmatpush1.msra.mxu0 %v6607
    %8171 = vmatprep.subr.mxu0 0.0
    %8172 = vmatpush1.msra.mxu0 %v6606
    %8173 = vmatprep.subr.mxu0 0.0
    %8174 = vmatpush1.msra.mxu0 %v6605
    %8175 = vmatprep.subr.mxu0 0.0
    %8176 = vmatpush1.msra.mxu0 %v6604
    %8177 = vmatprep.subr.mxu0 0.0
    %8178 = vmatpush1.msra.mxu0 %v6603
    %8179 = vmatprep.subr.mxu0 0.0
    %8180 = vmatpush1.msra.mxu0 %v6602
    %8181 = vmatprep.subr.mxu0 0.0
    %8182 = vmatpush1.msra.mxu0 %v6601
    %8183 = vmatprep.subr.mxu0 0.0
    %8184 = vmatpush1.msra.mxu0 %v6600
    %8185 = vmatprep.subr.mxu0 0.0
    %8186 = vmatpush1.msra.mxu0 %v6599
    %8187 = vmatprep.subr.mxu0 0.0
    %8188 = vmatpush2.msra.mxu0 0.0
    %8189 = vmatprep.subr.mxu0 0.0
    %8190 = vmatpush2.msra.mxu0 0.0
    %8191 = vmatprep.subr.mxu0 0.0
    %8192 = vmatpush2.msra.mxu0 0.0
    %8193 = vmatprep.subr.mxu0 0.0
    %8194 = vmatpush2.msra.mxu0 0.0
    %8195 = vmatprep.subr.mxu0 0.0
    %8196 = vmatpush2.msra.mxu0 0.0
    %8197 = vmatprep.subr.mxu0 0.0
    %8198 = vmatpush2.msra.mxu0 0.0
    %8199 = vmatprep.subr.mxu0 0.0
    %8200 = vmatpush2.msra.mxu0 0.0
    %8201 = vmatprep.subr.mxu0 0.0
    %8202 = vmatpush2.msra.mxu0 0.0
    %8203 = vmatprep.subr.mxu0 0.0
    %8204 = vmatpush2.msra.mxu0 0.0
    %8205 = vmatprep.subr.mxu0 0.0
    %8206 = vmatpush2.msra.mxu0 0.0
    %8207 = vmatprep.subr.mxu0 0.0
    %8208 = vmatpush2.msra.mxu0 0.0
    %8209 = vmatprep.subr.mxu0 0.0
    %8210 = vmatpush2.msra.mxu0 0.0
    %8211 = vmatprep.subr.mxu0 0.0
    %8212 = vmatpush2.msra.mxu0 0.0
    %8213 = vmatprep.subr.mxu0 0.0
    %8214 = vmatpush2.msra.mxu0 0.0
    %8215 = vmatprep.subr.mxu0 0.0
    %8216 = vmatpush2.msra.mxu0 0.0
    %8217 = vmatprep.subr.mxu0 0.0
    %8218 = vmatpush2.msra.mxu0 0.0
    %8219 = vmatprep.mubr.f32.mxu0 0.0
    %8220 = vmatmul.mubr.f32.gmra.mxu0 %v5903
    %v8221 = vpop.f32.mrf.mxu0
    %v8222 = vadd.f32 %v7837, %v8221
    %v8223 = vpop.f32.mrf.mxu0
    %8224 = vmatprep.mubr.f32.mxu0 0.0
    %8225 = vmatmul.mubr.f32.gmra.mxu0 %v5912
    %v8226 = vpop.f32.mrf.mxu0
    %v8227 = vadd.f32 %v7842, %v8226
    %v8228 = vpop.f32.mrf.mxu0
    %8229 = vmatprep.mubr.f32.mxu0 0.0
    %8230 = vmatmul.mubr.f32.gmra.mxu0 %v5921
    %v8231 = vpop.f32.mrf.mxu0
    %v8232 = vadd.f32 %v7847, %v8231
    %v8233 = vpop.f32.mrf.mxu0
    %8234 = vmatprep.mubr.f32.mxu0 0.0
    %8235 = vmatmul.mubr.f32.gmra.mxu0 %v5930
    %v8236 = vpop.f32.mrf.mxu0
    %v8237 = vadd.f32 %v7852, %v8236
    %v8238 = vpop.f32.mrf.mxu0
    %8239 = vmatprep.mubr.f32.mxu0 0.0
    %8240 = vmatmul.mubr.f32.gmra.mxu0 %v5939
    %v8241 = vpop.f32.mrf.mxu0
    %v8242 = vadd.f32 %v7857, %v8241
    %v8243 = vpop.f32.mrf.mxu0
    %8244 = vmatprep.mubr.f32.mxu0 0.0
    %8245 = vmatmul.mubr.f32.gmra.mxu0 %v5948
    %v8246 = vpop.f32.mrf.mxu0
    %v8247 = vadd.f32 %v7862, %v8246
    %v8248 = vpop.f32.mrf.mxu0
    %8249 = vmatprep.mubr.f32.mxu0 0.0
    %8250 = vmatmul.mubr.f32.gmra.mxu0 %v5957
    %v8251 = vpop.f32.mrf.mxu0
    %v8252 = vadd.f32 %v7867, %v8251
    %v8253 = vpop.f32.mrf.mxu0
    %8254 = vmatprep.mubr.f32.mxu0 0.0
    %8255 = vmatmul.mubr.f32.gmra.mxu0 %v5966
    %v8256 = vpop.f32.mrf.mxu0
    %v8257 = vadd.f32 %v7872, %v8256
    %v8258 = vpop.f32.mrf.mxu0
    %8259 = vmatprep.mubr.f32.mxu0 0.0
    %8260 = vmatmul.mubr.f32.gmra.mxu0 %v5975
    %v8261 = vpop.f32.mrf.mxu0
    %v8262 = vadd.f32 %v7877, %v8261
    %v8263 = vpop.f32.mrf.mxu0
    %8264 = vmatprep.mubr.f32.mxu0 0.0
    %8265 = vmatmul.mubr.f32.gmra.mxu0 %v5984
    %v8266 = vpop.f32.mrf.mxu0
    %v8267 = vadd.f32 %v7882, %v8266
    %v8268 = vpop.f32.mrf.mxu0
    %8269 = vmatprep.mubr.f32.mxu0 0.0
    %8270 = vmatmul.mubr.f32.gmra.mxu0 %v5993
    %v8271 = vpop.f32.mrf.mxu0
    %v8272 = vadd.f32 %v7887, %v8271
    %v8273 = vpop.f32.mrf.mxu0
    %8274 = vmatprep.mubr.f32.mxu0 0.0
    %8275 = vmatmul.mubr.f32.gmra.mxu0 %v6002
    %v8276 = vpop.f32.mrf.mxu0
    %v8277 = vadd.f32 %v7892, %v8276
    %v8278 = vpop.f32.mrf.mxu0
    %8279 = vmatprep.mubr.f32.mxu0 0.0
    %8280 = vmatmul.mubr.f32.gmra.mxu0 %v6011
    %v8281 = vpop.f32.mrf.mxu0
    %v8282 = vadd.f32 %v7897, %v8281
    %v8283 = vpop.f32.mrf.mxu0
    %8284 = vmatprep.mubr.f32.mxu0 0.0
    %8285 = vmatmul.mubr.f32.gmra.mxu0 %v6020
    %v8286 = vpop.f32.mrf.mxu0
    %v8287 = vadd.f32 %v7902, %v8286
    %v8288 = vpop.f32.mrf.mxu0
    %8289 = vmatprep.mubr.f32.mxu0 0.0
    %8290 = vmatmul.mubr.f32.gmra.mxu0 %v6029
    %v8291 = vpop.f32.mrf.mxu0
    %v8292 = vadd.f32 %v7907, %v8291
    %v8293 = vpop.f32.mrf.mxu0
    %8294 = vmatprep.mubr.f32.mxu0 0.0
    %8295 = vmatmul.mubr.f32.gmra.mxu0 %v6038
    %v8296 = vpop.f32.mrf.mxu0
    %v8297 = vadd.f32 %v7912, %v8296
    %v8298 = vpop.f32.mrf.mxu0
    %8299 = vmatprep.mubr.f32.mxu0 0.0
    %8300 = vmatmul.mubr.f32.gmra.mxu0 %v6047
    %v8301 = vpop.f32.mrf.mxu0
    %v8302 = vadd.f32 %v7917, %v8301
    %v8303 = vpop.f32.mrf.mxu0
    %8304 = vmatprep.mubr.f32.mxu0 0.0
    %8305 = vmatmul.mubr.f32.gmra.mxu0 %v6056
    %v8306 = vpop.f32.mrf.mxu0
    %v8307 = vadd.f32 %v7922, %v8306
    %v8308 = vpop.f32.mrf.mxu0
    %8309 = vmatprep.mubr.f32.mxu0 0.0
    %8310 = vmatmul.mubr.f32.gmra.mxu0 %v6065
    %v8311 = vpop.f32.mrf.mxu0
    %v8312 = vadd.f32 %v7927, %v8311
    %v8313 = vpop.f32.mrf.mxu0
    %8314 = vmatprep.mubr.f32.mxu0 0.0
    %8315 = vmatmul.mubr.f32.gmra.mxu0 %v6074
    %v8316 = vpop.f32.mrf.mxu0
    %v8317 = vadd.f32 %v7932, %v8316
    %v8318 = vpop.f32.mrf.mxu0
    %8319 = vmatprep.mubr.f32.mxu0 0.0
    %8320 = vmatmul.mubr.f32.gmra.mxu0 %v6083
    %v8321 = vpop.f32.mrf.mxu0
    %v8322 = vadd.f32 %v7937, %v8321
    %v8323 = vpop.f32.mrf.mxu0
    %8324 = vmatprep.mubr.f32.mxu0 0.0
    %8325 = vmatmul.mubr.f32.gmra.mxu0 %v6092
    %v8326 = vpop.f32.mrf.mxu0
    %v8327 = vadd.f32 %v7942, %v8326
    %v8328 = vpop.f32.mrf.mxu0
    %8329 = vmatprep.mubr.f32.mxu0 0.0
    %8330 = vmatmul.mubr.f32.gmra.mxu0 %v6101
    %v8331 = vpop.f32.mrf.mxu0
    %v8332 = vadd.f32 %v7947, %v8331
    %v8333 = vpop.f32.mrf.mxu0
    %8334 = vmatprep.mubr.f32.mxu0 0.0
    %8335 = vmatmul.mubr.f32.gmra.mxu0 %v6110
    %v8336 = vpop.f32.mrf.mxu0
    %v8337 = vadd.f32 %v7952, %v8336
    %v8338 = vpop.f32.mrf.mxu0
    %8339 = vmatprep.mubr.f32.mxu0 0.0
    %8340 = vmatmul.mubr.f32.gmra.mxu0 %v6119
    %v8341 = vpop.f32.mrf.mxu0
    %v8342 = vadd.f32 %v7957, %v8341
    %v8343 = vpop.f32.mrf.mxu0
    %8344 = vmatprep.mubr.f32.mxu0 0.0
    %8345 = vmatmul.mubr.f32.gmra.mxu0 %v6128
    %v8346 = vpop.f32.mrf.mxu0
    %v8347 = vadd.f32 %v7962, %v8346
    %v8348 = vpop.f32.mrf.mxu0
    %8349 = vmatprep.mubr.f32.mxu0 0.0
    %8350 = vmatmul.mubr.f32.gmra.mxu0 %v6137
    %v8351 = vpop.f32.mrf.mxu0
    %v8352 = vadd.f32 %v7967, %v8351
    %v8353 = vpop.f32.mrf.mxu0
    %8354 = vmatprep.mubr.f32.mxu0 0.0
    %8355 = vmatmul.mubr.f32.gmra.mxu0 %v6146
    %v8356 = vpop.f32.mrf.mxu0
    %v8357 = vadd.f32 %v7972, %v8356
    %v8358 = vpop.f32.mrf.mxu0
    %8359 = vmatprep.mubr.f32.mxu0 0.0
    %8360 = vmatmul.mubr.f32.gmra.mxu0 %v6155
    %v8361 = vpop.f32.mrf.mxu0
    %v8362 = vadd.f32 %v7977, %v8361
    %v8363 = vpop.f32.mrf.mxu0
    %8364 = vmatprep.mubr.f32.mxu0 0.0
    %8365 = vmatmul.mubr.f32.gmra.mxu0 %v6164
    %v8366 = vpop.f32.mrf.mxu0
    %v8367 = vadd.f32 %v7982, %v8366
    %v8368 = vpop.f32.mrf.mxu0
    %8369 = vmatprep.mubr.f32.mxu0 0.0
    %8370 = vmatmul.mubr.f32.gmra.mxu0 %v6173
    %v8371 = vpop.f32.mrf.mxu0
    %v8372 = vadd.f32 %v7987, %v8371
    %v8373 = vpop.f32.mrf.mxu0
    %8374 = vmatprep.mubr.f32.mxu0 0.0
    %8375 = vmatmul.mubr.f32.gmra.mxu0 %v6182
    %v8376 = vpop.f32.mrf.mxu0
    %v8377 = vadd.f32 %v7992, %v8376
    %v8378 = vpop.f32.mrf.mxu0
    %8379 = vmatprep.mubr.f32.mxu0 0.0
    %8380 = vmatmul.mubr.f32.gmra.mxu0 %v6191
    %v8381 = vpop.f32.mrf.mxu0
    %v8382 = vadd.f32 %v7997, %v8381
    %v8383 = vpop.f32.mrf.mxu0
    %8384 = vmatprep.mubr.f32.mxu0 0.0
    %8385 = vmatmul.mubr.f32.gmra.mxu0 %v6200
    %v8386 = vpop.f32.mrf.mxu0
    %v8387 = vadd.f32 %v8002, %v8386
    %v8388 = vpop.f32.mrf.mxu0
    %8389 = vmatprep.mubr.f32.mxu0 0.0
    %8390 = vmatmul.mubr.f32.gmra.mxu0 %v6209
    %v8391 = vpop.f32.mrf.mxu0
    %v8392 = vadd.f32 %v8007, %v8391
    %v8393 = vpop.f32.mrf.mxu0
    %8394 = vmatprep.mubr.f32.mxu0 0.0
    %8395 = vmatmul.mubr.f32.gmra.mxu0 %v6218
    %v8396 = vpop.f32.mrf.mxu0
    %v8397 = vadd.f32 %v8012, %v8396
    %v8398 = vpop.f32.mrf.mxu0
    %8399 = vmatprep.mubr.f32.mxu0 0.0
    %8400 = vmatmul.mubr.f32.gmra.mxu0 %v6227
    %v8401 = vpop.f32.mrf.mxu0
    %v8402 = vadd.f32 %v8017, %v8401
    %v8403 = vpop.f32.mrf.mxu0
    %8404 = vmatprep.mubr.f32.mxu0 0.0
    %8405 = vmatmul.mubr.f32.gmra.mxu0 %v6236
    %v8406 = vpop.f32.mrf.mxu0
    %v8407 = vadd.f32 %v8022, %v8406
    %v8408 = vpop.f32.mrf.mxu0
    %8409 = vmatprep.mubr.f32.mxu0 0.0
    %8410 = vmatmul.mubr.f32.gmra.mxu0 %v6245
    %v8411 = vpop.f32.mrf.mxu0
    %v8412 = vadd.f32 %v8027, %v8411
    %v8413 = vpop.f32.mrf.mxu0
    %8414 = vmatprep.mubr.f32.mxu0 0.0
    %8415 = vmatmul.mubr.f32.gmra.mxu0 %v6254
    %v8416 = vpop.f32.mrf.mxu0
    %v8417 = vadd.f32 %v8032, %v8416
    %v8418 = vpop.f32.mrf.mxu0
    %8419 = vmatprep.mubr.f32.mxu0 0.0
    %8420 = vmatmul.mubr.f32.gmra.mxu0 %v6263
    %v8421 = vpop.f32.mrf.mxu0
    %v8422 = vadd.f32 %v8037, %v8421
    %v8423 = vpop.f32.mrf.mxu0
    %8424 = vmatprep.mubr.f32.mxu0 0.0
    %8425 = vmatmul.mubr.f32.gmra.mxu0 %v6272
    %v8426 = vpop.f32.mrf.mxu0
    %v8427 = vadd.f32 %v8042, %v8426
    %v8428 = vpop.f32.mrf.mxu0
    %8429 = vmatprep.mubr.f32.mxu0 0.0
    %8430 = vmatmul.mubr.f32.gmra.mxu0 %v6281
    %v8431 = vpop.f32.mrf.mxu0
    %v8432 = vadd.f32 %v8047, %v8431
    %v8433 = vpop.f32.mrf.mxu0
    %8434 = vmatprep.mubr.f32.mxu0 0.0
    %8435 = vmatmul.mubr.f32.gmra.mxu0 %v6290
    %v8436 = vpop.f32.mrf.mxu0
    %v8437 = vadd.f32 %v8052, %v8436
    %v8438 = vpop.f32.mrf.mxu0
    %8439 = vmatprep.mubr.f32.mxu0 0.0
    %8440 = vmatmul.mubr.f32.gmra.mxu0 %v6299
    %v8441 = vpop.f32.mrf.mxu0
    %v8442 = vadd.f32 %v8057, %v8441
    %v8443 = vpop.f32.mrf.mxu0
    %8444 = vmatprep.mubr.f32.mxu0 0.0
    %8445 = vmatmul.mubr.f32.gmra.mxu0 %v6308
    %v8446 = vpop.f32.mrf.mxu0
    %v8447 = vadd.f32 %v8062, %v8446
    %v8448 = vpop.f32.mrf.mxu0
    %8449 = vmatprep.mubr.f32.mxu0 0.0
    %8450 = vmatmul.mubr.f32.gmra.mxu0 %v6317
    %v8451 = vpop.f32.mrf.mxu0
    %v8452 = vadd.f32 %v8067, %v8451
    %v8453 = vpop.f32.mrf.mxu0
    %8454 = vmatprep.mubr.f32.mxu0 0.0
    %8455 = vmatmul.mubr.f32.gmra.mxu0 %v6326
    %v8456 = vpop.f32.mrf.mxu0
    %v8457 = vadd.f32 %v8072, %v8456
    %v8458 = vpop.f32.mrf.mxu0
    %8459 = vmatprep.mubr.f32.mxu0 0.0
    %8460 = vmatmul.mubr.f32.gmra.mxu0 %v6335
    %v8461 = vpop.f32.mrf.mxu0
    %v8462 = vadd.f32 %v8077, %v8461
    %v8463 = vpop.f32.mrf.mxu0
    %8464 = vmatprep.mubr.f32.mxu0 0.0
    %8465 = vmatmul.mubr.f32.gmra.mxu0 %v6344
    %v8466 = vpop.f32.mrf.mxu0
    %v8467 = vadd.f32 %v8082, %v8466
    %v8468 = vpop.f32.mrf.mxu0
    %8469 = vmatprep.mubr.f32.mxu0 0.0
    %8470 = vmatmul.mubr.f32.gmra.mxu0 %v6353
    %v8471 = vpop.f32.mrf.mxu0
    %v8472 = vadd.f32 %v8087, %v8471
    %v8473 = vpop.f32.mrf.mxu0
    %8474 = vmatprep.mubr.f32.mxu0 0.0
    %8475 = vmatmul.mubr.f32.gmra.mxu0 %v6362
    %v8476 = vpop.f32.mrf.mxu0
    %v8477 = vadd.f32 %v8092, %v8476
    %v8478 = vpop.f32.mrf.mxu0
    %8479 = vmatprep.mubr.f32.mxu0 0.0
    %8480 = vmatmul.mubr.f32.gmra.mxu0 %v6371
    %v8481 = vpop.f32.mrf.mxu0
    %v8482 = vadd.f32 %v8097, %v8481
    %v8483 = vpop.f32.mrf.mxu0
    %8484 = vmatprep.mubr.f32.mxu0 0.0
    %8485 = vmatmul.mubr.f32.gmra.mxu0 %v6380
    %v8486 = vpop.f32.mrf.mxu0
    %v8487 = vadd.f32 %v8102, %v8486
    %v8488 = vpop.f32.mrf.mxu0
    %8489 = vmatprep.mubr.f32.mxu0 0.0
    %8490 = vmatmul.mubr.f32.gmra.mxu0 %v6389
    %v8491 = vpop.f32.mrf.mxu0
    %v8492 = vadd.f32 %v8107, %v8491
    %v8493 = vpop.f32.mrf.mxu0
    %8494 = vmatprep.mubr.f32.mxu0 0.0
    %8495 = vmatmul.mubr.f32.gmra.mxu0 %v6398
    %v8496 = vpop.f32.mrf.mxu0
    %v8497 = vadd.f32 %v8112, %v8496
    %v8498 = vpop.f32.mrf.mxu0
    %8499 = vmatprep.mubr.f32.mxu0 0.0
    %8500 = vmatmul.mubr.f32.gmra.mxu0 %v6407
    %v8501 = vpop.f32.mrf.mxu0
    %v8502 = vadd.f32 %v8117, %v8501
    %v8503 = vpop.f32.mrf.mxu0
    %8504 = vmatprep.mubr.f32.mxu0 0.0
    %8505 = vmatmul.mubr.f32.gmra.mxu0 %v6416
    %v8506 = vpop.f32.mrf.mxu0
    %v8507 = vadd.f32 %v8122, %v8506
    %v8508 = vpop.f32.mrf.mxu0
    %8509 = vmatprep.mubr.f32.mxu0 0.0
    %8510 = vmatmul.mubr.f32.gmra.mxu0 %v6425
    %v8511 = vpop.f32.mrf.mxu0
    %v8512 = vadd.f32 %v8127, %v8511
    %v8513 = vpop.f32.mrf.mxu0
    %8514 = vmatprep.mubr.f32.mxu0 0.0
    %8515 = vmatmul.mubr.f32.gmra.mxu0 %v6434
    %v8516 = vpop.f32.mrf.mxu0
    %v8517 = vadd.f32 %v8132, %v8516
    %v8518 = vpop.f32.mrf.mxu0
    %8519 = vmatprep.mubr.f32.mxu0 0.0
    %8520 = vmatmul.mubr.f32.gmra.mxu0 %v6443
    %v8521 = vpop.f32.mrf.mxu0
    %v8522 = vadd.f32 %v8137, %v8521
    %v8523 = vpop.f32.mrf.mxu0
    %8524 = vmatprep.mubr.f32.mxu0 0.0
    %8525 = vmatmul.mubr.f32.gmra.mxu0 %v6452
    %v8526 = vpop.f32.mrf.mxu0
    %v8527 = vadd.f32 %v8142, %v8526
    %v8528 = vpop.f32.mrf.mxu0
    %8529 = vmatprep.mubr.f32.mxu0 0.0
    %8530 = vmatmul.mubr.f32.gmra.mxu0 %v6461
    %v8531 = vpop.f32.mrf.mxu0
    %v8532 = vadd.f32 %v8147, %v8531
    %v8533 = vpop.f32.mrf.mxu0
    %8534 = vmatprep.mubr.f32.mxu0 0.0
    %8535 = vmatmul.mubr.f32.gmra.mxu0 %v6470
    %v8536 = vpop.f32.mrf.mxu0
    %v8537 = vadd.f32 %v8152, %v8536
    %v8538 = vpop.f32.mrf.mxu0
    %8539 = vdwg.mxu0
    %v8540 = vadd.f32 %v8222, %v8227
    %v8541 = vadd.f32 %v8540, %v8232
    %v8542 = vadd.f32 %v8541, %v8237
    %v8543 = vadd.f32 %v8542, %v8242
    %v8544 = vadd.f32 %v8543, %v8247
    %v8545 = vadd.f32 %v8544, %v8252
    %v8546 = vadd.f32 %v8545, %v8257
    %v8547 = vadd.f32 %v8546, %v8262
    %v8548 = vadd.f32 %v8547, %v8267
    %v8549 = vadd.f32 %v8548, %v8272
    %v8550 = vadd.f32 %v8549, %v8277
    %v8551 = vadd.f32 %v8550, %v8282
    %v8552 = vadd.f32 %v8551, %v8287
    %v8553 = vadd.f32 %v8552, %v8292
    %v8554 = vadd.f32 %v8553, %v8297
    %v8555 = vadd.f32 %v8554, %v8302
    %v8556 = vadd.f32 %v8555, %v8307
    %v8557 = vadd.f32 %v8556, %v8312
    %v8558 = vadd.f32 %v8557, %v8317
    %v8559 = vadd.f32 %v8558, %v8322
    %v8560 = vadd.f32 %v8559, %v8327
    %v8561 = vadd.f32 %v8560, %v8332
    %v8562 = vadd.f32 %v8561, %v8337
    %v8563 = vadd.f32 %v8562, %v8342
    %v8564 = vadd.f32 %v8563, %v8347
    %v8565 = vadd.f32 %v8564, %v8352
    %v8566 = vadd.f32 %v8565, %v8357
    %v8567 = vadd.f32 %v8566, %v8362
    %v8568 = vadd.f32 %v8567, %v8367
    %v8569 = vadd.f32 %v8568, %v8372
    %v8570 = vadd.f32 %v8569, %v8377
    %v8571 = vadd.f32 %v8570, %v8382
    %v8572 = vadd.f32 %v8571, %v8387
    %v8573 = vadd.f32 %v8572, %v8392
    %v8574 = vadd.f32 %v8573, %v8397
    %v8575 = vadd.f32 %v8574, %v8402
    %v8576 = vadd.f32 %v8575, %v8407
    %v8577 = vadd.f32 %v8576, %v8412
    %v8578 = vadd.f32 %v8577, %v8417
    %v8579 = vadd.f32 %v8578, %v8422
    %v8580 = vadd.f32 %v8579, %v8427
    %v8581 = vadd.f32 %v8580, %v8432
    %v8582 = vadd.f32 %v8581, %v8437
    %v8583 = vadd.f32 %v8582, %v8442
    %v8584 = vadd.f32 %v8583, %v8447
    %v8585 = vadd.f32 %v8584, %v8452
    %v8586 = vadd.f32 %v8585, %v8457
    %v8587 = vadd.f32 %v8586, %v8462
    %v8588 = vadd.f32 %v8587, %v8467
    %v8589 = vadd.f32 %v8588, %v8472
    %v8590 = vadd.f32 %v8589, %v8477
    %v8591 = vadd.f32 %v8590, %v8482
    %v8592 = vadd.f32 %v8591, %v8487
    %v8593 = vadd.f32 %v8592, %v8492
    %v8594 = vadd.f32 %v8593, %v8497
    %v8595 = vadd.f32 %v8594, %v8502
    %v8596 = vadd.f32 %v8595, %v8507
    %v8597 = vadd.f32 %v8596, %v8512
    %v8598 = vadd.f32 %v8597, %v8517
    %v8599 = vadd.f32 %v8598, %v8522
    %v8600 = vadd.f32 %v8599, %v8527
    %v8601 = vadd.f32 %v8600, %v8532
    %v8602 = vadd.f32 %v8601, %v8537
    %v8603 = vrot.slane %v8602, 4
    %v8604 = vadd.f32 %v8602, %v8603
    %v8605 = vrot.slane %v8604, 2
    %v8606 = vadd.f32 %v8604, %v8605
    %v8607 = vrot.slane %v8606, 1
    %v8608 = vadd.f32 %v8606, %v8607
    %v8609 = vmul.f32 %v8222, %v8222
    %v8610 = vmul.f32 %v8227, %v8227
    %v8611 = vmul.f32 %v8232, %v8232
    %v8612 = vmul.f32 %v8237, %v8237
    %v8613 = vmul.f32 %v8242, %v8242
    %v8614 = vmul.f32 %v8247, %v8247
    %v8615 = vmul.f32 %v8252, %v8252
    %v8616 = vmul.f32 %v8257, %v8257
    %v8617 = vmul.f32 %v8262, %v8262
    %v8618 = vmul.f32 %v8267, %v8267
    %v8619 = vmul.f32 %v8272, %v8272
    %v8620 = vmul.f32 %v8277, %v8277
    %v8621 = vmul.f32 %v8282, %v8282
    %v8622 = vmul.f32 %v8287, %v8287
    %v8623 = vmul.f32 %v8292, %v8292
    %v8624 = vmul.f32 %v8297, %v8297
    %v8625 = vmul.f32 %v8302, %v8302
    %v8626 = vmul.f32 %v8307, %v8307
    %v8627 = vmul.f32 %v8312, %v8312
    %v8628 = vmul.f32 %v8317, %v8317
    %v8629 = vmul.f32 %v8322, %v8322
    %v8630 = vmul.f32 %v8327, %v8327
    %v8631 = vmul.f32 %v8332, %v8332
    %v8632 = vmul.f32 %v8337, %v8337
    %v8633 = vmul.f32 %v8342, %v8342
    %v8634 = vmul.f32 %v8347, %v8347
    %v8635 = vmul.f32 %v8352, %v8352
    %v8636 = vmul.f32 %v8357, %v8357
    %v8637 = vmul.f32 %v8362, %v8362
    %v8638 = vmul.f32 %v8367, %v8367
    %v8639 = vmul.f32 %v8372, %v8372
    %v8640 = vmul.f32 %v8377, %v8377
    %v8641 = vmul.f32 %v8382, %v8382
    %v8642 = vmul.f32 %v8387, %v8387
    %v8643 = vmul.f32 %v8392, %v8392
    %v8644 = vmul.f32 %v8397, %v8397
    %v8645 = vmul.f32 %v8402, %v8402
    %v8646 = vmul.f32 %v8407, %v8407
    %v8647 = vmul.f32 %v8412, %v8412
    %v8648 = vmul.f32 %v8417, %v8417
    %v8649 = vmul.f32 %v8422, %v8422
    %v8650 = vmul.f32 %v8427, %v8427
    %v8651 = vmul.f32 %v8432, %v8432
    %v8652 = vmul.f32 %v8437, %v8437
    %v8653 = vmul.f32 %v8442, %v8442
    %v8654 = vmul.f32 %v8447, %v8447
    %v8655 = vmul.f32 %v8452, %v8452
    %v8656 = vmul.f32 %v8457, %v8457
    %v8657 = vmul.f32 %v8462, %v8462
    %v8658 = vmul.f32 %v8467, %v8467
    %v8659 = vmul.f32 %v8472, %v8472
    %v8660 = vmul.f32 %v8477, %v8477
    %v8661 = vmul.f32 %v8482, %v8482
    %v8662 = vmul.f32 %v8487, %v8487
    %v8663 = vmul.f32 %v8492, %v8492
    %v8664 = vmul.f32 %v8497, %v8497
    %v8665 = vmul.f32 %v8502, %v8502
    %v8666 = vmul.f32 %v8507, %v8507
    %v8667 = vmul.f32 %v8512, %v8512
    %v8668 = vmul.f32 %v8517, %v8517
    %v8669 = vmul.f32 %v8522, %v8522
    %v8670 = vmul.f32 %v8527, %v8527
    %v8671 = vmul.f32 %v8532, %v8532
    %v8672 = vmul.f32 %v8537, %v8537
    %v8673 = vadd.f32 %v8609, %v8610
    %v8674 = vadd.f32 %v8673, %v8611
    %v8675 = vadd.f32 %v8674, %v8612
    %v8676 = vadd.f32 %v8675, %v8613
    %v8677 = vadd.f32 %v8676, %v8614
    %v8678 = vadd.f32 %v8677, %v8615
    %v8679 = vadd.f32 %v8678, %v8616
    %v8680 = vadd.f32 %v8679, %v8617
    %v8681 = vadd.f32 %v8680, %v8618
    %v8682 = vadd.f32 %v8681, %v8619
    %v8683 = vadd.f32 %v8682, %v8620
    %v8684 = vadd.f32 %v8683, %v8621
    %v8685 = vadd.f32 %v8684, %v8622
    %v8686 = vadd.f32 %v8685, %v8623
    %v8687 = vadd.f32 %v8686, %v8624
    %v8688 = vadd.f32 %v8687, %v8625
    %v8689 = vadd.f32 %v8688, %v8626
    %v8690 = vadd.f32 %v8689, %v8627
    %v8691 = vadd.f32 %v8690, %v8628
    %v8692 = vadd.f32 %v8691, %v8629
    %v8693 = vadd.f32 %v8692, %v8630
    %v8694 = vadd.f32 %v8693, %v8631
    %v8695 = vadd.f32 %v8694, %v8632
    %v8696 = vadd.f32 %v8695, %v8633
    %v8697 = vadd.f32 %v8696, %v8634
    %v8698 = vadd.f32 %v8697, %v8635
    %v8699 = vadd.f32 %v8698, %v8636
    %v8700 = vadd.f32 %v8699, %v8637
    %v8701 = vadd.f32 %v8700, %v8638
    %v8702 = vadd.f32 %v8701, %v8639
    %v8703 = vadd.f32 %v8702, %v8640
    %v8704 = vadd.f32 %v8703, %v8641
    %v8705 = vadd.f32 %v8704, %v8642
    %v8706 = vadd.f32 %v8705, %v8643
    %v8707 = vadd.f32 %v8706, %v8644
    %v8708 = vadd.f32 %v8707, %v8645
    %v8709 = vadd.f32 %v8708, %v8646
    %v8710 = vadd.f32 %v8709, %v8647
    %v8711 = vadd.f32 %v8710, %v8648
    %v8712 = vadd.f32 %v8711, %v8649
    %v8713 = vadd.f32 %v8712, %v8650
    %v8714 = vadd.f32 %v8713, %v8651
    %v8715 = vadd.f32 %v8714, %v8652
    %v8716 = vadd.f32 %v8715, %v8653
    %v8717 = vadd.f32 %v8716, %v8654
    %v8718 = vadd.f32 %v8717, %v8655
    %v8719 = vadd.f32 %v8718, %v8656
    %v8720 = vadd.f32 %v8719, %v8657
    %v8721 = vadd.f32 %v8720, %v8658
    %v8722 = vadd.f32 %v8721, %v8659
    %v8723 = vadd.f32 %v8722, %v8660
    %v8724 = vadd.f32 %v8723, %v8661
    %v8725 = vadd.f32 %v8724, %v8662
    %v8726 = vadd.f32 %v8725, %v8663
    %v8727 = vadd.f32 %v8726, %v8664
    %v8728 = vadd.f32 %v8727, %v8665
    %v8729 = vadd.f32 %v8728, %v8666
    %v8730 = vadd.f32 %v8729, %v8667
    %v8731 = vadd.f32 %v8730, %v8668
    %v8732 = vadd.f32 %v8731, %v8669
    %v8733 = vadd.f32 %v8732, %v8670
    %v8734 = vadd.f32 %v8733, %v8671
    %v8735 = vadd.f32 %v8734, %v8672
    %v8736 = vrot.slane %v8735, 4
    %v8737 = vadd.f32 %v8735, %v8736
    %v8738 = vrot.slane %v8737, 2
    %v8739 = vadd.f32 %v8737, %v8738
    %v8740 = vrot.slane %v8739, 1
    %v8741 = vadd.f32 %v8739, %v8740
    %v8742 = vmul.f32 %v8608, 0.001953125
    %v8743 = vmul.f32 %v8741, 0.001953125
    %v8744 = vmul.f32 %v8742, %v8742
    %v8745 = vsub.f32 %v8743, %v8744
    %v8746 = vmax.f32 %v8745, 0.0
    %v8747 = vadd.f32 %v8746, 1e-05
    %v8748 = vrsqrt.pop %v8747
    %v8749 = vld [vmem:[%s5] sm:$0x1]
    %v8750 = vmul.f32 %v8748, %v8749
    %v8751 = vsub.f32 %v8222, %v8742
    %v8752 = vsub.f32 %v8227, %v8742
    %v8753 = vsub.f32 %v8232, %v8742
    %v8754 = vsub.f32 %v8237, %v8742
    %v8755 = vsub.f32 %v8242, %v8742
    %v8756 = vsub.f32 %v8247, %v8742
    %v8757 = vsub.f32 %v8252, %v8742
    %v8758 = vsub.f32 %v8257, %v8742
    %v8759 = vsub.f32 %v8262, %v8742
    %v8760 = vsub.f32 %v8267, %v8742
    %v8761 = vsub.f32 %v8272, %v8742
    %v8762 = vsub.f32 %v8277, %v8742
    %v8763 = vsub.f32 %v8282, %v8742
    %v8764 = vsub.f32 %v8287, %v8742
    %v8765 = vsub.f32 %v8292, %v8742
    %v8766 = vsub.f32 %v8297, %v8742
    %v8767 = vsub.f32 %v8302, %v8742
    %v8768 = vsub.f32 %v8307, %v8742
    %v8769 = vsub.f32 %v8312, %v8742
    %v8770 = vsub.f32 %v8317, %v8742
    %v8771 = vsub.f32 %v8322, %v8742
    %v8772 = vsub.f32 %v8327, %v8742
    %v8773 = vsub.f32 %v8332, %v8742
    %v8774 = vsub.f32 %v8337, %v8742
    %v8775 = vsub.f32 %v8342, %v8742
    %v8776 = vsub.f32 %v8347, %v8742
    %v8777 = vsub.f32 %v8352, %v8742
    %v8778 = vsub.f32 %v8357, %v8742
    %v8779 = vsub.f32 %v8362, %v8742
    %v8780 = vsub.f32 %v8367, %v8742
    %v8781 = vsub.f32 %v8372, %v8742
    %v8782 = vsub.f32 %v8377, %v8742
    %v8783 = vsub.f32 %v8382, %v8742
    %v8784 = vsub.f32 %v8387, %v8742
    %v8785 = vsub.f32 %v8392, %v8742
    %v8786 = vsub.f32 %v8397, %v8742
    %v8787 = vsub.f32 %v8402, %v8742
    %v8788 = vsub.f32 %v8407, %v8742
    %v8789 = vsub.f32 %v8412, %v8742
    %v8790 = vsub.f32 %v8417, %v8742
    %v8791 = vsub.f32 %v8422, %v8742
    %v8792 = vsub.f32 %v8427, %v8742
    %v8793 = vsub.f32 %v8432, %v8742
    %v8794 = vsub.f32 %v8437, %v8742
    %v8795 = vsub.f32 %v8442, %v8742
    %v8796 = vsub.f32 %v8447, %v8742
    %v8797 = vsub.f32 %v8452, %v8742
    %v8798 = vsub.f32 %v8457, %v8742
    %v8799 = vsub.f32 %v8462, %v8742
    %v8800 = vsub.f32 %v8467, %v8742
    %v8801 = vsub.f32 %v8472, %v8742
    %v8802 = vsub.f32 %v8477, %v8742
    %v8803 = vsub.f32 %v8482, %v8742
    %v8804 = vsub.f32 %v8487, %v8742
    %v8805 = vsub.f32 %v8492, %v8742
    %v8806 = vsub.f32 %v8497, %v8742
    %v8807 = vsub.f32 %v8502, %v8742
    %v8808 = vsub.f32 %v8507, %v8742
    %v8809 = vsub.f32 %v8512, %v8742
    %v8810 = vsub.f32 %v8517, %v8742
    %v8811 = vsub.f32 %v8522, %v8742
    %v8812 = vsub.f32 %v8527, %v8742
    %v8813 = vsub.f32 %v8532, %v8742
    %v8814 = vsub.f32 %v8537, %v8742
    %v8815 = vlaneseq
    %v8816 = vshrl.u32 %v8815, 7
    %v8817 = vsub.s32 0, %v8816
    %v8818 = vrot.slane %v8750, %v8817
    %v8819 = vmul.f32 %v8751, %v8818
    %v8820 = vmul.f32 %v8752, %v8818
    %v8821 = vmul.f32 %v8753, %v8818
    %v8822 = vmul.f32 %v8754, %v8818
    %v8823 = vmul.f32 %v8755, %v8818
    %v8824 = vmul.f32 %v8756, %v8818
    %v8825 = vmul.f32 %v8757, %v8818
    %v8826 = vmul.f32 %v8758, %v8818
    %v8827 = vmul.f32 %v8759, %v8818
    %v8828 = vmul.f32 %v8760, %v8818
    %v8829 = vmul.f32 %v8761, %v8818
    %v8830 = vmul.f32 %v8762, %v8818
    %v8831 = vmul.f32 %v8763, %v8818
    %v8832 = vmul.f32 %v8764, %v8818
    %v8833 = vmul.f32 %v8765, %v8818
    %v8834 = vmul.f32 %v8766, %v8818
    %v8835 = vmul.f32 %v8767, %v8818
    %v8836 = vmul.f32 %v8768, %v8818
    %v8837 = vmul.f32 %v8769, %v8818
    %v8838 = vmul.f32 %v8770, %v8818
    %v8839 = vmul.f32 %v8771, %v8818
    %v8840 = vmul.f32 %v8772, %v8818
    %v8841 = vmul.f32 %v8773, %v8818
    %v8842 = vmul.f32 %v8774, %v8818
    %v8843 = vmul.f32 %v8775, %v8818
    %v8844 = vmul.f32 %v8776, %v8818
    %v8845 = vmul.f32 %v8777, %v8818
    %v8846 = vmul.f32 %v8778, %v8818
    %v8847 = vmul.f32 %v8779, %v8818
    %v8848 = vmul.f32 %v8780, %v8818
    %v8849 = vmul.f32 %v8781, %v8818
    %v8850 = vmul.f32 %v8782, %v8818
    %v8851 = vmul.f32 %v8783, %v8818
    %v8852 = vmul.f32 %v8784, %v8818
    %v8853 = vmul.f32 %v8785, %v8818
    %v8854 = vmul.f32 %v8786, %v8818
    %v8855 = vmul.f32 %v8787, %v8818
    %v8856 = vmul.f32 %v8788, %v8818
    %v8857 = vmul.f32 %v8789, %v8818
    %v8858 = vmul.f32 %v8790, %v8818
    %v8859 = vmul.f32 %v8791, %v8818
    %v8860 = vmul.f32 %v8792, %v8818
    %v8861 = vmul.f32 %v8793, %v8818
    %v8862 = vmul.f32 %v8794, %v8818
    %v8863 = vmul.f32 %v8795, %v8818
    %v8864 = vmul.f32 %v8796, %v8818
    %v8865 = vmul.f32 %v8797, %v8818
    %v8866 = vmul.f32 %v8798, %v8818
    %v8867 = vmul.f32 %v8799, %v8818
    %v8868 = vmul.f32 %v8800, %v8818
    %v8869 = vmul.f32 %v8801, %v8818
    %v8870 = vmul.f32 %v8802, %v8818
    %v8871 = vmul.f32 %v8803, %v8818
    %v8872 = vmul.f32 %v8804, %v8818
    %v8873 = vmul.f32 %v8805, %v8818
    %v8874 = vmul.f32 %v8806, %v8818
    %v8875 = vmul.f32 %v8807, %v8818
    %v8876 = vmul.f32 %v8808, %v8818
    %v8877 = vmul.f32 %v8809, %v8818
    %v8878 = vmul.f32 %v8810, %v8818
    %v8879 = vmul.f32 %v8811, %v8818
    %v8880 = vmul.f32 %v8812, %v8818
    %v8881 = vmul.f32 %v8813, %v8818
    %v8882 = vmul.f32 %v8814, %v8818
    %v8883 = vld [vmem:[%s6] sm:$0x1]
    %v8885 = vlaneseq
    %v8886 = vshrl.u32 %v8885, 7
    %v8887 = vsub.s32 0, %v8886
    %v8888 = vrot.slane %v8883, %v8887
    %v8890 = vadd.f32 %v8819, %v8888
    %v8891 = vadd.f32 %v8820, %v8888
    %v8892 = vadd.f32 %v8821, %v8888
    %v8893 = vadd.f32 %v8822, %v8888
    %v8894 = vadd.f32 %v8823, %v8888
    %v8895 = vadd.f32 %v8824, %v8888
    %v8896 = vadd.f32 %v8825, %v8888
    %v8897 = vadd.f32 %v8826, %v8888
    %v8898 = vadd.f32 %v8827, %v8888
    %v8899 = vadd.f32 %v8828, %v8888
    %v8900 = vadd.f32 %v8829, %v8888
    %v8901 = vadd.f32 %v8830, %v8888
    %v8902 = vadd.f32 %v8831, %v8888
    %v8903 = vadd.f32 %v8832, %v8888
    %v8904 = vadd.f32 %v8833, %v8888
    %v8905 = vadd.f32 %v8834, %v8888
    %v8906 = vadd.f32 %v8835, %v8888
    %v8907 = vadd.f32 %v8836, %v8888
    %v8908 = vadd.f32 %v8837, %v8888
    %v8909 = vadd.f32 %v8838, %v8888
    %v8910 = vadd.f32 %v8839, %v8888
    %v8911 = vadd.f32 %v8840, %v8888
    %v8912 = vadd.f32 %v8841, %v8888
    %v8913 = vadd.f32 %v8842, %v8888
    %v8914 = vadd.f32 %v8843, %v8888
    %v8915 = vadd.f32 %v8844, %v8888
    %v8916 = vadd.f32 %v8845, %v8888
    %v8917 = vadd.f32 %v8846, %v8888
    %v8918 = vadd.f32 %v8847, %v8888
    %v8919 = vadd.f32 %v8848, %v8888
    %v8920 = vadd.f32 %v8849, %v8888
    %v8921 = vadd.f32 %v8850, %v8888
    %v8922 = vadd.f32 %v8851, %v8888
    %v8923 = vadd.f32 %v8852, %v8888
    %v8924 = vadd.f32 %v8853, %v8888
    %v8925 = vadd.f32 %v8854, %v8888
    %v8926 = vadd.f32 %v8855, %v8888
    %v8927 = vadd.f32 %v8856, %v8888
    %v8928 = vadd.f32 %v8857, %v8888
    %v8929 = vadd.f32 %v8858, %v8888
    %v8930 = vadd.f32 %v8859, %v8888
    %v8931 = vadd.f32 %v8860, %v8888
    %v8932 = vadd.f32 %v8861, %v8888
    %v8933 = vadd.f32 %v8862, %v8888
    %v8934 = vadd.f32 %v8863, %v8888
    %v8935 = vadd.f32 %v8864, %v8888
    %v8936 = vadd.f32 %v8865, %v8888
    %v8937 = vadd.f32 %v8866, %v8888
    %v8938 = vadd.f32 %v8867, %v8888
    %v8939 = vadd.f32 %v8868, %v8888
    %v8940 = vadd.f32 %v8869, %v8888
    %v8941 = vadd.f32 %v8870, %v8888
    %v8942 = vadd.f32 %v8871, %v8888
    %v8943 = vadd.f32 %v8872, %v8888
    %v8944 = vadd.f32 %v8873, %v8888
    %v8945 = vadd.f32 %v8874, %v8888
    %v8946 = vadd.f32 %v8875, %v8888
    %v8947 = vadd.f32 %v8876, %v8888
    %v8948 = vadd.f32 %v8877, %v8888
    %v8949 = vadd.f32 %v8878, %v8888
    %v8950 = vadd.f32 %v8879, %v8888
    %v8951 = vadd.f32 %v8880, %v8888
    %v8952 = vadd.f32 %v8881, %v8888
    %v8953 = vadd.f32 %v8882, %v8888
    %v8954 = vld [vmem:[%s227 + $0x1] sm:$0xff]
    %v8955 = vld [vmem:[%s227 + $0x9] sm:$0xff]
    %v8956 = vld [vmem:[%s227 + $0x19] sm:$0xff]
    %v8957 = vld [vmem:[%s227 + $0x21] sm:$0xff]
    %v8958 = vld [vmem:[%s227 + $0x31] sm:$0xff]
    %v8959 = vld [vmem:[%s227 + $0x39] sm:$0xff]
    %v8960 = vld [vmem:[%s227 + $0x49] sm:$0xff]
    %v8961 = vld [vmem:[%s227 + $0x51] sm:$0xff]
    %v8962 = vld [vmem:[%s227 + $0x61] sm:$0xff]
    %v8963 = vld [vmem:[%s227 + $0x69] sm:$0xff]
    %v8964 = vld [vmem:[%s227 + $0x79] sm:$0xff]
    %v8965 = vld [vmem:[%s227 + $0x81] sm:$0xff]
    %v8966 = vld [vmem:[%s227 + $0x91] sm:$0xff]
    %v8967 = vld [vmem:[%s227 + $0x99] sm:$0xff]
    %v8968 = vld [vmem:[%s227 + $0xa9] sm:$0xff]
    %v8969 = vld [vmem:[%s227 + $0xb1] sm:$0xff]
    %v8970 = vld [vmem:[%s227 + $0xc1] sm:$0xff]
    %v8971 = vld [vmem:[%s227 + $0xc9] sm:$0xff]
    %v8972 = vld [vmem:[%s227 + $0xd9] sm:$0xff]
    %v8973 = vld [vmem:[%s227 + $0xe1] sm:$0xff]
    %v8974 = vld [vmem:[%s227 + $0xf1] sm:$0xff]
    %v8975 = vld [vmem:[%s227 + $0xf9] sm:$0xff]
    %v8976 = vld [vmem:[%s227 + $0x109] sm:$0xff]
    %v8977 = vld [vmem:[%s227 + $0x111] sm:$0xff]
    %v8978 = vld [vmem:[%s227 + $0x121] sm:$0xff]
    %v8979 = vld [vmem:[%s227 + $0x129] sm:$0xff]
    %v8980 = vld [vmem:[%s227 + $0x139] sm:$0xff]
    %v8981 = vld [vmem:[%s227 + $0x141] sm:$0xff]
    %v8982 = vld [vmem:[%s227 + $0x151] sm:$0xff]
    %v8983 = vld [vmem:[%s227 + $0x159] sm:$0xff]
    %v8984 = vld [vmem:[%s227 + $0x169] sm:$0xff]
    %v8985 = vld [vmem:[%s227 + $0x171] sm:$0xff]
    %v8986 = vld [vmem:[%s227 + $0x1b1] sm:$0xff]
    %v8987 = vld [vmem:[%s227 + $0x1b9] sm:$0xff]
    %v8988 = vld [vmem:[%s227 + $0x1c9] sm:$0xff]
    %v8989 = vld [vmem:[%s227 + $0x1d1] sm:$0xff]
    %v8990 = vld [vmem:[%s227 + $0x1e1] sm:$0xff]
    %v8991 = vld [vmem:[%s227 + $0x1e9] sm:$0xff]
    %v8992 = vld [vmem:[%s227 + $0x1f9] sm:$0xff]
    %v8993 = vld [vmem:[%s227 + $0x201] sm:$0xff]
    %v8994 = vld [vmem:[%s227 + $0x211] sm:$0xff]
    %v8995 = vld [vmem:[%s227 + $0x219] sm:$0xff]
    %v8996 = vld [vmem:[%s227 + $0x229] sm:$0xff]
    %v8997 = vld [vmem:[%s227 + $0x231] sm:$0xff]
    %v8998 = vld [vmem:[%s227 + $0x241] sm:$0xff]
    %v8999 = vld [vmem:[%s227 + $0x249] sm:$0xff]
    %v9000 = vld [vmem:[%s227 + $0x259] sm:$0xff]
    %v9001 = vld [vmem:[%s227 + $0x261] sm:$0xff]
    %v9002 = vld [vmem:[%s227 + $0x271] sm:$0xff]
    %v9003 = vld [vmem:[%s227 + $0x279] sm:$0xff]
    %v9004 = vld [vmem:[%s227 + $0x289] sm:$0xff]
    %v9005 = vld [vmem:[%s227 + $0x291] sm:$0xff]
    %v9006 = vld [vmem:[%s227 + $0x2a1] sm:$0xff]
    %v9007 = vld [vmem:[%s227 + $0x2a9] sm:$0xff]
    %v9008 = vld [vmem:[%s227 + $0x2b9] sm:$0xff]
    %v9009 = vld [vmem:[%s227 + $0x2c1] sm:$0xff]
    %v9010 = vld [vmem:[%s227 + $0x2d1] sm:$0xff]
    %v9011 = vld [vmem:[%s227 + $0x2d9] sm:$0xff]
    %v9012 = vld [vmem:[%s227 + $0x2e9] sm:$0xff]
    %v9013 = vld [vmem:[%s227 + $0x2f1] sm:$0xff]
    %v9014 = vld [vmem:[%s227 + $0x301] sm:$0xff]
    %v9015 = vld [vmem:[%s227 + $0x309] sm:$0xff]
    %v9016 = vld [vmem:[%s227 + $0x319] sm:$0xff]
    %v9017 = vld [vmem:[%s227 + $0x321] sm:$0xff]
    %v9018 = vadd.f32 %v8890, %v8954
    %v9019 = vadd.f32 %v8891, %v8955
    %v9020 = vadd.f32 %v8892, %v8956
    %v9021 = vadd.f32 %v8893, %v8957
    %v9022 = vadd.f32 %v8894, %v8958
    %v9023 = vadd.f32 %v8895, %v8959
    %v9024 = vadd.f32 %v8896, %v8960
    %v9025 = vadd.f32 %v8897, %v8961
    %v9026 = vadd.f32 %v8898, %v8962
    %v9027 = vadd.f32 %v8899, %v8963
    %v9028 = vadd.f32 %v8900, %v8964
    %v9029 = vadd.f32 %v8901, %v8965
    %v9030 = vadd.f32 %v8902, %v8966
    %v9031 = vadd.f32 %v8903, %v8967
    %v9032 = vadd.f32 %v8904, %v8968
    %v9033 = vadd.f32 %v8905, %v8969
    %v9034 = vadd.f32 %v8906, %v8970
    %v9035 = vadd.f32 %v8907, %v8971
    %v9036 = vadd.f32 %v8908, %v8972
    %v9037 = vadd.f32 %v8909, %v8973
    %v9038 = vadd.f32 %v8910, %v8974
    %v9039 = vadd.f32 %v8911, %v8975
    %v9040 = vadd.f32 %v8912, %v8976
    %v9041 = vadd.f32 %v8913, %v8977
    %v9042 = vadd.f32 %v8914, %v8978
    %v9043 = vadd.f32 %v8915, %v8979
    %v9044 = vadd.f32 %v8916, %v8980
    %v9045 = vadd.f32 %v8917, %v8981
    %v9046 = vadd.f32 %v8918, %v8982
    %v9047 = vadd.f32 %v8919, %v8983
    %v9048 = vadd.f32 %v8920, %v8984
    %v9049 = vadd.f32 %v8921, %v8985
    %v9050 = vadd.f32 %v8922, %v8986
    %v9051 = vadd.f32 %v8923, %v8987
    %v9052 = vadd.f32 %v8924, %v8988
    %v9053 = vadd.f32 %v8925, %v8989
    %v9054 = vadd.f32 %v8926, %v8990
    %v9055 = vadd.f32 %v8927, %v8991
    %v9056 = vadd.f32 %v8928, %v8992
    %v9057 = vadd.f32 %v8929, %v8993
    %v9058 = vadd.f32 %v8930, %v8994
    %v9059 = vadd.f32 %v8931, %v8995
    %v9060 = vadd.f32 %v8932, %v8996
    %v9061 = vadd.f32 %v8933, %v8997
    %v9062 = vadd.f32 %v8934, %v8998
    %v9063 = vadd.f32 %v8935, %v8999
    %v9064 = vadd.f32 %v8936, %v9000
    %v9065 = vadd.f32 %v8937, %v9001
    %v9066 = vadd.f32 %v8938, %v9002
    %v9067 = vadd.f32 %v8939, %v9003
    %v9068 = vadd.f32 %v8940, %v9004
    %v9069 = vadd.f32 %v8941, %v9005
    %v9070 = vadd.f32 %v8942, %v9006
    %v9071 = vadd.f32 %v8943, %v9007
    %v9072 = vadd.f32 %v8944, %v9008
    %v9073 = vadd.f32 %v8945, %v9009
    %v9074 = vadd.f32 %v8946, %v9010
    %v9075 = vadd.f32 %v8947, %v9011
    %v9076 = vadd.f32 %v8948, %v9012
    %v9077 = vadd.f32 %v8949, %v9013
    %v9078 = vadd.f32 %v8950, %v9014
    %v9079 = vadd.f32 %v8951, %v9015
    %v9080 = vadd.f32 %v8952, %v9016
    %v9081 = vadd.f32 %v8953, %v9017
    %v9082 = vmax.f32 %v9018, 0.0
    %v9083 = vmax.f32 %v9019, 0.0
    %v9084 = vmax.f32 %v9020, 0.0
    %v9085 = vmax.f32 %v9021, 0.0
    %v9086 = vmax.f32 %v9022, 0.0
    %v9087 = vmax.f32 %v9023, 0.0
    %v9088 = vmax.f32 %v9024, 0.0
    %v9089 = vmax.f32 %v9025, 0.0
    %v9090 = vmax.f32 %v9026, 0.0
    %v9091 = vmax.f32 %v9027, 0.0
    %v9092 = vmax.f32 %v9028, 0.0
    %v9093 = vmax.f32 %v9029, 0.0
    %v9094 = vmax.f32 %v9030, 0.0
    %v9095 = vmax.f32 %v9031, 0.0
    %v9096 = vmax.f32 %v9032, 0.0
    %v9097 = vmax.f32 %v9033, 0.0
    %v9098 = vmax.f32 %v9034, 0.0
    %v9099 = vmax.f32 %v9035, 0.0
    %v9100 = vmax.f32 %v9036, 0.0
    %v9101 = vmax.f32 %v9037, 0.0
    %v9102 = vmax.f32 %v9038, 0.0
    %v9103 = vmax.f32 %v9039, 0.0
    %v9104 = vmax.f32 %v9040, 0.0
    %v9105 = vmax.f32 %v9041, 0.0
    %v9106 = vmax.f32 %v9042, 0.0
    %v9107 = vmax.f32 %v9043, 0.0
    %v9108 = vmax.f32 %v9044, 0.0
    %v9109 = vmax.f32 %v9045, 0.0
    %v9110 = vmax.f32 %v9046, 0.0
    %v9111 = vmax.f32 %v9047, 0.0
    %v9112 = vmax.f32 %v9048, 0.0
    %v9113 = vmax.f32 %v9049, 0.0
    %v9114 = vmax.f32 %v9050, 0.0
    %v9115 = vmax.f32 %v9051, 0.0
    %v9116 = vmax.f32 %v9052, 0.0
    %v9117 = vmax.f32 %v9053, 0.0
    %v9118 = vmax.f32 %v9054, 0.0
    %v9119 = vmax.f32 %v9055, 0.0
    %v9120 = vmax.f32 %v9056, 0.0
    %v9121 = vmax.f32 %v9057, 0.0
    %v9122 = vmax.f32 %v9058, 0.0
    %v9123 = vmax.f32 %v9059, 0.0
    %v9124 = vmax.f32 %v9060, 0.0
    %v9125 = vmax.f32 %v9061, 0.0
    %v9126 = vmax.f32 %v9062, 0.0
    %v9127 = vmax.f32 %v9063, 0.0
    %v9128 = vmax.f32 %v9064, 0.0
    %v9129 = vmax.f32 %v9065, 0.0
    %v9130 = vmax.f32 %v9066, 0.0
    %v9131 = vmax.f32 %v9067, 0.0
    %v9132 = vmax.f32 %v9068, 0.0
    %v9133 = vmax.f32 %v9069, 0.0
    %v9134 = vmax.f32 %v9070, 0.0
    %v9135 = vmax.f32 %v9071, 0.0
    %v9136 = vmax.f32 %v9072, 0.0
    %v9137 = vmax.f32 %v9073, 0.0
    %v9138 = vmax.f32 %v9074, 0.0
    %v9139 = vmax.f32 %v9075, 0.0
    %v9140 = vmax.f32 %v9076, 0.0
    %v9141 = vmax.f32 %v9077, 0.0
    %v9142 = vmax.f32 %v9078, 0.0
    %v9143 = vmax.f32 %v9079, 0.0
    %v9144 = vmax.f32 %v9080, 0.0
    %v9145 = vmax.f32 %v9081, 0.0
    %9146 = vst [vmem:[#allocation10] sm:$0xff] %v9082
    %9147 = vst [vmem:[#allocation10 + $0x8] sm:$0xff] %v9083
    %9148 = vst [vmem:[#allocation10 + $0x10] sm:$0xff] %v9084
    %9149 = vst [vmem:[#allocation10 + $0x18] sm:$0xff] %v9085
    %9150 = vst [vmem:[#allocation10 + $0x20] sm:$0xff] %v9086
    %9151 = vst [vmem:[#allocation10 + $0x28] sm:$0xff] %v9087
    %9152 = vst [vmem:[#allocation10 + $0x30] sm:$0xff] %v9088
    %9153 = vst [vmem:[#allocation10 + $0x38] sm:$0xff] %v9089
    %9154 = vst [vmem:[#allocation10 + $0x40] sm:$0xff] %v9090
    %9155 = vst [vmem:[#allocation10 + $0x48] sm:$0xff] %v9091
    %9156 = vst [vmem:[#allocation10 + $0x50] sm:$0xff] %v9092
    %9157 = vst [vmem:[#allocation10 + $0x58] sm:$0xff] %v9093
    %9158 = vst [vmem:[#allocation10 + $0x60] sm:$0xff] %v9094
    %9159 = vst [vmem:[#allocation10 + $0x68] sm:$0xff] %v9095
    %9160 = vst [vmem:[#allocation10 + $0x70] sm:$0xff] %v9096
    %9161 = vst [vmem:[#allocation10 + $0x78] sm:$0xff] %v9097
    %9162 = vst [vmem:[#allocation10 + $0x80] sm:$0xff] %v9098
    %9163 = vst [vmem:[#allocation10 + $0x88] sm:$0xff] %v9099
    %9164 = vst [vmem:[#allocation10 + $0x90] sm:$0xff] %v9100
    %9165 = vst [vmem:[#allocation10 + $0x98] sm:$0xff] %v9101
    %9166 = vst [vmem:[#allocation10 + $0xa0] sm:$0xff] %v9102
    %9167 = vst [vmem:[#allocation10 + $0xa8] sm:$0xff] %v9103
    %9168 = vst [vmem:[#allocation10 + $0xb0] sm:$0xff] %v9104
    %9169 = vst [vmem:[#allocation10 + $0xb8] sm:$0xff] %v9105
    %9170 = vst [vmem:[#allocation10 + $0xc0] sm:$0xff] %v9106
    %9171 = vst [vmem:[#allocation10 + $0xc8] sm:$0xff] %v9107
    %9172 = vst [vmem:[#allocation10 + $0xd0] sm:$0xff] %v9108
    %9173 = vst [vmem:[#allocation10 + $0xd8] sm:$0xff] %v9109
    %9174 = vst [vmem:[#allocation10 + $0xe0] sm:$0xff] %v9110
    %9175 = vst [vmem:[#allocation10 + $0xe8] sm:$0xff] %v9111
    %9176 = vst [vmem:[#allocation10 + $0xf0] sm:$0xff] %v9112
    %9177 = vst [vmem:[#allocation10 + $0xf8] sm:$0xff] %v9113
    %9178 = vst [vmem:[#allocation10 + $0x100] sm:$0xff] %v9114
    %9179 = vst [vmem:[#allocation10 + $0x108] sm:$0xff] %v9115
    %9180 = vst [vmem:[#allocation10 + $0x110] sm:$0xff] %v9116
    %9181 = vst [vmem:[#allocation10 + $0x118] sm:$0xff] %v9117
    %9182 = vst [vmem:[#allocation10 + $0x120] sm:$0xff] %v9118
    %9183 = vst [vmem:[#allocation10 + $0x128] sm:$0xff] %v9119
    %9184 = vst [vmem:[#allocation10 + $0x130] sm:$0xff] %v9120
    %9185 = vst [vmem:[#allocation10 + $0x138] sm:$0xff] %v9121
    %9186 = vst [vmem:[#allocation10 + $0x140] sm:$0xff] %v9122
    %9187 = vst [vmem:[#allocation10 + $0x148] sm:$0xff] %v9123
    %9188 = vst [vmem:[#allocation10 + $0x150] sm:$0xff] %v9124
    %9189 = vst [vmem:[#allocation10 + $0x158] sm:$0xff] %v9125
    %9190 = vst [vmem:[#allocation10 + $0x160] sm:$0xff] %v9126
    %9191 = vst [vmem:[#allocation10 + $0x168] sm:$0xff] %v9127
    %9192 = vst [vmem:[#allocation10 + $0x170] sm:$0xff] %v9128
    %9193 = vst [vmem:[#allocation10 + $0x178] sm:$0xff] %v9129
    %9194 = vst [vmem:[#allocation10 + $0x180] sm:$0xff] %v9130
    %9195 = vst [vmem:[#allocation10 + $0x188] sm:$0xff] %v9131
    %9196 = vst [vmem:[#allocation10 + $0x190] sm:$0xff] %v9132
    %9197 = vst [vmem:[#allocation10 + $0x198] sm:$0xff] %v9133
    %9198 = vst [vmem:[#allocation10 + $0x1a0] sm:$0xff] %v9134
    %9199 = vst [vmem:[#allocation10 + $0x1a8] sm:$0xff] %v9135
    %9200 = vst [vmem:[#allocation10 + $0x1b0] sm:$0xff] %v9136
    %9201 = vst [vmem:[#allocation10 + $0x1b8] sm:$0xff] %v9137
    %9202 = vst [vmem:[#allocation10 + $0x1c0] sm:$0xff] %v9138
    %9203 = vst [vmem:[#allocation10 + $0x1c8] sm:$0xff] %v9139
    %9204 = vst [vmem:[#allocation10 + $0x1d0] sm:$0xff] %v9140
    %9205 = vst [vmem:[#allocation10 + $0x1d8] sm:$0xff] %v9141
    %9206 = vst [vmem:[#allocation10 + $0x1e0] sm:$0xff] %v9142
    %9207 = vst [vmem:[#allocation10 + $0x1e8] sm:$0xff] %v9143
    %9208 = vst [vmem:[#allocation10 + $0x1f0] sm:$0xff] %v9144
    %9209 = vst [vmem:[#allocation10 + $0x1f8] sm:$0xff] %v9145
    // Predicated region
    $region38: #{tpu_custom_call.1} parent=1 // pred_check
      _
    $region39: #{tpu_custom_call.1} parent=1 // pred_check_branch
      %9211 = sbr.rel (0) target = $region41
    $region40: #{tpu_custom_call.1} parent=1 // pred_region
      %s9213 = ssub.s32 8192, 8192
      %9214 = vsyncadd [#allocation7], %s9213
      %s9215 = sshll.u32 [#allocation10], 4
      %s9216 = int_to_ptr.vmem [resolvable:$true] %s9215
      %9221 = dma.vmem_to_hbm [thread:$0]  %s9216, 8192, %s7, [#allocation7], 128, 128, 8
    $region41: #{tpu_custom_call.1} parent=1 // pred_fallthru
      _
    // Predicated region
    $region42: #{tpu_custom_call.1} parent=1 // pred_check
      _
    $region43: #{tpu_custom_call.1} parent=1 // pred_check_branch
      %9223 = sbr.rel (0) target = $region45
    $region44: #{tpu_custom_call.1} parent=1 // pred_region
      %9224 = dma.done [#allocation7], 8192
    $region45: #{tpu_custom_call.1} parent=1 // pred_fallthru
      _
    %9225 = vsyncpa [#allocation6], 1
    %9226 = vsyncpa [#allocation9], 1
    %9227 = vsyncpa [#allocation7], 1

</llo_original>
